<compile_context>
chip_gen: v7x
topology: tpu7x:2x2x1
jax: 0.10.0
libtpu: 0.0.40
codegen_flags: <defaults>
</compile_context>

<pallas_src>
import jax
import jax.numpy as jnp
from jax.experimental import pallas as pl
from jax.experimental.pallas import tpu as pltpu


def _round_up(x, m):
    return (x + m - 1) // m * m


# ----------------------------------------------------------------------------
# Conv (im2col matmul + ReLU) kernel — batch folded into M, single block
# ----------------------------------------------------------------------------
def _conv_mm_relu_kernel(p_ref, w_ref, o_ref):
    # p_ref: (Mp, Kp)   w_ref: (Kp, Coutp)   o_ref: (Mp, Coutp)
    acc = jnp.dot(p_ref[...], w_ref[...], preferred_element_type=jnp.float32)
    o_ref[...] = jnp.maximum(acc, 0.0).astype(o_ref.dtype)


def conv2x2_relu(x_nhwc, w_hwio):
    """ReLU(Conv2d(kernel=2, stride=1, pad=0, bias=False)) in NHWC layout."""
    n, hp_, wp_, cin = x_nhwc.shape
    cout = w_hwio.shape[-1]
    ho, wo = hp_ - 1, wp_ - 1

    # im2col (XLA glue, tiny tensors): 4 shifted windows concatenated on the
    # channel axis; batch folded into the matmul M dimension.
    patches = [x_nhwc[:, di:di + ho, dj:dj + wo, :]
               for di in range(2) for dj in range(2)]
    m, k = n * ho * wo, 4 * cin
    p = jnp.concatenate(patches, axis=-1).reshape(m, k)
    w2d = w_hwio.reshape(k, cout)          # (di, dj, cin) order matches patches

    # Pad to hardware tiles: M -> multiple of 8 (sublanes), K -> multiple of
    # 128 (lanes / MXU contraction depth), Cout -> multiple of 128 so the
    # output store is lane-dense (unmasked vst).  Padded rows/cols sliced off.
    mp_, kp_ = _round_up(m, 8), _round_up(k, 128)
    coutp = _round_up(cout, 128)
    p = jnp.pad(p, ((0, mp_ - m), (0, kp_ - k)))
    w2d = jnp.pad(w2d, ((0, kp_ - k), (0, coutp - cout)))

    cost = pl.CostEstimate(
        flops=int(2 * mp_ * kp_ * coutp),
        transcendentals=0,
        bytes_accessed=int(4 * (mp_ * kp_ + kp_ * coutp + mp_ * coutp)))

    out = pl.pallas_call(
        _conv_mm_relu_kernel,
        out_shape=jax.ShapeDtypeStruct((mp_, coutp), x_nhwc.dtype),
        in_specs=[pl.BlockSpec(memory_space=pltpu.MemorySpace.VMEM),
                  pl.BlockSpec(memory_space=pltpu.MemorySpace.VMEM)],
        out_specs=pl.BlockSpec(memory_space=pltpu.MemorySpace.VMEM),
        cost_estimate=cost,
    )(p, w2d)
    return out[:m, :cout].reshape(n, ho, wo, cout)


# ----------------------------------------------------------------------------
# Fused fc1 -> ReLU -> fc2 -> ReLU -> fc3 kernel
# ----------------------------------------------------------------------------
def _fc_fused_kernel(x_ref, w1_ref, w2_ref, w3_ref, h1_ref, h2_ref, y_ref):
    k = pl.program_id(0)

    @pl.when(k == 0)
    def _():
        h1_ref[...] = jnp.zeros_like(h1_ref)

    # Accumulate fc1 directly into the resident h1 output block (f32 acc;
    # weights may be bf16 — MXU bf16 path, f32 accumulate).
    h1_ref[...] += jnp.dot(x_ref[...].astype(w1_ref.dtype), w1_ref[...],
                           preferred_element_type=jnp.float32)

    @pl.when(k == pl.num_programs(0) - 1)
    def _():
        h1 = jnp.maximum(h1_ref[...], 0.0)                       # ReLU(fc1)
        h1_ref[...] = h1
        h2 = jnp.maximum(
            jnp.dot(h1.astype(w2_ref.dtype), w2_ref[...],
                    preferred_element_type=jnp.float32), 0.0)    # ReLU(fc2)
        h2_ref[...] = h2.astype(h2_ref.dtype)
        y_ref[...] = jnp.dot(h2.astype(w3_ref.dtype), w3_ref[...],
                             preferred_element_type=jnp.float32
                             ).astype(y_ref.dtype)               # fc3


def fc_fused(h, w1p, w2p, w3p, out_dims, *, tk=1024):
    """h: (B, K1) f32.  w*p: pre-transposed, zero-padded weights of shapes
    (K1p, N1p), (N1p, N2p), (N2p, N3p) in f32 or bf16.
    out_dims = true (unpadded) output widths."""
    b, k1 = h.shape
    n1, n2, n3 = out_dims
    k1p = w1p.shape[0]
    n1p, n2p, n3p = w1p.shape[1], w2p.shape[1], w3p.shape[1]
    bp = _round_up(b, 8)                         # pad batch rows to sublanes

    hp = jnp.pad(h, ((0, bp - b), (0, k1p - k1)))

    tk = max(128, min(tk, k1p))
    while k1p % tk:
        tk //= 2
    grid_k = k1p // tk

    w_bytes = w1p.dtype.itemsize
    a_bytes = hp.dtype.itemsize
    # Actual VMEM footprint (double-buffered conservatively) + compiler margin.
    vmem_need = (2 * bp * tk * a_bytes            # streamed activation tiles
                 + 2 * tk * n1p * w_bytes         # streamed fc1 weight tiles
                 + 2 * n1p * n2p * w_bytes        # resident fc2 weight
                 + 2 * n2p * n3p * w_bytes        # resident fc3 weight
                 + 2 * bp * (n1p + n2p + n3p) * 4)  # f32 outputs
    vmem_limit = int(vmem_need) + (4 << 20)

    cost = pl.CostEstimate(
        flops=int(2 * bp * (k1p * n1p + n1p * n2p + n2p * n3p)),
        transcendentals=0,
        bytes_accessed=int(w_bytes * (k1p * n1p + n1p * n2p + n2p * n3p)
                           + a_bytes * bp * k1p
                           + 4 * bp * (n1p + n2p + n3p)))

    h1, h2, y = pl.pallas_call(
        _fc_fused_kernel,
        out_shape=(jax.ShapeDtypeStruct((bp, n1p), jnp.float32),
                   jax.ShapeDtypeStruct((bp, n2p), jnp.float32),
                   jax.ShapeDtypeStruct((bp, n3p), jnp.float32)),
        grid_spec=pltpu.PrefetchScalarGridSpec(
            num_scalar_prefetch=0,
            grid=(grid_k,),
            in_specs=[
                pl.BlockSpec((bp, tk), lambda i: (0, i)),     # activations
                pl.BlockSpec((tk, n1p), lambda i: (i, 0)),    # fc1 w (streamed)
                pl.BlockSpec((n1p, n2p), lambda i: (0, 0)),   # fc2 w (resident)
                pl.BlockSpec((n2p, n3p), lambda i: (0, 0)),   # fc3 w (resident)
            ],
            out_specs=[
                pl.BlockSpec((bp, n1p), lambda i: (0, 0)),
                pl.BlockSpec((bp, n2p), lambda i: (0, 0)),
                pl.BlockSpec((bp, n3p), lambda i: (0, 0)),
            ],
        ),
        compiler_params=pltpu.CompilerParams(
            dimension_semantics=("arbitrary",),
            vmem_limit_bytes=vmem_limit),
        cost_estimate=cost,
    )(hp, w1p, w2p, w3p)
    # Slice padded rows/lanes off before anything downstream (h_list means).
    return h1[:b, :n1], h2[:b, :n2], y[:b, :n3]


# ----------------------------------------------------------------------------
# Plain-JAX glue (pad / pool / means / flatten)
# ----------------------------------------------------------------------------
def replication_pad1_nhwc(x):
    return jnp.pad(x, ((0, 0), (1, 1), (1, 1), (0, 0)), mode="edge")


def maxpool2_nhwc(x):
    n, h, w, c = x.shape
    h2, w2 = h // 2, w // 2
    x = x[:, :2 * h2, :2 * w2, :]
    return x.reshape(n, h2, 2, w2, 2, c).max(axis=(2, 4))


def _batch_mean_nchw(x_nhwc):
    return jnp.transpose(jnp.mean(x_nhwc, axis=0, keepdims=True), (0, 3, 1, 2))


# ----------------------------------------------------------------------------
# Parameters (deterministic, functionally match the PyTorch module)
# ----------------------------------------------------------------------------
def init_params(key, ncha, fc_dtype=jnp.bfloat16):
    """Conv weights stored HWIO (f32, tiny).  FC weights stored transposed
    (fin, fout), zero-padded to 128-lane multiples once at init, and cast to
    fc_dtype (bf16 default: halves the dominant HBM weight stream; matmuls
    still accumulate in f32).  Pass fc_dtype=jnp.float32 for strict parity
    with the f32 PyTorch reference."""
    ks = jax.random.split(key, 6)

    def conv_w(k, cin, cout):
        fan_in = cin * 2 * 2
        return (jax.random.normal(k, (2, 2, cin, cout), jnp.float32)
                * jnp.sqrt(2.0 / fan_in))

    def fc_w(k, fin, fout):
        std = jnp.sqrt(2.0 / (fin + fout))          # xavier normal
        w = jax.random.normal(k, (fin, fout), jnp.float32) * std
        w = jnp.pad(w, ((0, _round_up(fin, 128) - fin),
                        (0, _round_up(fout, 128) - fout)))
        return w.astype(fc_dtype)

    return {
        "c1": conv_w(ks[0], ncha, 64),
        "c2": conv_w(ks[1], 64, 128),
        "c3": conv_w(ks[2], 128, 256),
        "fc1": fc_w(ks[3], 256 * 4 * 4, 1000),
        "fc2": fc_w(ks[4], 1000, 1000),
        "fc3": fc_w(ks[5], 1000, 10),
    }


# ----------------------------------------------------------------------------
# Forward (mirrors Net.forward)
# ----------------------------------------------------------------------------
def net_forward(params, x_nchw):
    # TODO(synk): Dropout(0.2) is treated as identity (inference mode).
    x = jnp.transpose(x_nchw, (0, 2, 3, 1))  # NCHW -> NHWC
    h_list, x_list = [], []

    xp = replication_pad1_nhwc(x)
    x_list.append(_batch_mean_nchw(xp))
    con1 = conv2x2_relu(xp, params["c1"])
    con1_p = replication_pad1_nhwc(maxpool2_nhwc(con1))

    x_list.append(_batch_mean_nchw(con1_p))
    con2 = conv2x2_relu(con1_p, params["c2"])
    con2_p = replication_pad1_nhwc(maxpool2_nhwc(con2))

    x_list.append(_batch_mean_nchw(con2_p))
    con3 = conv2x2_relu(con2_p, params["c3"])
    con3_p = maxpool2_nhwc(con3)

    n = con3_p.shape[0]
    h = jnp.transpose(con3_p, (0, 3, 1, 2)).reshape(n, -1)  # NCHW flatten order
    h_list.append(jnp.mean(h, axis=0, keepdims=True))

    h1, h2, y = fc_fused(h, params["fc1"], params["fc2"], params["fc3"],
                         out_dims=(1000, 1000, 10))
    h_list.append(jnp.mean(h1, axis=0, keepdims=True))
    h_list.append(jnp.mean(h2, axis=0, keepdims=True))
    return y, h_list, x_list


# ----------------------------------------------------------------------------
if __name__ == "__main__":
    key = jax.random.PRNGKey(0)
    kx, kp = jax.random.split(key)

    batch, ncha, size = 2, 3, 32  # size must be 32: fc1 expects 256*4*4 feats
    x = jax.random.normal(kx, (batch, ncha, size, size), jnp.float32)
    params = init_params(kp, ncha)

    y, h_list, x_list = jax.jit(net_forward)(params, x)
    jax.block_until_ready((y, h_list, x_list))

    assert y.shape == (batch, 10)
    assert [t.shape for t in h_list] == [(1, 4096), (1, 1000), (1, 1000)]
    assert [t.shape for t in x_list] == [(1, ncha, 34, 34), (1, 64, 18, 18),
                                         (1, 128, 10, 10)]
    print("KERNEL_OK")
</pallas_src>

<mosaic_0001>
module attributes {stable_mosaic.version = 11 : i64} {
  func.func @_conv_mm_relu_kernel(%arg0: memref<2184x128xf32, #tpu.memory_space<vmem>>, %arg1: memref<128x128xf32, #tpu.memory_space<vmem>>, %arg2: memref<2184x128xf32, #tpu.memory_space<vmem>>) attributes {dimension_semantics = [], scalar_prefetch = 0 : i64, scratch_operands = 0 : i64, tpu.core_type = #tpu.core_type<tc>} {
    %c0 = arith.constant 0 : index
    %c0_0 = arith.constant 0 : index
    %0 = vector.load %arg0[%c0, %c0_0] : memref<2184x128xf32, #tpu.memory_space<vmem>>, vector<2184x128xf32>
    %c0_1 = arith.constant 0 : index
    %c0_2 = arith.constant 0 : index
    %1 = vector.load %arg1[%c0_1, %c0_2] : memref<128x128xf32, #tpu.memory_space<vmem>>, vector<128x128xf32>
    %cst = arith.constant dense<0.000000e+00> : vector<2184x128xf32>
    %2 = tpu.matmul %0, %1, %cst {dimension_numbers = #tpu.dot_dimension_numbers<[1], [0], [0], [1], [0, 0, 1, 1], [], []>} : vector<2184x128xf32>, vector<128x128xf32>, vector<2184x128xf32> -> vector<2184x128xf32>
    %cst_3 = arith.constant 0.000000e+00 : f32
    %3 = vector.broadcast %cst_3 : f32 to vector<2184x128xf32>
    %4 = arith.maximumf %2, %3 : vector<2184x128xf32>
    %c0_4 = arith.constant 0 : index
    %c0_5 = arith.constant 0 : index
    %5 = vector.load %arg2[%c0_4, %c0_5] : memref<2184x128xf32, #tpu.memory_space<vmem>>, vector<2184x128xf32>
    tpu.vector_store %arg2[%c0_4, %c0_5], %4 {strides = array<i32>} : memref<2184x128xf32, #tpu.memory_space<vmem>>, vector<2184x128xf32>,
    return
  }
}

module attributes {stable_mosaic.version = 11 : i64} {
  func.func @_conv_mm_relu_kernel(%arg0: memref<584x256xf32, #tpu.memory_space<vmem>>, %arg1: memref<256x128xf32, #tpu.memory_space<vmem>>, %arg2: memref<584x128xf32, #tpu.memory_space<vmem>>) attributes {dimension_semantics = [], scalar_prefetch = 0 : i64, scratch_operands = 0 : i64, tpu.core_type = #tpu.core_type<tc>} {
    %c0 = arith.constant 0 : index
    %c0_0 = arith.constant 0 : index
    %0 = vector.load %arg0[%c0, %c0_0] : memref<584x256xf32, #tpu.memory_space<vmem>>, vector<584x256xf32>
    %c0_1 = arith.constant 0 : index
    %c0_2 = arith.constant 0 : index
    %1 = vector.load %arg1[%c0_1, %c0_2] : memref<256x128xf32, #tpu.memory_space<vmem>>, vector<256x128xf32>
    %cst = arith.constant dense<0.000000e+00> : vector<584x128xf32>
    %2 = tpu.matmul %0, %1, %cst {dimension_numbers = #tpu.dot_dimension_numbers<[1], [0], [0], [1], [0, 0, 1, 1], [], []>} : vector<584x256xf32>, vector<256x128xf32>, vector<584x128xf32> -> vector<584x128xf32>
    %cst_3 = arith.constant 0.000000e+00 : f32
    %3 = vector.broadcast %cst_3 : f32 to vector<584x128xf32>
    %4 = arith.maximumf %2, %3 : vector<584x128xf32>
    %c0_4 = arith.constant 0 : index
    %c0_5 = arith.constant 0 : index
    %5 = vector.load %arg2[%c0_4, %c0_5] : memref<584x128xf32, #tpu.memory_space<vmem>>, vector<584x128xf32>
    tpu.vector_store %arg2[%c0_4, %c0_5], %4 {strides = array<i32>} : memref<584x128xf32, #tpu.memory_space<vmem>>, vector<584x128xf32>,
    return
  }
}

module attributes {stable_mosaic.version = 11 : i64} {
  func.func @_conv_mm_relu_kernel(%arg0: memref<168x512xf32, #tpu.memory_space<vmem>>, %arg1: memref<512x256xf32, #tpu.memory_space<vmem>>, %arg2: memref<168x256xf32, #tpu.memory_space<vmem>>) attributes {dimension_semantics = [], scalar_prefetch = 0 : i64, scratch_operands = 0 : i64, tpu.core_type = #tpu.core_type<tc>} {
    %c0 = arith.constant 0 : index
    %c0_0 = arith.constant 0 : index
    %0 = vector.load %arg0[%c0, %c0_0] : memref<168x512xf32, #tpu.memory_space<vmem>>, vector<168x512xf32>
    %c0_1 = arith.constant 0 : index
    %c0_2 = arith.constant 0 : index
    %1 = vector.load %arg1[%c0_1, %c0_2] : memref<512x256xf32, #tpu.memory_space<vmem>>, vector<512x256xf32>
    %cst = arith.constant dense<0.000000e+00> : vector<168x256xf32>
    %2 = tpu.matmul %0, %1, %cst {dimension_numbers = #tpu.dot_dimension_numbers<[1], [0], [0], [1], [0, 0, 1, 1], [], []>} : vector<168x512xf32>, vector<512x256xf32>, vector<168x256xf32> -> vector<168x256xf32>
    %cst_3 = arith.constant 0.000000e+00 : f32
    %3 = vector.broadcast %cst_3 : f32 to vector<168x256xf32>
    %4 = arith.maximumf %2, %3 : vector<168x256xf32>
    %c0_4 = arith.constant 0 : index
    %c0_5 = arith.constant 0 : index
    %5 = vector.load %arg2[%c0_4, %c0_5] : memref<168x256xf32, #tpu.memory_space<vmem>>, vector<168x256xf32>
    tpu.vector_store %arg2[%c0_4, %c0_5], %4 {strides = array<i32>} : memref<168x256xf32, #tpu.memory_space<vmem>>, vector<168x256xf32>,
    return
  }
}

module attributes {stable_mosaic.version = 11 : i64} {
  func.func @_fc_fused_kernel(%arg0: i32, %arg1: memref<8x1024xf32, #tpu.memory_space<vmem>>, %arg2: memref<1024x1024xbf16, #tpu.memory_space<vmem>>, %arg3: memref<1024x1024xbf16, #tpu.memory_space<vmem>>, %arg4: memref<1024x128xbf16, #tpu.memory_space<vmem>>, %arg5: memref<8x1024xf32, #tpu.memory_space<vmem>>, %arg6: memref<8x1024xf32, #tpu.memory_space<vmem>>, %arg7: memref<8x128xf32, #tpu.memory_space<vmem>>) attributes {dimension_semantics = [#tpu.dimension_semantics<arbitrary>], iteration_bounds = array<i64: 4>, scalar_prefetch = 0 : i64, scratch_operands = 0 : i64, tpu.core_type = #tpu.core_type<tc>, window_params = [{transform_indices = @transform_0, window_bounds = array<i64: 8, 1024>}, {transform_indices = @transform_1, window_bounds = array<i64: 1024, 1024>}, {pipeline_mode = #tpu.pipeline_mode<synchronous>, transform_indices = @transform_2, window_bounds = array<i64: 1024, 1024>}, {pipeline_mode = #tpu.pipeline_mode<synchronous>, transform_indices = @transform_3, window_bounds = array<i64: 1024, 128>}, {pipeline_mode = #tpu.pipeline_mode<synchronous>, transform_indices = @transform_4, window_bounds = array<i64: 8, 1024>}, {pipeline_mode = #tpu.pipeline_mode<synchronous>, transform_indices = @transform_5, window_bounds = array<i64: 8, 1024>}, {pipeline_mode = #tpu.pipeline_mode<synchronous>, transform_indices = @transform_6, window_bounds = array<i64: 8, 128>}]} {
    %c0_i32 = arith.constant 0 : i32
    %0 = arith.cmpi eq, %arg0, %c0_i32 : i32
    %1 = arith.extui %0 : i1 to i32
    %c0_i32_0 = arith.constant 0 : i32
    %2 = arith.cmpi ne, %1, %c0_i32_0 : i32
    scf.if %2 {
      %cst_9 = arith.constant 0.000000e+00 : f32
      %13 = vector.broadcast %cst_9 : f32 to vector<8x1024xf32>
      %c0_10 = arith.constant 0 : index
      %c0_11 = arith.constant 0 : index
      %14 = vector.load %arg5[%c0_10, %c0_11] : memref<8x1024xf32, #tpu.memory_space<vmem>>, vector<8x1024xf32>
      tpu.vector_store %arg5[%c0_10, %c0_11], %13 {strides = array<i32>} : memref<8x1024xf32, #tpu.memory_space<vmem>>, vector<8x1024xf32>,
    } else {
    }
    %c0 = arith.constant 0 : index
    %c0_1 = arith.constant 0 : index
    %3 = vector.load %arg5[%c0, %c0_1] : memref<8x1024xf32, #tpu.memory_space<vmem>>, vector<8x1024xf32>
    %c0_2 = arith.constant 0 : index
    %c0_3 = arith.constant 0 : index
    %4 = vector.load %arg1[%c0_2, %c0_3] : memref<8x1024xf32, #tpu.memory_space<vmem>>, vector<8x1024xf32>
    %5 = arith.truncf %4 : vector<8x1024xf32> to vector<8x1024xbf16>
    %c0_4 = arith.constant 0 : index
    %c0_5 = arith.constant 0 : index
    %6 = vector.load %arg2[%c0_4, %c0_5] : memref<1024x1024xbf16, #tpu.memory_space<vmem>>, vector<1024x1024xbf16>
    %cst = arith.constant dense<0.000000e+00> : vector<8x1024xf32>
    %7 = tpu.matmul %5, %6, %cst {dimension_numbers = #tpu.dot_dimension_numbers<[1], [0], [0], [1], [0, 0, 1, 1], [], []>} : vector<8x1024xbf16>, vector<1024x1024xbf16>, vector<8x1024xf32> -> vector<8x1024xf32>
    %8 = arith.addf %3, %7 : vector<8x1024xf32>
    %c0_6 = arith.constant 0 : index
    %c0_7 = arith.constant 0 : index
    %9 = vector.load %arg5[%c0_6, %c0_7] : memref<8x1024xf32, #tpu.memory_space<vmem>>, vector<8x1024xf32>
    tpu.vector_store %arg5[%c0_6, %c0_7], %8 {strides = array<i32>} : memref<8x1024xf32, #tpu.memory_space<vmem>>, vector<8x1024xf32>,
    %c3_i32 = arith.constant 3 : i32
    %10 = arith.cmpi eq, %arg0, %c3_i32 : i32
    %11 = arith.extui %10 : i1 to i32
    %c0_i32_8 = arith.constant 0 : i32
    %12 = arith.cmpi ne, %11, %c0_i32_8 : i32
    scf.if %12 {
      %c0_9 = arith.constant 0 : index
      %c0_10 = arith.constant 0 : index
      %13 = vector.load %arg5[%c0_9, %c0_10] : memref<8x1024xf32, #tpu.memory_space<vmem>>, vector<8x1024xf32>
      %cst_11 = arith.constant 0.000000e+00 : f32
      %14 = vector.broadcast %cst_11 : f32 to vector<8x1024xf32>
      %15 = arith.maximumf %13, %14 : vector<8x1024xf32>
      %c0_12 = arith.constant 0 : index
      %c0_13 = arith.constant 0 : index
      %16 = vector.load %arg5[%c0_12, %c0_13] : memref<8x1024xf32, #tpu.memory_space<vmem>>, vector<8x1024xf32>
      tpu.vector_store %arg5[%c0_12, %c0_13], %15 {strides = array<i32>} : memref<8x1024xf32, #tpu.memory_space<vmem>>, vector<8x1024xf32>,
      %17 = arith.truncf %15 : vector<8x1024xf32> to vector<8x1024xbf16>
      %c0_14 = arith.constant 0 : index
      %c0_15 = arith.constant 0 : index
      %18 = vector.load %arg3[%c0_14, %c0_15] : memref<1024x1024xbf16, #tpu.memory_space<vmem>>, vector<1024x1024xbf16>
      %cst_16 = arith.constant dense<0.000000e+00> : vector<8x1024xf32>
      %19 = tpu.matmul %17, %18, %cst_16 {dimension_numbers = #tpu.dot_dimension_numbers<[1], [0], [0], [1], [0, 0, 1, 1], [], []>} : vector<8x1024xbf16>, vector<1024x1024xbf16>, vector<8x1024xf32> -> vector<8x1024xf32>
      %cst_17 = arith.constant 0.000000e+00 : f32
      %20 = vector.broadcast %cst_17 : f32 to vector<8x1024xf32>
      %21 = arith.maximumf %19, %20 : vector<8x1024xf32>
      %c0_18 = arith.constant 0 : index
      %c0_19 = arith.constant 0 : index
      %22 = vector.load %arg6[%c0_18, %c0_19] : memref<8x1024xf32, #tpu.memory_space<vmem>>, vector<8x1024xf32>
      tpu.vector_store %arg6[%c0_18, %c0_19], %21 {strides = array<i32>} : memref<8x1024xf32, #tpu.memory_space<vmem>>, vector<8x1024xf32>,
      %23 = arith.truncf %21 : vector<8x1024xf32> to vector<8x1024xbf16>
      %c0_20 = arith.constant 0 : index
      %c0_21 = arith.constant 0 : index
      %24 = vector.load %arg4[%c0_20, %c0_21] : memref<1024x128xbf16, #tpu.memory_space<vmem>>, vector<1024x128xbf16>
      %cst_22 = arith.constant dense<0.000000e+00> : vector<8x128xf32>
      %25 = tpu.matmul %23, %24, %cst_22 {dimension_numbers = #tpu.dot_dimension_numbers<[1], [0], [0], [1], [0, 0, 1, 1], [], []>} : vector<8x1024xbf16>, vector<1024x128xbf16>, vector<8x128xf32> -> vector<8x128xf32>
      %c0_23 = arith.constant 0 : index
      %c0_24 = arith.constant 0 : index
      %26 = vector.load %arg7[%c0_23, %c0_24] : memref<8x128xf32, #tpu.memory_space<vmem>>, vector<8x128xf32>
      tpu.vector_store %arg7[%c0_23, %c0_24], %25 {strides = array<i32>} : memref<8x128xf32, #tpu.memory_space<vmem>>, vector<8x128xf32>,
    } else {
    }
    return
  }
  func.func @transform_0(%arg0: i32) -> (i32, i32) {
    %c0_i32 = arith.constant 0 : i32
    %c0_i32_0 = arith.constant 0 : i32
    return %c0_i32, %arg0 : i32, i32
  }
  func.func @transform_1(%arg0: i32) -> (i32, i32) {
    %c0_i32 = arith.constant 0 : i32
    %c0_i32_0 = arith.constant 0 : i32
    return %arg0, %c0_i32 : i32, i32
  }
  func.func @transform_2(%arg0: i32) -> (i32, i32) {
    %c0_i32 = arith.constant 0 : i32
    %c0_i32_0 = arith.constant 0 : i32
    %c0_i32_1 = arith.constant 0 : i32
    return %c0_i32, %c0_i32_0 : i32, i32
  }
  func.func @transform_3(%arg0: i32) -> (i32, i32) {
    %c0_i32 = arith.constant 0 : i32
    %c0_i32_0 = arith.constant 0 : i32
    %c0_i32_1 = arith.constant 0 : i32
    return %c0_i32, %c0_i32_0 : i32, i32
  }
  func.func @transform_4(%arg0: i32) -> (i32, i32) {
    %c0_i32 = arith.constant 0 : i32
    %c0_i32_0 = arith.constant 0 : i32
    %c0_i32_1 = arith.constant 0 : i32
    return %c0_i32, %c0_i32_0 : i32, i32
  }
  func.func @transform_5(%arg0: i32) -> (i32, i32) {
    %c0_i32 = arith.constant 0 : i32
    %c0_i32_0 = arith.constant 0 : i32
    %c0_i32_1 = arith.constant 0 : i32
    return %c0_i32, %c0_i32_0 : i32, i32
  }
  func.func @transform_6(%arg0: i32) -> (i32, i32) {
    %c0_i32 = arith.constant 0 : i32
    %c0_i32_0 = arith.constant 0 : i32
    %c0_i32_1 = arith.constant 0 : i32
    return %c0_i32, %c0_i32_0 : i32, i32
  }
}

</mosaic_0001>

<llo_original>
// kernel: net_forward.4
$region0: #{net_forward.4}
  #allocation0 [shape = 'u32[]', space=smem, size = 0x4, offset = 0x4, fixed_abs, tag = 'smem constant byte address 0x4 - core index']
  #allocation1 [shape = 'u32[144,128]{1,0:T(1,128)}', space=vmem, size = 0x12000, scoped, tag = 'internal scratch']
  %s0 = inlined_call_operand.vmem [shape: f32[2184,128], index: 0, kind: input, shape index: {}]
  %s1 = inlined_call_operand.vmem [shape: f32[128,128], index: 1, kind: input, shape index: {}]
  %s2 = inlined_call_operand.vmem [shape: f32[2184,128], index: 2, kind: output, shape index: {}]
  %s3 = sld [smem:[#allocation0]]
  $region18: #{net_forward.4} parent=0
    _
  %s5 = ssub.s32 1, %s3
  %s6 = scalar_select 0, %s5, %s3
  // Predicated region
  $region2: #{net_forward.4} parent=0 // pred_check
    _
  $region3: #{net_forward.4} parent=0 // pred_check_branch
    %8 = sbr.rel (0) target = $region5
  $region4: #{net_forward.4} parent=0 // pred_region
    _
  $region5: #{net_forward.4} parent=0 // pred_fallthru
    _
  // Predicated region
  $region6: #{net_forward.4} parent=0 // pred_check
    _
  $region7: #{net_forward.4} parent=0 // pred_check_branch
    %10 = sbr.rel (0) target = $region9
  $region8: #{net_forward.4} parent=0 // pred_region
    _
  $region9: #{net_forward.4} parent=0 // pred_fallthru
    _
  %v11 = vld [vmem:[%s0] sm:$0xff]
  %v12 = vld [vmem:[%s0 + $0x8] sm:$0xff]
  %v13 = vld [vmem:[%s0 + $0x10] sm:$0xff]
  %v14 = vld [vmem:[%s0 + $0x18] sm:$0xff]
  %v15 = vld [vmem:[%s0 + $0x20] sm:$0xff]
  %v16 = vld [vmem:[%s0 + $0x28] sm:$0xff]
  %v17 = vld [vmem:[%s0 + $0x30] sm:$0xff]
  %v18 = vld [vmem:[%s0 + $0x38] sm:$0xff]
  %v19 = vld [vmem:[%s0 + $0x40] sm:$0xff]
  %v20 = vld [vmem:[%s0 + $0x48] sm:$0xff]
  %v21 = vld [vmem:[%s0 + $0x50] sm:$0xff]
  %v22 = vld [vmem:[%s0 + $0x58] sm:$0xff]
  %v23 = vld [vmem:[%s0 + $0x60] sm:$0xff]
  %v24 = vld [vmem:[%s0 + $0x68] sm:$0xff]
  %v25 = vld [vmem:[%s0 + $0x70] sm:$0xff]
  %v26 = vld [vmem:[%s0 + $0x78] sm:$0xff]
  %v27 = vld [vmem:[%s0 + $0x80] sm:$0xff]
  %v28 = vld [vmem:[%s0 + $0x88] sm:$0xff]
  %v29 = vld [vmem:[%s0 + $0x90] sm:$0xff]
  %v30 = vld [vmem:[%s0 + $0x98] sm:$0xff]
  %v31 = vld [vmem:[%s0 + $0xa0] sm:$0xff]
  %v32 = vld [vmem:[%s0 + $0xa8] sm:$0xff]
  %v33 = vld [vmem:[%s0 + $0xb0] sm:$0xff]
  %v34 = vld [vmem:[%s0 + $0xb8] sm:$0xff]
  %v35 = vld [vmem:[%s0 + $0xc0] sm:$0xff]
  %v36 = vld [vmem:[%s0 + $0xc8] sm:$0xff]
  %v37 = vld [vmem:[%s0 + $0xd0] sm:$0xff]
  %v38 = vld [vmem:[%s0 + $0xd8] sm:$0xff]
  %v39 = vld [vmem:[%s0 + $0xe0] sm:$0xff]
  %v40 = vld [vmem:[%s0 + $0xe8] sm:$0xff]
  %v41 = vld [vmem:[%s0 + $0xf0] sm:$0xff]
  %v42 = vld [vmem:[%s0 + $0xf8] sm:$0xff]
  %v43 = vld [vmem:[%s0 + $0x100] sm:$0xff]
  %v44 = vld [vmem:[%s0 + $0x108] sm:$0xff]
  %v45 = vld [vmem:[%s0 + $0x110] sm:$0xff]
  %v46 = vld [vmem:[%s0 + $0x118] sm:$0xff]
  %v47 = vld [vmem:[%s0 + $0x120] sm:$0xff]
  %v48 = vld [vmem:[%s0 + $0x128] sm:$0xff]
  %v49 = vld [vmem:[%s0 + $0x130] sm:$0xff]
  %v50 = vld [vmem:[%s0 + $0x138] sm:$0xff]
  %v51 = vld [vmem:[%s0 + $0x140] sm:$0xff]
  %v52 = vld [vmem:[%s0 + $0x148] sm:$0xff]
  %v53 = vld [vmem:[%s0 + $0x150] sm:$0xff]
  %v54 = vld [vmem:[%s0 + $0x158] sm:$0xff]
  %v55 = vld [vmem:[%s0 + $0x160] sm:$0xff]
  %v56 = vld [vmem:[%s0 + $0x168] sm:$0xff]
  %v57 = vld [vmem:[%s0 + $0x170] sm:$0xff]
  %v58 = vld [vmem:[%s0 + $0x178] sm:$0xff]
  %v59 = vld [vmem:[%s0 + $0x180] sm:$0xff]
  %v60 = vld [vmem:[%s0 + $0x188] sm:$0xff]
  %v61 = vld [vmem:[%s0 + $0x190] sm:$0xff]
  %v62 = vld [vmem:[%s0 + $0x198] sm:$0xff]
  %v63 = vld [vmem:[%s0 + $0x1a0] sm:$0xff]
  %v64 = vld [vmem:[%s0 + $0x1a8] sm:$0xff]
  %v65 = vld [vmem:[%s0 + $0x1b0] sm:$0xff]
  %v66 = vld [vmem:[%s0 + $0x1b8] sm:$0xff]
  %v67 = vld [vmem:[%s0 + $0x1c0] sm:$0xff]
  %v68 = vld [vmem:[%s0 + $0x1c8] sm:$0xff]
  %v69 = vld [vmem:[%s0 + $0x1d0] sm:$0xff]
  %v70 = vld [vmem:[%s0 + $0x1d8] sm:$0xff]
  %v71 = vld [vmem:[%s0 + $0x1e0] sm:$0xff]
  %v72 = vld [vmem:[%s0 + $0x1e8] sm:$0xff]
  %v73 = vld [vmem:[%s0 + $0x1f0] sm:$0xff]
  %v74 = vld [vmem:[%s0 + $0x1f8] sm:$0xff]
  %v75 = vld [vmem:[%s0 + $0x200] sm:$0xff]
  %v76 = vld [vmem:[%s0 + $0x208] sm:$0xff]
  %v77 = vld [vmem:[%s0 + $0x210] sm:$0xff]
  %v78 = vld [vmem:[%s0 + $0x218] sm:$0xff]
  %v79 = vld [vmem:[%s0 + $0x220] sm:$0xff]
  %v80 = vld [vmem:[%s0 + $0x228] sm:$0xff]
  %v81 = vld [vmem:[%s0 + $0x230] sm:$0xff]
  %v82 = vld [vmem:[%s0 + $0x238] sm:$0xff]
  %v83 = vld [vmem:[%s0 + $0x240] sm:$0xff]
  %v84 = vld [vmem:[%s0 + $0x248] sm:$0xff]
  %v85 = vld [vmem:[%s0 + $0x250] sm:$0xff]
  %v86 = vld [vmem:[%s0 + $0x258] sm:$0xff]
  %v87 = vld [vmem:[%s0 + $0x260] sm:$0xff]
  %v88 = vld [vmem:[%s0 + $0x268] sm:$0xff]
  %v89 = vld [vmem:[%s0 + $0x270] sm:$0xff]
  %v90 = vld [vmem:[%s0 + $0x278] sm:$0xff]
  %v91 = vld [vmem:[%s0 + $0x280] sm:$0xff]
  %v92 = vld [vmem:[%s0 + $0x288] sm:$0xff]
  %v93 = vld [vmem:[%s0 + $0x290] sm:$0xff]
  %v94 = vld [vmem:[%s0 + $0x298] sm:$0xff]
  %v95 = vld [vmem:[%s0 + $0x2a0] sm:$0xff]
  %v96 = vld [vmem:[%s0 + $0x2a8] sm:$0xff]
  %v97 = vld [vmem:[%s0 + $0x2b0] sm:$0xff]
  %v98 = vld [vmem:[%s0 + $0x2b8] sm:$0xff]
  %v99 = vld [vmem:[%s0 + $0x2c0] sm:$0xff]
  %v100 = vld [vmem:[%s0 + $0x2c8] sm:$0xff]
  %v101 = vld [vmem:[%s0 + $0x2d0] sm:$0xff]
  %v102 = vld [vmem:[%s0 + $0x2d8] sm:$0xff]
  %v103 = vld [vmem:[%s0 + $0x2e0] sm:$0xff]
  %v104 = vld [vmem:[%s0 + $0x2e8] sm:$0xff]
  %v105 = vld [vmem:[%s0 + $0x2f0] sm:$0xff]
  %v106 = vld [vmem:[%s0 + $0x2f8] sm:$0xff]
  %v107 = vld [vmem:[%s0 + $0x300] sm:$0xff]
  %v108 = vld [vmem:[%s0 + $0x308] sm:$0xff]
  %v109 = vld [vmem:[%s0 + $0x310] sm:$0xff]
  %v110 = vld [vmem:[%s0 + $0x318] sm:$0xff]
  %v111 = vld [vmem:[%s0 + $0x320] sm:$0xff]
  %v112 = vld [vmem:[%s0 + $0x328] sm:$0xff]
  %v113 = vld [vmem:[%s0 + $0x330] sm:$0xff]
  %v114 = vld [vmem:[%s0 + $0x338] sm:$0xff]
  %v115 = vld [vmem:[%s0 + $0x340] sm:$0xff]
  %v116 = vld [vmem:[%s0 + $0x348] sm:$0xff]
  %v117 = vld [vmem:[%s0 + $0x350] sm:$0xff]
  %v118 = vld [vmem:[%s0 + $0x358] sm:$0xff]
  %v119 = vld [vmem:[%s0 + $0x360] sm:$0xff]
  %v120 = vld [vmem:[%s0 + $0x368] sm:$0xff]
  %v121 = vld [vmem:[%s0 + $0x370] sm:$0xff]
  %v122 = vld [vmem:[%s0 + $0x378] sm:$0xff]
  %v123 = vld [vmem:[%s0 + $0x380] sm:$0xff]
  %v124 = vld [vmem:[%s0 + $0x388] sm:$0xff]
  %v125 = vld [vmem:[%s0 + $0x390] sm:$0xff]
  %v126 = vld [vmem:[%s0 + $0x398] sm:$0xff]
  %v127 = vld [vmem:[%s0 + $0x3a0] sm:$0xff]
  %v128 = vld [vmem:[%s0 + $0x3a8] sm:$0xff]
  %v129 = vld [vmem:[%s0 + $0x3b0] sm:$0xff]
  %v130 = vld [vmem:[%s0 + $0x3b8] sm:$0xff]
  %v131 = vld [vmem:[%s0 + $0x3c0] sm:$0xff]
  %v132 = vld [vmem:[%s0 + $0x3c8] sm:$0xff]
  %v133 = vld [vmem:[%s0 + $0x3d0] sm:$0xff]
  %v134 = vld [vmem:[%s0 + $0x3d8] sm:$0xff]
  %v135 = vld [vmem:[%s0 + $0x3e0] sm:$0xff]
  %v136 = vld [vmem:[%s0 + $0x3e8] sm:$0xff]
  %v137 = vld [vmem:[%s0 + $0x3f0] sm:$0xff]
  %v138 = vld [vmem:[%s0 + $0x3f8] sm:$0xff]
  %v139 = vld [vmem:[%s0 + $0x400] sm:$0xff]
  %v140 = vld [vmem:[%s0 + $0x408] sm:$0xff]
  %v141 = vld [vmem:[%s0 + $0x410] sm:$0xff]
  %v142 = vld [vmem:[%s0 + $0x418] sm:$0xff]
  %v143 = vld [vmem:[%s0 + $0x420] sm:$0xff]
  %v144 = vld [vmem:[%s0 + $0x428] sm:$0xff]
  %v145 = vld [vmem:[%s0 + $0x430] sm:$0xff]
  %v146 = vld [vmem:[%s0 + $0x438] sm:$0xff]
  %v147 = vld [vmem:[%s0 + $0x440] sm:$0xff]
  %v148 = vld [vmem:[%s0 + $0x448] sm:$0xff]
  %v149 = vld [vmem:[%s0 + $0x450] sm:$0xff]
  %v150 = vld [vmem:[%s0 + $0x458] sm:$0xff]
  %v151 = vld [vmem:[%s0 + $0x460] sm:$0xff]
  %v152 = vld [vmem:[%s0 + $0x468] sm:$0xff]
  %v153 = vld [vmem:[%s0 + $0x470] sm:$0xff]
  %v154 = vld [vmem:[%s0 + $0x478] sm:$0xff]
  %v155 = vld [vmem:[%s0 + $0x480] sm:$0xff]
  %v156 = vld [vmem:[%s0 + $0x488] sm:$0xff]
  %v157 = vld [vmem:[%s0 + $0x490] sm:$0xff]
  %v158 = vld [vmem:[%s0 + $0x498] sm:$0xff]
  %v159 = vld [vmem:[%s0 + $0x4a0] sm:$0xff]
  %v160 = vld [vmem:[%s0 + $0x4a8] sm:$0xff]
  %v161 = vld [vmem:[%s0 + $0x4b0] sm:$0xff]
  %v162 = vld [vmem:[%s0 + $0x4b8] sm:$0xff]
  %v163 = vld [vmem:[%s0 + $0x4c0] sm:$0xff]
  %v164 = vld [vmem:[%s0 + $0x4c8] sm:$0xff]
  %v165 = vld [vmem:[%s0 + $0x4d0] sm:$0xff]
  %v166 = vld [vmem:[%s0 + $0x4d8] sm:$0xff]
  %v167 = vld [vmem:[%s0 + $0x4e0] sm:$0xff]
  %v168 = vld [vmem:[%s0 + $0x4e8] sm:$0xff]
  %v169 = vld [vmem:[%s0 + $0x4f0] sm:$0xff]
  %v170 = vld [vmem:[%s0 + $0x4f8] sm:$0xff]
  %v171 = vld [vmem:[%s0 + $0x500] sm:$0xff]
  %v172 = vld [vmem:[%s0 + $0x508] sm:$0xff]
  %v173 = vld [vmem:[%s0 + $0x510] sm:$0xff]
  %v174 = vld [vmem:[%s0 + $0x518] sm:$0xff]
  %v175 = vld [vmem:[%s0 + $0x520] sm:$0xff]
  %v176 = vld [vmem:[%s0 + $0x528] sm:$0xff]
  %v177 = vld [vmem:[%s0 + $0x530] sm:$0xff]
  %v178 = vld [vmem:[%s0 + $0x538] sm:$0xff]
  %v179 = vld [vmem:[%s0 + $0x540] sm:$0xff]
  %v180 = vld [vmem:[%s0 + $0x548] sm:$0xff]
  %v181 = vld [vmem:[%s0 + $0x550] sm:$0xff]
  %v182 = vld [vmem:[%s0 + $0x558] sm:$0xff]
  %v183 = vld [vmem:[%s0 + $0x560] sm:$0xff]
  %v184 = vld [vmem:[%s0 + $0x568] sm:$0xff]
  %v185 = vld [vmem:[%s0 + $0x570] sm:$0xff]
  %v186 = vld [vmem:[%s0 + $0x578] sm:$0xff]
  %v187 = vld [vmem:[%s0 + $0x580] sm:$0xff]
  %v188 = vld [vmem:[%s0 + $0x588] sm:$0xff]
  %v189 = vld [vmem:[%s0 + $0x590] sm:$0xff]
  %v190 = vld [vmem:[%s0 + $0x598] sm:$0xff]
  %v191 = vld [vmem:[%s0 + $0x5a0] sm:$0xff]
  %v192 = vld [vmem:[%s0 + $0x5a8] sm:$0xff]
  %v193 = vld [vmem:[%s0 + $0x5b0] sm:$0xff]
  %v194 = vld [vmem:[%s0 + $0x5b8] sm:$0xff]
  %v195 = vld [vmem:[%s0 + $0x5c0] sm:$0xff]
  %v196 = vld [vmem:[%s0 + $0x5c8] sm:$0xff]
  %v197 = vld [vmem:[%s0 + $0x5d0] sm:$0xff]
  %v198 = vld [vmem:[%s0 + $0x5d8] sm:$0xff]
  %v199 = vld [vmem:[%s0 + $0x5e0] sm:$0xff]
  %v200 = vld [vmem:[%s0 + $0x5e8] sm:$0xff]
  %v201 = vld [vmem:[%s0 + $0x5f0] sm:$0xff]
  %v202 = vld [vmem:[%s0 + $0x5f8] sm:$0xff]
  %v203 = vld [vmem:[%s0 + $0x600] sm:$0xff]
  %v204 = vld [vmem:[%s0 + $0x608] sm:$0xff]
  %v205 = vld [vmem:[%s0 + $0x610] sm:$0xff]
  %v206 = vld [vmem:[%s0 + $0x618] sm:$0xff]
  %v207 = vld [vmem:[%s0 + $0x620] sm:$0xff]
  %v208 = vld [vmem:[%s0 + $0x628] sm:$0xff]
  %v209 = vld [vmem:[%s0 + $0x630] sm:$0xff]
  %v210 = vld [vmem:[%s0 + $0x638] sm:$0xff]
  %v211 = vld [vmem:[%s0 + $0x640] sm:$0xff]
  %v212 = vld [vmem:[%s0 + $0x648] sm:$0xff]
  %v213 = vld [vmem:[%s0 + $0x650] sm:$0xff]
  %v214 = vld [vmem:[%s0 + $0x658] sm:$0xff]
  %v215 = vld [vmem:[%s0 + $0x660] sm:$0xff]
  %v216 = vld [vmem:[%s0 + $0x668] sm:$0xff]
  %v217 = vld [vmem:[%s0 + $0x670] sm:$0xff]
  %v218 = vld [vmem:[%s0 + $0x678] sm:$0xff]
  %v219 = vld [vmem:[%s0 + $0x680] sm:$0xff]
  %v220 = vld [vmem:[%s0 + $0x688] sm:$0xff]
  %v221 = vld [vmem:[%s0 + $0x690] sm:$0xff]
  %v222 = vld [vmem:[%s0 + $0x698] sm:$0xff]
  %v223 = vld [vmem:[%s0 + $0x6a0] sm:$0xff]
  %v224 = vld [vmem:[%s0 + $0x6a8] sm:$0xff]
  %v225 = vld [vmem:[%s0 + $0x6b0] sm:$0xff]
  %v226 = vld [vmem:[%s0 + $0x6b8] sm:$0xff]
  %v227 = vld [vmem:[%s0 + $0x6c0] sm:$0xff]
  %v228 = vld [vmem:[%s0 + $0x6c8] sm:$0xff]
  %v229 = vld [vmem:[%s0 + $0x6d0] sm:$0xff]
  %v230 = vld [vmem:[%s0 + $0x6d8] sm:$0xff]
  %v231 = vld [vmem:[%s0 + $0x6e0] sm:$0xff]
  %v232 = vld [vmem:[%s0 + $0x6e8] sm:$0xff]
  %v233 = vld [vmem:[%s0 + $0x6f0] sm:$0xff]
  %v234 = vld [vmem:[%s0 + $0x6f8] sm:$0xff]
  %v235 = vld [vmem:[%s0 + $0x700] sm:$0xff]
  %v236 = vld [vmem:[%s0 + $0x708] sm:$0xff]
  %v237 = vld [vmem:[%s0 + $0x710] sm:$0xff]
  %v238 = vld [vmem:[%s0 + $0x718] sm:$0xff]
  %v239 = vld [vmem:[%s0 + $0x720] sm:$0xff]
  %v240 = vld [vmem:[%s0 + $0x728] sm:$0xff]
  %v241 = vld [vmem:[%s0 + $0x730] sm:$0xff]
  %v242 = vld [vmem:[%s0 + $0x738] sm:$0xff]
  %v243 = vld [vmem:[%s0 + $0x740] sm:$0xff]
  %v244 = vld [vmem:[%s0 + $0x748] sm:$0xff]
  %v245 = vld [vmem:[%s0 + $0x750] sm:$0xff]
  %v246 = vld [vmem:[%s0 + $0x758] sm:$0xff]
  %v247 = vld [vmem:[%s0 + $0x760] sm:$0xff]
  %v248 = vld [vmem:[%s0 + $0x768] sm:$0xff]
  %v249 = vld [vmem:[%s0 + $0x770] sm:$0xff]
  %v250 = vld [vmem:[%s0 + $0x778] sm:$0xff]
  %v251 = vld [vmem:[%s0 + $0x780] sm:$0xff]
  %v252 = vld [vmem:[%s0 + $0x788] sm:$0xff]
  %v253 = vld [vmem:[%s0 + $0x790] sm:$0xff]
  %v254 = vld [vmem:[%s0 + $0x798] sm:$0xff]
  %v255 = vld [vmem:[%s0 + $0x7a0] sm:$0xff]
  %v256 = vld [vmem:[%s0 + $0x7a8] sm:$0xff]
  %v257 = vld [vmem:[%s0 + $0x7b0] sm:$0xff]
  %v258 = vld [vmem:[%s0 + $0x7b8] sm:$0xff]
  %v259 = vld [vmem:[%s0 + $0x7c0] sm:$0xff]
  %v260 = vld [vmem:[%s0 + $0x7c8] sm:$0xff]
  %v261 = vld [vmem:[%s0 + $0x7d0] sm:$0xff]
  %v262 = vld [vmem:[%s0 + $0x7d8] sm:$0xff]
  %v263 = vld [vmem:[%s0 + $0x7e0] sm:$0xff]
  %v264 = vld [vmem:[%s0 + $0x7e8] sm:$0xff]
  %v265 = vld [vmem:[%s0 + $0x7f0] sm:$0xff]
  %v266 = vld [vmem:[%s0 + $0x7f8] sm:$0xff]
  %v267 = vld [vmem:[%s0 + $0x800] sm:$0xff]
  %v268 = vld [vmem:[%s0 + $0x808] sm:$0xff]
  %v269 = vld [vmem:[%s0 + $0x810] sm:$0xff]
  %v270 = vld [vmem:[%s0 + $0x818] sm:$0xff]
  %v271 = vld [vmem:[%s0 + $0x820] sm:$0xff]
  %v272 = vld [vmem:[%s0 + $0x828] sm:$0xff]
  %v273 = vld [vmem:[%s0 + $0x830] sm:$0xff]
  %v274 = vld [vmem:[%s0 + $0x838] sm:$0xff]
  %v275 = vld [vmem:[%s0 + $0x840] sm:$0xff]
  %v276 = vld [vmem:[%s0 + $0x848] sm:$0xff]
  %v277 = vld [vmem:[%s0 + $0x850] sm:$0xff]
  %v278 = vld [vmem:[%s0 + $0x858] sm:$0xff]
  %v279 = vld [vmem:[%s0 + $0x860] sm:$0xff]
  %v280 = vld [vmem:[%s0 + $0x868] sm:$0xff]
  %v281 = vld [vmem:[%s0 + $0x870] sm:$0xff]
  %v282 = vld [vmem:[%s0 + $0x878] sm:$0xff]
  %v283 = vld [vmem:[%s0 + $0x880] sm:$0xff]
  %v284 = vld [vmem:[%s1] sm:$0xff]
  %v285 = vld [vmem:[%s1 + $0x8] sm:$0xff]
  %v286 = vld [vmem:[%s1 + $0x10] sm:$0xff]
  %v287 = vld [vmem:[%s1 + $0x18] sm:$0xff]
  %v288 = vld [vmem:[%s1 + $0x20] sm:$0xff]
  %v289 = vld [vmem:[%s1 + $0x28] sm:$0xff]
  %v290 = vld [vmem:[%s1 + $0x30] sm:$0xff]
  %v291 = vld [vmem:[%s1 + $0x38] sm:$0xff]
  %v292 = vld [vmem:[%s1 + $0x40] sm:$0xff]
  %v293 = vld [vmem:[%s1 + $0x48] sm:$0xff]
  %v294 = vld [vmem:[%s1 + $0x50] sm:$0xff]
  %v295 = vld [vmem:[%s1 + $0x58] sm:$0xff]
  %v296 = vld [vmem:[%s1 + $0x60] sm:$0xff]
  %v297 = vld [vmem:[%s1 + $0x68] sm:$0xff]
  %v298 = vld [vmem:[%s1 + $0x70] sm:$0xff]
  %v299 = vld [vmem:[%s1 + $0x78] sm:$0xff]
  %300 = vmatprep.subr.mxu0 0.0
  %301 = vmatpush1.msra.mxu0 %v284
  %302 = vmatprep.subr.mxu0 0.0
  %303 = vmatpush1.msra.mxu0 %v285
  %304 = vmatprep.subr.mxu0 0.0
  %305 = vmatpush1.msra.mxu0 %v286
  %306 = vmatprep.subr.mxu0 0.0
  %307 = vmatpush1.msra.mxu0 %v287
  %308 = vmatprep.subr.mxu0 0.0
  %309 = vmatpush1.msra.mxu0 %v288
  %310 = vmatprep.subr.mxu0 0.0
  %311 = vmatpush1.msra.mxu0 %v289
  %312 = vmatprep.subr.mxu0 0.0
  %313 = vmatpush1.msra.mxu0 %v290
  %314 = vmatprep.subr.mxu0 0.0
  %315 = vmatpush1.msra.mxu0 %v291
  %316 = vmatprep.subr.mxu0 0.0
  %317 = vmatpush1.msra.mxu0 %v292
  %318 = vmatprep.subr.mxu0 0.0
  %319 = vmatpush1.msra.mxu0 %v293
  %320 = vmatprep.subr.mxu0 0.0
  %321 = vmatpush1.msra.mxu0 %v294
  %322 = vmatprep.subr.mxu0 0.0
  %323 = vmatpush1.msra.mxu0 %v295
  %324 = vmatprep.subr.mxu0 0.0
  %325 = vmatpush1.msra.mxu0 %v296
  %326 = vmatprep.subr.mxu0 0.0
  %327 = vmatpush1.msra.mxu0 %v297
  %328 = vmatprep.subr.mxu0 0.0
  %329 = vmatpush1.msra.mxu0 %v298
  %330 = vmatprep.subr.mxu0 0.0
  %331 = vmatpush1.msra.mxu0 %v299
  %332 = vmatprep.subr.mxu0 0.0
  %333 = vmatpush1.msra.mxu0 0.0
  %334 = vmatprep.subr.mxu0 0.0
  %335 = vmatpush1.msra.mxu0 0.0
  %336 = vmatprep.subr.mxu0 0.0
  %337 = vmatpush1.msra.mxu0 0.0
  %338 = vmatprep.subr.mxu0 0.0
  %339 = vmatpush1.msra.mxu0 0.0
  %340 = vmatprep.subr.mxu0 0.0
  %341 = vmatpush1.msra.mxu0 0.0
  %342 = vmatprep.subr.mxu0 0.0
  %343 = vmatpush1.msra.mxu0 0.0
  %344 = vmatprep.subr.mxu0 0.0
  %345 = vmatpush1.msra.mxu0 0.0
  %346 = vmatprep.subr.mxu0 0.0
  %347 = vmatpush1.msra.mxu0 0.0
  %348 = vmatprep.subr.mxu0 0.0
  %349 = vmatpush1.msra.mxu0 0.0
  %350 = vmatprep.subr.mxu0 0.0
  %351 = vmatpush1.msra.mxu0 0.0
  %352 = vmatprep.subr.mxu0 0.0
  %353 = vmatpush1.msra.mxu0 0.0
  %354 = vmatprep.subr.mxu0 0.0
  %355 = vmatpush1.msra.mxu0 0.0
  %356 = vmatprep.subr.mxu0 0.0
  %357 = vmatpush1.msra.mxu0 0.0
  %358 = vmatprep.subr.mxu0 0.0
  %359 = vmatpush1.msra.mxu0 0.0
  %360 = vmatprep.subr.mxu0 0.0
  %361 = vmatpush1.msra.mxu0 0.0
  %362 = vmatprep.subr.mxu0 0.0
  %363 = vmatpush1.msra.mxu0 0.0
  %364 = vmatprep.mubr.f32.mxu0 0.0
  %365 = vmatmul.mubr.f32.gmra.mrb[0].mxu0 %v11
  %v366 = vpop.f32.mrb[0].mxu0
  %v367 = vadd.f32 0.0, %v366
  %v368 = vpop.f32.mrb[0].mxu0
  %369 = vmatprep.mubr.f32.mxu0 0.0
  %370 = vmatmul.mubr.f32.gmra.mrb[0].mxu0 %v12
  %v371 = vpop.f32.mrb[0].mxu0
  %v372 = vadd.f32 0.0, %v371
  %v373 = vpop.f32.mrb[0].mxu0
  %374 = vmatprep.mubr.f32.mxu0 0.0
  %375 = vmatmul.mubr.f32.gmra.mrb[0].mxu0 %v13
  %v376 = vpop.f32.mrb[0].mxu0
  %v377 = vadd.f32 0.0, %v376
  %v378 = vpop.f32.mrb[0].mxu0
  %379 = vmatprep.mubr.f32.mxu0 0.0
  %380 = vmatmul.mubr.f32.gmra.mrb[0].mxu0 %v14
  %v381 = vpop.f32.mrb[0].mxu0
  %v382 = vadd.f32 0.0, %v381
  %v383 = vpop.f32.mrb[0].mxu0
  %384 = vmatprep.mubr.f32.mxu0 0.0
  %385 = vmatmul.mubr.f32.gmra.mrb[0].mxu0 %v15
  %v386 = vpop.f32.mrb[0].mxu0
  %v387 = vadd.f32 0.0, %v386
  %v388 = vpop.f32.mrb[0].mxu0
  %389 = vmatprep.mubr.f32.mxu0 0.0
  %390 = vmatmul.mubr.f32.gmra.mrb[0].mxu0 %v16
  %v391 = vpop.f32.mrb[0].mxu0
  %v392 = vadd.f32 0.0, %v391
  %v393 = vpop.f32.mrb[0].mxu0
  %394 = vmatprep.mubr.f32.mxu0 0.0
  %395 = vmatmul.mubr.f32.gmra.mrb[0].mxu0 %v17
  %v396 = vpop.f32.mrb[0].mxu0
  %v397 = vadd.f32 0.0, %v396
  %v398 = vpop.f32.mrb[0].mxu0
  %399 = vmatprep.mubr.f32.mxu0 0.0
  %400 = vmatmul.mubr.f32.gmra.mrb[0].mxu0 %v18
  %v401 = vpop.f32.mrb[0].mxu0
  %v402 = vadd.f32 0.0, %v401
  %v403 = vpop.f32.mrb[0].mxu0
  %404 = vmatprep.mubr.f32.mxu0 0.0
  %405 = vmatmul.mubr.f32.gmra.mrb[0].mxu0 %v19
  %v406 = vpop.f32.mrb[0].mxu0
  %v407 = vadd.f32 0.0, %v406
  %v408 = vpop.f32.mrb[0].mxu0
  %409 = vmatprep.mubr.f32.mxu0 0.0
  %410 = vmatmul.mubr.f32.gmra.mrb[0].mxu0 %v20
  %v411 = vpop.f32.mrb[0].mxu0
  %v412 = vadd.f32 0.0, %v411
  %v413 = vpop.f32.mrb[0].mxu0
  %414 = vmatprep.mubr.f32.mxu0 0.0
  %415 = vmatmul.mubr.f32.gmra.mrb[0].mxu0 %v21
  %v416 = vpop.f32.mrb[0].mxu0
  %v417 = vadd.f32 0.0, %v416
  %v418 = vpop.f32.mrb[0].mxu0
  %419 = vmatprep.mubr.f32.mxu0 0.0
  %420 = vmatmul.mubr.f32.gmra.mrb[0].mxu0 %v22
  %v421 = vpop.f32.mrb[0].mxu0
  %v422 = vadd.f32 0.0, %v421
  %v423 = vpop.f32.mrb[0].mxu0
  %424 = vmatprep.mubr.f32.mxu0 0.0
  %425 = vmatmul.mubr.f32.gmra.mrb[0].mxu0 %v23
  %v426 = vpop.f32.mrb[0].mxu0
  %v427 = vadd.f32 0.0, %v426
  %v428 = vpop.f32.mrb[0].mxu0
  %429 = vmatprep.mubr.f32.mxu0 0.0
  %430 = vmatmul.mubr.f32.gmra.mrb[0].mxu0 %v24
  %v431 = vpop.f32.mrb[0].mxu0
  %v432 = vadd.f32 0.0, %v431
  %v433 = vpop.f32.mrb[0].mxu0
  %434 = vmatprep.mubr.f32.mxu0 0.0
  %435 = vmatmul.mubr.f32.gmra.mrb[0].mxu0 %v25
  %v436 = vpop.f32.mrb[0].mxu0
  %v437 = vadd.f32 0.0, %v436
  %v438 = vpop.f32.mrb[0].mxu0
  %439 = vmatprep.mubr.f32.mxu0 0.0
  %440 = vmatmul.mubr.f32.gmra.mrb[0].mxu0 %v26
  %v441 = vpop.f32.mrb[0].mxu0
  %v442 = vadd.f32 0.0, %v441
  %v443 = vpop.f32.mrb[0].mxu0
  %444 = vmatprep.mubr.f32.mxu0 0.0
  %445 = vmatmul.mubr.f32.gmra.mrb[0].mxu0 %v27
  %v446 = vpop.f32.mrb[0].mxu0
  %v447 = vadd.f32 0.0, %v446
  %v448 = vpop.f32.mrb[0].mxu0
  %449 = vmatprep.mubr.f32.mxu0 0.0
  %450 = vmatmul.mubr.f32.gmra.mrb[0].mxu0 %v28
  %v451 = vpop.f32.mrb[0].mxu0
  %v452 = vadd.f32 0.0, %v451
  %v453 = vpop.f32.mrb[0].mxu0
  %454 = vmatprep.mubr.f32.mxu0 0.0
  %455 = vmatmul.mubr.f32.gmra.mrb[0].mxu0 %v29
  %v456 = vpop.f32.mrb[0].mxu0
  %v457 = vadd.f32 0.0, %v456
  %v458 = vpop.f32.mrb[0].mxu0
  %459 = vmatprep.mubr.f32.mxu0 0.0
  %460 = vmatmul.mubr.f32.gmra.mrb[0].mxu0 %v30
  %v461 = vpop.f32.mrb[0].mxu0
  %v462 = vadd.f32 0.0, %v461
  %v463 = vpop.f32.mrb[0].mxu0
  %464 = vmatprep.mubr.f32.mxu0 0.0
  %465 = vmatmul.mubr.f32.gmra.mrb[0].mxu0 %v31
  %v466 = vpop.f32.mrb[0].mxu0
  %v467 = vadd.f32 0.0, %v466
  %v468 = vpop.f32.mrb[0].mxu0
  %469 = vmatprep.mubr.f32.mxu0 0.0
  %470 = vmatmul.mubr.f32.gmra.mrb[0].mxu0 %v32
  %v471 = vpop.f32.mrb[0].mxu0
  %v472 = vadd.f32 0.0, %v471
  %v473 = vpop.f32.mrb[0].mxu0
  %474 = vmatprep.mubr.f32.mxu0 0.0
  %475 = vmatmul.mubr.f32.gmra.mrb[0].mxu0 %v33
  %v476 = vpop.f32.mrb[0].mxu0
  %v477 = vadd.f32 0.0, %v476
  %v478 = vpop.f32.mrb[0].mxu0
  %479 = vmatprep.mubr.f32.mxu0 0.0
  %480 = vmatmul.mubr.f32.gmra.mrb[0].mxu0 %v34
  %v481 = vpop.f32.mrb[0].mxu0
  %v482 = vadd.f32 0.0, %v481
  %v483 = vpop.f32.mrb[0].mxu0
  %484 = vmatprep.mubr.f32.mxu0 0.0
  %485 = vmatmul.mubr.f32.gmra.mrb[0].mxu0 %v35
  %v486 = vpop.f32.mrb[0].mxu0
  %v487 = vadd.f32 0.0, %v486
  %v488 = vpop.f32.mrb[0].mxu0
  %489 = vmatprep.mubr.f32.mxu0 0.0
  %490 = vmatmul.mubr.f32.gmra.mrb[0].mxu0 %v36
  %v491 = vpop.f32.mrb[0].mxu0
  %v492 = vadd.f32 0.0, %v491
  %v493 = vpop.f32.mrb[0].mxu0
  %494 = vmatprep.mubr.f32.mxu0 0.0
  %495 = vmatmul.mubr.f32.gmra.mrb[0].mxu0 %v37
  %v496 = vpop.f32.mrb[0].mxu0
  %v497 = vadd.f32 0.0, %v496
  %v498 = vpop.f32.mrb[0].mxu0
  %499 = vmatprep.mubr.f32.mxu0 0.0
  %500 = vmatmul.mubr.f32.gmra.mrb[0].mxu0 %v38
  %v501 = vpop.f32.mrb[0].mxu0
  %v502 = vadd.f32 0.0, %v501
  %v503 = vpop.f32.mrb[0].mxu0
  %504 = vmatprep.mubr.f32.mxu0 0.0
  %505 = vmatmul.mubr.f32.gmra.mrb[0].mxu0 %v39
  %v506 = vpop.f32.mrb[0].mxu0
  %v507 = vadd.f32 0.0, %v506
  %v508 = vpop.f32.mrb[0].mxu0
  %509 = vmatprep.mubr.f32.mxu0 0.0
  %510 = vmatmul.mubr.f32.gmra.mrb[0].mxu0 %v40
  %v511 = vpop.f32.mrb[0].mxu0
  %v512 = vadd.f32 0.0, %v511
  %v513 = vpop.f32.mrb[0].mxu0
  %514 = vmatprep.mubr.f32.mxu0 0.0
  %515 = vmatmul.mubr.f32.gmra.mrb[0].mxu0 %v41
  %v516 = vpop.f32.mrb[0].mxu0
  %v517 = vadd.f32 0.0, %v516
  %v518 = vpop.f32.mrb[0].mxu0
  %519 = vmatprep.mubr.f32.mxu0 0.0
  %520 = vmatmul.mubr.f32.gmra.mrb[0].mxu0 %v42
  %v521 = vpop.f32.mrb[0].mxu0
  %v522 = vadd.f32 0.0, %v521
  %v523 = vpop.f32.mrb[0].mxu0
  %524 = vmatprep.mubr.f32.mxu0 0.0
  %525 = vmatmul.mubr.f32.gmra.mrb[0].mxu0 %v43
  %v526 = vpop.f32.mrb[0].mxu0
  %v527 = vadd.f32 0.0, %v526
  %v528 = vpop.f32.mrb[0].mxu0
  %529 = vmatprep.mubr.f32.mxu0 0.0
  %530 = vmatmul.mubr.f32.gmra.mrb[0].mxu0 %v44
  %v531 = vpop.f32.mrb[0].mxu0
  %v532 = vadd.f32 0.0, %v531
  %v533 = vpop.f32.mrb[0].mxu0
  %534 = vmatprep.mubr.f32.mxu0 0.0
  %535 = vmatmul.mubr.f32.gmra.mrb[0].mxu0 %v45
  %v536 = vpop.f32.mrb[0].mxu0
  %v537 = vadd.f32 0.0, %v536
  %v538 = vpop.f32.mrb[0].mxu0
  %539 = vmatprep.mubr.f32.mxu0 0.0
  %540 = vmatmul.mubr.f32.gmra.mrb[0].mxu0 %v46
  %v541 = vpop.f32.mrb[0].mxu0
  %v542 = vadd.f32 0.0, %v541
  %v543 = vpop.f32.mrb[0].mxu0
  %544 = vmatprep.mubr.f32.mxu0 0.0
  %545 = vmatmul.mubr.f32.gmra.mrb[0].mxu0 %v47
  %v546 = vpop.f32.mrb[0].mxu0
  %v547 = vadd.f32 0.0, %v546
  %v548 = vpop.f32.mrb[0].mxu0
  %549 = vmatprep.mubr.f32.mxu0 0.0
  %550 = vmatmul.mubr.f32.gmra.mrb[0].mxu0 %v48
  %v551 = vpop.f32.mrb[0].mxu0
  %v552 = vadd.f32 0.0, %v551
  %v553 = vpop.f32.mrb[0].mxu0
  %554 = vmatprep.mubr.f32.mxu0 0.0
  %555 = vmatmul.mubr.f32.gmra.mrb[0].mxu0 %v49
  %v556 = vpop.f32.mrb[0].mxu0
  %v557 = vadd.f32 0.0, %v556
  %v558 = vpop.f32.mrb[0].mxu0
  %559 = vmatprep.mubr.f32.mxu0 0.0
  %560 = vmatmul.mubr.f32.gmra.mrb[0].mxu0 %v50
  %v561 = vpop.f32.mrb[0].mxu0
  %v562 = vadd.f32 0.0, %v561
  %v563 = vpop.f32.mrb[0].mxu0
  %564 = vmatprep.mubr.f32.mxu0 0.0
  %565 = vmatmul.mubr.f32.gmra.mrb[0].mxu0 %v51
  %v566 = vpop.f32.mrb[0].mxu0
  %v567 = vadd.f32 0.0, %v566
  %v568 = vpop.f32.mrb[0].mxu0
  %569 = vmatprep.mubr.f32.mxu0 0.0
  %570 = vmatmul.mubr.f32.gmra.mrb[0].mxu0 %v52
  %v571 = vpop.f32.mrb[0].mxu0
  %v572 = vadd.f32 0.0, %v571
  %v573 = vpop.f32.mrb[0].mxu0
  %574 = vmatprep.mubr.f32.mxu0 0.0
  %575 = vmatmul.mubr.f32.gmra.mrb[0].mxu0 %v53
  %v576 = vpop.f32.mrb[0].mxu0
  %v577 = vadd.f32 0.0, %v576
  %v578 = vpop.f32.mrb[0].mxu0
  %579 = vmatprep.mubr.f32.mxu0 0.0
  %580 = vmatmul.mubr.f32.gmra.mrb[0].mxu0 %v54
  %v581 = vpop.f32.mrb[0].mxu0
  %v582 = vadd.f32 0.0, %v581
  %v583 = vpop.f32.mrb[0].mxu0
  %584 = vmatprep.mubr.f32.mxu0 0.0
  %585 = vmatmul.mubr.f32.gmra.mrb[0].mxu0 %v55
  %v586 = vpop.f32.mrb[0].mxu0
  %v587 = vadd.f32 0.0, %v586
  %v588 = vpop.f32.mrb[0].mxu0
  %589 = vmatprep.mubr.f32.mxu0 0.0
  %590 = vmatmul.mubr.f32.gmra.mrb[0].mxu0 %v56
  %v591 = vpop.f32.mrb[0].mxu0
  %v592 = vadd.f32 0.0, %v591
  %v593 = vpop.f32.mrb[0].mxu0
  %594 = vmatprep.mubr.f32.mxu0 0.0
  %595 = vmatmul.mubr.f32.gmra.mrb[0].mxu0 %v57
  %v596 = vpop.f32.mrb[0].mxu0
  %v597 = vadd.f32 0.0, %v596
  %v598 = vpop.f32.mrb[0].mxu0
  %599 = vmatprep.mubr.f32.mxu0 0.0
  %600 = vmatmul.mubr.f32.gmra.mrb[0].mxu0 %v58
  %v601 = vpop.f32.mrb[0].mxu0
  %v602 = vadd.f32 0.0, %v601
  %v603 = vpop.f32.mrb[0].mxu0
  %604 = vmatprep.mubr.f32.mxu0 0.0
  %605 = vmatmul.mubr.f32.gmra.mrb[0].mxu0 %v59
  %v606 = vpop.f32.mrb[0].mxu0
  %v607 = vadd.f32 0.0, %v606
  %v608 = vpop.f32.mrb[0].mxu0
  %609 = vmatprep.mubr.f32.mxu0 0.0
  %610 = vmatmul.mubr.f32.gmra.mrb[0].mxu0 %v60
  %v611 = vpop.f32.mrb[0].mxu0
  %v612 = vadd.f32 0.0, %v611
  %v613 = vpop.f32.mrb[0].mxu0
  %614 = vmatprep.mubr.f32.mxu0 0.0
  %615 = vmatmul.mubr.f32.gmra.mrb[0].mxu0 %v61
  %v616 = vpop.f32.mrb[0].mxu0
  %v617 = vadd.f32 0.0, %v616
  %v618 = vpop.f32.mrb[0].mxu0
  %619 = vmatprep.mubr.f32.mxu0 0.0
  %620 = vmatmul.mubr.f32.gmra.mrb[0].mxu0 %v62
  %v621 = vpop.f32.mrb[0].mxu0
  %v622 = vadd.f32 0.0, %v621
  %v623 = vpop.f32.mrb[0].mxu0
  %624 = vmatprep.mubr.f32.mxu0 0.0
  %625 = vmatmul.mubr.f32.gmra.mrb[0].mxu0 %v63
  %v626 = vpop.f32.mrb[0].mxu0
  %v627 = vadd.f32 0.0, %v626
  %v628 = vpop.f32.mrb[0].mxu0
  %629 = vmatprep.mubr.f32.mxu0 0.0
  %630 = vmatmul.mubr.f32.gmra.mrb[0].mxu0 %v64
  %v631 = vpop.f32.mrb[0].mxu0
  %v632 = vadd.f32 0.0, %v631
  %v633 = vpop.f32.mrb[0].mxu0
  %634 = vmatprep.mubr.f32.mxu0 0.0
  %635 = vmatmul.mubr.f32.gmra.mrb[0].mxu0 %v65
  %v636 = vpop.f32.mrb[0].mxu0
  %v637 = vadd.f32 0.0, %v636
  %v638 = vpop.f32.mrb[0].mxu0
  %639 = vmatprep.mubr.f32.mxu0 0.0
  %640 = vmatmul.mubr.f32.gmra.mrb[0].mxu0 %v66
  %v641 = vpop.f32.mrb[0].mxu0
  %v642 = vadd.f32 0.0, %v641
  %v643 = vpop.f32.mrb[0].mxu0
  %644 = vmatprep.mubr.f32.mxu0 0.0
  %645 = vmatmul.mubr.f32.gmra.mrb[0].mxu0 %v67
  %v646 = vpop.f32.mrb[0].mxu0
  %v647 = vadd.f32 0.0, %v646
  %v648 = vpop.f32.mrb[0].mxu0
  %649 = vmatprep.mubr.f32.mxu0 0.0
  %650 = vmatmul.mubr.f32.gmra.mrb[0].mxu0 %v68
  %v651 = vpop.f32.mrb[0].mxu0
  %v652 = vadd.f32 0.0, %v651
  %v653 = vpop.f32.mrb[0].mxu0
  %654 = vmatprep.mubr.f32.mxu0 0.0
  %655 = vmatmul.mubr.f32.gmra.mrb[0].mxu0 %v69
  %v656 = vpop.f32.mrb[0].mxu0
  %v657 = vadd.f32 0.0, %v656
  %v658 = vpop.f32.mrb[0].mxu0
  %659 = vmatprep.mubr.f32.mxu0 0.0
  %660 = vmatmul.mubr.f32.gmra.mrb[0].mxu0 %v70
  %v661 = vpop.f32.mrb[0].mxu0
  %v662 = vadd.f32 0.0, %v661
  %v663 = vpop.f32.mrb[0].mxu0
  %664 = vmatprep.mubr.f32.mxu0 0.0
  %665 = vmatmul.mubr.f32.gmra.mrb[0].mxu0 %v71
  %v666 = vpop.f32.mrb[0].mxu0
  %v667 = vadd.f32 0.0, %v666
  %v668 = vpop.f32.mrb[0].mxu0
  %669 = vmatprep.mubr.f32.mxu0 0.0
  %670 = vmatmul.mubr.f32.gmra.mrb[0].mxu0 %v72
  %v671 = vpop.f32.mrb[0].mxu0
  %v672 = vadd.f32 0.0, %v671
  %v673 = vpop.f32.mrb[0].mxu0
  %674 = vmatprep.mubr.f32.mxu0 0.0
  %675 = vmatmul.mubr.f32.gmra.mrb[0].mxu0 %v73
  %v676 = vpop.f32.mrb[0].mxu0
  %v677 = vadd.f32 0.0, %v676
  %v678 = vpop.f32.mrb[0].mxu0
  %679 = vmatprep.mubr.f32.mxu0 0.0
  %680 = vmatmul.mubr.f32.gmra.mrb[0].mxu0 %v74
  %v681 = vpop.f32.mrb[0].mxu0
  %v682 = vadd.f32 0.0, %v681
  %v683 = vpop.f32.mrb[0].mxu0
  %684 = vmatprep.mubr.f32.mxu0 0.0
  %685 = vmatmul.mubr.f32.gmra.mrb[0].mxu0 %v75
  %v686 = vpop.f32.mrb[0].mxu0
  %v687 = vadd.f32 0.0, %v686
  %v688 = vpop.f32.mrb[0].mxu0
  %689 = vmatprep.mubr.f32.mxu0 0.0
  %690 = vmatmul.mubr.f32.gmra.mrb[0].mxu0 %v76
  %v691 = vpop.f32.mrb[0].mxu0
  %v692 = vadd.f32 0.0, %v691
  %v693 = vpop.f32.mrb[0].mxu0
  %694 = vmatprep.mubr.f32.mxu0 0.0
  %695 = vmatmul.mubr.f32.gmra.mrb[0].mxu0 %v77
  %v696 = vpop.f32.mrb[0].mxu0
  %v697 = vadd.f32 0.0, %v696
  %v698 = vpop.f32.mrb[0].mxu0
  %699 = vmatprep.mubr.f32.mxu0 0.0
  %700 = vmatmul.mubr.f32.gmra.mrb[0].mxu0 %v78
  %v701 = vpop.f32.mrb[0].mxu0
  %v702 = vadd.f32 0.0, %v701
  %v703 = vpop.f32.mrb[0].mxu0
  %704 = vmatprep.mubr.f32.mxu0 0.0
  %705 = vmatmul.mubr.f32.gmra.mrb[0].mxu0 %v79
  %v706 = vpop.f32.mrb[0].mxu0
  %v707 = vadd.f32 0.0, %v706
  %v708 = vpop.f32.mrb[0].mxu0
  %709 = vmatprep.mubr.f32.mxu0 0.0
  %710 = vmatmul.mubr.f32.gmra.mrb[0].mxu0 %v80
  %v711 = vpop.f32.mrb[0].mxu0
  %v712 = vadd.f32 0.0, %v711
  %v713 = vpop.f32.mrb[0].mxu0
  %714 = vmatprep.mubr.f32.mxu0 0.0
  %715 = vmatmul.mubr.f32.gmra.mrb[0].mxu0 %v81
  %v716 = vpop.f32.mrb[0].mxu0
  %v717 = vadd.f32 0.0, %v716
  %v718 = vpop.f32.mrb[0].mxu0
  %719 = vmatprep.mubr.f32.mxu0 0.0
  %720 = vmatmul.mubr.f32.gmra.mrb[0].mxu0 %v82
  %v721 = vpop.f32.mrb[0].mxu0
  %v722 = vadd.f32 0.0, %v721
  %v723 = vpop.f32.mrb[0].mxu0
  %724 = vmatprep.mubr.f32.mxu0 0.0
  %725 = vmatmul.mubr.f32.gmra.mrb[0].mxu0 %v83
  %v726 = vpop.f32.mrb[0].mxu0
  %v727 = vadd.f32 0.0, %v726
  %v728 = vpop.f32.mrb[0].mxu0
  %729 = vmatprep.mubr.f32.mxu0 0.0
  %730 = vmatmul.mubr.f32.gmra.mrb[0].mxu0 %v84
  %v731 = vpop.f32.mrb[0].mxu0
  %v732 = vadd.f32 0.0, %v731
  %v733 = vpop.f32.mrb[0].mxu0
  %734 = vmatprep.mubr.f32.mxu0 0.0
  %735 = vmatmul.mubr.f32.gmra.mrb[0].mxu0 %v85
  %v736 = vpop.f32.mrb[0].mxu0
  %v737 = vadd.f32 0.0, %v736
  %v738 = vpop.f32.mrb[0].mxu0
  %739 = vmatprep.mubr.f32.mxu0 0.0
  %740 = vmatmul.mubr.f32.gmra.mrb[0].mxu0 %v86
  %v741 = vpop.f32.mrb[0].mxu0
  %v742 = vadd.f32 0.0, %v741
  %v743 = vpop.f32.mrb[0].mxu0
  %744 = vmatprep.mubr.f32.mxu0 0.0
  %745 = vmatmul.mubr.f32.gmra.mrb[0].mxu0 %v87
  %v746 = vpop.f32.mrb[0].mxu0
  %v747 = vadd.f32 0.0, %v746
  %v748 = vpop.f32.mrb[0].mxu0
  %749 = vmatprep.mubr.f32.mxu0 0.0
  %750 = vmatmul.mubr.f32.gmra.mrb[0].mxu0 %v88
  %v751 = vpop.f32.mrb[0].mxu0
  %v752 = vadd.f32 0.0, %v751
  %v753 = vpop.f32.mrb[0].mxu0
  %754 = vmatprep.mubr.f32.mxu0 0.0
  %755 = vmatmul.mubr.f32.gmra.mrb[0].mxu0 %v89
  %v756 = vpop.f32.mrb[0].mxu0
  %v757 = vadd.f32 0.0, %v756
  %v758 = vpop.f32.mrb[0].mxu0
  %759 = vmatprep.mubr.f32.mxu0 0.0
  %760 = vmatmul.mubr.f32.gmra.mrb[0].mxu0 %v90
  %v761 = vpop.f32.mrb[0].mxu0
  %v762 = vadd.f32 0.0, %v761
  %v763 = vpop.f32.mrb[0].mxu0
  %764 = vmatprep.mubr.f32.mxu0 0.0
  %765 = vmatmul.mubr.f32.gmra.mrb[0].mxu0 %v91
  %v766 = vpop.f32.mrb[0].mxu0
  %v767 = vadd.f32 0.0, %v766
  %v768 = vpop.f32.mrb[0].mxu0
  %769 = vmatprep.mubr.f32.mxu0 0.0
  %770 = vmatmul.mubr.f32.gmra.mrb[0].mxu0 %v92
  %v771 = vpop.f32.mrb[0].mxu0
  %v772 = vadd.f32 0.0, %v771
  %v773 = vpop.f32.mrb[0].mxu0
  %774 = vmatprep.mubr.f32.mxu0 0.0
  %775 = vmatmul.mubr.f32.gmra.mrb[0].mxu0 %v93
  %v776 = vpop.f32.mrb[0].mxu0
  %v777 = vadd.f32 0.0, %v776
  %v778 = vpop.f32.mrb[0].mxu0
  %779 = vmatprep.mubr.f32.mxu0 0.0
  %780 = vmatmul.mubr.f32.gmra.mrb[0].mxu0 %v94
  %v781 = vpop.f32.mrb[0].mxu0
  %v782 = vadd.f32 0.0, %v781
  %v783 = vpop.f32.mrb[0].mxu0
  %784 = vmatprep.mubr.f32.mxu0 0.0
  %785 = vmatmul.mubr.f32.gmra.mrb[0].mxu0 %v95
  %v786 = vpop.f32.mrb[0].mxu0
  %v787 = vadd.f32 0.0, %v786
  %v788 = vpop.f32.mrb[0].mxu0
  %789 = vmatprep.mubr.f32.mxu0 0.0
  %790 = vmatmul.mubr.f32.gmra.mrb[0].mxu0 %v96
  %v791 = vpop.f32.mrb[0].mxu0
  %v792 = vadd.f32 0.0, %v791
  %v793 = vpop.f32.mrb[0].mxu0
  %794 = vmatprep.mubr.f32.mxu0 0.0
  %795 = vmatmul.mubr.f32.gmra.mrb[0].mxu0 %v97
  %v796 = vpop.f32.mrb[0].mxu0
  %v797 = vadd.f32 0.0, %v796
  %v798 = vpop.f32.mrb[0].mxu0
  %799 = vmatprep.mubr.f32.mxu0 0.0
  %800 = vmatmul.mubr.f32.gmra.mrb[0].mxu0 %v98
  %v801 = vpop.f32.mrb[0].mxu0
  %v802 = vadd.f32 0.0, %v801
  %v803 = vpop.f32.mrb[0].mxu0
  %804 = vmatprep.mubr.f32.mxu0 0.0
  %805 = vmatmul.mubr.f32.gmra.mrb[0].mxu0 %v99
  %v806 = vpop.f32.mrb[0].mxu0
  %v807 = vadd.f32 0.0, %v806
  %v808 = vpop.f32.mrb[0].mxu0
  %809 = vmatprep.mubr.f32.mxu0 0.0
  %810 = vmatmul.mubr.f32.gmra.mrb[0].mxu0 %v100
  %v811 = vpop.f32.mrb[0].mxu0
  %v812 = vadd.f32 0.0, %v811
  %v813 = vpop.f32.mrb[0].mxu0
  %814 = vmatprep.mubr.f32.mxu0 0.0
  %815 = vmatmul.mubr.f32.gmra.mrb[0].mxu0 %v101
  %v816 = vpop.f32.mrb[0].mxu0
  %v817 = vadd.f32 0.0, %v816
  %v818 = vpop.f32.mrb[0].mxu0
  %819 = vmatprep.mubr.f32.mxu0 0.0
  %820 = vmatmul.mubr.f32.gmra.mrb[0].mxu0 %v102
  %v821 = vpop.f32.mrb[0].mxu0
  %v822 = vadd.f32 0.0, %v821
  %v823 = vpop.f32.mrb[0].mxu0
  %824 = vmatprep.mubr.f32.mxu0 0.0
  %825 = vmatmul.mubr.f32.gmra.mrb[0].mxu0 %v103
  %v826 = vpop.f32.mrb[0].mxu0
  %v827 = vadd.f32 0.0, %v826
  %v828 = vpop.f32.mrb[0].mxu0
  %829 = vmatprep.mubr.f32.mxu0 0.0
  %830 = vmatmul.mubr.f32.gmra.mrb[0].mxu0 %v104
  %v831 = vpop.f32.mrb[0].mxu0
  %v832 = vadd.f32 0.0, %v831
  %v833 = vpop.f32.mrb[0].mxu0
  %834 = vmatprep.mubr.f32.mxu0 0.0
  %835 = vmatmul.mubr.f32.gmra.mrb[0].mxu0 %v105
  %v836 = vpop.f32.mrb[0].mxu0
  %v837 = vadd.f32 0.0, %v836
  %v838 = vpop.f32.mrb[0].mxu0
  %839 = vmatprep.mubr.f32.mxu0 0.0
  %840 = vmatmul.mubr.f32.gmra.mrb[0].mxu0 %v106
  %v841 = vpop.f32.mrb[0].mxu0
  %v842 = vadd.f32 0.0, %v841
  %v843 = vpop.f32.mrb[0].mxu0
  %844 = vmatprep.mubr.f32.mxu0 0.0
  %845 = vmatmul.mubr.f32.gmra.mrb[0].mxu0 %v107
  %v846 = vpop.f32.mrb[0].mxu0
  %v847 = vadd.f32 0.0, %v846
  %v848 = vpop.f32.mrb[0].mxu0
  %849 = vmatprep.mubr.f32.mxu0 0.0
  %850 = vmatmul.mubr.f32.gmra.mrb[0].mxu0 %v108
  %v851 = vpop.f32.mrb[0].mxu0
  %v852 = vadd.f32 0.0, %v851
  %v853 = vpop.f32.mrb[0].mxu0
  %854 = vmatprep.mubr.f32.mxu0 0.0
  %855 = vmatmul.mubr.f32.gmra.mrb[0].mxu0 %v109
  %v856 = vpop.f32.mrb[0].mxu0
  %v857 = vadd.f32 0.0, %v856
  %v858 = vpop.f32.mrb[0].mxu0
  %859 = vmatprep.mubr.f32.mxu0 0.0
  %860 = vmatmul.mubr.f32.gmra.mrb[0].mxu0 %v110
  %v861 = vpop.f32.mrb[0].mxu0
  %v862 = vadd.f32 0.0, %v861
  %v863 = vpop.f32.mrb[0].mxu0
  %864 = vmatprep.mubr.f32.mxu0 0.0
  %865 = vmatmul.mubr.f32.gmra.mrb[0].mxu0 %v111
  %v866 = vpop.f32.mrb[0].mxu0
  %v867 = vadd.f32 0.0, %v866
  %v868 = vpop.f32.mrb[0].mxu0
  %869 = vmatprep.mubr.f32.mxu0 0.0
  %870 = vmatmul.mubr.f32.gmra.mrb[0].mxu0 %v112
  %v871 = vpop.f32.mrb[0].mxu0
  %v872 = vadd.f32 0.0, %v871
  %v873 = vpop.f32.mrb[0].mxu0
  %874 = vmatprep.mubr.f32.mxu0 0.0
  %875 = vmatmul.mubr.f32.gmra.mrb[0].mxu0 %v113
  %v876 = vpop.f32.mrb[0].mxu0
  %v877 = vadd.f32 0.0, %v876
  %v878 = vpop.f32.mrb[0].mxu0
  %879 = vmatprep.mubr.f32.mxu0 0.0
  %880 = vmatmul.mubr.f32.gmra.mrb[0].mxu0 %v114
  %v881 = vpop.f32.mrb[0].mxu0
  %v882 = vadd.f32 0.0, %v881
  %v883 = vpop.f32.mrb[0].mxu0
  %884 = vmatprep.mubr.f32.mxu0 0.0
  %885 = vmatmul.mubr.f32.gmra.mrb[0].mxu0 %v115
  %v886 = vpop.f32.mrb[0].mxu0
  %v887 = vadd.f32 0.0, %v886
  %v888 = vpop.f32.mrb[0].mxu0
  %889 = vmatprep.mubr.f32.mxu0 0.0
  %890 = vmatmul.mubr.f32.gmra.mrb[0].mxu0 %v116
  %v891 = vpop.f32.mrb[0].mxu0
  %v892 = vadd.f32 0.0, %v891
  %v893 = vpop.f32.mrb[0].mxu0
  %894 = vmatprep.mubr.f32.mxu0 0.0
  %895 = vmatmul.mubr.f32.gmra.mrb[0].mxu0 %v117
  %v896 = vpop.f32.mrb[0].mxu0
  %v897 = vadd.f32 0.0, %v896
  %v898 = vpop.f32.mrb[0].mxu0
  %899 = vmatprep.mubr.f32.mxu0 0.0
  %900 = vmatmul.mubr.f32.gmra.mrb[0].mxu0 %v118
  %v901 = vpop.f32.mrb[0].mxu0
  %v902 = vadd.f32 0.0, %v901
  %v903 = vpop.f32.mrb[0].mxu0
  %904 = vmatprep.mubr.f32.mxu0 0.0
  %905 = vmatmul.mubr.f32.gmra.mrb[0].mxu0 %v119
  %v906 = vpop.f32.mrb[0].mxu0
  %v907 = vadd.f32 0.0, %v906
  %v908 = vpop.f32.mrb[0].mxu0
  %909 = vmatprep.mubr.f32.mxu0 0.0
  %910 = vmatmul.mubr.f32.gmra.mrb[0].mxu0 %v120
  %v911 = vpop.f32.mrb[0].mxu0
  %v912 = vadd.f32 0.0, %v911
  %v913 = vpop.f32.mrb[0].mxu0
  %914 = vmatprep.mubr.f32.mxu0 0.0
  %915 = vmatmul.mubr.f32.gmra.mrb[0].mxu0 %v121
  %v916 = vpop.f32.mrb[0].mxu0
  %v917 = vadd.f32 0.0, %v916
  %v918 = vpop.f32.mrb[0].mxu0
  %919 = vmatprep.mubr.f32.mxu0 0.0
  %920 = vmatmul.mubr.f32.gmra.mrb[0].mxu0 %v122
  %v921 = vpop.f32.mrb[0].mxu0
  %v922 = vadd.f32 0.0, %v921
  %v923 = vpop.f32.mrb[0].mxu0
  %924 = vmatprep.mubr.f32.mxu0 0.0
  %925 = vmatmul.mubr.f32.gmra.mrb[0].mxu0 %v123
  %v926 = vpop.f32.mrb[0].mxu0
  %v927 = vadd.f32 0.0, %v926
  %v928 = vpop.f32.mrb[0].mxu0
  %929 = vmatprep.mubr.f32.mxu0 0.0
  %930 = vmatmul.mubr.f32.gmra.mrb[0].mxu0 %v124
  %v931 = vpop.f32.mrb[0].mxu0
  %v932 = vadd.f32 0.0, %v931
  %v933 = vpop.f32.mrb[0].mxu0
  %934 = vmatprep.mubr.f32.mxu0 0.0
  %935 = vmatmul.mubr.f32.gmra.mrb[0].mxu0 %v125
  %v936 = vpop.f32.mrb[0].mxu0
  %v937 = vadd.f32 0.0, %v936
  %v938 = vpop.f32.mrb[0].mxu0
  %939 = vmatprep.mubr.f32.mxu0 0.0
  %940 = vmatmul.mubr.f32.gmra.mrb[0].mxu0 %v126
  %v941 = vpop.f32.mrb[0].mxu0
  %v942 = vadd.f32 0.0, %v941
  %v943 = vpop.f32.mrb[0].mxu0
  %944 = vmatprep.mubr.f32.mxu0 0.0
  %945 = vmatmul.mubr.f32.gmra.mrb[0].mxu0 %v127
  %v946 = vpop.f32.mrb[0].mxu0
  %v947 = vadd.f32 0.0, %v946
  %v948 = vpop.f32.mrb[0].mxu0
  %949 = vmatprep.mubr.f32.mxu0 0.0
  %950 = vmatmul.mubr.f32.gmra.mrb[0].mxu0 %v128
  %v951 = vpop.f32.mrb[0].mxu0
  %v952 = vadd.f32 0.0, %v951
  %v953 = vpop.f32.mrb[0].mxu0
  %954 = vmatprep.mubr.f32.mxu0 0.0
  %955 = vmatmul.mubr.f32.gmra.mrb[0].mxu0 %v129
  %v956 = vpop.f32.mrb[0].mxu0
  %v957 = vadd.f32 0.0, %v956
  %v958 = vpop.f32.mrb[0].mxu0
  %959 = vmatprep.mubr.f32.mxu0 0.0
  %960 = vmatmul.mubr.f32.gmra.mrb[0].mxu0 %v130
  %v961 = vpop.f32.mrb[0].mxu0
  %v962 = vadd.f32 0.0, %v961
  %v963 = vpop.f32.mrb[0].mxu0
  %964 = vmatprep.mubr.f32.mxu0 0.0
  %965 = vmatmul.mubr.f32.gmra.mrb[0].mxu0 %v131
  %v966 = vpop.f32.mrb[0].mxu0
  %v967 = vadd.f32 0.0, %v966
  %v968 = vpop.f32.mrb[0].mxu0
  %969 = vmatprep.mubr.f32.mxu0 0.0
  %970 = vmatmul.mubr.f32.gmra.mrb[0].mxu0 %v132
  %v971 = vpop.f32.mrb[0].mxu0
  %v972 = vadd.f32 0.0, %v971
  %v973 = vpop.f32.mrb[0].mxu0
  %974 = vmatprep.mubr.f32.mxu0 0.0
  %975 = vmatmul.mubr.f32.gmra.mrb[0].mxu0 %v133
  %v976 = vpop.f32.mrb[0].mxu0
  %v977 = vadd.f32 0.0, %v976
  %v978 = vpop.f32.mrb[0].mxu0
  %979 = vmatprep.mubr.f32.mxu0 0.0
  %980 = vmatmul.mubr.f32.gmra.mrb[0].mxu0 %v134
  %v981 = vpop.f32.mrb[0].mxu0
  %v982 = vadd.f32 0.0, %v981
  %v983 = vpop.f32.mrb[0].mxu0
  %984 = vmatprep.mubr.f32.mxu0 0.0
  %985 = vmatmul.mubr.f32.gmra.mrb[0].mxu0 %v135
  %v986 = vpop.f32.mrb[0].mxu0
  %v987 = vadd.f32 0.0, %v986
  %v988 = vpop.f32.mrb[0].mxu0
  %989 = vmatprep.mubr.f32.mxu0 0.0
  %990 = vmatmul.mubr.f32.gmra.mrb[0].mxu0 %v136
  %v991 = vpop.f32.mrb[0].mxu0
  %v992 = vadd.f32 0.0, %v991
  %v993 = vpop.f32.mrb[0].mxu0
  %994 = vmatprep.mubr.f32.mxu0 0.0
  %995 = vmatmul.mubr.f32.gmra.mrb[0].mxu0 %v137
  %v996 = vpop.f32.mrb[0].mxu0
  %v997 = vadd.f32 0.0, %v996
  %v998 = vpop.f32.mrb[0].mxu0
  %999 = vmatprep.mubr.f32.mxu0 0.0
  %1000 = vmatmul.mubr.f32.gmra.mrb[0].mxu0 %v138
  %v1001 = vpop.f32.mrb[0].mxu0
  %v1002 = vadd.f32 0.0, %v1001
  %v1003 = vpop.f32.mrb[0].mxu0
  %1004 = vmatprep.mubr.f32.mxu0 0.0
  %1005 = vmatmul.mubr.f32.gmra.mrb[0].mxu0 %v139
  %v1006 = vpop.f32.mrb[0].mxu0
  %v1007 = vadd.f32 0.0, %v1006
  %v1008 = vpop.f32.mrb[0].mxu0
  %1009 = vmatprep.mubr.f32.mxu0 0.0
  %1010 = vmatmul.mubr.f32.gmra.mrb[0].mxu0 %v140
  %v1011 = vpop.f32.mrb[0].mxu0
  %v1012 = vadd.f32 0.0, %v1011
  %v1013 = vpop.f32.mrb[0].mxu0
  %1014 = vmatprep.mubr.f32.mxu0 0.0
  %1015 = vmatmul.mubr.f32.gmra.mrb[0].mxu0 %v141
  %v1016 = vpop.f32.mrb[0].mxu0
  %v1017 = vadd.f32 0.0, %v1016
  %v1018 = vpop.f32.mrb[0].mxu0
  %1019 = vmatprep.mubr.f32.mxu0 0.0
  %1020 = vmatmul.mubr.f32.gmra.mrb[0].mxu0 %v142
  %v1021 = vpop.f32.mrb[0].mxu0
  %v1022 = vadd.f32 0.0, %v1021
  %v1023 = vpop.f32.mrb[0].mxu0
  %1024 = vmatprep.mubr.f32.mxu0 0.0
  %1025 = vmatmul.mubr.f32.gmra.mrb[0].mxu0 %v143
  %v1026 = vpop.f32.mrb[0].mxu0
  %v1027 = vadd.f32 0.0, %v1026
  %v1028 = vpop.f32.mrb[0].mxu0
  %1029 = vmatprep.mubr.f32.mxu0 0.0
  %1030 = vmatmul.mubr.f32.gmra.mrb[0].mxu0 %v144
  %v1031 = vpop.f32.mrb[0].mxu0
  %v1032 = vadd.f32 0.0, %v1031
  %v1033 = vpop.f32.mrb[0].mxu0
  %1034 = vmatprep.mubr.f32.mxu0 0.0
  %1035 = vmatmul.mubr.f32.gmra.mrb[0].mxu0 %v145
  %v1036 = vpop.f32.mrb[0].mxu0
  %v1037 = vadd.f32 0.0, %v1036
  %v1038 = vpop.f32.mrb[0].mxu0
  %1039 = vmatprep.mubr.f32.mxu0 0.0
  %1040 = vmatmul.mubr.f32.gmra.mrb[0].mxu0 %v146
  %v1041 = vpop.f32.mrb[0].mxu0
  %v1042 = vadd.f32 0.0, %v1041
  %v1043 = vpop.f32.mrb[0].mxu0
  %1044 = vmatprep.mubr.f32.mxu0 0.0
  %1045 = vmatmul.mubr.f32.gmra.mrb[0].mxu0 %v147
  %v1046 = vpop.f32.mrb[0].mxu0
  %v1047 = vadd.f32 0.0, %v1046
  %v1048 = vpop.f32.mrb[0].mxu0
  %1049 = vmatprep.mubr.f32.mxu0 0.0
  %1050 = vmatmul.mubr.f32.gmra.mrb[0].mxu0 %v148
  %v1051 = vpop.f32.mrb[0].mxu0
  %v1052 = vadd.f32 0.0, %v1051
  %v1053 = vpop.f32.mrb[0].mxu0
  %1054 = vmatprep.mubr.f32.mxu0 0.0
  %1055 = vmatmul.mubr.f32.gmra.mrb[0].mxu0 %v149
  %v1056 = vpop.f32.mrb[0].mxu0
  %v1057 = vadd.f32 0.0, %v1056
  %v1058 = vpop.f32.mrb[0].mxu0
  %1059 = vmatprep.mubr.f32.mxu0 0.0
  %1060 = vmatmul.mubr.f32.gmra.mrb[0].mxu0 %v150
  %v1061 = vpop.f32.mrb[0].mxu0
  %v1062 = vadd.f32 0.0, %v1061
  %v1063 = vpop.f32.mrb[0].mxu0
  %1064 = vmatprep.mubr.f32.mxu0 0.0
  %1065 = vmatmul.mubr.f32.gmra.mrb[0].mxu0 %v151
  %v1066 = vpop.f32.mrb[0].mxu0
  %v1067 = vadd.f32 0.0, %v1066
  %v1068 = vpop.f32.mrb[0].mxu0
  %1069 = vmatprep.mubr.f32.mxu0 0.0
  %1070 = vmatmul.mubr.f32.gmra.mrb[0].mxu0 %v152
  %v1071 = vpop.f32.mrb[0].mxu0
  %v1072 = vadd.f32 0.0, %v1071
  %v1073 = vpop.f32.mrb[0].mxu0
  %1074 = vmatprep.mubr.f32.mxu0 0.0
  %1075 = vmatmul.mubr.f32.gmra.mrb[0].mxu0 %v153
  %v1076 = vpop.f32.mrb[0].mxu0
  %v1077 = vadd.f32 0.0, %v1076
  %v1078 = vpop.f32.mrb[0].mxu0
  %1079 = vmatprep.mubr.f32.mxu0 0.0
  %1080 = vmatmul.mubr.f32.gmra.mrb[0].mxu0 %v154
  %v1081 = vpop.f32.mrb[0].mxu0
  %v1082 = vadd.f32 0.0, %v1081
  %v1083 = vpop.f32.mrb[0].mxu0
  %1084 = vmatprep.mubr.f32.mxu0 0.0
  %1085 = vmatmul.mubr.f32.gmra.mrb[0].mxu0 %v155
  %v1086 = vpop.f32.mrb[0].mxu0
  %v1087 = vadd.f32 0.0, %v1086
  %v1088 = vpop.f32.mrb[0].mxu0
  %1089 = vmatprep.mubr.f32.mxu0 0.0
  %1090 = vmatmul.mubr.f32.gmra.mrb[0].mxu0 %v156
  %v1091 = vpop.f32.mrb[0].mxu0
  %v1092 = vadd.f32 0.0, %v1091
  %v1093 = vpop.f32.mrb[0].mxu0
  %1094 = vmatprep.mubr.f32.mxu0 0.0
  %1095 = vmatmul.mubr.f32.gmra.mrb[0].mxu0 %v157
  %v1096 = vpop.f32.mrb[0].mxu0
  %v1097 = vadd.f32 0.0, %v1096
  %v1098 = vpop.f32.mrb[0].mxu0
  %1099 = vmatprep.mubr.f32.mxu0 0.0
  %1100 = vmatmul.mubr.f32.gmra.mrb[0].mxu0 %v158
  %v1101 = vpop.f32.mrb[0].mxu0
  %v1102 = vadd.f32 0.0, %v1101
  %v1103 = vpop.f32.mrb[0].mxu0
  %1104 = vmatprep.mubr.f32.mxu0 0.0
  %1105 = vmatmul.mubr.f32.gmra.mrb[0].mxu0 %v159
  %v1106 = vpop.f32.mrb[0].mxu0
  %v1107 = vadd.f32 0.0, %v1106
  %v1108 = vpop.f32.mrb[0].mxu0
  %1109 = vmatprep.mubr.f32.mxu0 0.0
  %1110 = vmatmul.mubr.f32.gmra.mrb[0].mxu0 %v160
  %v1111 = vpop.f32.mrb[0].mxu0
  %v1112 = vadd.f32 0.0, %v1111
  %v1113 = vpop.f32.mrb[0].mxu0
  %1114 = vmatprep.mubr.f32.mxu0 0.0
  %1115 = vmatmul.mubr.f32.gmra.mrb[0].mxu0 %v161
  %v1116 = vpop.f32.mrb[0].mxu0
  %v1117 = vadd.f32 0.0, %v1116
  %v1118 = vpop.f32.mrb[0].mxu0
  %1119 = vmatprep.mubr.f32.mxu0 0.0
  %1120 = vmatmul.mubr.f32.gmra.mrb[0].mxu0 %v162
  %v1121 = vpop.f32.mrb[0].mxu0
  %v1122 = vadd.f32 0.0, %v1121
  %v1123 = vpop.f32.mrb[0].mxu0
  %1124 = vmatprep.mubr.f32.mxu0 0.0
  %1125 = vmatmul.mubr.f32.gmra.mrb[0].mxu0 %v163
  %v1126 = vpop.f32.mrb[0].mxu0
  %v1127 = vadd.f32 0.0, %v1126
  %v1128 = vpop.f32.mrb[0].mxu0
  %1129 = vmatprep.mubr.f32.mxu0 0.0
  %1130 = vmatmul.mubr.f32.gmra.mrb[0].mxu0 %v164
  %v1131 = vpop.f32.mrb[0].mxu0
  %v1132 = vadd.f32 0.0, %v1131
  %v1133 = vpop.f32.mrb[0].mxu0
  %1134 = vmatprep.mubr.f32.mxu0 0.0
  %1135 = vmatmul.mubr.f32.gmra.mrb[0].mxu0 %v165
  %v1136 = vpop.f32.mrb[0].mxu0
  %v1137 = vadd.f32 0.0, %v1136
  %v1138 = vpop.f32.mrb[0].mxu0
  %1139 = vmatprep.mubr.f32.mxu0 0.0
  %1140 = vmatmul.mubr.f32.gmra.mrb[0].mxu0 %v166
  %v1141 = vpop.f32.mrb[0].mxu0
  %v1142 = vadd.f32 0.0, %v1141
  %v1143 = vpop.f32.mrb[0].mxu0
  %1144 = vmatprep.mubr.f32.mxu0 0.0
  %1145 = vmatmul.mubr.f32.gmra.mrb[0].mxu0 %v167
  %v1146 = vpop.f32.mrb[0].mxu0
  %v1147 = vadd.f32 0.0, %v1146
  %v1148 = vpop.f32.mrb[0].mxu0
  %1149 = vmatprep.mubr.f32.mxu0 0.0
  %1150 = vmatmul.mubr.f32.gmra.mrb[0].mxu0 %v168
  %v1151 = vpop.f32.mrb[0].mxu0
  %v1152 = vadd.f32 0.0, %v1151
  %v1153 = vpop.f32.mrb[0].mxu0
  %1154 = vmatprep.mubr.f32.mxu0 0.0
  %1155 = vmatmul.mubr.f32.gmra.mrb[0].mxu0 %v169
  %v1156 = vpop.f32.mrb[0].mxu0
  %v1157 = vadd.f32 0.0, %v1156
  %v1158 = vpop.f32.mrb[0].mxu0
  %1159 = vmatprep.mubr.f32.mxu0 0.0
  %1160 = vmatmul.mubr.f32.gmra.mrb[0].mxu0 %v170
  %v1161 = vpop.f32.mrb[0].mxu0
  %v1162 = vadd.f32 0.0, %v1161
  %v1163 = vpop.f32.mrb[0].mxu0
  %1164 = vmatprep.mubr.f32.mxu0 0.0
  %1165 = vmatmul.mubr.f32.gmra.mrb[0].mxu0 %v171
  %v1166 = vpop.f32.mrb[0].mxu0
  %v1167 = vadd.f32 0.0, %v1166
  %v1168 = vpop.f32.mrb[0].mxu0
  %1169 = vmatprep.mubr.f32.mxu0 0.0
  %1170 = vmatmul.mubr.f32.gmra.mrb[0].mxu0 %v172
  %v1171 = vpop.f32.mrb[0].mxu0
  %v1172 = vadd.f32 0.0, %v1171
  %v1173 = vpop.f32.mrb[0].mxu0
  %1174 = vmatprep.mubr.f32.mxu0 0.0
  %1175 = vmatmul.mubr.f32.gmra.mrb[0].mxu0 %v173
  %v1176 = vpop.f32.mrb[0].mxu0
  %v1177 = vadd.f32 0.0, %v1176
  %v1178 = vpop.f32.mrb[0].mxu0
  %1179 = vmatprep.mubr.f32.mxu0 0.0
  %1180 = vmatmul.mubr.f32.gmra.mrb[0].mxu0 %v174
  %v1181 = vpop.f32.mrb[0].mxu0
  %v1182 = vadd.f32 0.0, %v1181
  %v1183 = vpop.f32.mrb[0].mxu0
  %1184 = vmatprep.mubr.f32.mxu0 0.0
  %1185 = vmatmul.mubr.f32.gmra.mrb[0].mxu0 %v175
  %v1186 = vpop.f32.mrb[0].mxu0
  %v1187 = vadd.f32 0.0, %v1186
  %v1188 = vpop.f32.mrb[0].mxu0
  %1189 = vmatprep.mubr.f32.mxu0 0.0
  %1190 = vmatmul.mubr.f32.gmra.mrb[0].mxu0 %v176
  %v1191 = vpop.f32.mrb[0].mxu0
  %v1192 = vadd.f32 0.0, %v1191
  %v1193 = vpop.f32.mrb[0].mxu0
  %1194 = vmatprep.mubr.f32.mxu0 0.0
  %1195 = vmatmul.mubr.f32.gmra.mrb[0].mxu0 %v177
  %v1196 = vpop.f32.mrb[0].mxu0
  %v1197 = vadd.f32 0.0, %v1196
  %v1198 = vpop.f32.mrb[0].mxu0
  %1199 = vmatprep.mubr.f32.mxu0 0.0
  %1200 = vmatmul.mubr.f32.gmra.mrb[0].mxu0 %v178
  %v1201 = vpop.f32.mrb[0].mxu0
  %v1202 = vadd.f32 0.0, %v1201
  %v1203 = vpop.f32.mrb[0].mxu0
  %1204 = vmatprep.mubr.f32.mxu0 0.0
  %1205 = vmatmul.mubr.f32.gmra.mrb[0].mxu0 %v179
  %v1206 = vpop.f32.mrb[0].mxu0
  %v1207 = vadd.f32 0.0, %v1206
  %v1208 = vpop.f32.mrb[0].mxu0
  %1209 = vmatprep.mubr.f32.mxu0 0.0
  %1210 = vmatmul.mubr.f32.gmra.mrb[0].mxu0 %v180
  %v1211 = vpop.f32.mrb[0].mxu0
  %v1212 = vadd.f32 0.0, %v1211
  %v1213 = vpop.f32.mrb[0].mxu0
  %1214 = vmatprep.mubr.f32.mxu0 0.0
  %1215 = vmatmul.mubr.f32.gmra.mrb[0].mxu0 %v181
  %v1216 = vpop.f32.mrb[0].mxu0
  %v1217 = vadd.f32 0.0, %v1216
  %v1218 = vpop.f32.mrb[0].mxu0
  %1219 = vmatprep.mubr.f32.mxu0 0.0
  %1220 = vmatmul.mubr.f32.gmra.mrb[0].mxu0 %v182
  %v1221 = vpop.f32.mrb[0].mxu0
  %v1222 = vadd.f32 0.0, %v1221
  %v1223 = vpop.f32.mrb[0].mxu0
  %1224 = vmatprep.mubr.f32.mxu0 0.0
  %1225 = vmatmul.mubr.f32.gmra.mrb[0].mxu0 %v183
  %v1226 = vpop.f32.mrb[0].mxu0
  %v1227 = vadd.f32 0.0, %v1226
  %v1228 = vpop.f32.mrb[0].mxu0
  %1229 = vmatprep.mubr.f32.mxu0 0.0
  %1230 = vmatmul.mubr.f32.gmra.mrb[0].mxu0 %v184
  %v1231 = vpop.f32.mrb[0].mxu0
  %v1232 = vadd.f32 0.0, %v1231
  %v1233 = vpop.f32.mrb[0].mxu0
  %1234 = vmatprep.mubr.f32.mxu0 0.0
  %1235 = vmatmul.mubr.f32.gmra.mrb[0].mxu0 %v185
  %v1236 = vpop.f32.mrb[0].mxu0
  %v1237 = vadd.f32 0.0, %v1236
  %v1238 = vpop.f32.mrb[0].mxu0
  %1239 = vmatprep.mubr.f32.mxu0 0.0
  %1240 = vmatmul.mubr.f32.gmra.mrb[0].mxu0 %v186
  %v1241 = vpop.f32.mrb[0].mxu0
  %v1242 = vadd.f32 0.0, %v1241
  %v1243 = vpop.f32.mrb[0].mxu0
  %1244 = vmatprep.mubr.f32.mxu0 0.0
  %1245 = vmatmul.mubr.f32.gmra.mrb[0].mxu0 %v187
  %v1246 = vpop.f32.mrb[0].mxu0
  %v1247 = vadd.f32 0.0, %v1246
  %v1248 = vpop.f32.mrb[0].mxu0
  %1249 = vmatprep.mubr.f32.mxu0 0.0
  %1250 = vmatmul.mubr.f32.gmra.mrb[0].mxu0 %v188
  %v1251 = vpop.f32.mrb[0].mxu0
  %v1252 = vadd.f32 0.0, %v1251
  %v1253 = vpop.f32.mrb[0].mxu0
  %1254 = vmatprep.mubr.f32.mxu0 0.0
  %1255 = vmatmul.mubr.f32.gmra.mrb[0].mxu0 %v189
  %v1256 = vpop.f32.mrb[0].mxu0
  %v1257 = vadd.f32 0.0, %v1256
  %v1258 = vpop.f32.mrb[0].mxu0
  %1259 = vmatprep.mubr.f32.mxu0 0.0
  %1260 = vmatmul.mubr.f32.gmra.mrb[0].mxu0 %v190
  %v1261 = vpop.f32.mrb[0].mxu0
  %v1262 = vadd.f32 0.0, %v1261
  %v1263 = vpop.f32.mrb[0].mxu0
  %1264 = vmatprep.mubr.f32.mxu0 0.0
  %1265 = vmatmul.mubr.f32.gmra.mrb[0].mxu0 %v191
  %v1266 = vpop.f32.mrb[0].mxu0
  %v1267 = vadd.f32 0.0, %v1266
  %v1268 = vpop.f32.mrb[0].mxu0
  %1269 = vmatprep.mubr.f32.mxu0 0.0
  %1270 = vmatmul.mubr.f32.gmra.mrb[0].mxu0 %v192
  %v1271 = vpop.f32.mrb[0].mxu0
  %v1272 = vadd.f32 0.0, %v1271
  %v1273 = vpop.f32.mrb[0].mxu0
  %1274 = vmatprep.mubr.f32.mxu0 0.0
  %1275 = vmatmul.mubr.f32.gmra.mrb[0].mxu0 %v193
  %v1276 = vpop.f32.mrb[0].mxu0
  %v1277 = vadd.f32 0.0, %v1276
  %v1278 = vpop.f32.mrb[0].mxu0
  %1279 = vmatprep.mubr.f32.mxu0 0.0
  %1280 = vmatmul.mubr.f32.gmra.mrb[0].mxu0 %v194
  %v1281 = vpop.f32.mrb[0].mxu0
  %v1282 = vadd.f32 0.0, %v1281
  %v1283 = vpop.f32.mrb[0].mxu0
  %1284 = vmatprep.mubr.f32.mxu0 0.0
  %1285 = vmatmul.mubr.f32.gmra.mrb[0].mxu0 %v195
  %v1286 = vpop.f32.mrb[0].mxu0
  %v1287 = vadd.f32 0.0, %v1286
  %v1288 = vpop.f32.mrb[0].mxu0
  %1289 = vmatprep.mubr.f32.mxu0 0.0
  %1290 = vmatmul.mubr.f32.gmra.mrb[0].mxu0 %v196
  %v1291 = vpop.f32.mrb[0].mxu0
  %v1292 = vadd.f32 0.0, %v1291
  %v1293 = vpop.f32.mrb[0].mxu0
  %1294 = vmatprep.mubr.f32.mxu0 0.0
  %1295 = vmatmul.mubr.f32.gmra.mrb[0].mxu0 %v197
  %v1296 = vpop.f32.mrb[0].mxu0
  %v1297 = vadd.f32 0.0, %v1296
  %v1298 = vpop.f32.mrb[0].mxu0
  %1299 = vmatprep.mubr.f32.mxu0 0.0
  %1300 = vmatmul.mubr.f32.gmra.mrb[0].mxu0 %v198
  %v1301 = vpop.f32.mrb[0].mxu0
  %v1302 = vadd.f32 0.0, %v1301
  %v1303 = vpop.f32.mrb[0].mxu0
  %1304 = vmatprep.mubr.f32.mxu0 0.0
  %1305 = vmatmul.mubr.f32.gmra.mrb[0].mxu0 %v199
  %v1306 = vpop.f32.mrb[0].mxu0
  %v1307 = vadd.f32 0.0, %v1306
  %v1308 = vpop.f32.mrb[0].mxu0
  %1309 = vmatprep.mubr.f32.mxu0 0.0
  %1310 = vmatmul.mubr.f32.gmra.mrb[0].mxu0 %v200
  %v1311 = vpop.f32.mrb[0].mxu0
  %v1312 = vadd.f32 0.0, %v1311
  %v1313 = vpop.f32.mrb[0].mxu0
  %1314 = vmatprep.mubr.f32.mxu0 0.0
  %1315 = vmatmul.mubr.f32.gmra.mrb[0].mxu0 %v201
  %v1316 = vpop.f32.mrb[0].mxu0
  %v1317 = vadd.f32 0.0, %v1316
  %v1318 = vpop.f32.mrb[0].mxu0
  %1319 = vmatprep.mubr.f32.mxu0 0.0
  %1320 = vmatmul.mubr.f32.gmra.mrb[0].mxu0 %v202
  %v1321 = vpop.f32.mrb[0].mxu0
  %v1322 = vadd.f32 0.0, %v1321
  %v1323 = vpop.f32.mrb[0].mxu0
  %1324 = vmatprep.mubr.f32.mxu0 0.0
  %1325 = vmatmul.mubr.f32.gmra.mrb[0].mxu0 %v203
  %v1326 = vpop.f32.mrb[0].mxu0
  %v1327 = vadd.f32 0.0, %v1326
  %v1328 = vpop.f32.mrb[0].mxu0
  %1329 = vmatprep.mubr.f32.mxu0 0.0
  %1330 = vmatmul.mubr.f32.gmra.mrb[0].mxu0 %v204
  %v1331 = vpop.f32.mrb[0].mxu0
  %v1332 = vadd.f32 0.0, %v1331
  %v1333 = vpop.f32.mrb[0].mxu0
  %1334 = vmatprep.mubr.f32.mxu0 0.0
  %1335 = vmatmul.mubr.f32.gmra.mrb[0].mxu0 %v205
  %v1336 = vpop.f32.mrb[0].mxu0
  %v1337 = vadd.f32 0.0, %v1336
  %v1338 = vpop.f32.mrb[0].mxu0
  %1339 = vmatprep.mubr.f32.mxu0 0.0
  %1340 = vmatmul.mubr.f32.gmra.mrb[0].mxu0 %v206
  %v1341 = vpop.f32.mrb[0].mxu0
  %v1342 = vadd.f32 0.0, %v1341
  %v1343 = vpop.f32.mrb[0].mxu0
  %1344 = vmatprep.mubr.f32.mxu0 0.0
  %1345 = vmatmul.mubr.f32.gmra.mrb[0].mxu0 %v207
  %v1346 = vpop.f32.mrb[0].mxu0
  %v1347 = vadd.f32 0.0, %v1346
  %v1348 = vpop.f32.mrb[0].mxu0
  %1349 = vmatprep.mubr.f32.mxu0 0.0
  %1350 = vmatmul.mubr.f32.gmra.mrb[0].mxu0 %v208
  %v1351 = vpop.f32.mrb[0].mxu0
  %v1352 = vadd.f32 0.0, %v1351
  %v1353 = vpop.f32.mrb[0].mxu0
  %1354 = vmatprep.mubr.f32.mxu0 0.0
  %1355 = vmatmul.mubr.f32.gmra.mrb[0].mxu0 %v209
  %v1356 = vpop.f32.mrb[0].mxu0
  %v1357 = vadd.f32 0.0, %v1356
  %v1358 = vpop.f32.mrb[0].mxu0
  %1359 = vmatprep.mubr.f32.mxu0 0.0
  %1360 = vmatmul.mubr.f32.gmra.mrb[0].mxu0 %v210
  %v1361 = vpop.f32.mrb[0].mxu0
  %v1362 = vadd.f32 0.0, %v1361
  %v1363 = vpop.f32.mrb[0].mxu0
  %1364 = vmatprep.mubr.f32.mxu0 0.0
  %1365 = vmatmul.mubr.f32.gmra.mrb[0].mxu0 %v211
  %v1366 = vpop.f32.mrb[0].mxu0
  %v1367 = vadd.f32 0.0, %v1366
  %v1368 = vpop.f32.mrb[0].mxu0
  %1369 = vmatprep.mubr.f32.mxu0 0.0
  %1370 = vmatmul.mubr.f32.gmra.mrb[0].mxu0 %v212
  %v1371 = vpop.f32.mrb[0].mxu0
  %v1372 = vadd.f32 0.0, %v1371
  %v1373 = vpop.f32.mrb[0].mxu0
  %1374 = vmatprep.mubr.f32.mxu0 0.0
  %1375 = vmatmul.mubr.f32.gmra.mrb[0].mxu0 %v213
  %v1376 = vpop.f32.mrb[0].mxu0
  %v1377 = vadd.f32 0.0, %v1376
  %v1378 = vpop.f32.mrb[0].mxu0
  %1379 = vmatprep.mubr.f32.mxu0 0.0
  %1380 = vmatmul.mubr.f32.gmra.mrb[0].mxu0 %v214
  %v1381 = vpop.f32.mrb[0].mxu0
  %v1382 = vadd.f32 0.0, %v1381
  %v1383 = vpop.f32.mrb[0].mxu0
  %1384 = vmatprep.mubr.f32.mxu0 0.0
  %1385 = vmatmul.mubr.f32.gmra.mrb[0].mxu0 %v215
  %v1386 = vpop.f32.mrb[0].mxu0
  %v1387 = vadd.f32 0.0, %v1386
  %v1388 = vpop.f32.mrb[0].mxu0
  %1389 = vmatprep.mubr.f32.mxu0 0.0
  %1390 = vmatmul.mubr.f32.gmra.mrb[0].mxu0 %v216
  %v1391 = vpop.f32.mrb[0].mxu0
  %v1392 = vadd.f32 0.0, %v1391
  %v1393 = vpop.f32.mrb[0].mxu0
  %1394 = vmatprep.mubr.f32.mxu0 0.0
  %1395 = vmatmul.mubr.f32.gmra.mrb[0].mxu0 %v217
  %v1396 = vpop.f32.mrb[0].mxu0
  %v1397 = vadd.f32 0.0, %v1396
  %v1398 = vpop.f32.mrb[0].mxu0
  %1399 = vmatprep.mubr.f32.mxu0 0.0
  %1400 = vmatmul.mubr.f32.gmra.mrb[0].mxu0 %v218
  %v1401 = vpop.f32.mrb[0].mxu0
  %v1402 = vadd.f32 0.0, %v1401
  %v1403 = vpop.f32.mrb[0].mxu0
  %1404 = vmatprep.mubr.f32.mxu0 0.0
  %1405 = vmatmul.mubr.f32.gmra.mrb[0].mxu0 %v219
  %v1406 = vpop.f32.mrb[0].mxu0
  %v1407 = vadd.f32 0.0, %v1406
  %v1408 = vpop.f32.mrb[0].mxu0
  %1409 = vmatprep.mubr.f32.mxu0 0.0
  %1410 = vmatmul.mubr.f32.gmra.mrb[0].mxu0 %v220
  %v1411 = vpop.f32.mrb[0].mxu0
  %v1412 = vadd.f32 0.0, %v1411
  %v1413 = vpop.f32.mrb[0].mxu0
  %1414 = vmatprep.mubr.f32.mxu0 0.0
  %1415 = vmatmul.mubr.f32.gmra.mrb[0].mxu0 %v221
  %v1416 = vpop.f32.mrb[0].mxu0
  %v1417 = vadd.f32 0.0, %v1416
  %v1418 = vpop.f32.mrb[0].mxu0
  %1419 = vmatprep.mubr.f32.mxu0 0.0
  %1420 = vmatmul.mubr.f32.gmra.mrb[0].mxu0 %v222
  %v1421 = vpop.f32.mrb[0].mxu0
  %v1422 = vadd.f32 0.0, %v1421
  %v1423 = vpop.f32.mrb[0].mxu0
  %1424 = vmatprep.mubr.f32.mxu0 0.0
  %1425 = vmatmul.mubr.f32.gmra.mrb[0].mxu0 %v223
  %v1426 = vpop.f32.mrb[0].mxu0
  %v1427 = vadd.f32 0.0, %v1426
  %v1428 = vpop.f32.mrb[0].mxu0
  %1429 = vmatprep.mubr.f32.mxu0 0.0
  %1430 = vmatmul.mubr.f32.gmra.mrb[0].mxu0 %v224
  %v1431 = vpop.f32.mrb[0].mxu0
  %v1432 = vadd.f32 0.0, %v1431
  %v1433 = vpop.f32.mrb[0].mxu0
  %1434 = vmatprep.mubr.f32.mxu0 0.0
  %1435 = vmatmul.mubr.f32.gmra.mrb[0].mxu0 %v225
  %v1436 = vpop.f32.mrb[0].mxu0
  %v1437 = vadd.f32 0.0, %v1436
  %v1438 = vpop.f32.mrb[0].mxu0
  %1439 = vmatprep.mubr.f32.mxu0 0.0
  %1440 = vmatmul.mubr.f32.gmra.mrb[0].mxu0 %v226
  %v1441 = vpop.f32.mrb[0].mxu0
  %v1442 = vadd.f32 0.0, %v1441
  %v1443 = vpop.f32.mrb[0].mxu0
  %1444 = vmatprep.mubr.f32.mxu0 0.0
  %1445 = vmatmul.mubr.f32.gmra.mrb[0].mxu0 %v227
  %v1446 = vpop.f32.mrb[0].mxu0
  %v1447 = vadd.f32 0.0, %v1446
  %v1448 = vpop.f32.mrb[0].mxu0
  %1449 = vmatprep.mubr.f32.mxu0 0.0
  %1450 = vmatmul.mubr.f32.gmra.mrb[0].mxu0 %v228
  %v1451 = vpop.f32.mrb[0].mxu0
  %v1452 = vadd.f32 0.0, %v1451
  %v1453 = vpop.f32.mrb[0].mxu0
  %1454 = vmatprep.mubr.f32.mxu0 0.0
  %1455 = vmatmul.mubr.f32.gmra.mrb[0].mxu0 %v229
  %v1456 = vpop.f32.mrb[0].mxu0
  %v1457 = vadd.f32 0.0, %v1456
  %v1458 = vpop.f32.mrb[0].mxu0
  %1459 = vmatprep.mubr.f32.mxu0 0.0
  %1460 = vmatmul.mubr.f32.gmra.mrb[0].mxu0 %v230
  %v1461 = vpop.f32.mrb[0].mxu0
  %v1462 = vadd.f32 0.0, %v1461
  %v1463 = vpop.f32.mrb[0].mxu0
  %1464 = vmatprep.mubr.f32.mxu0 0.0
  %1465 = vmatmul.mubr.f32.gmra.mrb[0].mxu0 %v231
  %v1466 = vpop.f32.mrb[0].mxu0
  %v1467 = vadd.f32 0.0, %v1466
  %v1468 = vpop.f32.mrb[0].mxu0
  %1469 = vmatprep.mubr.f32.mxu0 0.0
  %1470 = vmatmul.mubr.f32.gmra.mrb[0].mxu0 %v232
  %v1471 = vpop.f32.mrb[0].mxu0
  %v1472 = vadd.f32 0.0, %v1471
  %v1473 = vpop.f32.mrb[0].mxu0
  %1474 = vmatprep.mubr.f32.mxu0 0.0
  %1475 = vmatmul.mubr.f32.gmra.mrb[0].mxu0 %v233
  %v1476 = vpop.f32.mrb[0].mxu0
  %v1477 = vadd.f32 0.0, %v1476
  %v1478 = vpop.f32.mrb[0].mxu0
  %1479 = vmatprep.mubr.f32.mxu0 0.0
  %1480 = vmatmul.mubr.f32.gmra.mrb[0].mxu0 %v234
  %v1481 = vpop.f32.mrb[0].mxu0
  %v1482 = vadd.f32 0.0, %v1481
  %v1483 = vpop.f32.mrb[0].mxu0
  %1484 = vmatprep.mubr.f32.mxu0 0.0
  %1485 = vmatmul.mubr.f32.gmra.mrb[0].mxu0 %v235
  %v1486 = vpop.f32.mrb[0].mxu0
  %v1487 = vadd.f32 0.0, %v1486
  %v1488 = vpop.f32.mrb[0].mxu0
  %1489 = vmatprep.mubr.f32.mxu0 0.0
  %1490 = vmatmul.mubr.f32.gmra.mrb[0].mxu0 %v236
  %v1491 = vpop.f32.mrb[0].mxu0
  %v1492 = vadd.f32 0.0, %v1491
  %v1493 = vpop.f32.mrb[0].mxu0
  %1494 = vmatprep.mubr.f32.mxu0 0.0
  %1495 = vmatmul.mubr.f32.gmra.mrb[0].mxu0 %v237
  %v1496 = vpop.f32.mrb[0].mxu0
  %v1497 = vadd.f32 0.0, %v1496
  %v1498 = vpop.f32.mrb[0].mxu0
  %1499 = vmatprep.mubr.f32.mxu0 0.0
  %1500 = vmatmul.mubr.f32.gmra.mrb[0].mxu0 %v238
  %v1501 = vpop.f32.mrb[0].mxu0
  %v1502 = vadd.f32 0.0, %v1501
  %v1503 = vpop.f32.mrb[0].mxu0
  %1504 = vmatprep.mubr.f32.mxu0 0.0
  %1505 = vmatmul.mubr.f32.gmra.mrb[0].mxu0 %v239
  %v1506 = vpop.f32.mrb[0].mxu0
  %v1507 = vadd.f32 0.0, %v1506
  %v1508 = vpop.f32.mrb[0].mxu0
  %1509 = vmatprep.mubr.f32.mxu0 0.0
  %1510 = vmatmul.mubr.f32.gmra.mrb[0].mxu0 %v240
  %v1511 = vpop.f32.mrb[0].mxu0
  %v1512 = vadd.f32 0.0, %v1511
  %v1513 = vpop.f32.mrb[0].mxu0
  %1514 = vmatprep.mubr.f32.mxu0 0.0
  %1515 = vmatmul.mubr.f32.gmra.mrb[0].mxu0 %v241
  %v1516 = vpop.f32.mrb[0].mxu0
  %v1517 = vadd.f32 0.0, %v1516
  %v1518 = vpop.f32.mrb[0].mxu0
  %1519 = vmatprep.mubr.f32.mxu0 0.0
  %1520 = vmatmul.mubr.f32.gmra.mrb[0].mxu0 %v242
  %v1521 = vpop.f32.mrb[0].mxu0
  %v1522 = vadd.f32 0.0, %v1521
  %v1523 = vpop.f32.mrb[0].mxu0
  %1524 = vmatprep.mubr.f32.mxu0 0.0
  %1525 = vmatmul.mubr.f32.gmra.mrb[0].mxu0 %v243
  %v1526 = vpop.f32.mrb[0].mxu0
  %v1527 = vadd.f32 0.0, %v1526
  %v1528 = vpop.f32.mrb[0].mxu0
  %1529 = vmatprep.mubr.f32.mxu0 0.0
  %1530 = vmatmul.mubr.f32.gmra.mrb[0].mxu0 %v244
  %v1531 = vpop.f32.mrb[0].mxu0
  %v1532 = vadd.f32 0.0, %v1531
  %v1533 = vpop.f32.mrb[0].mxu0
  %1534 = vmatprep.mubr.f32.mxu0 0.0
  %1535 = vmatmul.mubr.f32.gmra.mrb[0].mxu0 %v245
  %v1536 = vpop.f32.mrb[0].mxu0
  %v1537 = vadd.f32 0.0, %v1536
  %v1538 = vpop.f32.mrb[0].mxu0
  %1539 = vmatprep.mubr.f32.mxu0 0.0
  %1540 = vmatmul.mubr.f32.gmra.mrb[0].mxu0 %v246
  %v1541 = vpop.f32.mrb[0].mxu0
  %v1542 = vadd.f32 0.0, %v1541
  %v1543 = vpop.f32.mrb[0].mxu0
  %1544 = vmatprep.mubr.f32.mxu0 0.0
  %1545 = vmatmul.mubr.f32.gmra.mrb[0].mxu0 %v247
  %v1546 = vpop.f32.mrb[0].mxu0
  %v1547 = vadd.f32 0.0, %v1546
  %v1548 = vpop.f32.mrb[0].mxu0
  %1549 = vmatprep.mubr.f32.mxu0 0.0
  %1550 = vmatmul.mubr.f32.gmra.mrb[0].mxu0 %v248
  %v1551 = vpop.f32.mrb[0].mxu0
  %v1552 = vadd.f32 0.0, %v1551
  %v1553 = vpop.f32.mrb[0].mxu0
  %1554 = vmatprep.mubr.f32.mxu0 0.0
  %1555 = vmatmul.mubr.f32.gmra.mrb[0].mxu0 %v249
  %v1556 = vpop.f32.mrb[0].mxu0
  %v1557 = vadd.f32 0.0, %v1556
  %v1558 = vpop.f32.mrb[0].mxu0
  %1559 = vmatprep.mubr.f32.mxu0 0.0
  %1560 = vmatmul.mubr.f32.gmra.mrb[0].mxu0 %v250
  %v1561 = vpop.f32.mrb[0].mxu0
  %v1562 = vadd.f32 0.0, %v1561
  %v1563 = vpop.f32.mrb[0].mxu0
  %1564 = vmatprep.mubr.f32.mxu0 0.0
  %1565 = vmatmul.mubr.f32.gmra.mrb[0].mxu0 %v251
  %v1566 = vpop.f32.mrb[0].mxu0
  %v1567 = vadd.f32 0.0, %v1566
  %v1568 = vpop.f32.mrb[0].mxu0
  %1569 = vmatprep.mubr.f32.mxu0 0.0
  %1570 = vmatmul.mubr.f32.gmra.mrb[0].mxu0 %v252
  %v1571 = vpop.f32.mrb[0].mxu0
  %v1572 = vadd.f32 0.0, %v1571
  %v1573 = vpop.f32.mrb[0].mxu0
  %1574 = vmatprep.mubr.f32.mxu0 0.0
  %1575 = vmatmul.mubr.f32.gmra.mrb[0].mxu0 %v253
  %v1576 = vpop.f32.mrb[0].mxu0
  %v1577 = vadd.f32 0.0, %v1576
  %v1578 = vpop.f32.mrb[0].mxu0
  %1579 = vmatprep.mubr.f32.mxu0 0.0
  %1580 = vmatmul.mubr.f32.gmra.mrb[0].mxu0 %v254
  %v1581 = vpop.f32.mrb[0].mxu0
  %v1582 = vadd.f32 0.0, %v1581
  %v1583 = vpop.f32.mrb[0].mxu0
  %1584 = vmatprep.mubr.f32.mxu0 0.0
  %1585 = vmatmul.mubr.f32.gmra.mrb[0].mxu0 %v255
  %v1586 = vpop.f32.mrb[0].mxu0
  %v1587 = vadd.f32 0.0, %v1586
  %v1588 = vpop.f32.mrb[0].mxu0
  %1589 = vmatprep.mubr.f32.mxu0 0.0
  %1590 = vmatmul.mubr.f32.gmra.mrb[0].mxu0 %v256
  %v1591 = vpop.f32.mrb[0].mxu0
  %v1592 = vadd.f32 0.0, %v1591
  %v1593 = vpop.f32.mrb[0].mxu0
  %1594 = vmatprep.mubr.f32.mxu0 0.0
  %1595 = vmatmul.mubr.f32.gmra.mrb[0].mxu0 %v257
  %v1596 = vpop.f32.mrb[0].mxu0
  %v1597 = vadd.f32 0.0, %v1596
  %v1598 = vpop.f32.mrb[0].mxu0
  %1599 = vmatprep.mubr.f32.mxu0 0.0
  %1600 = vmatmul.mubr.f32.gmra.mrb[0].mxu0 %v258
  %v1601 = vpop.f32.mrb[0].mxu0
  %v1602 = vadd.f32 0.0, %v1601
  %v1603 = vpop.f32.mrb[0].mxu0
  %1604 = vmatprep.mubr.f32.mxu0 0.0
  %1605 = vmatmul.mubr.f32.gmra.mrb[0].mxu0 %v259
  %v1606 = vpop.f32.mrb[0].mxu0
  %v1607 = vadd.f32 0.0, %v1606
  %v1608 = vpop.f32.mrb[0].mxu0
  %1609 = vmatprep.mubr.f32.mxu0 0.0
  %1610 = vmatmul.mubr.f32.gmra.mrb[0].mxu0 %v260
  %v1611 = vpop.f32.mrb[0].mxu0
  %v1612 = vadd.f32 0.0, %v1611
  %v1613 = vpop.f32.mrb[0].mxu0
  %1614 = vmatprep.mubr.f32.mxu0 0.0
  %1615 = vmatmul.mubr.f32.gmra.mrb[0].mxu0 %v261
  %v1616 = vpop.f32.mrb[0].mxu0
  %v1617 = vadd.f32 0.0, %v1616
  %v1618 = vpop.f32.mrb[0].mxu0
  %1619 = vmatprep.mubr.f32.mxu0 0.0
  %1620 = vmatmul.mubr.f32.gmra.mrb[0].mxu0 %v262
  %v1621 = vpop.f32.mrb[0].mxu0
  %v1622 = vadd.f32 0.0, %v1621
  %v1623 = vpop.f32.mrb[0].mxu0
  %1624 = vmatprep.mubr.f32.mxu0 0.0
  %1625 = vmatmul.mubr.f32.gmra.mrb[0].mxu0 %v263
  %v1626 = vpop.f32.mrb[0].mxu0
  %v1627 = vadd.f32 0.0, %v1626
  %v1628 = vpop.f32.mrb[0].mxu0
  %1629 = vmatprep.mubr.f32.mxu0 0.0
  %1630 = vmatmul.mubr.f32.gmra.mrb[0].mxu0 %v264
  %v1631 = vpop.f32.mrb[0].mxu0
  %v1632 = vadd.f32 0.0, %v1631
  %v1633 = vpop.f32.mrb[0].mxu0
  %1634 = vmatprep.mubr.f32.mxu0 0.0
  %1635 = vmatmul.mubr.f32.gmra.mrb[0].mxu0 %v265
  %v1636 = vpop.f32.mrb[0].mxu0
  %v1637 = vadd.f32 0.0, %v1636
  %v1638 = vpop.f32.mrb[0].mxu0
  %1639 = vmatprep.mubr.f32.mxu0 0.0
  %1640 = vmatmul.mubr.f32.gmra.mrb[0].mxu0 %v266
  %v1641 = vpop.f32.mrb[0].mxu0
  %v1642 = vadd.f32 0.0, %v1641
  %v1643 = vpop.f32.mrb[0].mxu0
  %1644 = vmatprep.mubr.f32.mxu0 0.0
  %1645 = vmatmul.mubr.f32.gmra.mrb[0].mxu0 %v267
  %v1646 = vpop.f32.mrb[0].mxu0
  %v1647 = vadd.f32 0.0, %v1646
  %v1648 = vpop.f32.mrb[0].mxu0
  %1649 = vmatprep.mubr.f32.mxu0 0.0
  %1650 = vmatmul.mubr.f32.gmra.mrb[0].mxu0 %v268
  %v1651 = vpop.f32.mrb[0].mxu0
  %v1652 = vadd.f32 0.0, %v1651
  %v1653 = vpop.f32.mrb[0].mxu0
  %1654 = vmatprep.mubr.f32.mxu0 0.0
  %1655 = vmatmul.mubr.f32.gmra.mrb[0].mxu0 %v269
  %v1656 = vpop.f32.mrb[0].mxu0
  %v1657 = vadd.f32 0.0, %v1656
  %v1658 = vpop.f32.mrb[0].mxu0
  %1659 = vmatprep.mubr.f32.mxu0 0.0
  %1660 = vmatmul.mubr.f32.gmra.mrb[0].mxu0 %v270
  %v1661 = vpop.f32.mrb[0].mxu0
  %v1662 = vadd.f32 0.0, %v1661
  %v1663 = vpop.f32.mrb[0].mxu0
  %1664 = vmatprep.mubr.f32.mxu0 0.0
  %1665 = vmatmul.mubr.f32.gmra.mrb[0].mxu0 %v271
  %v1666 = vpop.f32.mrb[0].mxu0
  %v1667 = vadd.f32 0.0, %v1666
  %v1668 = vpop.f32.mrb[0].mxu0
  %1669 = vmatprep.mubr.f32.mxu0 0.0
  %1670 = vmatmul.mubr.f32.gmra.mrb[0].mxu0 %v272
  %v1671 = vpop.f32.mrb[0].mxu0
  %v1672 = vadd.f32 0.0, %v1671
  %v1673 = vpop.f32.mrb[0].mxu0
  %1674 = vmatprep.mubr.f32.mxu0 0.0
  %1675 = vmatmul.mubr.f32.gmra.mrb[0].mxu0 %v273
  %v1676 = vpop.f32.mrb[0].mxu0
  %v1677 = vadd.f32 0.0, %v1676
  %v1678 = vpop.f32.mrb[0].mxu0
  %1679 = vmatprep.mubr.f32.mxu0 0.0
  %1680 = vmatmul.mubr.f32.gmra.mrb[0].mxu0 %v274
  %v1681 = vpop.f32.mrb[0].mxu0
  %v1682 = vadd.f32 0.0, %v1681
  %v1683 = vpop.f32.mrb[0].mxu0
  %1684 = vmatprep.mubr.f32.mxu0 0.0
  %1685 = vmatmul.mubr.f32.gmra.mrb[0].mxu0 %v275
  %v1686 = vpop.f32.mrb[0].mxu0
  %v1687 = vadd.f32 0.0, %v1686
  %v1688 = vpop.f32.mrb[0].mxu0
  %1689 = vmatprep.mubr.f32.mxu0 0.0
  %1690 = vmatmul.mubr.f32.gmra.mrb[0].mxu0 %v276
  %v1691 = vpop.f32.mrb[0].mxu0
  %v1692 = vadd.f32 0.0, %v1691
  %v1693 = vpop.f32.mrb[0].mxu0
  %1694 = vmatprep.mubr.f32.mxu0 0.0
  %1695 = vmatmul.mubr.f32.gmra.mrb[0].mxu0 %v277
  %v1696 = vpop.f32.mrb[0].mxu0
  %v1697 = vadd.f32 0.0, %v1696
  %v1698 = vpop.f32.mrb[0].mxu0
  %1699 = vmatprep.mubr.f32.mxu0 0.0
  %1700 = vmatmul.mubr.f32.gmra.mrb[0].mxu0 %v278
  %v1701 = vpop.f32.mrb[0].mxu0
  %v1702 = vadd.f32 0.0, %v1701
  %v1703 = vpop.f32.mrb[0].mxu0
  %1704 = vmatprep.mubr.f32.mxu0 0.0
  %1705 = vmatmul.mubr.f32.gmra.mrb[0].mxu0 %v279
  %v1706 = vpop.f32.mrb[0].mxu0
  %v1707 = vadd.f32 0.0, %v1706
  %v1708 = vpop.f32.mrb[0].mxu0
  %1709 = vmatprep.mubr.f32.mxu0 0.0
  %1710 = vmatmul.mubr.f32.gmra.mrb[0].mxu0 %v280
  %v1711 = vpop.f32.mrb[0].mxu0
  %v1712 = vadd.f32 0.0, %v1711
  %v1713 = vpop.f32.mrb[0].mxu0
  %1714 = vmatprep.mubr.f32.mxu0 0.0
  %1715 = vmatmul.mubr.f32.gmra.mrb[0].mxu0 %v281
  %v1716 = vpop.f32.mrb[0].mxu0
  %v1717 = vadd.f32 0.0, %v1716
  %v1718 = vpop.f32.mrb[0].mxu0
  %1719 = vmatprep.mubr.f32.mxu0 0.0
  %1720 = vmatmul.mubr.f32.gmra.mrb[0].mxu0 %v282
  %v1721 = vpop.f32.mrb[0].mxu0
  %v1722 = vadd.f32 0.0, %v1721
  %v1723 = vpop.f32.mrb[0].mxu0
  %1724 = vmatprep.mubr.f32.mxu0 0.0
  %1725 = vmatmul.mubr.f32.gmra.mrb[0].mxu0 %v283
  %v1726 = vpop.f32.mrb[0].mxu0
  %v1727 = vadd.f32 0.0, %v1726
  %v1728 = vpop.f32.mrb[0].mxu0
  %1729 = vdwg.mxu0
  %v1730 = vmax.f32 %v367, 0.0
  %v1731 = vmax.f32 %v372, 0.0
  %v1732 = vmax.f32 %v377, 0.0
  %v1733 = vmax.f32 %v382, 0.0
  %v1734 = vmax.f32 %v387, 0.0
  %v1735 = vmax.f32 %v392, 0.0
  %v1736 = vmax.f32 %v397, 0.0
  %v1737 = vmax.f32 %v402, 0.0
  %v1738 = vmax.f32 %v407, 0.0
  %v1739 = vmax.f32 %v412, 0.0
  %v1740 = vmax.f32 %v417, 0.0
  %v1741 = vmax.f32 %v422, 0.0
  %v1742 = vmax.f32 %v427, 0.0
  %v1743 = vmax.f32 %v432, 0.0
  %v1744 = vmax.f32 %v437, 0.0
  %v1745 = vmax.f32 %v442, 0.0
  %v1746 = vmax.f32 %v447, 0.0
  %v1747 = vmax.f32 %v452, 0.0
  %v1748 = vmax.f32 %v457, 0.0
  %v1749 = vmax.f32 %v462, 0.0
  %v1750 = vmax.f32 %v467, 0.0
  %v1751 = vmax.f32 %v472, 0.0
  %v1752 = vmax.f32 %v477, 0.0
  %v1753 = vmax.f32 %v482, 0.0
  %v1754 = vmax.f32 %v487, 0.0
  %v1755 = vmax.f32 %v492, 0.0
  %v1756 = vmax.f32 %v497, 0.0
  %v1757 = vmax.f32 %v502, 0.0
  %v1758 = vmax.f32 %v507, 0.0
  %v1759 = vmax.f32 %v512, 0.0
  %v1760 = vmax.f32 %v517, 0.0
  %v1761 = vmax.f32 %v522, 0.0
  %v1762 = vmax.f32 %v527, 0.0
  %v1763 = vmax.f32 %v532, 0.0
  %v1764 = vmax.f32 %v537, 0.0
  %v1765 = vmax.f32 %v542, 0.0
  %v1766 = vmax.f32 %v547, 0.0
  %v1767 = vmax.f32 %v552, 0.0
  %v1768 = vmax.f32 %v557, 0.0
  %v1769 = vmax.f32 %v562, 0.0
  %v1770 = vmax.f32 %v567, 0.0
  %v1771 = vmax.f32 %v572, 0.0
  %v1772 = vmax.f32 %v577, 0.0
  %v1773 = vmax.f32 %v582, 0.0
  %v1774 = vmax.f32 %v587, 0.0
  %v1775 = vmax.f32 %v592, 0.0
  %v1776 = vmax.f32 %v597, 0.0
  %v1777 = vmax.f32 %v602, 0.0
  %v1778 = vmax.f32 %v607, 0.0
  %v1779 = vmax.f32 %v612, 0.0
  %v1780 = vmax.f32 %v617, 0.0
  %v1781 = vmax.f32 %v622, 0.0
  %v1782 = vmax.f32 %v627, 0.0
  %v1783 = vmax.f32 %v632, 0.0
  %v1784 = vmax.f32 %v637, 0.0
  %v1785 = vmax.f32 %v642, 0.0
  %v1786 = vmax.f32 %v647, 0.0
  %v1787 = vmax.f32 %v652, 0.0
  %v1788 = vmax.f32 %v657, 0.0
  %v1789 = vmax.f32 %v662, 0.0
  %v1790 = vmax.f32 %v667, 0.0
  %v1791 = vmax.f32 %v672, 0.0
  %v1792 = vmax.f32 %v677, 0.0
  %v1793 = vmax.f32 %v682, 0.0
  %v1794 = vmax.f32 %v687, 0.0
  %v1795 = vmax.f32 %v692, 0.0
  %v1796 = vmax.f32 %v697, 0.0
  %v1797 = vmax.f32 %v702, 0.0
  %v1798 = vmax.f32 %v707, 0.0
  %v1799 = vmax.f32 %v712, 0.0
  %v1800 = vmax.f32 %v717, 0.0
  %v1801 = vmax.f32 %v722, 0.0
  %v1802 = vmax.f32 %v727, 0.0
  %v1803 = vmax.f32 %v732, 0.0
  %v1804 = vmax.f32 %v737, 0.0
  %v1805 = vmax.f32 %v742, 0.0
  %v1806 = vmax.f32 %v747, 0.0
  %v1807 = vmax.f32 %v752, 0.0
  %v1808 = vmax.f32 %v757, 0.0
  %v1809 = vmax.f32 %v762, 0.0
  %v1810 = vmax.f32 %v767, 0.0
  %v1811 = vmax.f32 %v772, 0.0
  %v1812 = vmax.f32 %v777, 0.0
  %v1813 = vmax.f32 %v782, 0.0
  %v1814 = vmax.f32 %v787, 0.0
  %v1815 = vmax.f32 %v792, 0.0
  %v1816 = vmax.f32 %v797, 0.0
  %v1817 = vmax.f32 %v802, 0.0
  %v1818 = vmax.f32 %v807, 0.0
  %v1819 = vmax.f32 %v812, 0.0
  %v1820 = vmax.f32 %v817, 0.0
  %v1821 = vmax.f32 %v822, 0.0
  %v1822 = vmax.f32 %v827, 0.0
  %v1823 = vmax.f32 %v832, 0.0
  %v1824 = vmax.f32 %v837, 0.0
  %v1825 = vmax.f32 %v842, 0.0
  %v1826 = vmax.f32 %v847, 0.0
  %v1827 = vmax.f32 %v852, 0.0
  %v1828 = vmax.f32 %v857, 0.0
  %v1829 = vmax.f32 %v862, 0.0
  %v1830 = vmax.f32 %v867, 0.0
  %v1831 = vmax.f32 %v872, 0.0
  %v1832 = vmax.f32 %v877, 0.0
  %v1833 = vmax.f32 %v882, 0.0
  %v1834 = vmax.f32 %v887, 0.0
  %v1835 = vmax.f32 %v892, 0.0
  %v1836 = vmax.f32 %v897, 0.0
  %v1837 = vmax.f32 %v902, 0.0
  %v1838 = vmax.f32 %v907, 0.0
  %v1839 = vmax.f32 %v912, 0.0
  %v1840 = vmax.f32 %v917, 0.0
  %v1841 = vmax.f32 %v922, 0.0
  %v1842 = vmax.f32 %v927, 0.0
  %v1843 = vmax.f32 %v932, 0.0
  %v1844 = vmax.f32 %v937, 0.0
  %v1845 = vmax.f32 %v942, 0.0
  %v1846 = vmax.f32 %v947, 0.0
  %v1847 = vmax.f32 %v952, 0.0
  %v1848 = vmax.f32 %v957, 0.0
  %v1849 = vmax.f32 %v962, 0.0
  %v1850 = vmax.f32 %v967, 0.0
  %v1851 = vmax.f32 %v972, 0.0
  %v1852 = vmax.f32 %v977, 0.0
  %v1853 = vmax.f32 %v982, 0.0
  %v1854 = vmax.f32 %v987, 0.0
  %v1855 = vmax.f32 %v992, 0.0
  %v1856 = vmax.f32 %v997, 0.0
  %v1857 = vmax.f32 %v1002, 0.0
  %v1858 = vmax.f32 %v1007, 0.0
  %v1859 = vmax.f32 %v1012, 0.0
  %v1860 = vmax.f32 %v1017, 0.0
  %v1861 = vmax.f32 %v1022, 0.0
  %v1862 = vmax.f32 %v1027, 0.0
  %v1863 = vmax.f32 %v1032, 0.0
  %v1864 = vmax.f32 %v1037, 0.0
  %v1865 = vmax.f32 %v1042, 0.0
  %v1866 = vmax.f32 %v1047, 0.0
  %v1867 = vmax.f32 %v1052, 0.0
  %v1868 = vmax.f32 %v1057, 0.0
  %v1869 = vmax.f32 %v1062, 0.0
  %v1870 = vmax.f32 %v1067, 0.0
  %v1871 = vmax.f32 %v1072, 0.0
  %v1872 = vmax.f32 %v1077, 0.0
  %v1873 = vmax.f32 %v1082, 0.0
  %v1874 = vmax.f32 %v1087, 0.0
  %v1875 = vmax.f32 %v1092, 0.0
  %v1876 = vmax.f32 %v1097, 0.0
  %v1877 = vmax.f32 %v1102, 0.0
  %v1878 = vmax.f32 %v1107, 0.0
  %v1879 = vmax.f32 %v1112, 0.0
  %v1880 = vmax.f32 %v1117, 0.0
  %v1881 = vmax.f32 %v1122, 0.0
  %v1882 = vmax.f32 %v1127, 0.0
  %v1883 = vmax.f32 %v1132, 0.0
  %v1884 = vmax.f32 %v1137, 0.0
  %v1885 = vmax.f32 %v1142, 0.0
  %v1886 = vmax.f32 %v1147, 0.0
  %v1887 = vmax.f32 %v1152, 0.0
  %v1888 = vmax.f32 %v1157, 0.0
  %v1889 = vmax.f32 %v1162, 0.0
  %v1890 = vmax.f32 %v1167, 0.0
  %v1891 = vmax.f32 %v1172, 0.0
  %v1892 = vmax.f32 %v1177, 0.0
  %v1893 = vmax.f32 %v1182, 0.0
  %v1894 = vmax.f32 %v1187, 0.0
  %v1895 = vmax.f32 %v1192, 0.0
  %v1896 = vmax.f32 %v1197, 0.0
  %v1897 = vmax.f32 %v1202, 0.0
  %v1898 = vmax.f32 %v1207, 0.0
  %v1899 = vmax.f32 %v1212, 0.0
  %v1900 = vmax.f32 %v1217, 0.0
  %v1901 = vmax.f32 %v1222, 0.0
  %v1902 = vmax.f32 %v1227, 0.0
  %v1903 = vmax.f32 %v1232, 0.0
  %v1904 = vmax.f32 %v1237, 0.0
  %v1905 = vmax.f32 %v1242, 0.0
  %v1906 = vmax.f32 %v1247, 0.0
  %v1907 = vmax.f32 %v1252, 0.0
  %v1908 = vmax.f32 %v1257, 0.0
  %v1909 = vmax.f32 %v1262, 0.0
  %v1910 = vmax.f32 %v1267, 0.0
  %v1911 = vmax.f32 %v1272, 0.0
  %v1912 = vmax.f32 %v1277, 0.0
  %v1913 = vmax.f32 %v1282, 0.0
  %v1914 = vmax.f32 %v1287, 0.0
  %v1915 = vmax.f32 %v1292, 0.0
  %v1916 = vmax.f32 %v1297, 0.0
  %v1917 = vmax.f32 %v1302, 0.0
  %v1918 = vmax.f32 %v1307, 0.0
  %v1919 = vmax.f32 %v1312, 0.0
  %v1920 = vmax.f32 %v1317, 0.0
  %v1921 = vmax.f32 %v1322, 0.0
  %v1922 = vmax.f32 %v1327, 0.0
  %v1923 = vmax.f32 %v1332, 0.0
  %v1924 = vmax.f32 %v1337, 0.0
  %v1925 = vmax.f32 %v1342, 0.0
  %v1926 = vmax.f32 %v1347, 0.0
  %v1927 = vmax.f32 %v1352, 0.0
  %v1928 = vmax.f32 %v1357, 0.0
  %v1929 = vmax.f32 %v1362, 0.0
  %v1930 = vmax.f32 %v1367, 0.0
  %v1931 = vmax.f32 %v1372, 0.0
  %v1932 = vmax.f32 %v1377, 0.0
  %v1933 = vmax.f32 %v1382, 0.0
  %v1934 = vmax.f32 %v1387, 0.0
  %v1935 = vmax.f32 %v1392, 0.0
  %v1936 = vmax.f32 %v1397, 0.0
  %v1937 = vmax.f32 %v1402, 0.0
  %v1938 = vmax.f32 %v1407, 0.0
  %v1939 = vmax.f32 %v1412, 0.0
  %v1940 = vmax.f32 %v1417, 0.0
  %v1941 = vmax.f32 %v1422, 0.0
  %v1942 = vmax.f32 %v1427, 0.0
  %v1943 = vmax.f32 %v1432, 0.0
  %v1944 = vmax.f32 %v1437, 0.0
  %v1945 = vmax.f32 %v1442, 0.0
  %v1946 = vmax.f32 %v1447, 0.0
  %v1947 = vmax.f32 %v1452, 0.0
  %v1948 = vmax.f32 %v1457, 0.0
  %v1949 = vmax.f32 %v1462, 0.0
  %v1950 = vmax.f32 %v1467, 0.0
  %v1951 = vmax.f32 %v1472, 0.0
  %v1952 = vmax.f32 %v1477, 0.0
  %v1953 = vmax.f32 %v1482, 0.0
  %v1954 = vmax.f32 %v1487, 0.0
  %v1955 = vmax.f32 %v1492, 0.0
  %v1956 = vmax.f32 %v1497, 0.0
  %v1957 = vmax.f32 %v1502, 0.0
  %v1958 = vmax.f32 %v1507, 0.0
  %v1959 = vmax.f32 %v1512, 0.0
  %v1960 = vmax.f32 %v1517, 0.0
  %v1961 = vmax.f32 %v1522, 0.0
  %v1962 = vmax.f32 %v1527, 0.0
  %v1963 = vmax.f32 %v1532, 0.0
  %v1964 = vmax.f32 %v1537, 0.0
  %v1965 = vmax.f32 %v1542, 0.0
  %v1966 = vmax.f32 %v1547, 0.0
  %v1967 = vmax.f32 %v1552, 0.0
  %v1968 = vmax.f32 %v1557, 0.0
  %v1969 = vmax.f32 %v1562, 0.0
  %v1970 = vmax.f32 %v1567, 0.0
  %v1971 = vmax.f32 %v1572, 0.0
  %v1972 = vmax.f32 %v1577, 0.0
  %v1973 = vmax.f32 %v1582, 0.0
  %v1974 = vmax.f32 %v1587, 0.0
  %v1975 = vmax.f32 %v1592, 0.0
  %v1976 = vmax.f32 %v1597, 0.0
  %v1977 = vmax.f32 %v1602, 0.0
  %v1978 = vmax.f32 %v1607, 0.0
  %v1979 = vmax.f32 %v1612, 0.0
  %v1980 = vmax.f32 %v1617, 0.0
  %v1981 = vmax.f32 %v1622, 0.0
  %v1982 = vmax.f32 %v1627, 0.0
  %v1983 = vmax.f32 %v1632, 0.0
  %v1984 = vmax.f32 %v1637, 0.0
  %v1985 = vmax.f32 %v1642, 0.0
  %v1986 = vmax.f32 %v1647, 0.0
  %v1987 = vmax.f32 %v1652, 0.0
  %v1988 = vmax.f32 %v1657, 0.0
  %v1989 = vmax.f32 %v1662, 0.0
  %v1990 = vmax.f32 %v1667, 0.0
  %v1991 = vmax.f32 %v1672, 0.0
  %v1992 = vmax.f32 %v1677, 0.0
  %v1993 = vmax.f32 %v1682, 0.0
  %v1994 = vmax.f32 %v1687, 0.0
  %v1995 = vmax.f32 %v1692, 0.0
  %v1996 = vmax.f32 %v1697, 0.0
  %v1997 = vmax.f32 %v1702, 0.0
  %v1998 = vmax.f32 %v1707, 0.0
  %v1999 = vmax.f32 %v1712, 0.0
  %v2000 = vmax.f32 %v1717, 0.0
  %v2001 = vmax.f32 %v1722, 0.0
  %v2002 = vmax.f32 %v1727, 0.0
  %2003 = vst [vmem:[%s2] sm:$0xff] %v1730
  %2004 = vst [vmem:[%s2 + $0x8] sm:$0xff] %v1731
  %2005 = vst [vmem:[%s2 + $0x10] sm:$0xff] %v1732
  %2006 = vst [vmem:[%s2 + $0x18] sm:$0xff] %v1733
  %2007 = vst [vmem:[%s2 + $0x20] sm:$0xff] %v1734
  %2008 = vst [vmem:[%s2 + $0x28] sm:$0xff] %v1735
  %2009 = vst [vmem:[%s2 + $0x30] sm:$0xff] %v1736
  %2010 = vst [vmem:[%s2 + $0x38] sm:$0xff] %v1737
  %2011 = vst [vmem:[%s2 + $0x40] sm:$0xff] %v1738
  %2012 = vst [vmem:[%s2 + $0x48] sm:$0xff] %v1739
  %2013 = vst [vmem:[%s2 + $0x50] sm:$0xff] %v1740
  %2014 = vst [vmem:[%s2 + $0x58] sm:$0xff] %v1741
  %2015 = vst [vmem:[%s2 + $0x60] sm:$0xff] %v1742
  %2016 = vst [vmem:[%s2 + $0x68] sm:$0xff] %v1743
  %2017 = vst [vmem:[%s2 + $0x70] sm:$0xff] %v1744
  %2018 = vst [vmem:[%s2 + $0x78] sm:$0xff] %v1745
  %2019 = vst [vmem:[%s2 + $0x80] sm:$0xff] %v1746
  %2020 = vst [vmem:[%s2 + $0x88] sm:$0xff] %v1747
  %2021 = vst [vmem:[%s2 + $0x90] sm:$0xff] %v1748
  %2022 = vst [vmem:[%s2 + $0x98] sm:$0xff] %v1749
  %2023 = vst [vmem:[%s2 + $0xa0] sm:$0xff] %v1750
  %2024 = vst [vmem:[%s2 + $0xa8] sm:$0xff] %v1751
  %2025 = vst [vmem:[%s2 + $0xb0] sm:$0xff] %v1752
  %2026 = vst [vmem:[%s2 + $0xb8] sm:$0xff] %v1753
  %2027 = vst [vmem:[%s2 + $0xc0] sm:$0xff] %v1754
  %2028 = vst [vmem:[%s2 + $0xc8] sm:$0xff] %v1755
  %2029 = vst [vmem:[%s2 + $0xd0] sm:$0xff] %v1756
  %2030 = vst [vmem:[%s2 + $0xd8] sm:$0xff] %v1757
  %2031 = vst [vmem:[%s2 + $0xe0] sm:$0xff] %v1758
  %2032 = vst [vmem:[%s2 + $0xe8] sm:$0xff] %v1759
  %2033 = vst [vmem:[%s2 + $0xf0] sm:$0xff] %v1760
  %2034 = vst [vmem:[%s2 + $0xf8] sm:$0xff] %v1761
  %2035 = vst [vmem:[%s2 + $0x100] sm:$0xff] %v1762
  %2036 = vst [vmem:[%s2 + $0x108] sm:$0xff] %v1763
  %2037 = vst [vmem:[%s2 + $0x110] sm:$0xff] %v1764
  %2038 = vst [vmem:[%s2 + $0x118] sm:$0xff] %v1765
  %2039 = vst [vmem:[%s2 + $0x120] sm:$0xff] %v1766
  %2040 = vst [vmem:[%s2 + $0x128] sm:$0xff] %v1767
  %2041 = vst [vmem:[%s2 + $0x130] sm:$0xff] %v1768
  %2042 = vst [vmem:[%s2 + $0x138] sm:$0xff] %v1769
  %2043 = vst [vmem:[%s2 + $0x140] sm:$0xff] %v1770
  %2044 = vst [vmem:[%s2 + $0x148] sm:$0xff] %v1771
  %2045 = vst [vmem:[%s2 + $0x150] sm:$0xff] %v1772
  %2046 = vst [vmem:[%s2 + $0x158] sm:$0xff] %v1773
  %2047 = vst [vmem:[%s2 + $0x160] sm:$0xff] %v1774
  %2048 = vst [vmem:[%s2 + $0x168] sm:$0xff] %v1775
  %2049 = vst [vmem:[%s2 + $0x170] sm:$0xff] %v1776
  %2050 = vst [vmem:[%s2 + $0x178] sm:$0xff] %v1777
  %2051 = vst [vmem:[%s2 + $0x180] sm:$0xff] %v1778
  %2052 = vst [vmem:[%s2 + $0x188] sm:$0xff] %v1779
  %2053 = vst [vmem:[%s2 + $0x190] sm:$0xff] %v1780
  %2054 = vst [vmem:[%s2 + $0x198] sm:$0xff] %v1781
  %2055 = vst [vmem:[%s2 + $0x1a0] sm:$0xff] %v1782
  %2056 = vst [vmem:[%s2 + $0x1a8] sm:$0xff] %v1783
  %2057 = vst [vmem:[%s2 + $0x1b0] sm:$0xff] %v1784
  %2058 = vst [vmem:[%s2 + $0x1b8] sm:$0xff] %v1785
  %2059 = vst [vmem:[%s2 + $0x1c0] sm:$0xff] %v1786
  %2060 = vst [vmem:[%s2 + $0x1c8] sm:$0xff] %v1787
  %2061 = vst [vmem:[%s2 + $0x1d0] sm:$0xff] %v1788
  %2062 = vst [vmem:[%s2 + $0x1d8] sm:$0xff] %v1789
  %2063 = vst [vmem:[%s2 + $0x1e0] sm:$0xff] %v1790
  %2064 = vst [vmem:[%s2 + $0x1e8] sm:$0xff] %v1791
  %2065 = vst [vmem:[%s2 + $0x1f0] sm:$0xff] %v1792
  %2066 = vst [vmem:[%s2 + $0x1f8] sm:$0xff] %v1793
  %2067 = vst [vmem:[%s2 + $0x200] sm:$0xff] %v1794
  %2068 = vst [vmem:[%s2 + $0x208] sm:$0xff] %v1795
  %2069 = vst [vmem:[%s2 + $0x210] sm:$0xff] %v1796
  %2070 = vst [vmem:[%s2 + $0x218] sm:$0xff] %v1797
  %2071 = vst [vmem:[%s2 + $0x220] sm:$0xff] %v1798
  %2072 = vst [vmem:[%s2 + $0x228] sm:$0xff] %v1799
  %2073 = vst [vmem:[%s2 + $0x230] sm:$0xff] %v1800
  %2074 = vst [vmem:[%s2 + $0x238] sm:$0xff] %v1801
  %2075 = vst [vmem:[%s2 + $0x240] sm:$0xff] %v1802
  %2076 = vst [vmem:[%s2 + $0x248] sm:$0xff] %v1803
  %2077 = vst [vmem:[%s2 + $0x250] sm:$0xff] %v1804
  %2078 = vst [vmem:[%s2 + $0x258] sm:$0xff] %v1805
  %2079 = vst [vmem:[%s2 + $0x260] sm:$0xff] %v1806
  %2080 = vst [vmem:[%s2 + $0x268] sm:$0xff] %v1807
  %2081 = vst [vmem:[%s2 + $0x270] sm:$0xff] %v1808
  %2082 = vst [vmem:[%s2 + $0x278] sm:$0xff] %v1809
  %2083 = vst [vmem:[%s2 + $0x280] sm:$0xff] %v1810
  %2084 = vst [vmem:[%s2 + $0x288] sm:$0xff] %v1811
  %2085 = vst [vmem:[%s2 + $0x290] sm:$0xff] %v1812
  %2086 = vst [vmem:[%s2 + $0x298] sm:$0xff] %v1813
  %2087 = vst [vmem:[%s2 + $0x2a0] sm:$0xff] %v1814
  %2088 = vst [vmem:[%s2 + $0x2a8] sm:$0xff] %v1815
  %2089 = vst [vmem:[%s2 + $0x2b0] sm:$0xff] %v1816
  %2090 = vst [vmem:[%s2 + $0x2b8] sm:$0xff] %v1817
  %2091 = vst [vmem:[%s2 + $0x2c0] sm:$0xff] %v1818
  %2092 = vst [vmem:[%s2 + $0x2c8] sm:$0xff] %v1819
  %2093 = vst [vmem:[%s2 + $0x2d0] sm:$0xff] %v1820
  %2094 = vst [vmem:[%s2 + $0x2d8] sm:$0xff] %v1821
  %2095 = vst [vmem:[%s2 + $0x2e0] sm:$0xff] %v1822
  %2096 = vst [vmem:[%s2 + $0x2e8] sm:$0xff] %v1823
  %2097 = vst [vmem:[%s2 + $0x2f0] sm:$0xff] %v1824
  %2098 = vst [vmem:[%s2 + $0x2f8] sm:$0xff] %v1825
  %2099 = vst [vmem:[%s2 + $0x300] sm:$0xff] %v1826
  %2100 = vst [vmem:[%s2 + $0x308] sm:$0xff] %v1827
  %2101 = vst [vmem:[%s2 + $0x310] sm:$0xff] %v1828
  %2102 = vst [vmem:[%s2 + $0x318] sm:$0xff] %v1829
  %2103 = vst [vmem:[%s2 + $0x320] sm:$0xff] %v1830
  %2104 = vst [vmem:[%s2 + $0x328] sm:$0xff] %v1831
  %2105 = vst [vmem:[%s2 + $0x330] sm:$0xff] %v1832
  %2106 = vst [vmem:[%s2 + $0x338] sm:$0xff] %v1833
  %2107 = vst [vmem:[%s2 + $0x340] sm:$0xff] %v1834
  %2108 = vst [vmem:[%s2 + $0x348] sm:$0xff] %v1835
  %2109 = vst [vmem:[%s2 + $0x350] sm:$0xff] %v1836
  %2110 = vst [vmem:[%s2 + $0x358] sm:$0xff] %v1837
  %2111 = vst [vmem:[%s2 + $0x360] sm:$0xff] %v1838
  %2112 = vst [vmem:[%s2 + $0x368] sm:$0xff] %v1839
  %2113 = vst [vmem:[%s2 + $0x370] sm:$0xff] %v1840
  %2114 = vst [vmem:[%s2 + $0x378] sm:$0xff] %v1841
  %2115 = vst [vmem:[%s2 + $0x380] sm:$0xff] %v1842
  %2116 = vst [vmem:[%s2 + $0x388] sm:$0xff] %v1843
  %2117 = vst [vmem:[%s2 + $0x390] sm:$0xff] %v1844
  %2118 = vst [vmem:[%s2 + $0x398] sm:$0xff] %v1845
  %2119 = vst [vmem:[%s2 + $0x3a0] sm:$0xff] %v1846
  %2120 = vst [vmem:[%s2 + $0x3a8] sm:$0xff] %v1847
  %2121 = vst [vmem:[%s2 + $0x3b0] sm:$0xff] %v1848
  %2122 = vst [vmem:[%s2 + $0x3b8] sm:$0xff] %v1849
  %2123 = vst [vmem:[%s2 + $0x3c0] sm:$0xff] %v1850
  %2124 = vst [vmem:[%s2 + $0x3c8] sm:$0xff] %v1851
  %2125 = vst [vmem:[%s2 + $0x3d0] sm:$0xff] %v1852
  %2126 = vst [vmem:[%s2 + $0x3d8] sm:$0xff] %v1853
  %2127 = vst [vmem:[%s2 + $0x3e0] sm:$0xff] %v1854
  %2128 = vst [vmem:[%s2 + $0x3e8] sm:$0xff] %v1855
  %2129 = vst [vmem:[%s2 + $0x3f0] sm:$0xff] %v1856
  %2130 = vst [vmem:[%s2 + $0x3f8] sm:$0xff] %v1857
  %2131 = vst [vmem:[%s2 + $0x400] sm:$0xff] %v1858
  %2132 = vst [vmem:[%s2 + $0x408] sm:$0xff] %v1859
  %2133 = vst [vmem:[%s2 + $0x410] sm:$0xff] %v1860
  %2134 = vst [vmem:[%s2 + $0x418] sm:$0xff] %v1861
  %2135 = vst [vmem:[%s2 + $0x420] sm:$0xff] %v1862
  %2136 = vst [vmem:[%s2 + $0x428] sm:$0xff] %v1863
  %2137 = vst [vmem:[%s2 + $0x430] sm:$0xff] %v1864
  %2138 = vst [vmem:[%s2 + $0x438] sm:$0xff] %v1865
  %2139 = vst [vmem:[%s2 + $0x440] sm:$0xff] %v1866
  %2140 = vst [vmem:[%s2 + $0x448] sm:$0xff] %v1867
  %2141 = vst [vmem:[%s2 + $0x450] sm:$0xff] %v1868
  %2142 = vst [vmem:[%s2 + $0x458] sm:$0xff] %v1869
  %2143 = vst [vmem:[%s2 + $0x460] sm:$0xff] %v1870
  %2144 = vst [vmem:[%s2 + $0x468] sm:$0xff] %v1871
  %2145 = vst [vmem:[%s2 + $0x470] sm:$0xff] %v1872
  %2146 = vst [vmem:[%s2 + $0x478] sm:$0xff] %v1873
  %2147 = vst [vmem:[%s2 + $0x480] sm:$0xff] %v1874
  %2148 = vst [vmem:[%s2 + $0x488] sm:$0xff] %v1875
  %2149 = vst [vmem:[%s2 + $0x490] sm:$0xff] %v1876
  %2150 = vst [vmem:[%s2 + $0x498] sm:$0xff] %v1877
  %2151 = vst [vmem:[%s2 + $0x4a0] sm:$0xff] %v1878
  %2152 = vst [vmem:[%s2 + $0x4a8] sm:$0xff] %v1879
  %2153 = vst [vmem:[%s2 + $0x4b0] sm:$0xff] %v1880
  %2154 = vst [vmem:[%s2 + $0x4b8] sm:$0xff] %v1881
  %2155 = vst [vmem:[%s2 + $0x4c0] sm:$0xff] %v1882
  %2156 = vst [vmem:[%s2 + $0x4c8] sm:$0xff] %v1883
  %2157 = vst [vmem:[%s2 + $0x4d0] sm:$0xff] %v1884
  %2158 = vst [vmem:[%s2 + $0x4d8] sm:$0xff] %v1885
  %2159 = vst [vmem:[%s2 + $0x4e0] sm:$0xff] %v1886
  %2160 = vst [vmem:[%s2 + $0x4e8] sm:$0xff] %v1887
  %2161 = vst [vmem:[%s2 + $0x4f0] sm:$0xff] %v1888
  %2162 = vst [vmem:[%s2 + $0x4f8] sm:$0xff] %v1889
  %2163 = vst [vmem:[%s2 + $0x500] sm:$0xff] %v1890
  %2164 = vst [vmem:[%s2 + $0x508] sm:$0xff] %v1891
  %2165 = vst [vmem:[%s2 + $0x510] sm:$0xff] %v1892
  %2166 = vst [vmem:[%s2 + $0x518] sm:$0xff] %v1893
  %2167 = vst [vmem:[%s2 + $0x520] sm:$0xff] %v1894
  %2168 = vst [vmem:[%s2 + $0x528] sm:$0xff] %v1895
  %2169 = vst [vmem:[%s2 + $0x530] sm:$0xff] %v1896
  %2170 = vst [vmem:[%s2 + $0x538] sm:$0xff] %v1897
  %2171 = vst [vmem:[%s2 + $0x540] sm:$0xff] %v1898
  %2172 = vst [vmem:[%s2 + $0x548] sm:$0xff] %v1899
  %2173 = vst [vmem:[%s2 + $0x550] sm:$0xff] %v1900
  %2174 = vst [vmem:[%s2 + $0x558] sm:$0xff] %v1901
  %2175 = vst [vmem:[%s2 + $0x560] sm:$0xff] %v1902
  %2176 = vst [vmem:[%s2 + $0x568] sm:$0xff] %v1903
  %2177 = vst [vmem:[%s2 + $0x570] sm:$0xff] %v1904
  %2178 = vst [vmem:[%s2 + $0x578] sm:$0xff] %v1905
  %2179 = vst [vmem:[%s2 + $0x580] sm:$0xff] %v1906
  %2180 = vst [vmem:[%s2 + $0x588] sm:$0xff] %v1907
  %2181 = vst [vmem:[%s2 + $0x590] sm:$0xff] %v1908
  %2182 = vst [vmem:[%s2 + $0x598] sm:$0xff] %v1909
  %2183 = vst [vmem:[%s2 + $0x5a0] sm:$0xff] %v1910
  %2184 = vst [vmem:[%s2 + $0x5a8] sm:$0xff] %v1911
  %2185 = vst [vmem:[%s2 + $0x5b0] sm:$0xff] %v1912
  %2186 = vst [vmem:[%s2 + $0x5b8] sm:$0xff] %v1913
  %2187 = vst [vmem:[%s2 + $0x5c0] sm:$0xff] %v1914
  %2188 = vst [vmem:[%s2 + $0x5c8] sm:$0xff] %v1915
  %2189 = vst [vmem:[%s2 + $0x5d0] sm:$0xff] %v1916
  %2190 = vst [vmem:[%s2 + $0x5d8] sm:$0xff] %v1917
  %2191 = vst [vmem:[%s2 + $0x5e0] sm:$0xff] %v1918
  %2192 = vst [vmem:[%s2 + $0x5e8] sm:$0xff] %v1919
  %2193 = vst [vmem:[%s2 + $0x5f0] sm:$0xff] %v1920
  %2194 = vst [vmem:[%s2 + $0x5f8] sm:$0xff] %v1921
  %2195 = vst [vmem:[%s2 + $0x600] sm:$0xff] %v1922
  %2196 = vst [vmem:[%s2 + $0x608] sm:$0xff] %v1923
  %2197 = vst [vmem:[%s2 + $0x610] sm:$0xff] %v1924
  %2198 = vst [vmem:[%s2 + $0x618] sm:$0xff] %v1925
  %2199 = vst [vmem:[%s2 + $0x620] sm:$0xff] %v1926
  %2200 = vst [vmem:[%s2 + $0x628] sm:$0xff] %v1927
  %2201 = vst [vmem:[%s2 + $0x630] sm:$0xff] %v1928
  %2202 = vst [vmem:[%s2 + $0x638] sm:$0xff] %v1929
  %2203 = vst [vmem:[%s2 + $0x640] sm:$0xff] %v1930
  %2204 = vst [vmem:[%s2 + $0x648] sm:$0xff] %v1931
  %2205 = vst [vmem:[%s2 + $0x650] sm:$0xff] %v1932
  %2206 = vst [vmem:[%s2 + $0x658] sm:$0xff] %v1933
  %2207 = vst [vmem:[%s2 + $0x660] sm:$0xff] %v1934
  %2208 = vst [vmem:[%s2 + $0x668] sm:$0xff] %v1935
  %2209 = vst [vmem:[%s2 + $0x670] sm:$0xff] %v1936
  %2210 = vst [vmem:[%s2 + $0x678] sm:$0xff] %v1937
  %2211 = vst [vmem:[%s2 + $0x680] sm:$0xff] %v1938
  %2212 = vst [vmem:[%s2 + $0x688] sm:$0xff] %v1939
  %2213 = vst [vmem:[%s2 + $0x690] sm:$0xff] %v1940
  %2214 = vst [vmem:[%s2 + $0x698] sm:$0xff] %v1941
  %2215 = vst [vmem:[%s2 + $0x6a0] sm:$0xff] %v1942
  %2216 = vst [vmem:[%s2 + $0x6a8] sm:$0xff] %v1943
  %2217 = vst [vmem:[%s2 + $0x6b0] sm:$0xff] %v1944
  %2218 = vst [vmem:[%s2 + $0x6b8] sm:$0xff] %v1945
  %2219 = vst [vmem:[%s2 + $0x6c0] sm:$0xff] %v1946
  %2220 = vst [vmem:[%s2 + $0x6c8] sm:$0xff] %v1947
  %2221 = vst [vmem:[%s2 + $0x6d0] sm:$0xff] %v1948
  %2222 = vst [vmem:[%s2 + $0x6d8] sm:$0xff] %v1949
  %2223 = vst [vmem:[%s2 + $0x6e0] sm:$0xff] %v1950
  %2224 = vst [vmem:[%s2 + $0x6e8] sm:$0xff] %v1951
  %2225 = vst [vmem:[%s2 + $0x6f0] sm:$0xff] %v1952
  %2226 = vst [vmem:[%s2 + $0x6f8] sm:$0xff] %v1953
  %2227 = vst [vmem:[%s2 + $0x700] sm:$0xff] %v1954
  %2228 = vst [vmem:[%s2 + $0x708] sm:$0xff] %v1955
  %2229 = vst [vmem:[%s2 + $0x710] sm:$0xff] %v1956
  %2230 = vst [vmem:[%s2 + $0x718] sm:$0xff] %v1957
  %2231 = vst [vmem:[%s2 + $0x720] sm:$0xff] %v1958
  %2232 = vst [vmem:[%s2 + $0x728] sm:$0xff] %v1959
  %2233 = vst [vmem:[%s2 + $0x730] sm:$0xff] %v1960
  %2234 = vst [vmem:[%s2 + $0x738] sm:$0xff] %v1961
  %2235 = vst [vmem:[%s2 + $0x740] sm:$0xff] %v1962
  %2236 = vst [vmem:[%s2 + $0x748] sm:$0xff] %v1963
  %2237 = vst [vmem:[%s2 + $0x750] sm:$0xff] %v1964
  %2238 = vst [vmem:[%s2 + $0x758] sm:$0xff] %v1965
  %2239 = vst [vmem:[%s2 + $0x760] sm:$0xff] %v1966
  %2240 = vst [vmem:[%s2 + $0x768] sm:$0xff] %v1967
  %2241 = vst [vmem:[%s2 + $0x770] sm:$0xff] %v1968
  %2242 = vst [vmem:[%s2 + $0x778] sm:$0xff] %v1969
  %2243 = vst [vmem:[%s2 + $0x780] sm:$0xff] %v1970
  %2244 = vst [vmem:[%s2 + $0x788] sm:$0xff] %v1971
  %2245 = vst [vmem:[%s2 + $0x790] sm:$0xff] %v1972
  %2246 = vst [vmem:[%s2 + $0x798] sm:$0xff] %v1973
  %2247 = vst [vmem:[%s2 + $0x7a0] sm:$0xff] %v1974
  %2248 = vst [vmem:[%s2 + $0x7a8] sm:$0xff] %v1975
  %2249 = vst [vmem:[%s2 + $0x7b0] sm:$0xff] %v1976
  %2250 = vst [vmem:[%s2 + $0x7b8] sm:$0xff] %v1977
  %2251 = vst [vmem:[%s2 + $0x7c0] sm:$0xff] %v1978
  %2252 = vst [vmem:[%s2 + $0x7c8] sm:$0xff] %v1979
  %2253 = vst [vmem:[%s2 + $0x7d0] sm:$0xff] %v1980
  %2254 = vst [vmem:[%s2 + $0x7d8] sm:$0xff] %v1981
  %2255 = vst [vmem:[%s2 + $0x7e0] sm:$0xff] %v1982
  %2256 = vst [vmem:[%s2 + $0x7e8] sm:$0xff] %v1983
  %2257 = vst [vmem:[%s2 + $0x7f0] sm:$0xff] %v1984
  %2258 = vst [vmem:[%s2 + $0x7f8] sm:$0xff] %v1985
  %2259 = vst [vmem:[%s2 + $0x800] sm:$0xff] %v1986
  %2260 = vst [vmem:[%s2 + $0x808] sm:$0xff] %v1987
  %2261 = vst [vmem:[%s2 + $0x810] sm:$0xff] %v1988
  %2262 = vst [vmem:[%s2 + $0x818] sm:$0xff] %v1989
  %2263 = vst [vmem:[%s2 + $0x820] sm:$0xff] %v1990
  %2264 = vst [vmem:[%s2 + $0x828] sm:$0xff] %v1991
  %2265 = vst [vmem:[%s2 + $0x830] sm:$0xff] %v1992
  %2266 = vst [vmem:[%s2 + $0x838] sm:$0xff] %v1993
  %2267 = vst [vmem:[%s2 + $0x840] sm:$0xff] %v1994
  %2268 = vst [vmem:[%s2 + $0x848] sm:$0xff] %v1995
  %2269 = vst [vmem:[%s2 + $0x850] sm:$0xff] %v1996
  %2270 = vst [vmem:[%s2 + $0x858] sm:$0xff] %v1997
  %2271 = vst [vmem:[%s2 + $0x860] sm:$0xff] %v1998
  %2272 = vst [vmem:[%s2 + $0x868] sm:$0xff] %v1999
  %2273 = vst [vmem:[%s2 + $0x870] sm:$0xff] %v2000
  %2274 = vst [vmem:[%s2 + $0x878] sm:$0xff] %v2001
  %2275 = vst [vmem:[%s2 + $0x880] sm:$0xff] %v2002
  // Predicated region
  $region10: #{net_forward.4} parent=0 // pred_check
    _
  $region11: #{net_forward.4} parent=0 // pred_check_branch
    %2277 = sbr.rel (0) target = $region13
  $region12: #{net_forward.4} parent=0 // pred_region
    _
  $region13: #{net_forward.4} parent=0 // pred_fallthru
    _
  // Predicated region
  $region14: #{net_forward.4} parent=0 // pred_check
    _
  $region15: #{net_forward.4} parent=0 // pred_check_branch
    %2279 = sbr.rel (0) target = $region17
  $region16: #{net_forward.4} parent=0 // pred_region
    _
  $region17: #{net_forward.4} parent=0 // pred_fallthru
    _

// kernel: net_forward.5
$region0: #{net_forward.5}
  #allocation0 [shape = 'u32[]', space=smem, size = 0x4, offset = 0x4, fixed_abs, tag = 'smem constant byte address 0x4 - core index']
  #allocation1 [shape = 'u32[144,128]{1,0:T(1,128)}', space=vmem, size = 0x12000, scoped, tag = 'internal scratch']
  %s0 = inlined_call_operand.vmem [shape: f32[584,256], index: 0, kind: input, shape index: {}]
  %s1 = inlined_call_operand.vmem [shape: f32[256,128], index: 1, kind: input, shape index: {}]
  %s2 = inlined_call_operand.vmem [shape: f32[584,128], index: 2, kind: output, shape index: {}]
  %s3 = sld [smem:[#allocation0]]
  $region18: #{net_forward.5} parent=0
    _
  %s5 = ssub.s32 1, %s3
  %s6 = scalar_select 0, %s5, %s3
  // Predicated region
  $region2: #{net_forward.5} parent=0 // pred_check
    _
  $region3: #{net_forward.5} parent=0 // pred_check_branch
    %8 = sbr.rel (0) target = $region5
  $region4: #{net_forward.5} parent=0 // pred_region
    _
  $region5: #{net_forward.5} parent=0 // pred_fallthru
    _
  // Predicated region
  $region6: #{net_forward.5} parent=0 // pred_check
    _
  $region7: #{net_forward.5} parent=0 // pred_check_branch
    %10 = sbr.rel (0) target = $region9
  $region8: #{net_forward.5} parent=0 // pred_region
    _
  $region9: #{net_forward.5} parent=0 // pred_fallthru
    _
  %v11 = vld [vmem:[%s0] sm:$0xff]
  %v12 = vld [vmem:[%s0 + $0x8] sm:$0xff]
  %v13 = vld [vmem:[%s0 + $0x10] sm:$0xff]
  %v14 = vld [vmem:[%s0 + $0x18] sm:$0xff]
  %v15 = vld [vmem:[%s0 + $0x20] sm:$0xff]
  %v16 = vld [vmem:[%s0 + $0x28] sm:$0xff]
  %v17 = vld [vmem:[%s0 + $0x30] sm:$0xff]
  %v18 = vld [vmem:[%s0 + $0x38] sm:$0xff]
  %v19 = vld [vmem:[%s0 + $0x40] sm:$0xff]
  %v20 = vld [vmem:[%s0 + $0x48] sm:$0xff]
  %v21 = vld [vmem:[%s0 + $0x50] sm:$0xff]
  %v22 = vld [vmem:[%s0 + $0x58] sm:$0xff]
  %v23 = vld [vmem:[%s0 + $0x60] sm:$0xff]
  %v24 = vld [vmem:[%s0 + $0x68] sm:$0xff]
  %v25 = vld [vmem:[%s0 + $0x70] sm:$0xff]
  %v26 = vld [vmem:[%s0 + $0x78] sm:$0xff]
  %v27 = vld [vmem:[%s0 + $0x80] sm:$0xff]
  %v28 = vld [vmem:[%s0 + $0x88] sm:$0xff]
  %v29 = vld [vmem:[%s0 + $0x90] sm:$0xff]
  %v30 = vld [vmem:[%s0 + $0x98] sm:$0xff]
  %v31 = vld [vmem:[%s0 + $0xa0] sm:$0xff]
  %v32 = vld [vmem:[%s0 + $0xa8] sm:$0xff]
  %v33 = vld [vmem:[%s0 + $0xb0] sm:$0xff]
  %v34 = vld [vmem:[%s0 + $0xb8] sm:$0xff]
  %v35 = vld [vmem:[%s0 + $0xc0] sm:$0xff]
  %v36 = vld [vmem:[%s0 + $0xc8] sm:$0xff]
  %v37 = vld [vmem:[%s0 + $0xd0] sm:$0xff]
  %v38 = vld [vmem:[%s0 + $0xd8] sm:$0xff]
  %v39 = vld [vmem:[%s0 + $0xe0] sm:$0xff]
  %v40 = vld [vmem:[%s0 + $0xe8] sm:$0xff]
  %v41 = vld [vmem:[%s0 + $0xf0] sm:$0xff]
  %v42 = vld [vmem:[%s0 + $0xf8] sm:$0xff]
  %v43 = vld [vmem:[%s0 + $0x100] sm:$0xff]
  %v44 = vld [vmem:[%s0 + $0x108] sm:$0xff]
  %v45 = vld [vmem:[%s0 + $0x110] sm:$0xff]
  %v46 = vld [vmem:[%s0 + $0x118] sm:$0xff]
  %v47 = vld [vmem:[%s0 + $0x120] sm:$0xff]
  %v48 = vld [vmem:[%s0 + $0x128] sm:$0xff]
  %v49 = vld [vmem:[%s0 + $0x130] sm:$0xff]
  %v50 = vld [vmem:[%s0 + $0x138] sm:$0xff]
  %v51 = vld [vmem:[%s0 + $0x140] sm:$0xff]
  %v52 = vld [vmem:[%s0 + $0x148] sm:$0xff]
  %v53 = vld [vmem:[%s0 + $0x150] sm:$0xff]
  %v54 = vld [vmem:[%s0 + $0x158] sm:$0xff]
  %v55 = vld [vmem:[%s0 + $0x160] sm:$0xff]
  %v56 = vld [vmem:[%s0 + $0x168] sm:$0xff]
  %v57 = vld [vmem:[%s0 + $0x170] sm:$0xff]
  %v58 = vld [vmem:[%s0 + $0x178] sm:$0xff]
  %v59 = vld [vmem:[%s0 + $0x180] sm:$0xff]
  %v60 = vld [vmem:[%s0 + $0x188] sm:$0xff]
  %v61 = vld [vmem:[%s0 + $0x190] sm:$0xff]
  %v62 = vld [vmem:[%s0 + $0x198] sm:$0xff]
  %v63 = vld [vmem:[%s0 + $0x1a0] sm:$0xff]
  %v64 = vld [vmem:[%s0 + $0x1a8] sm:$0xff]
  %v65 = vld [vmem:[%s0 + $0x1b0] sm:$0xff]
  %v66 = vld [vmem:[%s0 + $0x1b8] sm:$0xff]
  %v67 = vld [vmem:[%s0 + $0x1c0] sm:$0xff]
  %v68 = vld [vmem:[%s0 + $0x1c8] sm:$0xff]
  %v69 = vld [vmem:[%s0 + $0x1d0] sm:$0xff]
  %v70 = vld [vmem:[%s0 + $0x1d8] sm:$0xff]
  %v71 = vld [vmem:[%s0 + $0x1e0] sm:$0xff]
  %v72 = vld [vmem:[%s0 + $0x1e8] sm:$0xff]
  %v73 = vld [vmem:[%s0 + $0x1f0] sm:$0xff]
  %v74 = vld [vmem:[%s0 + $0x1f8] sm:$0xff]
  %v75 = vld [vmem:[%s0 + $0x200] sm:$0xff]
  %v76 = vld [vmem:[%s0 + $0x208] sm:$0xff]
  %v77 = vld [vmem:[%s0 + $0x210] sm:$0xff]
  %v78 = vld [vmem:[%s0 + $0x218] sm:$0xff]
  %v79 = vld [vmem:[%s0 + $0x220] sm:$0xff]
  %v80 = vld [vmem:[%s0 + $0x228] sm:$0xff]
  %v81 = vld [vmem:[%s0 + $0x230] sm:$0xff]
  %v82 = vld [vmem:[%s0 + $0x238] sm:$0xff]
  %v83 = vld [vmem:[%s0 + $0x240] sm:$0xff]
  %v84 = vld [vmem:[%s0 + $0x248] sm:$0xff]
  %v85 = vld [vmem:[%s0 + $0x250] sm:$0xff]
  %v86 = vld [vmem:[%s0 + $0x258] sm:$0xff]
  %v87 = vld [vmem:[%s0 + $0x260] sm:$0xff]
  %v88 = vld [vmem:[%s0 + $0x268] sm:$0xff]
  %v89 = vld [vmem:[%s0 + $0x270] sm:$0xff]
  %v90 = vld [vmem:[%s0 + $0x278] sm:$0xff]
  %v91 = vld [vmem:[%s0 + $0x280] sm:$0xff]
  %v92 = vld [vmem:[%s0 + $0x288] sm:$0xff]
  %v93 = vld [vmem:[%s0 + $0x290] sm:$0xff]
  %v94 = vld [vmem:[%s0 + $0x298] sm:$0xff]
  %v95 = vld [vmem:[%s0 + $0x2a0] sm:$0xff]
  %v96 = vld [vmem:[%s0 + $0x2a8] sm:$0xff]
  %v97 = vld [vmem:[%s0 + $0x2b0] sm:$0xff]
  %v98 = vld [vmem:[%s0 + $0x2b8] sm:$0xff]
  %v99 = vld [vmem:[%s0 + $0x2c0] sm:$0xff]
  %v100 = vld [vmem:[%s0 + $0x2c8] sm:$0xff]
  %v101 = vld [vmem:[%s0 + $0x2d0] sm:$0xff]
  %v102 = vld [vmem:[%s0 + $0x2d8] sm:$0xff]
  %v103 = vld [vmem:[%s0 + $0x2e0] sm:$0xff]
  %v104 = vld [vmem:[%s0 + $0x2e8] sm:$0xff]
  %v105 = vld [vmem:[%s0 + $0x2f0] sm:$0xff]
  %v106 = vld [vmem:[%s0 + $0x2f8] sm:$0xff]
  %v107 = vld [vmem:[%s0 + $0x300] sm:$0xff]
  %v108 = vld [vmem:[%s0 + $0x308] sm:$0xff]
  %v109 = vld [vmem:[%s0 + $0x310] sm:$0xff]
  %v110 = vld [vmem:[%s0 + $0x318] sm:$0xff]
  %v111 = vld [vmem:[%s0 + $0x320] sm:$0xff]
  %v112 = vld [vmem:[%s0 + $0x328] sm:$0xff]
  %v113 = vld [vmem:[%s0 + $0x330] sm:$0xff]
  %v114 = vld [vmem:[%s0 + $0x338] sm:$0xff]
  %v115 = vld [vmem:[%s0 + $0x340] sm:$0xff]
  %v116 = vld [vmem:[%s0 + $0x348] sm:$0xff]
  %v117 = vld [vmem:[%s0 + $0x350] sm:$0xff]
  %v118 = vld [vmem:[%s0 + $0x358] sm:$0xff]
  %v119 = vld [vmem:[%s0 + $0x360] sm:$0xff]
  %v120 = vld [vmem:[%s0 + $0x368] sm:$0xff]
  %v121 = vld [vmem:[%s0 + $0x370] sm:$0xff]
  %v122 = vld [vmem:[%s0 + $0x378] sm:$0xff]
  %v123 = vld [vmem:[%s0 + $0x380] sm:$0xff]
  %v124 = vld [vmem:[%s0 + $0x388] sm:$0xff]
  %v125 = vld [vmem:[%s0 + $0x390] sm:$0xff]
  %v126 = vld [vmem:[%s0 + $0x398] sm:$0xff]
  %v127 = vld [vmem:[%s0 + $0x3a0] sm:$0xff]
  %v128 = vld [vmem:[%s0 + $0x3a8] sm:$0xff]
  %v129 = vld [vmem:[%s0 + $0x3b0] sm:$0xff]
  %v130 = vld [vmem:[%s0 + $0x3b8] sm:$0xff]
  %v131 = vld [vmem:[%s0 + $0x3c0] sm:$0xff]
  %v132 = vld [vmem:[%s0 + $0x3c8] sm:$0xff]
  %v133 = vld [vmem:[%s0 + $0x3d0] sm:$0xff]
  %v134 = vld [vmem:[%s0 + $0x3d8] sm:$0xff]
  %v135 = vld [vmem:[%s0 + $0x3e0] sm:$0xff]
  %v136 = vld [vmem:[%s0 + $0x3e8] sm:$0xff]
  %v137 = vld [vmem:[%s0 + $0x3f0] sm:$0xff]
  %v138 = vld [vmem:[%s0 + $0x3f8] sm:$0xff]
  %v139 = vld [vmem:[%s0 + $0x400] sm:$0xff]
  %v140 = vld [vmem:[%s0 + $0x408] sm:$0xff]
  %v141 = vld [vmem:[%s0 + $0x410] sm:$0xff]
  %v142 = vld [vmem:[%s0 + $0x418] sm:$0xff]
  %v143 = vld [vmem:[%s0 + $0x420] sm:$0xff]
  %v144 = vld [vmem:[%s0 + $0x428] sm:$0xff]
  %v145 = vld [vmem:[%s0 + $0x430] sm:$0xff]
  %v146 = vld [vmem:[%s0 + $0x438] sm:$0xff]
  %v147 = vld [vmem:[%s0 + $0x440] sm:$0xff]
  %v148 = vld [vmem:[%s0 + $0x448] sm:$0xff]
  %v149 = vld [vmem:[%s0 + $0x450] sm:$0xff]
  %v150 = vld [vmem:[%s0 + $0x458] sm:$0xff]
  %v151 = vld [vmem:[%s0 + $0x460] sm:$0xff]
  %v152 = vld [vmem:[%s0 + $0x468] sm:$0xff]
  %v153 = vld [vmem:[%s0 + $0x470] sm:$0xff]
  %v154 = vld [vmem:[%s0 + $0x478] sm:$0xff]
  %v155 = vld [vmem:[%s0 + $0x480] sm:$0xff]
  %v156 = vld [vmem:[%s0 + $0x488] sm:$0xff]
  %v157 = vld [vmem:[%s1] sm:$0xff]
  %v158 = vld [vmem:[%s1 + $0x8] sm:$0xff]
  %v159 = vld [vmem:[%s1 + $0x10] sm:$0xff]
  %v160 = vld [vmem:[%s1 + $0x18] sm:$0xff]
  %v161 = vld [vmem:[%s1 + $0x20] sm:$0xff]
  %v162 = vld [vmem:[%s1 + $0x28] sm:$0xff]
  %v163 = vld [vmem:[%s1 + $0x30] sm:$0xff]
  %v164 = vld [vmem:[%s1 + $0x38] sm:$0xff]
  %v165 = vld [vmem:[%s1 + $0x40] sm:$0xff]
  %v166 = vld [vmem:[%s1 + $0x48] sm:$0xff]
  %v167 = vld [vmem:[%s1 + $0x50] sm:$0xff]
  %v168 = vld [vmem:[%s1 + $0x58] sm:$0xff]
  %v169 = vld [vmem:[%s1 + $0x60] sm:$0xff]
  %v170 = vld [vmem:[%s1 + $0x68] sm:$0xff]
  %v171 = vld [vmem:[%s1 + $0x70] sm:$0xff]
  %v172 = vld [vmem:[%s1 + $0x78] sm:$0xff]
  %v173 = vld [vmem:[%s1 + $0x80] sm:$0xff]
  %v174 = vld [vmem:[%s1 + $0x88] sm:$0xff]
  %v175 = vld [vmem:[%s1 + $0x90] sm:$0xff]
  %v176 = vld [vmem:[%s1 + $0x98] sm:$0xff]
  %v177 = vld [vmem:[%s1 + $0xa0] sm:$0xff]
  %v178 = vld [vmem:[%s1 + $0xa8] sm:$0xff]
  %v179 = vld [vmem:[%s1 + $0xb0] sm:$0xff]
  %v180 = vld [vmem:[%s1 + $0xb8] sm:$0xff]
  %v181 = vld [vmem:[%s1 + $0xc0] sm:$0xff]
  %v182 = vld [vmem:[%s1 + $0xc8] sm:$0xff]
  %v183 = vld [vmem:[%s1 + $0xd0] sm:$0xff]
  %v184 = vld [vmem:[%s1 + $0xd8] sm:$0xff]
  %v185 = vld [vmem:[%s1 + $0xe0] sm:$0xff]
  %v186 = vld [vmem:[%s1 + $0xe8] sm:$0xff]
  %v187 = vld [vmem:[%s1 + $0xf0] sm:$0xff]
  %v188 = vld [vmem:[%s1 + $0xf8] sm:$0xff]
  %189 = vmatprep.subr.mxu0 0.0
  %190 = vmatpush1.msra.mxu0 %v157
  %191 = vmatprep.subr.mxu0 0.0
  %192 = vmatpush1.msra.mxu0 %v158
  %193 = vmatprep.subr.mxu0 0.0
  %194 = vmatpush1.msra.mxu0 %v159
  %195 = vmatprep.subr.mxu0 0.0
  %196 = vmatpush1.msra.mxu0 %v160
  %197 = vmatprep.subr.mxu0 0.0
  %198 = vmatpush1.msra.mxu0 %v161
  %199 = vmatprep.subr.mxu0 0.0
  %200 = vmatpush1.msra.mxu0 %v162
  %201 = vmatprep.subr.mxu0 0.0
  %202 = vmatpush1.msra.mxu0 %v163
  %203 = vmatprep.subr.mxu0 0.0
  %204 = vmatpush1.msra.mxu0 %v164
  %205 = vmatprep.subr.mxu0 0.0
  %206 = vmatpush1.msra.mxu0 %v165
  %207 = vmatprep.subr.mxu0 0.0
  %208 = vmatpush1.msra.mxu0 %v166
  %209 = vmatprep.subr.mxu0 0.0
  %210 = vmatpush1.msra.mxu0 %v167
  %211 = vmatprep.subr.mxu0 0.0
  %212 = vmatpush1.msra.mxu0 %v168
  %213 = vmatprep.subr.mxu0 0.0
  %214 = vmatpush1.msra.mxu0 %v169
  %215 = vmatprep.subr.mxu0 0.0
  %216 = vmatpush1.msra.mxu0 %v170
  %217 = vmatprep.subr.mxu0 0.0
  %218 = vmatpush1.msra.mxu0 %v171
  %219 = vmatprep.subr.mxu0 0.0
  %220 = vmatpush1.msra.mxu0 %v172
  %221 = vmatprep.subr.mxu0 0.0
  %222 = vmatpush1.msra.mxu0 %v173
  %223 = vmatprep.subr.mxu0 0.0
  %224 = vmatpush1.msra.mxu0 %v174
  %225 = vmatprep.subr.mxu0 0.0
  %226 = vmatpush1.msra.mxu0 %v175
  %227 = vmatprep.subr.mxu0 0.0
  %228 = vmatpush1.msra.mxu0 %v176
  %229 = vmatprep.subr.mxu0 0.0
  %230 = vmatpush1.msra.mxu0 %v177
  %231 = vmatprep.subr.mxu0 0.0
  %232 = vmatpush1.msra.mxu0 %v178
  %233 = vmatprep.subr.mxu0 0.0
  %234 = vmatpush1.msra.mxu0 %v179
  %235 = vmatprep.subr.mxu0 0.0
  %236 = vmatpush1.msra.mxu0 %v180
  %237 = vmatprep.subr.mxu0 0.0
  %238 = vmatpush1.msra.mxu0 %v181
  %239 = vmatprep.subr.mxu0 0.0
  %240 = vmatpush1.msra.mxu0 %v182
  %241 = vmatprep.subr.mxu0 0.0
  %242 = vmatpush1.msra.mxu0 %v183
  %243 = vmatprep.subr.mxu0 0.0
  %244 = vmatpush1.msra.mxu0 %v184
  %245 = vmatprep.subr.mxu0 0.0
  %246 = vmatpush1.msra.mxu0 %v185
  %247 = vmatprep.subr.mxu0 0.0
  %248 = vmatpush1.msra.mxu0 %v186
  %249 = vmatprep.subr.mxu0 0.0
  %250 = vmatpush1.msra.mxu0 %v187
  %251 = vmatprep.subr.mxu0 0.0
  %252 = vmatpush1.msra.mxu0 %v188
  %253 = vmatprep.mubr.f32.mxu0 %v12
  %254 = vmatmul.mubr.f32.gmra.mrb[0].mxu0 %v11
  %v255 = vpop.f32.mrb[0].mxu0
  %v256 = vadd.f32 0.0, %v255
  %v257 = vpop.f32.mrb[0].mxu0
  %258 = vmatprep.mubr.f32.mxu0 %v14
  %259 = vmatmul.mubr.f32.gmra.mrb[0].mxu0 %v13
  %v260 = vpop.f32.mrb[0].mxu0
  %v261 = vadd.f32 0.0, %v260
  %v262 = vpop.f32.mrb[0].mxu0
  %263 = vmatprep.mubr.f32.mxu0 %v16
  %264 = vmatmul.mubr.f32.gmra.mrb[0].mxu0 %v15
  %v265 = vpop.f32.mrb[0].mxu0
  %v266 = vadd.f32 0.0, %v265
  %v267 = vpop.f32.mrb[0].mxu0
  %268 = vmatprep.mubr.f32.mxu0 %v18
  %269 = vmatmul.mubr.f32.gmra.mrb[0].mxu0 %v17
  %v270 = vpop.f32.mrb[0].mxu0
  %v271 = vadd.f32 0.0, %v270
  %v272 = vpop.f32.mrb[0].mxu0
  %273 = vmatprep.mubr.f32.mxu0 %v20
  %274 = vmatmul.mubr.f32.gmra.mrb[0].mxu0 %v19
  %v275 = vpop.f32.mrb[0].mxu0
  %v276 = vadd.f32 0.0, %v275
  %v277 = vpop.f32.mrb[0].mxu0
  %278 = vmatprep.mubr.f32.mxu0 %v22
  %279 = vmatmul.mubr.f32.gmra.mrb[0].mxu0 %v21
  %v280 = vpop.f32.mrb[0].mxu0
  %v281 = vadd.f32 0.0, %v280
  %v282 = vpop.f32.mrb[0].mxu0
  %283 = vmatprep.mubr.f32.mxu0 %v24
  %284 = vmatmul.mubr.f32.gmra.mrb[0].mxu0 %v23
  %v285 = vpop.f32.mrb[0].mxu0
  %v286 = vadd.f32 0.0, %v285
  %v287 = vpop.f32.mrb[0].mxu0
  %288 = vmatprep.mubr.f32.mxu0 %v26
  %289 = vmatmul.mubr.f32.gmra.mrb[0].mxu0 %v25
  %v290 = vpop.f32.mrb[0].mxu0
  %v291 = vadd.f32 0.0, %v290
  %v292 = vpop.f32.mrb[0].mxu0
  %293 = vmatprep.mubr.f32.mxu0 %v28
  %294 = vmatmul.mubr.f32.gmra.mrb[0].mxu0 %v27
  %v295 = vpop.f32.mrb[0].mxu0
  %v296 = vadd.f32 0.0, %v295
  %v297 = vpop.f32.mrb[0].mxu0
  %298 = vmatprep.mubr.f32.mxu0 %v30
  %299 = vmatmul.mubr.f32.gmra.mrb[0].mxu0 %v29
  %v300 = vpop.f32.mrb[0].mxu0
  %v301 = vadd.f32 0.0, %v300
  %v302 = vpop.f32.mrb[0].mxu0
  %303 = vmatprep.mubr.f32.mxu0 %v32
  %304 = vmatmul.mubr.f32.gmra.mrb[0].mxu0 %v31
  %v305 = vpop.f32.mrb[0].mxu0
  %v306 = vadd.f32 0.0, %v305
  %v307 = vpop.f32.mrb[0].mxu0
  %308 = vmatprep.mubr.f32.mxu0 %v34
  %309 = vmatmul.mubr.f32.gmra.mrb[0].mxu0 %v33
  %v310 = vpop.f32.mrb[0].mxu0
  %v311 = vadd.f32 0.0, %v310
  %v312 = vpop.f32.mrb[0].mxu0
  %313 = vmatprep.mubr.f32.mxu0 %v36
  %314 = vmatmul.mubr.f32.gmra.mrb[0].mxu0 %v35
  %v315 = vpop.f32.mrb[0].mxu0
  %v316 = vadd.f32 0.0, %v315
  %v317 = vpop.f32.mrb[0].mxu0
  %318 = vmatprep.mubr.f32.mxu0 %v38
  %319 = vmatmul.mubr.f32.gmra.mrb[0].mxu0 %v37
  %v320 = vpop.f32.mrb[0].mxu0
  %v321 = vadd.f32 0.0, %v320
  %v322 = vpop.f32.mrb[0].mxu0
  %323 = vmatprep.mubr.f32.mxu0 %v40
  %324 = vmatmul.mubr.f32.gmra.mrb[0].mxu0 %v39
  %v325 = vpop.f32.mrb[0].mxu0
  %v326 = vadd.f32 0.0, %v325
  %v327 = vpop.f32.mrb[0].mxu0
  %328 = vmatprep.mubr.f32.mxu0 %v42
  %329 = vmatmul.mubr.f32.gmra.mrb[0].mxu0 %v41
  %v330 = vpop.f32.mrb[0].mxu0
  %v331 = vadd.f32 0.0, %v330
  %v332 = vpop.f32.mrb[0].mxu0
  %333 = vmatprep.mubr.f32.mxu0 %v44
  %334 = vmatmul.mubr.f32.gmra.mrb[0].mxu0 %v43
  %v335 = vpop.f32.mrb[0].mxu0
  %v336 = vadd.f32 0.0, %v335
  %v337 = vpop.f32.mrb[0].mxu0
  %338 = vmatprep.mubr.f32.mxu0 %v46
  %339 = vmatmul.mubr.f32.gmra.mrb[0].mxu0 %v45
  %v340 = vpop.f32.mrb[0].mxu0
  %v341 = vadd.f32 0.0, %v340
  %v342 = vpop.f32.mrb[0].mxu0
  %343 = vmatprep.mubr.f32.mxu0 %v48
  %344 = vmatmul.mubr.f32.gmra.mrb[0].mxu0 %v47
  %v345 = vpop.f32.mrb[0].mxu0
  %v346 = vadd.f32 0.0, %v345
  %v347 = vpop.f32.mrb[0].mxu0
  %348 = vmatprep.mubr.f32.mxu0 %v50
  %349 = vmatmul.mubr.f32.gmra.mrb[0].mxu0 %v49
  %v350 = vpop.f32.mrb[0].mxu0
  %v351 = vadd.f32 0.0, %v350
  %v352 = vpop.f32.mrb[0].mxu0
  %353 = vmatprep.mubr.f32.mxu0 %v52
  %354 = vmatmul.mubr.f32.gmra.mrb[0].mxu0 %v51
  %v355 = vpop.f32.mrb[0].mxu0
  %v356 = vadd.f32 0.0, %v355
  %v357 = vpop.f32.mrb[0].mxu0
  %358 = vmatprep.mubr.f32.mxu0 %v54
  %359 = vmatmul.mubr.f32.gmra.mrb[0].mxu0 %v53
  %v360 = vpop.f32.mrb[0].mxu0
  %v361 = vadd.f32 0.0, %v360
  %v362 = vpop.f32.mrb[0].mxu0
  %363 = vmatprep.mubr.f32.mxu0 %v56
  %364 = vmatmul.mubr.f32.gmra.mrb[0].mxu0 %v55
  %v365 = vpop.f32.mrb[0].mxu0
  %v366 = vadd.f32 0.0, %v365
  %v367 = vpop.f32.mrb[0].mxu0
  %368 = vmatprep.mubr.f32.mxu0 %v58
  %369 = vmatmul.mubr.f32.gmra.mrb[0].mxu0 %v57
  %v370 = vpop.f32.mrb[0].mxu0
  %v371 = vadd.f32 0.0, %v370
  %v372 = vpop.f32.mrb[0].mxu0
  %373 = vmatprep.mubr.f32.mxu0 %v60
  %374 = vmatmul.mubr.f32.gmra.mrb[0].mxu0 %v59
  %v375 = vpop.f32.mrb[0].mxu0
  %v376 = vadd.f32 0.0, %v375
  %v377 = vpop.f32.mrb[0].mxu0
  %378 = vmatprep.mubr.f32.mxu0 %v62
  %379 = vmatmul.mubr.f32.gmra.mrb[0].mxu0 %v61
  %v380 = vpop.f32.mrb[0].mxu0
  %v381 = vadd.f32 0.0, %v380
  %v382 = vpop.f32.mrb[0].mxu0
  %383 = vmatprep.mubr.f32.mxu0 %v64
  %384 = vmatmul.mubr.f32.gmra.mrb[0].mxu0 %v63
  %v385 = vpop.f32.mrb[0].mxu0
  %v386 = vadd.f32 0.0, %v385
  %v387 = vpop.f32.mrb[0].mxu0
  %388 = vmatprep.mubr.f32.mxu0 %v66
  %389 = vmatmul.mubr.f32.gmra.mrb[0].mxu0 %v65
  %v390 = vpop.f32.mrb[0].mxu0
  %v391 = vadd.f32 0.0, %v390
  %v392 = vpop.f32.mrb[0].mxu0
  %393 = vmatprep.mubr.f32.mxu0 %v68
  %394 = vmatmul.mubr.f32.gmra.mrb[0].mxu0 %v67
  %v395 = vpop.f32.mrb[0].mxu0
  %v396 = vadd.f32 0.0, %v395
  %v397 = vpop.f32.mrb[0].mxu0
  %398 = vmatprep.mubr.f32.mxu0 %v70
  %399 = vmatmul.mubr.f32.gmra.mrb[0].mxu0 %v69
  %v400 = vpop.f32.mrb[0].mxu0
  %v401 = vadd.f32 0.0, %v400
  %v402 = vpop.f32.mrb[0].mxu0
  %403 = vmatprep.mubr.f32.mxu0 %v72
  %404 = vmatmul.mubr.f32.gmra.mrb[0].mxu0 %v71
  %v405 = vpop.f32.mrb[0].mxu0
  %v406 = vadd.f32 0.0, %v405
  %v407 = vpop.f32.mrb[0].mxu0
  %408 = vmatprep.mubr.f32.mxu0 %v74
  %409 = vmatmul.mubr.f32.gmra.mrb[0].mxu0 %v73
  %v410 = vpop.f32.mrb[0].mxu0
  %v411 = vadd.f32 0.0, %v410
  %v412 = vpop.f32.mrb[0].mxu0
  %413 = vmatprep.mubr.f32.mxu0 %v76
  %414 = vmatmul.mubr.f32.gmra.mrb[0].mxu0 %v75
  %v415 = vpop.f32.mrb[0].mxu0
  %v416 = vadd.f32 0.0, %v415
  %v417 = vpop.f32.mrb[0].mxu0
  %418 = vmatprep.mubr.f32.mxu0 %v78
  %419 = vmatmul.mubr.f32.gmra.mrb[0].mxu0 %v77
  %v420 = vpop.f32.mrb[0].mxu0
  %v421 = vadd.f32 0.0, %v420
  %v422 = vpop.f32.mrb[0].mxu0
  %423 = vmatprep.mubr.f32.mxu0 %v80
  %424 = vmatmul.mubr.f32.gmra.mrb[0].mxu0 %v79
  %v425 = vpop.f32.mrb[0].mxu0
  %v426 = vadd.f32 0.0, %v425
  %v427 = vpop.f32.mrb[0].mxu0
  %428 = vmatprep.mubr.f32.mxu0 %v82
  %429 = vmatmul.mubr.f32.gmra.mrb[0].mxu0 %v81
  %v430 = vpop.f32.mrb[0].mxu0
  %v431 = vadd.f32 0.0, %v430
  %v432 = vpop.f32.mrb[0].mxu0
  %433 = vmatprep.mubr.f32.mxu0 %v84
  %434 = vmatmul.mubr.f32.gmra.mrb[0].mxu0 %v83
  %v435 = vpop.f32.mrb[0].mxu0
  %v436 = vadd.f32 0.0, %v435
  %v437 = vpop.f32.mrb[0].mxu0
  %438 = vmatprep.mubr.f32.mxu0 %v86
  %439 = vmatmul.mubr.f32.gmra.mrb[0].mxu0 %v85
  %v440 = vpop.f32.mrb[0].mxu0
  %v441 = vadd.f32 0.0, %v440
  %v442 = vpop.f32.mrb[0].mxu0
  %443 = vmatprep.mubr.f32.mxu0 %v88
  %444 = vmatmul.mubr.f32.gmra.mrb[0].mxu0 %v87
  %v445 = vpop.f32.mrb[0].mxu0
  %v446 = vadd.f32 0.0, %v445
  %v447 = vpop.f32.mrb[0].mxu0
  %448 = vmatprep.mubr.f32.mxu0 %v90
  %449 = vmatmul.mubr.f32.gmra.mrb[0].mxu0 %v89
  %v450 = vpop.f32.mrb[0].mxu0
  %v451 = vadd.f32 0.0, %v450
  %v452 = vpop.f32.mrb[0].mxu0
  %453 = vmatprep.mubr.f32.mxu0 %v92
  %454 = vmatmul.mubr.f32.gmra.mrb[0].mxu0 %v91
  %v455 = vpop.f32.mrb[0].mxu0
  %v456 = vadd.f32 0.0, %v455
  %v457 = vpop.f32.mrb[0].mxu0
  %458 = vmatprep.mubr.f32.mxu0 %v94
  %459 = vmatmul.mubr.f32.gmra.mrb[0].mxu0 %v93
  %v460 = vpop.f32.mrb[0].mxu0
  %v461 = vadd.f32 0.0, %v460
  %v462 = vpop.f32.mrb[0].mxu0
  %463 = vmatprep.mubr.f32.mxu0 %v96
  %464 = vmatmul.mubr.f32.gmra.mrb[0].mxu0 %v95
  %v465 = vpop.f32.mrb[0].mxu0
  %v466 = vadd.f32 0.0, %v465
  %v467 = vpop.f32.mrb[0].mxu0
  %468 = vmatprep.mubr.f32.mxu0 %v98
  %469 = vmatmul.mubr.f32.gmra.mrb[0].mxu0 %v97
  %v470 = vpop.f32.mrb[0].mxu0
  %v471 = vadd.f32 0.0, %v470
  %v472 = vpop.f32.mrb[0].mxu0
  %473 = vmatprep.mubr.f32.mxu0 %v100
  %474 = vmatmul.mubr.f32.gmra.mrb[0].mxu0 %v99
  %v475 = vpop.f32.mrb[0].mxu0
  %v476 = vadd.f32 0.0, %v475
  %v477 = vpop.f32.mrb[0].mxu0
  %478 = vmatprep.mubr.f32.mxu0 %v102
  %479 = vmatmul.mubr.f32.gmra.mrb[0].mxu0 %v101
  %v480 = vpop.f32.mrb[0].mxu0
  %v481 = vadd.f32 0.0, %v480
  %v482 = vpop.f32.mrb[0].mxu0
  %483 = vmatprep.mubr.f32.mxu0 %v104
  %484 = vmatmul.mubr.f32.gmra.mrb[0].mxu0 %v103
  %v485 = vpop.f32.mrb[0].mxu0
  %v486 = vadd.f32 0.0, %v485
  %v487 = vpop.f32.mrb[0].mxu0
  %488 = vmatprep.mubr.f32.mxu0 %v106
  %489 = vmatmul.mubr.f32.gmra.mrb[0].mxu0 %v105
  %v490 = vpop.f32.mrb[0].mxu0
  %v491 = vadd.f32 0.0, %v490
  %v492 = vpop.f32.mrb[0].mxu0
  %493 = vmatprep.mubr.f32.mxu0 %v108
  %494 = vmatmul.mubr.f32.gmra.mrb[0].mxu0 %v107
  %v495 = vpop.f32.mrb[0].mxu0
  %v496 = vadd.f32 0.0, %v495
  %v497 = vpop.f32.mrb[0].mxu0
  %498 = vmatprep.mubr.f32.mxu0 %v110
  %499 = vmatmul.mubr.f32.gmra.mrb[0].mxu0 %v109
  %v500 = vpop.f32.mrb[0].mxu0
  %v501 = vadd.f32 0.0, %v500
  %v502 = vpop.f32.mrb[0].mxu0
  %503 = vmatprep.mubr.f32.mxu0 %v112
  %504 = vmatmul.mubr.f32.gmra.mrb[0].mxu0 %v111
  %v505 = vpop.f32.mrb[0].mxu0
  %v506 = vadd.f32 0.0, %v505
  %v507 = vpop.f32.mrb[0].mxu0
  %508 = vmatprep.mubr.f32.mxu0 %v114
  %509 = vmatmul.mubr.f32.gmra.mrb[0].mxu0 %v113
  %v510 = vpop.f32.mrb[0].mxu0
  %v511 = vadd.f32 0.0, %v510
  %v512 = vpop.f32.mrb[0].mxu0
  %513 = vmatprep.mubr.f32.mxu0 %v116
  %514 = vmatmul.mubr.f32.gmra.mrb[0].mxu0 %v115
  %v515 = vpop.f32.mrb[0].mxu0
  %v516 = vadd.f32 0.0, %v515
  %v517 = vpop.f32.mrb[0].mxu0
  %518 = vmatprep.mubr.f32.mxu0 %v118
  %519 = vmatmul.mubr.f32.gmra.mrb[0].mxu0 %v117
  %v520 = vpop.f32.mrb[0].mxu0
  %v521 = vadd.f32 0.0, %v520
  %v522 = vpop.f32.mrb[0].mxu0
  %523 = vmatprep.mubr.f32.mxu0 %v120
  %524 = vmatmul.mubr.f32.gmra.mrb[0].mxu0 %v119
  %v525 = vpop.f32.mrb[0].mxu0
  %v526 = vadd.f32 0.0, %v525
  %v527 = vpop.f32.mrb[0].mxu0
  %528 = vmatprep.mubr.f32.mxu0 %v122
  %529 = vmatmul.mubr.f32.gmra.mrb[0].mxu0 %v121
  %v530 = vpop.f32.mrb[0].mxu0
  %v531 = vadd.f32 0.0, %v530
  %v532 = vpop.f32.mrb[0].mxu0
  %533 = vmatprep.mubr.f32.mxu0 %v124
  %534 = vmatmul.mubr.f32.gmra.mrb[0].mxu0 %v123
  %v535 = vpop.f32.mrb[0].mxu0
  %v536 = vadd.f32 0.0, %v535
  %v537 = vpop.f32.mrb[0].mxu0
  %538 = vmatprep.mubr.f32.mxu0 %v126
  %539 = vmatmul.mubr.f32.gmra.mrb[0].mxu0 %v125
  %v540 = vpop.f32.mrb[0].mxu0
  %v541 = vadd.f32 0.0, %v540
  %v542 = vpop.f32.mrb[0].mxu0
  %543 = vmatprep.mubr.f32.mxu0 %v128
  %544 = vmatmul.mubr.f32.gmra.mrb[0].mxu0 %v127
  %v545 = vpop.f32.mrb[0].mxu0
  %v546 = vadd.f32 0.0, %v545
  %v547 = vpop.f32.mrb[0].mxu0
  %548 = vmatprep.mubr.f32.mxu0 %v130
  %549 = vmatmul.mubr.f32.gmra.mrb[0].mxu0 %v129
  %v550 = vpop.f32.mrb[0].mxu0
  %v551 = vadd.f32 0.0, %v550
  %v552 = vpop.f32.mrb[0].mxu0
  %553 = vmatprep.mubr.f32.mxu0 %v132
  %554 = vmatmul.mubr.f32.gmra.mrb[0].mxu0 %v131
  %v555 = vpop.f32.mrb[0].mxu0
  %v556 = vadd.f32 0.0, %v555
  %v557 = vpop.f32.mrb[0].mxu0
  %558 = vmatprep.mubr.f32.mxu0 %v134
  %559 = vmatmul.mubr.f32.gmra.mrb[0].mxu0 %v133
  %v560 = vpop.f32.mrb[0].mxu0
  %v561 = vadd.f32 0.0, %v560
  %v562 = vpop.f32.mrb[0].mxu0
  %563 = vmatprep.mubr.f32.mxu0 %v136
  %564 = vmatmul.mubr.f32.gmra.mrb[0].mxu0 %v135
  %v565 = vpop.f32.mrb[0].mxu0
  %v566 = vadd.f32 0.0, %v565
  %v567 = vpop.f32.mrb[0].mxu0
  %568 = vmatprep.mubr.f32.mxu0 %v138
  %569 = vmatmul.mubr.f32.gmra.mrb[0].mxu0 %v137
  %v570 = vpop.f32.mrb[0].mxu0
  %v571 = vadd.f32 0.0, %v570
  %v572 = vpop.f32.mrb[0].mxu0
  %573 = vmatprep.mubr.f32.mxu0 %v140
  %574 = vmatmul.mubr.f32.gmra.mrb[0].mxu0 %v139
  %v575 = vpop.f32.mrb[0].mxu0
  %v576 = vadd.f32 0.0, %v575
  %v577 = vpop.f32.mrb[0].mxu0
  %578 = vmatprep.mubr.f32.mxu0 %v142
  %579 = vmatmul.mubr.f32.gmra.mrb[0].mxu0 %v141
  %v580 = vpop.f32.mrb[0].mxu0
  %v581 = vadd.f32 0.0, %v580
  %v582 = vpop.f32.mrb[0].mxu0
  %583 = vmatprep.mubr.f32.mxu0 %v144
  %584 = vmatmul.mubr.f32.gmra.mrb[0].mxu0 %v143
  %v585 = vpop.f32.mrb[0].mxu0
  %v586 = vadd.f32 0.0, %v585
  %v587 = vpop.f32.mrb[0].mxu0
  %588 = vmatprep.mubr.f32.mxu0 %v146
  %589 = vmatmul.mubr.f32.gmra.mrb[0].mxu0 %v145
  %v590 = vpop.f32.mrb[0].mxu0
  %v591 = vadd.f32 0.0, %v590
  %v592 = vpop.f32.mrb[0].mxu0
  %593 = vmatprep.mubr.f32.mxu0 %v148
  %594 = vmatmul.mubr.f32.gmra.mrb[0].mxu0 %v147
  %v595 = vpop.f32.mrb[0].mxu0
  %v596 = vadd.f32 0.0, %v595
  %v597 = vpop.f32.mrb[0].mxu0
  %598 = vmatprep.mubr.f32.mxu0 %v150
  %599 = vmatmul.mubr.f32.gmra.mrb[0].mxu0 %v149
  %v600 = vpop.f32.mrb[0].mxu0
  %v601 = vadd.f32 0.0, %v600
  %v602 = vpop.f32.mrb[0].mxu0
  %603 = vmatprep.mubr.f32.mxu0 %v152
  %604 = vmatmul.mubr.f32.gmra.mrb[0].mxu0 %v151
  %v605 = vpop.f32.mrb[0].mxu0
  %v606 = vadd.f32 0.0, %v605
  %v607 = vpop.f32.mrb[0].mxu0
  %608 = vmatprep.mubr.f32.mxu0 %v154
  %609 = vmatmul.mubr.f32.gmra.mrb[0].mxu0 %v153
  %v610 = vpop.f32.mrb[0].mxu0
  %v611 = vadd.f32 0.0, %v610
  %v612 = vpop.f32.mrb[0].mxu0
  %613 = vmatprep.mubr.f32.mxu0 %v156
  %614 = vmatmul.mubr.f32.gmra.mrb[0].mxu0 %v155
  %v615 = vpop.f32.mrb[0].mxu0
  %v616 = vadd.f32 0.0, %v615
  %v617 = vpop.f32.mrb[0].mxu0
  %618 = vdwg.mxu0
  %v619 = vmax.f32 %v256, 0.0
  %v620 = vmax.f32 %v261, 0.0
  %v621 = vmax.f32 %v266, 0.0
  %v622 = vmax.f32 %v271, 0.0
  %v623 = vmax.f32 %v276, 0.0
  %v624 = vmax.f32 %v281, 0.0
  %v625 = vmax.f32 %v286, 0.0
  %v626 = vmax.f32 %v291, 0.0
  %v627 = vmax.f32 %v296, 0.0
  %v628 = vmax.f32 %v301, 0.0
  %v629 = vmax.f32 %v306, 0.0
  %v630 = vmax.f32 %v311, 0.0
  %v631 = vmax.f32 %v316, 0.0
  %v632 = vmax.f32 %v321, 0.0
  %v633 = vmax.f32 %v326, 0.0
  %v634 = vmax.f32 %v331, 0.0
  %v635 = vmax.f32 %v336, 0.0
  %v636 = vmax.f32 %v341, 0.0
  %v637 = vmax.f32 %v346, 0.0
  %v638 = vmax.f32 %v351, 0.0
  %v639 = vmax.f32 %v356, 0.0
  %v640 = vmax.f32 %v361, 0.0
  %v641 = vmax.f32 %v366, 0.0
  %v642 = vmax.f32 %v371, 0.0
  %v643 = vmax.f32 %v376, 0.0
  %v644 = vmax.f32 %v381, 0.0
  %v645 = vmax.f32 %v386, 0.0
  %v646 = vmax.f32 %v391, 0.0
  %v647 = vmax.f32 %v396, 0.0
  %v648 = vmax.f32 %v401, 0.0
  %v649 = vmax.f32 %v406, 0.0
  %v650 = vmax.f32 %v411, 0.0
  %v651 = vmax.f32 %v416, 0.0
  %v652 = vmax.f32 %v421, 0.0
  %v653 = vmax.f32 %v426, 0.0
  %v654 = vmax.f32 %v431, 0.0
  %v655 = vmax.f32 %v436, 0.0
  %v656 = vmax.f32 %v441, 0.0
  %v657 = vmax.f32 %v446, 0.0
  %v658 = vmax.f32 %v451, 0.0
  %v659 = vmax.f32 %v456, 0.0
  %v660 = vmax.f32 %v461, 0.0
  %v661 = vmax.f32 %v466, 0.0
  %v662 = vmax.f32 %v471, 0.0
  %v663 = vmax.f32 %v476, 0.0
  %v664 = vmax.f32 %v481, 0.0
  %v665 = vmax.f32 %v486, 0.0
  %v666 = vmax.f32 %v491, 0.0
  %v667 = vmax.f32 %v496, 0.0
  %v668 = vmax.f32 %v501, 0.0
  %v669 = vmax.f32 %v506, 0.0
  %v670 = vmax.f32 %v511, 0.0
  %v671 = vmax.f32 %v516, 0.0
  %v672 = vmax.f32 %v521, 0.0
  %v673 = vmax.f32 %v526, 0.0
  %v674 = vmax.f32 %v531, 0.0
  %v675 = vmax.f32 %v536, 0.0
  %v676 = vmax.f32 %v541, 0.0
  %v677 = vmax.f32 %v546, 0.0
  %v678 = vmax.f32 %v551, 0.0
  %v679 = vmax.f32 %v556, 0.0
  %v680 = vmax.f32 %v561, 0.0
  %v681 = vmax.f32 %v566, 0.0
  %v682 = vmax.f32 %v571, 0.0
  %v683 = vmax.f32 %v576, 0.0
  %v684 = vmax.f32 %v581, 0.0
  %v685 = vmax.f32 %v586, 0.0
  %v686 = vmax.f32 %v591, 0.0
  %v687 = vmax.f32 %v596, 0.0
  %v688 = vmax.f32 %v601, 0.0
  %v689 = vmax.f32 %v606, 0.0
  %v690 = vmax.f32 %v611, 0.0
  %v691 = vmax.f32 %v616, 0.0
  %692 = vst [vmem:[%s2] sm:$0xff] %v619
  %693 = vst [vmem:[%s2 + $0x8] sm:$0xff] %v620
  %694 = vst [vmem:[%s2 + $0x10] sm:$0xff] %v621
  %695 = vst [vmem:[%s2 + $0x18] sm:$0xff] %v622
  %696 = vst [vmem:[%s2 + $0x20] sm:$0xff] %v623
  %697 = vst [vmem:[%s2 + $0x28] sm:$0xff] %v624
  %698 = vst [vmem:[%s2 + $0x30] sm:$0xff] %v625
  %699 = vst [vmem:[%s2 + $0x38] sm:$0xff] %v626
  %700 = vst [vmem:[%s2 + $0x40] sm:$0xff] %v627
  %701 = vst [vmem:[%s2 + $0x48] sm:$0xff] %v628
  %702 = vst [vmem:[%s2 + $0x50] sm:$0xff] %v629
  %703 = vst [vmem:[%s2 + $0x58] sm:$0xff] %v630
  %704 = vst [vmem:[%s2 + $0x60] sm:$0xff] %v631
  %705 = vst [vmem:[%s2 + $0x68] sm:$0xff] %v632
  %706 = vst [vmem:[%s2 + $0x70] sm:$0xff] %v633
  %707 = vst [vmem:[%s2 + $0x78] sm:$0xff] %v634
  %708 = vst [vmem:[%s2 + $0x80] sm:$0xff] %v635
  %709 = vst [vmem:[%s2 + $0x88] sm:$0xff] %v636
  %710 = vst [vmem:[%s2 + $0x90] sm:$0xff] %v637
  %711 = vst [vmem:[%s2 + $0x98] sm:$0xff] %v638
  %712 = vst [vmem:[%s2 + $0xa0] sm:$0xff] %v639
  %713 = vst [vmem:[%s2 + $0xa8] sm:$0xff] %v640
  %714 = vst [vmem:[%s2 + $0xb0] sm:$0xff] %v641
  %715 = vst [vmem:[%s2 + $0xb8] sm:$0xff] %v642
  %716 = vst [vmem:[%s2 + $0xc0] sm:$0xff] %v643
  %717 = vst [vmem:[%s2 + $0xc8] sm:$0xff] %v644
  %718 = vst [vmem:[%s2 + $0xd0] sm:$0xff] %v645
  %719 = vst [vmem:[%s2 + $0xd8] sm:$0xff] %v646
  %720 = vst [vmem:[%s2 + $0xe0] sm:$0xff] %v647
  %721 = vst [vmem:[%s2 + $0xe8] sm:$0xff] %v648
  %722 = vst [vmem:[%s2 + $0xf0] sm:$0xff] %v649
  %723 = vst [vmem:[%s2 + $0xf8] sm:$0xff] %v650
  %724 = vst [vmem:[%s2 + $0x100] sm:$0xff] %v651
  %725 = vst [vmem:[%s2 + $0x108] sm:$0xff] %v652
  %726 = vst [vmem:[%s2 + $0x110] sm:$0xff] %v653
  %727 = vst [vmem:[%s2 + $0x118] sm:$0xff] %v654
  %728 = vst [vmem:[%s2 + $0x120] sm:$0xff] %v655
  %729 = vst [vmem:[%s2 + $0x128] sm:$0xff] %v656
  %730 = vst [vmem:[%s2 + $0x130] sm:$0xff] %v657
  %731 = vst [vmem:[%s2 + $0x138] sm:$0xff] %v658
  %732 = vst [vmem:[%s2 + $0x140] sm:$0xff] %v659
  %733 = vst [vmem:[%s2 + $0x148] sm:$0xff] %v660
  %734 = vst [vmem:[%s2 + $0x150] sm:$0xff] %v661
  %735 = vst [vmem:[%s2 + $0x158] sm:$0xff] %v662
  %736 = vst [vmem:[%s2 + $0x160] sm:$0xff] %v663
  %737 = vst [vmem:[%s2 + $0x168] sm:$0xff] %v664
  %738 = vst [vmem:[%s2 + $0x170] sm:$0xff] %v665
  %739 = vst [vmem:[%s2 + $0x178] sm:$0xff] %v666
  %740 = vst [vmem:[%s2 + $0x180] sm:$0xff] %v667
  %741 = vst [vmem:[%s2 + $0x188] sm:$0xff] %v668
  %742 = vst [vmem:[%s2 + $0x190] sm:$0xff] %v669
  %743 = vst [vmem:[%s2 + $0x198] sm:$0xff] %v670
  %744 = vst [vmem:[%s2 + $0x1a0] sm:$0xff] %v671
  %745 = vst [vmem:[%s2 + $0x1a8] sm:$0xff] %v672
  %746 = vst [vmem:[%s2 + $0x1b0] sm:$0xff] %v673
  %747 = vst [vmem:[%s2 + $0x1b8] sm:$0xff] %v674
  %748 = vst [vmem:[%s2 + $0x1c0] sm:$0xff] %v675
  %749 = vst [vmem:[%s2 + $0x1c8] sm:$0xff] %v676
  %750 = vst [vmem:[%s2 + $0x1d0] sm:$0xff] %v677
  %751 = vst [vmem:[%s2 + $0x1d8] sm:$0xff] %v678
  %752 = vst [vmem:[%s2 + $0x1e0] sm:$0xff] %v679
  %753 = vst [vmem:[%s2 + $0x1e8] sm:$0xff] %v680
  %754 = vst [vmem:[%s2 + $0x1f0] sm:$0xff] %v681
  %755 = vst [vmem:[%s2 + $0x1f8] sm:$0xff] %v682
  %756 = vst [vmem:[%s2 + $0x200] sm:$0xff] %v683
  %757 = vst [vmem:[%s2 + $0x208] sm:$0xff] %v684
  %758 = vst [vmem:[%s2 + $0x210] sm:$0xff] %v685
  %759 = vst [vmem:[%s2 + $0x218] sm:$0xff] %v686
  %760 = vst [vmem:[%s2 + $0x220] sm:$0xff] %v687
  %761 = vst [vmem:[%s2 + $0x228] sm:$0xff] %v688
  %762 = vst [vmem:[%s2 + $0x230] sm:$0xff] %v689
  %763 = vst [vmem:[%s2 + $0x238] sm:$0xff] %v690
  %764 = vst [vmem:[%s2 + $0x240] sm:$0xff] %v691
  // Predicated region
  $region10: #{net_forward.5} parent=0 // pred_check
    _
  $region11: #{net_forward.5} parent=0 // pred_check_branch
    %766 = sbr.rel (0) target = $region13
  $region12: #{net_forward.5} parent=0 // pred_region
    _
  $region13: #{net_forward.5} parent=0 // pred_fallthru
    _
  // Predicated region
  $region14: #{net_forward.5} parent=0 // pred_check
    _
  $region15: #{net_forward.5} parent=0 // pred_check_branch
    %768 = sbr.rel (0) target = $region17
  $region16: #{net_forward.5} parent=0 // pred_region
    _
  $region17: #{net_forward.5} parent=0 // pred_fallthru
    _

// kernel: net_forward.6
$region0: #{net_forward.6}
  #allocation0 [shape = 'u32[]', space=smem, size = 0x4, offset = 0x4, fixed_abs, tag = 'smem constant byte address 0x4 - core index']
  #allocation1 [shape = 'u32[144,128]{1,0:T(1,128)}', space=vmem, size = 0x12000, scoped, tag = 'internal scratch']
  %s0 = inlined_call_operand.vmem [shape: f32[168,512], index: 0, kind: input, shape index: {}]
  %s1 = inlined_call_operand.vmem [shape: f32[512,256], index: 1, kind: input, shape index: {}]
  %s2 = inlined_call_operand.vmem [shape: f32[168,256], index: 2, kind: output, shape index: {}]
  %s3 = sld [smem:[#allocation0]]
  $region18: #{net_forward.6} parent=0
    _
  %s5 = ssub.s32 1, %s3
  %s6 = scalar_select 0, %s5, %s3
  // Predicated region
  $region2: #{net_forward.6} parent=0 // pred_check
    _
  $region3: #{net_forward.6} parent=0 // pred_check_branch
    %8 = sbr.rel (0) target = $region5
  $region4: #{net_forward.6} parent=0 // pred_region
    _
  $region5: #{net_forward.6} parent=0 // pred_fallthru
    _
  // Predicated region
  $region6: #{net_forward.6} parent=0 // pred_check
    _
  $region7: #{net_forward.6} parent=0 // pred_check_branch
    %10 = sbr.rel (0) target = $region9
  $region8: #{net_forward.6} parent=0 // pred_region
    _
  $region9: #{net_forward.6} parent=0 // pred_fallthru
    _
  %v11 = vld [vmem:[%s0] sm:$0xff]
  %v12 = vld [vmem:[%s0 + $0x8] sm:$0xff]
  %v13 = vld [vmem:[%s0 + $0x10] sm:$0xff]
  %v14 = vld [vmem:[%s0 + $0x18] sm:$0xff]
  %v15 = vld [vmem:[%s0 + $0x20] sm:$0xff]
  %v16 = vld [vmem:[%s0 + $0x28] sm:$0xff]
  %v17 = vld [vmem:[%s0 + $0x30] sm:$0xff]
  %v18 = vld [vmem:[%s0 + $0x38] sm:$0xff]
  %v19 = vld [vmem:[%s0 + $0x40] sm:$0xff]
  %v20 = vld [vmem:[%s0 + $0x48] sm:$0xff]
  %v21 = vld [vmem:[%s0 + $0x50] sm:$0xff]
  %v22 = vld [vmem:[%s0 + $0x58] sm:$0xff]
  %v23 = vld [vmem:[%s0 + $0x60] sm:$0xff]
  %v24 = vld [vmem:[%s0 + $0x68] sm:$0xff]
  %v25 = vld [vmem:[%s0 + $0x70] sm:$0xff]
  %v26 = vld [vmem:[%s0 + $0x78] sm:$0xff]
  %v27 = vld [vmem:[%s0 + $0x80] sm:$0xff]
  %v28 = vld [vmem:[%s0 + $0x88] sm:$0xff]
  %v29 = vld [vmem:[%s0 + $0x90] sm:$0xff]
  %v30 = vld [vmem:[%s0 + $0x98] sm:$0xff]
  %v31 = vld [vmem:[%s0 + $0xa0] sm:$0xff]
  %v32 = vld [vmem:[%s0 + $0xa8] sm:$0xff]
  %v33 = vld [vmem:[%s0 + $0xb0] sm:$0xff]
  %v34 = vld [vmem:[%s0 + $0xb8] sm:$0xff]
  %v35 = vld [vmem:[%s0 + $0xc0] sm:$0xff]
  %v36 = vld [vmem:[%s0 + $0xc8] sm:$0xff]
  %v37 = vld [vmem:[%s0 + $0xd0] sm:$0xff]
  %v38 = vld [vmem:[%s0 + $0xd8] sm:$0xff]
  %v39 = vld [vmem:[%s0 + $0xe0] sm:$0xff]
  %v40 = vld [vmem:[%s0 + $0xe8] sm:$0xff]
  %v41 = vld [vmem:[%s0 + $0xf0] sm:$0xff]
  %v42 = vld [vmem:[%s0 + $0xf8] sm:$0xff]
  %v43 = vld [vmem:[%s0 + $0x100] sm:$0xff]
  %v44 = vld [vmem:[%s0 + $0x108] sm:$0xff]
  %v45 = vld [vmem:[%s0 + $0x110] sm:$0xff]
  %v46 = vld [vmem:[%s0 + $0x118] sm:$0xff]
  %v47 = vld [vmem:[%s0 + $0x120] sm:$0xff]
  %v48 = vld [vmem:[%s0 + $0x128] sm:$0xff]
  %v49 = vld [vmem:[%s0 + $0x130] sm:$0xff]
  %v50 = vld [vmem:[%s0 + $0x138] sm:$0xff]
  %v51 = vld [vmem:[%s0 + $0x140] sm:$0xff]
  %v52 = vld [vmem:[%s0 + $0x148] sm:$0xff]
  %v53 = vld [vmem:[%s0 + $0x150] sm:$0xff]
  %v54 = vld [vmem:[%s0 + $0x158] sm:$0xff]
  %v55 = vld [vmem:[%s0 + $0x160] sm:$0xff]
  %v56 = vld [vmem:[%s0 + $0x168] sm:$0xff]
  %v57 = vld [vmem:[%s0 + $0x170] sm:$0xff]
  %v58 = vld [vmem:[%s0 + $0x178] sm:$0xff]
  %v59 = vld [vmem:[%s0 + $0x180] sm:$0xff]
  %v60 = vld [vmem:[%s0 + $0x188] sm:$0xff]
  %v61 = vld [vmem:[%s0 + $0x190] sm:$0xff]
  %v62 = vld [vmem:[%s0 + $0x198] sm:$0xff]
  %v63 = vld [vmem:[%s0 + $0x1a0] sm:$0xff]
  %v64 = vld [vmem:[%s0 + $0x1a8] sm:$0xff]
  %v65 = vld [vmem:[%s0 + $0x1b0] sm:$0xff]
  %v66 = vld [vmem:[%s0 + $0x1b8] sm:$0xff]
  %v67 = vld [vmem:[%s0 + $0x1c0] sm:$0xff]
  %v68 = vld [vmem:[%s0 + $0x1c8] sm:$0xff]
  %v69 = vld [vmem:[%s0 + $0x1d0] sm:$0xff]
  %v70 = vld [vmem:[%s0 + $0x1d8] sm:$0xff]
  %v71 = vld [vmem:[%s0 + $0x1e0] sm:$0xff]
  %v72 = vld [vmem:[%s0 + $0x1e8] sm:$0xff]
  %v73 = vld [vmem:[%s0 + $0x1f0] sm:$0xff]
  %v74 = vld [vmem:[%s0 + $0x1f8] sm:$0xff]
  %v75 = vld [vmem:[%s0 + $0x200] sm:$0xff]
  %v76 = vld [vmem:[%s0 + $0x208] sm:$0xff]
  %v77 = vld [vmem:[%s0 + $0x210] sm:$0xff]
  %v78 = vld [vmem:[%s0 + $0x218] sm:$0xff]
  %v79 = vld [vmem:[%s0 + $0x220] sm:$0xff]
  %v80 = vld [vmem:[%s0 + $0x228] sm:$0xff]
  %v81 = vld [vmem:[%s0 + $0x230] sm:$0xff]
  %v82 = vld [vmem:[%s0 + $0x238] sm:$0xff]
  %v83 = vld [vmem:[%s0 + $0x240] sm:$0xff]
  %v84 = vld [vmem:[%s0 + $0x248] sm:$0xff]
  %v85 = vld [vmem:[%s0 + $0x250] sm:$0xff]
  %v86 = vld [vmem:[%s0 + $0x258] sm:$0xff]
  %v87 = vld [vmem:[%s0 + $0x260] sm:$0xff]
  %v88 = vld [vmem:[%s0 + $0x268] sm:$0xff]
  %v89 = vld [vmem:[%s0 + $0x270] sm:$0xff]
  %v90 = vld [vmem:[%s0 + $0x278] sm:$0xff]
  %v91 = vld [vmem:[%s0 + $0x280] sm:$0xff]
  %v92 = vld [vmem:[%s0 + $0x288] sm:$0xff]
  %v93 = vld [vmem:[%s0 + $0x290] sm:$0xff]
  %v94 = vld [vmem:[%s0 + $0x298] sm:$0xff]
  %v95 = vld [vmem:[%s1] sm:$0xff]
  %v96 = vld [vmem:[%s1 + $0x8] sm:$0xff]
  %v97 = vld [vmem:[%s1 + $0x10] sm:$0xff]
  %v98 = vld [vmem:[%s1 + $0x18] sm:$0xff]
  %v99 = vld [vmem:[%s1 + $0x20] sm:$0xff]
  %v100 = vld [vmem:[%s1 + $0x28] sm:$0xff]
  %v101 = vld [vmem:[%s1 + $0x30] sm:$0xff]
  %v102 = vld [vmem:[%s1 + $0x38] sm:$0xff]
  %v103 = vld [vmem:[%s1 + $0x40] sm:$0xff]
  %v104 = vld [vmem:[%s1 + $0x48] sm:$0xff]
  %v105 = vld [vmem:[%s1 + $0x50] sm:$0xff]
  %v106 = vld [vmem:[%s1 + $0x58] sm:$0xff]
  %v107 = vld [vmem:[%s1 + $0x60] sm:$0xff]
  %v108 = vld [vmem:[%s1 + $0x68] sm:$0xff]
  %v109 = vld [vmem:[%s1 + $0x70] sm:$0xff]
  %v110 = vld [vmem:[%s1 + $0x78] sm:$0xff]
  %v111 = vld [vmem:[%s1 + $0x80] sm:$0xff]
  %v112 = vld [vmem:[%s1 + $0x88] sm:$0xff]
  %v113 = vld [vmem:[%s1 + $0x90] sm:$0xff]
  %v114 = vld [vmem:[%s1 + $0x98] sm:$0xff]
  %v115 = vld [vmem:[%s1 + $0xa0] sm:$0xff]
  %v116 = vld [vmem:[%s1 + $0xa8] sm:$0xff]
  %v117 = vld [vmem:[%s1 + $0xb0] sm:$0xff]
  %v118 = vld [vmem:[%s1 + $0xb8] sm:$0xff]
  %v119 = vld [vmem:[%s1 + $0xc0] sm:$0xff]
  %v120 = vld [vmem:[%s1 + $0xc8] sm:$0xff]
  %v121 = vld [vmem:[%s1 + $0xd0] sm:$0xff]
  %v122 = vld [vmem:[%s1 + $0xd8] sm:$0xff]
  %v123 = vld [vmem:[%s1 + $0xe0] sm:$0xff]
  %v124 = vld [vmem:[%s1 + $0xe8] sm:$0xff]
  %v125 = vld [vmem:[%s1 + $0xf0] sm:$0xff]
  %v126 = vld [vmem:[%s1 + $0xf8] sm:$0xff]
  %v127 = vld [vmem:[%s1 + $0x100] sm:$0xff]
  %v128 = vld [vmem:[%s1 + $0x108] sm:$0xff]
  %v129 = vld [vmem:[%s1 + $0x110] sm:$0xff]
  %v130 = vld [vmem:[%s1 + $0x118] sm:$0xff]
  %v131 = vld [vmem:[%s1 + $0x120] sm:$0xff]
  %v132 = vld [vmem:[%s1 + $0x128] sm:$0xff]
  %v133 = vld [vmem:[%s1 + $0x130] sm:$0xff]
  %v134 = vld [vmem:[%s1 + $0x138] sm:$0xff]
  %v135 = vld [vmem:[%s1 + $0x140] sm:$0xff]
  %v136 = vld [vmem:[%s1 + $0x148] sm:$0xff]
  %v137 = vld [vmem:[%s1 + $0x150] sm:$0xff]
  %v138 = vld [vmem:[%s1 + $0x158] sm:$0xff]
  %v139 = vld [vmem:[%s1 + $0x160] sm:$0xff]
  %v140 = vld [vmem:[%s1 + $0x168] sm:$0xff]
  %v141 = vld [vmem:[%s1 + $0x170] sm:$0xff]
  %v142 = vld [vmem:[%s1 + $0x178] sm:$0xff]
  %v143 = vld [vmem:[%s1 + $0x180] sm:$0xff]
  %v144 = vld [vmem:[%s1 + $0x188] sm:$0xff]
  %v145 = vld [vmem:[%s1 + $0x190] sm:$0xff]
  %v146 = vld [vmem:[%s1 + $0x198] sm:$0xff]
  %v147 = vld [vmem:[%s1 + $0x1a0] sm:$0xff]
  %v148 = vld [vmem:[%s1 + $0x1a8] sm:$0xff]
  %v149 = vld [vmem:[%s1 + $0x1b0] sm:$0xff]
  %v150 = vld [vmem:[%s1 + $0x1b8] sm:$0xff]
  %v151 = vld [vmem:[%s1 + $0x1c0] sm:$0xff]
  %v152 = vld [vmem:[%s1 + $0x1c8] sm:$0xff]
  %v153 = vld [vmem:[%s1 + $0x1d0] sm:$0xff]
  %v154 = vld [vmem:[%s1 + $0x1d8] sm:$0xff]
  %v155 = vld [vmem:[%s1 + $0x1e0] sm:$0xff]
  %v156 = vld [vmem:[%s1 + $0x1e8] sm:$0xff]
  %v157 = vld [vmem:[%s1 + $0x1f0] sm:$0xff]
  %v158 = vld [vmem:[%s1 + $0x1f8] sm:$0xff]
  %v159 = vld [vmem:[%s1 + $0x200] sm:$0xff]
  %v160 = vld [vmem:[%s1 + $0x208] sm:$0xff]
  %v161 = vld [vmem:[%s1 + $0x210] sm:$0xff]
  %v162 = vld [vmem:[%s1 + $0x218] sm:$0xff]
  %v163 = vld [vmem:[%s1 + $0x220] sm:$0xff]
  %v164 = vld [vmem:[%s1 + $0x228] sm:$0xff]
  %v165 = vld [vmem:[%s1 + $0x230] sm:$0xff]
  %v166 = vld [vmem:[%s1 + $0x238] sm:$0xff]
  %v167 = vld [vmem:[%s1 + $0x240] sm:$0xff]
  %v168 = vld [vmem:[%s1 + $0x248] sm:$0xff]
  %v169 = vld [vmem:[%s1 + $0x250] sm:$0xff]
  %v170 = vld [vmem:[%s1 + $0x258] sm:$0xff]
  %v171 = vld [vmem:[%s1 + $0x260] sm:$0xff]
  %v172 = vld [vmem:[%s1 + $0x268] sm:$0xff]
  %v173 = vld [vmem:[%s1 + $0x270] sm:$0xff]
  %v174 = vld [vmem:[%s1 + $0x278] sm:$0xff]
  %v175 = vld [vmem:[%s1 + $0x280] sm:$0xff]
  %v176 = vld [vmem:[%s1 + $0x288] sm:$0xff]
  %v177 = vld [vmem:[%s1 + $0x290] sm:$0xff]
  %v178 = vld [vmem:[%s1 + $0x298] sm:$0xff]
  %v179 = vld [vmem:[%s1 + $0x2a0] sm:$0xff]
  %v180 = vld [vmem:[%s1 + $0x2a8] sm:$0xff]
  %v181 = vld [vmem:[%s1 + $0x2b0] sm:$0xff]
  %v182 = vld [vmem:[%s1 + $0x2b8] sm:$0xff]
  %v183 = vld [vmem:[%s1 + $0x2c0] sm:$0xff]
  %v184 = vld [vmem:[%s1 + $0x2c8] sm:$0xff]
  %v185 = vld [vmem:[%s1 + $0x2d0] sm:$0xff]
  %v186 = vld [vmem:[%s1 + $0x2d8] sm:$0xff]
  %v187 = vld [vmem:[%s1 + $0x2e0] sm:$0xff]
  %v188 = vld [vmem:[%s1 + $0x2e8] sm:$0xff]
  %v189 = vld [vmem:[%s1 + $0x2f0] sm:$0xff]
  %v190 = vld [vmem:[%s1 + $0x2f8] sm:$0xff]
  %v191 = vld [vmem:[%s1 + $0x300] sm:$0xff]
  %v192 = vld [vmem:[%s1 + $0x308] sm:$0xff]
  %v193 = vld [vmem:[%s1 + $0x310] sm:$0xff]
  %v194 = vld [vmem:[%s1 + $0x318] sm:$0xff]
  %v195 = vld [vmem:[%s1 + $0x320] sm:$0xff]
  %v196 = vld [vmem:[%s1 + $0x328] sm:$0xff]
  %v197 = vld [vmem:[%s1 + $0x330] sm:$0xff]
  %v198 = vld [vmem:[%s1 + $0x338] sm:$0xff]
  %v199 = vld [vmem:[%s1 + $0x340] sm:$0xff]
  %v200 = vld [vmem:[%s1 + $0x348] sm:$0xff]
  %v201 = vld [vmem:[%s1 + $0x350] sm:$0xff]
  %v202 = vld [vmem:[%s1 + $0x358] sm:$0xff]
  %v203 = vld [vmem:[%s1 + $0x360] sm:$0xff]
  %v204 = vld [vmem:[%s1 + $0x368] sm:$0xff]
  %v205 = vld [vmem:[%s1 + $0x370] sm:$0xff]
  %v206 = vld [vmem:[%s1 + $0x378] sm:$0xff]
  %v207 = vld [vmem:[%s1 + $0x380] sm:$0xff]
  %v208 = vld [vmem:[%s1 + $0x388] sm:$0xff]
  %v209 = vld [vmem:[%s1 + $0x390] sm:$0xff]
  %v210 = vld [vmem:[%s1 + $0x398] sm:$0xff]
  %v211 = vld [vmem:[%s1 + $0x3a0] sm:$0xff]
  %v212 = vld [vmem:[%s1 + $0x3a8] sm:$0xff]
  %v213 = vld [vmem:[%s1 + $0x3b0] sm:$0xff]
  %v214 = vld [vmem:[%s1 + $0x3b8] sm:$0xff]
  %v215 = vld [vmem:[%s1 + $0x3c0] sm:$0xff]
  %v216 = vld [vmem:[%s1 + $0x3c8] sm:$0xff]
  %v217 = vld [vmem:[%s1 + $0x3d0] sm:$0xff]
  %v218 = vld [vmem:[%s1 + $0x3d8] sm:$0xff]
  %v219 = vld [vmem:[%s1 + $0x3e0] sm:$0xff]
  %v220 = vld [vmem:[%s1 + $0x3e8] sm:$0xff]
  %v221 = vld [vmem:[%s1 + $0x3f0] sm:$0xff]
  %v222 = vld [vmem:[%s1 + $0x3f8] sm:$0xff]
  %223 = vmatprep.subr.mxu0 %v96
  %224 = vmatpush1.msra.mxu0 %v95
  %225 = vmatprep.subr.mxu0 %v98
  %226 = vmatpush1.msra.mxu0 %v97
  %227 = vmatprep.subr.mxu0 %v100
  %228 = vmatpush1.msra.mxu0 %v99
  %229 = vmatprep.subr.mxu0 %v102
  %230 = vmatpush1.msra.mxu0 %v101
  %231 = vmatprep.subr.mxu0 %v104
  %232 = vmatpush1.msra.mxu0 %v103
  %233 = vmatprep.subr.mxu0 %v106
  %234 = vmatpush1.msra.mxu0 %v105
  %235 = vmatprep.subr.mxu0 %v108
  %236 = vmatpush1.msra.mxu0 %v107
  %237 = vmatprep.subr.mxu0 %v110
  %238 = vmatpush1.msra.mxu0 %v109
  %239 = vmatprep.subr.mxu0 %v112
  %240 = vmatpush1.msra.mxu0 %v111
  %241 = vmatprep.subr.mxu0 %v114
  %242 = vmatpush1.msra.mxu0 %v113
  %243 = vmatprep.subr.mxu0 %v116
  %244 = vmatpush1.msra.mxu0 %v115
  %245 = vmatprep.subr.mxu0 %v118
  %246 = vmatpush1.msra.mxu0 %v117
  %247 = vmatprep.subr.mxu0 %v120
  %248 = vmatpush1.msra.mxu0 %v119
  %249 = vmatprep.subr.mxu0 %v122
  %250 = vmatpush1.msra.mxu0 %v121
  %251 = vmatprep.subr.mxu0 %v124
  %252 = vmatpush1.msra.mxu0 %v123
  %253 = vmatprep.subr.mxu0 %v126
  %254 = vmatpush1.msra.mxu0 %v125
  %255 = vmatprep.subr.mxu0 %v128
  %256 = vmatpush1.msra.mxu0 %v127
  %257 = vmatprep.subr.mxu0 %v130
  %258 = vmatpush1.msra.mxu0 %v129
  %259 = vmatprep.subr.mxu0 %v132
  %260 = vmatpush1.msra.mxu0 %v131
  %261 = vmatprep.subr.mxu0 %v134
  %262 = vmatpush1.msra.mxu0 %v133
  %263 = vmatprep.subr.mxu0 %v136
  %264 = vmatpush1.msra.mxu0 %v135
  %265 = vmatprep.subr.mxu0 %v138
  %266 = vmatpush1.msra.mxu0 %v137
  %267 = vmatprep.subr.mxu0 %v140
  %268 = vmatpush1.msra.mxu0 %v139
  %269 = vmatprep.subr.mxu0 %v142
  %270 = vmatpush1.msra.mxu0 %v141
  %271 = vmatprep.subr.mxu0 %v144
  %272 = vmatpush1.msra.mxu0 %v143
  %273 = vmatprep.subr.mxu0 %v146
  %274 = vmatpush1.msra.mxu0 %v145
  %275 = vmatprep.subr.mxu0 %v148
  %276 = vmatpush1.msra.mxu0 %v147
  %277 = vmatprep.subr.mxu0 %v150
  %278 = vmatpush1.msra.mxu0 %v149
  %279 = vmatprep.subr.mxu0 %v152
  %280 = vmatpush1.msra.mxu0 %v151
  %281 = vmatprep.subr.mxu0 %v154
  %282 = vmatpush1.msra.mxu0 %v153
  %283 = vmatprep.subr.mxu0 %v156
  %284 = vmatpush1.msra.mxu0 %v155
  %285 = vmatprep.subr.mxu0 %v158
  %286 = vmatpush1.msra.mxu0 %v157
  %287 = vmatprep.mubr.f32.mxu0 %v12
  %288 = vmatmul.mubr.f32.gmra.mrb[0].mxu0 %v11
  %v289 = vpop.f32.mrb[0].mxu0
  %v290 = vadd.f32 0.0, %v289
  %v291 = vpop.f32.mrb[0].mxu0
  %v292 = vadd.f32 0.0, %v291
  %293 = vmatprep.mubr.f32.mxu0 %v16
  %294 = vmatmul.mubr.f32.gmra.mrb[0].mxu0 %v15
  %v295 = vpop.f32.mrb[0].mxu0
  %v296 = vadd.f32 0.0, %v295
  %v297 = vpop.f32.mrb[0].mxu0
  %v298 = vadd.f32 0.0, %v297
  %299 = vmatprep.mubr.f32.mxu0 %v20
  %300 = vmatmul.mubr.f32.gmra.mrb[0].mxu0 %v19
  %v301 = vpop.f32.mrb[0].mxu0
  %v302 = vadd.f32 0.0, %v301
  %v303 = vpop.f32.mrb[0].mxu0
  %v304 = vadd.f32 0.0, %v303
  %305 = vmatprep.mubr.f32.mxu0 %v24
  %306 = vmatmul.mubr.f32.gmra.mrb[0].mxu0 %v23
  %v307 = vpop.f32.mrb[0].mxu0
  %v308 = vadd.f32 0.0, %v307
  %v309 = vpop.f32.mrb[0].mxu0
  %v310 = vadd.f32 0.0, %v309
  %311 = vmatprep.mubr.f32.mxu0 %v28
  %312 = vmatmul.mubr.f32.gmra.mrb[0].mxu0 %v27
  %v313 = vpop.f32.mrb[0].mxu0
  %v314 = vadd.f32 0.0, %v313
  %v315 = vpop.f32.mrb[0].mxu0
  %v316 = vadd.f32 0.0, %v315
  %317 = vmatprep.mubr.f32.mxu0 %v32
  %318 = vmatmul.mubr.f32.gmra.mrb[0].mxu0 %v31
  %v319 = vpop.f32.mrb[0].mxu0
  %v320 = vadd.f32 0.0, %v319
  %v321 = vpop.f32.mrb[0].mxu0
  %v322 = vadd.f32 0.0, %v321
  %323 = vmatprep.mubr.f32.mxu0 %v36
  %324 = vmatmul.mubr.f32.gmra.mrb[0].mxu0 %v35
  %v325 = vpop.f32.mrb[0].mxu0
  %v326 = vadd.f32 0.0, %v325
  %v327 = vpop.f32.mrb[0].mxu0
  %v328 = vadd.f32 0.0, %v327
  %329 = vmatprep.mubr.f32.mxu0 %v40
  %330 = vmatmul.mubr.f32.gmra.mrb[0].mxu0 %v39
  %v331 = vpop.f32.mrb[0].mxu0
  %v332 = vadd.f32 0.0, %v331
  %v333 = vpop.f32.mrb[0].mxu0
  %v334 = vadd.f32 0.0, %v333
  %335 = vmatprep.mubr.f32.mxu0 %v44
  %336 = vmatmul.mubr.f32.gmra.mrb[0].mxu0 %v43
  %v337 = vpop.f32.mrb[0].mxu0
  %v338 = vadd.f32 0.0, %v337
  %v339 = vpop.f32.mrb[0].mxu0
  %v340 = vadd.f32 0.0, %v339
  %341 = vmatprep.mubr.f32.mxu0 %v48
  %342 = vmatmul.mubr.f32.gmra.mrb[0].mxu0 %v47
  %v343 = vpop.f32.mrb[0].mxu0
  %v344 = vadd.f32 0.0, %v343
  %v345 = vpop.f32.mrb[0].mxu0
  %v346 = vadd.f32 0.0, %v345
  %347 = vmatprep.mubr.f32.mxu0 %v52
  %348 = vmatmul.mubr.f32.gmra.mrb[0].mxu0 %v51
  %v349 = vpop.f32.mrb[0].mxu0
  %v350 = vadd.f32 0.0, %v349
  %v351 = vpop.f32.mrb[0].mxu0
  %v352 = vadd.f32 0.0, %v351
  %353 = vmatprep.mubr.f32.mxu0 %v56
  %354 = vmatmul.mubr.f32.gmra.mrb[0].mxu0 %v55
  %v355 = vpop.f32.mrb[0].mxu0
  %v356 = vadd.f32 0.0, %v355
  %v357 = vpop.f32.mrb[0].mxu0
  %v358 = vadd.f32 0.0, %v357
  %359 = vmatprep.mubr.f32.mxu0 %v60
  %360 = vmatmul.mubr.f32.gmra.mrb[0].mxu0 %v59
  %v361 = vpop.f32.mrb[0].mxu0
  %v362 = vadd.f32 0.0, %v361
  %v363 = vpop.f32.mrb[0].mxu0
  %v364 = vadd.f32 0.0, %v363
  %365 = vmatprep.mubr.f32.mxu0 %v64
  %366 = vmatmul.mubr.f32.gmra.mrb[0].mxu0 %v63
  %v367 = vpop.f32.mrb[0].mxu0
  %v368 = vadd.f32 0.0, %v367
  %v369 = vpop.f32.mrb[0].mxu0
  %v370 = vadd.f32 0.0, %v369
  %371 = vmatprep.mubr.f32.mxu0 %v68
  %372 = vmatmul.mubr.f32.gmra.mrb[0].mxu0 %v67
  %v373 = vpop.f32.mrb[0].mxu0
  %v374 = vadd.f32 0.0, %v373
  %v375 = vpop.f32.mrb[0].mxu0
  %v376 = vadd.f32 0.0, %v375
  %377 = vmatprep.mubr.f32.mxu0 %v72
  %378 = vmatmul.mubr.f32.gmra.mrb[0].mxu0 %v71
  %v379 = vpop.f32.mrb[0].mxu0
  %v380 = vadd.f32 0.0, %v379
  %v381 = vpop.f32.mrb[0].mxu0
  %v382 = vadd.f32 0.0, %v381
  %383 = vmatprep.mubr.f32.mxu0 %v76
  %384 = vmatmul.mubr.f32.gmra.mrb[0].mxu0 %v75
  %v385 = vpop.f32.mrb[0].mxu0
  %v386 = vadd.f32 0.0, %v385
  %v387 = vpop.f32.mrb[0].mxu0
  %v388 = vadd.f32 0.0, %v387
  %389 = vmatprep.mubr.f32.mxu0 %v80
  %390 = vmatmul.mubr.f32.gmra.mrb[0].mxu0 %v79
  %v391 = vpop.f32.mrb[0].mxu0
  %v392 = vadd.f32 0.0, %v391
  %v393 = vpop.f32.mrb[0].mxu0
  %v394 = vadd.f32 0.0, %v393
  %395 = vmatprep.mubr.f32.mxu0 %v84
  %396 = vmatmul.mubr.f32.gmra.mrb[0].mxu0 %v83
  %v397 = vpop.f32.mrb[0].mxu0
  %v398 = vadd.f32 0.0, %v397
  %v399 = vpop.f32.mrb[0].mxu0
  %v400 = vadd.f32 0.0, %v399
  %401 = vmatprep.mubr.f32.mxu0 %v88
  %402 = vmatmul.mubr.f32.gmra.mrb[0].mxu0 %v87
  %v403 = vpop.f32.mrb[0].mxu0
  %v404 = vadd.f32 0.0, %v403
  %v405 = vpop.f32.mrb[0].mxu0
  %v406 = vadd.f32 0.0, %v405
  %407 = vmatprep.mubr.f32.mxu0 %v92
  %408 = vmatmul.mubr.f32.gmra.mrb[0].mxu0 %v91
  %v409 = vpop.f32.mrb[0].mxu0
  %v410 = vadd.f32 0.0, %v409
  %v411 = vpop.f32.mrb[0].mxu0
  %v412 = vadd.f32 0.0, %v411
  %413 = vdwg.mxu0
  %414 = vmatprep.subr.mxu0 %v160
  %415 = vmatpush1.msra.mxu0 %v159
  %416 = vmatprep.subr.mxu0 %v162
  %417 = vmatpush1.msra.mxu0 %v161
  %418 = vmatprep.subr.mxu0 %v164
  %419 = vmatpush1.msra.mxu0 %v163
  %420 = vmatprep.subr.mxu0 %v166
  %421 = vmatpush1.msra.mxu0 %v165
  %422 = vmatprep.subr.mxu0 %v168
  %423 = vmatpush1.msra.mxu0 %v167
  %424 = vmatprep.subr.mxu0 %v170
  %425 = vmatpush1.msra.mxu0 %v169
  %426 = vmatprep.subr.mxu0 %v172
  %427 = vmatpush1.msra.mxu0 %v171
  %428 = vmatprep.subr.mxu0 %v174
  %429 = vmatpush1.msra.mxu0 %v173
  %430 = vmatprep.subr.mxu0 %v176
  %431 = vmatpush1.msra.mxu0 %v175
  %432 = vmatprep.subr.mxu0 %v178
  %433 = vmatpush1.msra.mxu0 %v177
  %434 = vmatprep.subr.mxu0 %v180
  %435 = vmatpush1.msra.mxu0 %v179
  %436 = vmatprep.subr.mxu0 %v182
  %437 = vmatpush1.msra.mxu0 %v181
  %438 = vmatprep.subr.mxu0 %v184
  %439 = vmatpush1.msra.mxu0 %v183
  %440 = vmatprep.subr.mxu0 %v186
  %441 = vmatpush1.msra.mxu0 %v185
  %442 = vmatprep.subr.mxu0 %v188
  %443 = vmatpush1.msra.mxu0 %v187
  %444 = vmatprep.subr.mxu0 %v190
  %445 = vmatpush1.msra.mxu0 %v189
  %446 = vmatprep.subr.mxu0 %v192
  %447 = vmatpush1.msra.mxu0 %v191
  %448 = vmatprep.subr.mxu0 %v194
  %449 = vmatpush1.msra.mxu0 %v193
  %450 = vmatprep.subr.mxu0 %v196
  %451 = vmatpush1.msra.mxu0 %v195
  %452 = vmatprep.subr.mxu0 %v198
  %453 = vmatpush1.msra.mxu0 %v197
  %454 = vmatprep.subr.mxu0 %v200
  %455 = vmatpush1.msra.mxu0 %v199
  %456 = vmatprep.subr.mxu0 %v202
  %457 = vmatpush1.msra.mxu0 %v201
  %458 = vmatprep.subr.mxu0 %v204
  %459 = vmatpush1.msra.mxu0 %v203
  %460 = vmatprep.subr.mxu0 %v206
  %461 = vmatpush1.msra.mxu0 %v205
  %462 = vmatprep.subr.mxu0 %v208
  %463 = vmatpush1.msra.mxu0 %v207
  %464 = vmatprep.subr.mxu0 %v210
  %465 = vmatpush1.msra.mxu0 %v209
  %466 = vmatprep.subr.mxu0 %v212
  %467 = vmatpush1.msra.mxu0 %v211
  %468 = vmatprep.subr.mxu0 %v214
  %469 = vmatpush1.msra.mxu0 %v213
  %470 = vmatprep.subr.mxu0 %v216
  %471 = vmatpush1.msra.mxu0 %v215
  %472 = vmatprep.subr.mxu0 %v218
  %473 = vmatpush1.msra.mxu0 %v217
  %474 = vmatprep.subr.mxu0 %v220
  %475 = vmatpush1.msra.mxu0 %v219
  %476 = vmatprep.subr.mxu0 %v222
  %477 = vmatpush1.msra.mxu0 %v221
  %478 = vmatprep.mubr.f32.mxu0 %v14
  %479 = vmatmul.mubr.f32.gmra.mrb[0].mxu0 %v13
  %v480 = vpop.f32.mrb[0].mxu0
  %v481 = vadd.f32 %v290, %v480
  %v482 = vpop.f32.mrb[0].mxu0
  %v483 = vadd.f32 %v292, %v482
  %484 = vmatprep.mubr.f32.mxu0 %v18
  %485 = vmatmul.mubr.f32.gmra.mrb[0].mxu0 %v17
  %v486 = vpop.f32.mrb[0].mxu0
  %v487 = vadd.f32 %v296, %v486
  %v488 = vpop.f32.mrb[0].mxu0
  %v489 = vadd.f32 %v298, %v488
  %490 = vmatprep.mubr.f32.mxu0 %v22
  %491 = vmatmul.mubr.f32.gmra.mrb[0].mxu0 %v21
  %v492 = vpop.f32.mrb[0].mxu0
  %v493 = vadd.f32 %v302, %v492
  %v494 = vpop.f32.mrb[0].mxu0
  %v495 = vadd.f32 %v304, %v494
  %496 = vmatprep.mubr.f32.mxu0 %v26
  %497 = vmatmul.mubr.f32.gmra.mrb[0].mxu0 %v25
  %v498 = vpop.f32.mrb[0].mxu0
  %v499 = vadd.f32 %v308, %v498
  %v500 = vpop.f32.mrb[0].mxu0
  %v501 = vadd.f32 %v310, %v500
  %502 = vmatprep.mubr.f32.mxu0 %v30
  %503 = vmatmul.mubr.f32.gmra.mrb[0].mxu0 %v29
  %v504 = vpop.f32.mrb[0].mxu0
  %v505 = vadd.f32 %v314, %v504
  %v506 = vpop.f32.mrb[0].mxu0
  %v507 = vadd.f32 %v316, %v506
  %508 = vmatprep.mubr.f32.mxu0 %v34
  %509 = vmatmul.mubr.f32.gmra.mrb[0].mxu0 %v33
  %v510 = vpop.f32.mrb[0].mxu0
  %v511 = vadd.f32 %v320, %v510
  %v512 = vpop.f32.mrb[0].mxu0
  %v513 = vadd.f32 %v322, %v512
  %514 = vmatprep.mubr.f32.mxu0 %v38
  %515 = vmatmul.mubr.f32.gmra.mrb[0].mxu0 %v37
  %v516 = vpop.f32.mrb[0].mxu0
  %v517 = vadd.f32 %v326, %v516
  %v518 = vpop.f32.mrb[0].mxu0
  %v519 = vadd.f32 %v328, %v518
  %520 = vmatprep.mubr.f32.mxu0 %v42
  %521 = vmatmul.mubr.f32.gmra.mrb[0].mxu0 %v41
  %v522 = vpop.f32.mrb[0].mxu0
  %v523 = vadd.f32 %v332, %v522
  %v524 = vpop.f32.mrb[0].mxu0
  %v525 = vadd.f32 %v334, %v524
  %526 = vmatprep.mubr.f32.mxu0 %v46
  %527 = vmatmul.mubr.f32.gmra.mrb[0].mxu0 %v45
  %v528 = vpop.f32.mrb[0].mxu0
  %v529 = vadd.f32 %v338, %v528
  %v530 = vpop.f32.mrb[0].mxu0
  %v531 = vadd.f32 %v340, %v530
  %532 = vmatprep.mubr.f32.mxu0 %v50
  %533 = vmatmul.mubr.f32.gmra.mrb[0].mxu0 %v49
  %v534 = vpop.f32.mrb[0].mxu0
  %v535 = vadd.f32 %v344, %v534
  %v536 = vpop.f32.mrb[0].mxu0
  %v537 = vadd.f32 %v346, %v536
  %538 = vmatprep.mubr.f32.mxu0 %v54
  %539 = vmatmul.mubr.f32.gmra.mrb[0].mxu0 %v53
  %v540 = vpop.f32.mrb[0].mxu0
  %v541 = vadd.f32 %v350, %v540
  %v542 = vpop.f32.mrb[0].mxu0
  %v543 = vadd.f32 %v352, %v542
  %544 = vmatprep.mubr.f32.mxu0 %v58
  %545 = vmatmul.mubr.f32.gmra.mrb[0].mxu0 %v57
  %v546 = vpop.f32.mrb[0].mxu0
  %v547 = vadd.f32 %v356, %v546
  %v548 = vpop.f32.mrb[0].mxu0
  %v549 = vadd.f32 %v358, %v548
  %550 = vmatprep.mubr.f32.mxu0 %v62
  %551 = vmatmul.mubr.f32.gmra.mrb[0].mxu0 %v61
  %v552 = vpop.f32.mrb[0].mxu0
  %v553 = vadd.f32 %v362, %v552
  %v554 = vpop.f32.mrb[0].mxu0
  %v555 = vadd.f32 %v364, %v554
  %556 = vmatprep.mubr.f32.mxu0 %v66
  %557 = vmatmul.mubr.f32.gmra.mrb[0].mxu0 %v65
  %v558 = vpop.f32.mrb[0].mxu0
  %v559 = vadd.f32 %v368, %v558
  %v560 = vpop.f32.mrb[0].mxu0
  %v561 = vadd.f32 %v370, %v560
  %562 = vmatprep.mubr.f32.mxu0 %v70
  %563 = vmatmul.mubr.f32.gmra.mrb[0].mxu0 %v69
  %v564 = vpop.f32.mrb[0].mxu0
  %v565 = vadd.f32 %v374, %v564
  %v566 = vpop.f32.mrb[0].mxu0
  %v567 = vadd.f32 %v376, %v566
  %568 = vmatprep.mubr.f32.mxu0 %v74
  %569 = vmatmul.mubr.f32.gmra.mrb[0].mxu0 %v73
  %v570 = vpop.f32.mrb[0].mxu0
  %v571 = vadd.f32 %v380, %v570
  %v572 = vpop.f32.mrb[0].mxu0
  %v573 = vadd.f32 %v382, %v572
  %574 = vmatprep.mubr.f32.mxu0 %v78
  %575 = vmatmul.mubr.f32.gmra.mrb[0].mxu0 %v77
  %v576 = vpop.f32.mrb[0].mxu0
  %v577 = vadd.f32 %v386, %v576
  %v578 = vpop.f32.mrb[0].mxu0
  %v579 = vadd.f32 %v388, %v578
  %580 = vmatprep.mubr.f32.mxu0 %v82
  %581 = vmatmul.mubr.f32.gmra.mrb[0].mxu0 %v81
  %v582 = vpop.f32.mrb[0].mxu0
  %v583 = vadd.f32 %v392, %v582
  %v584 = vpop.f32.mrb[0].mxu0
  %v585 = vadd.f32 %v394, %v584
  %586 = vmatprep.mubr.f32.mxu0 %v86
  %587 = vmatmul.mubr.f32.gmra.mrb[0].mxu0 %v85
  %v588 = vpop.f32.mrb[0].mxu0
  %v589 = vadd.f32 %v398, %v588
  %v590 = vpop.f32.mrb[0].mxu0
  %v591 = vadd.f32 %v400, %v590
  %592 = vmatprep.mubr.f32.mxu0 %v90
  %593 = vmatmul.mubr.f32.gmra.mrb[0].mxu0 %v89
  %v594 = vpop.f32.mrb[0].mxu0
  %v595 = vadd.f32 %v404, %v594
  %v596 = vpop.f32.mrb[0].mxu0
  %v597 = vadd.f32 %v406, %v596
  %598 = vmatprep.mubr.f32.mxu0 %v94
  %599 = vmatmul.mubr.f32.gmra.mrb[0].mxu0 %v93
  %v600 = vpop.f32.mrb[0].mxu0
  %v601 = vadd.f32 %v410, %v600
  %v602 = vpop.f32.mrb[0].mxu0
  %v603 = vadd.f32 %v412, %v602
  %604 = vdwg.mxu0
  %v605 = vmax.f32 %v481, 0.0
  %v606 = vmax.f32 %v483, 0.0
  %v607 = vmax.f32 %v487, 0.0
  %v608 = vmax.f32 %v489, 0.0
  %v609 = vmax.f32 %v493, 0.0
  %v610 = vmax.f32 %v495, 0.0
  %v611 = vmax.f32 %v499, 0.0
  %v612 = vmax.f32 %v501, 0.0
  %v613 = vmax.f32 %v505, 0.0
  %v614 = vmax.f32 %v507, 0.0
  %v615 = vmax.f32 %v511, 0.0
  %v616 = vmax.f32 %v513, 0.0
  %v617 = vmax.f32 %v517, 0.0
  %v618 = vmax.f32 %v519, 0.0
  %v619 = vmax.f32 %v523, 0.0
  %v620 = vmax.f32 %v525, 0.0
  %v621 = vmax.f32 %v529, 0.0
  %v622 = vmax.f32 %v531, 0.0
  %v623 = vmax.f32 %v535, 0.0
  %v624 = vmax.f32 %v537, 0.0
  %v625 = vmax.f32 %v541, 0.0
  %v626 = vmax.f32 %v543, 0.0
  %v627 = vmax.f32 %v547, 0.0
  %v628 = vmax.f32 %v549, 0.0
  %v629 = vmax.f32 %v553, 0.0
  %v630 = vmax.f32 %v555, 0.0
  %v631 = vmax.f32 %v559, 0.0
  %v632 = vmax.f32 %v561, 0.0
  %v633 = vmax.f32 %v565, 0.0
  %v634 = vmax.f32 %v567, 0.0
  %v635 = vmax.f32 %v571, 0.0
  %v636 = vmax.f32 %v573, 0.0
  %v637 = vmax.f32 %v577, 0.0
  %v638 = vmax.f32 %v579, 0.0
  %v639 = vmax.f32 %v583, 0.0
  %v640 = vmax.f32 %v585, 0.0
  %v641 = vmax.f32 %v589, 0.0
  %v642 = vmax.f32 %v591, 0.0
  %v643 = vmax.f32 %v595, 0.0
  %v644 = vmax.f32 %v597, 0.0
  %v645 = vmax.f32 %v601, 0.0
  %v646 = vmax.f32 %v603, 0.0
  %647 = vst [vmem:[%s2] sm:$0xff] %v605
  %648 = vst [vmem:[%s2 + $0x8] sm:$0xff] %v606
  %649 = vst [vmem:[%s2 + $0x10] sm:$0xff] %v607
  %650 = vst [vmem:[%s2 + $0x18] sm:$0xff] %v608
  %651 = vst [vmem:[%s2 + $0x20] sm:$0xff] %v609
  %652 = vst [vmem:[%s2 + $0x28] sm:$0xff] %v610
  %653 = vst [vmem:[%s2 + $0x30] sm:$0xff] %v611
  %654 = vst [vmem:[%s2 + $0x38] sm:$0xff] %v612
  %655 = vst [vmem:[%s2 + $0x40] sm:$0xff] %v613
  %656 = vst [vmem:[%s2 + $0x48] sm:$0xff] %v614
  %657 = vst [vmem:[%s2 + $0x50] sm:$0xff] %v615
  %658 = vst [vmem:[%s2 + $0x58] sm:$0xff] %v616
  %659 = vst [vmem:[%s2 + $0x60] sm:$0xff] %v617
  %660 = vst [vmem:[%s2 + $0x68] sm:$0xff] %v618
  %661 = vst [vmem:[%s2 + $0x70] sm:$0xff] %v619
  %662 = vst [vmem:[%s2 + $0x78] sm:$0xff] %v620
  %663 = vst [vmem:[%s2 + $0x80] sm:$0xff] %v621
  %664 = vst [vmem:[%s2 + $0x88] sm:$0xff] %v622
  %665 = vst [vmem:[%s2 + $0x90] sm:$0xff] %v623
  %666 = vst [vmem:[%s2 + $0x98] sm:$0xff] %v624
  %667 = vst [vmem:[%s2 + $0xa0] sm:$0xff] %v625
  %668 = vst [vmem:[%s2 + $0xa8] sm:$0xff] %v626
  %669 = vst [vmem:[%s2 + $0xb0] sm:$0xff] %v627
  %670 = vst [vmem:[%s2 + $0xb8] sm:$0xff] %v628
  %671 = vst [vmem:[%s2 + $0xc0] sm:$0xff] %v629
  %672 = vst [vmem:[%s2 + $0xc8] sm:$0xff] %v630
  %673 = vst [vmem:[%s2 + $0xd0] sm:$0xff] %v631
  %674 = vst [vmem:[%s2 + $0xd8] sm:$0xff] %v632
  %675 = vst [vmem:[%s2 + $0xe0] sm:$0xff] %v633
  %676 = vst [vmem:[%s2 + $0xe8] sm:$0xff] %v634
  %677 = vst [vmem:[%s2 + $0xf0] sm:$0xff] %v635
  %678 = vst [vmem:[%s2 + $0xf8] sm:$0xff] %v636
  %679 = vst [vmem:[%s2 + $0x100] sm:$0xff] %v637
  %680 = vst [vmem:[%s2 + $0x108] sm:$0xff] %v638
  %681 = vst [vmem:[%s2 + $0x110] sm:$0xff] %v639
  %682 = vst [vmem:[%s2 + $0x118] sm:$0xff] %v640
  %683 = vst [vmem:[%s2 + $0x120] sm:$0xff] %v641
  %684 = vst [vmem:[%s2 + $0x128] sm:$0xff] %v642
  %685 = vst [vmem:[%s2 + $0x130] sm:$0xff] %v643
  %686 = vst [vmem:[%s2 + $0x138] sm:$0xff] %v644
  %687 = vst [vmem:[%s2 + $0x140] sm:$0xff] %v645
  %688 = vst [vmem:[%s2 + $0x148] sm:$0xff] %v646
  // Predicated region
  $region10: #{net_forward.6} parent=0 // pred_check
    _
  $region11: #{net_forward.6} parent=0 // pred_check_branch
    %690 = sbr.rel (0) target = $region13
  $region12: #{net_forward.6} parent=0 // pred_region
    _
  $region13: #{net_forward.6} parent=0 // pred_fallthru
    _
  // Predicated region
  $region14: #{net_forward.6} parent=0 // pred_check
    _
  $region15: #{net_forward.6} parent=0 // pred_check_branch
    %692 = sbr.rel (0) target = $region17
  $region16: #{net_forward.6} parent=0 // pred_region
    _
  $region17: #{net_forward.6} parent=0 // pred_fallthru
    _

// kernel: net_forward.7
$region0: #{net_forward.7}
  #allocation0 [shape = 'u32[]', space=smem, size = 0x4, offset = 0x4, fixed_abs, tag = 'smem constant byte address 0x4 - core index']
  #allocation1 [shape = 'u32[144,128]{1,0:T(1,128)}', space=vmem, size = 0x12000, scoped, tag = 'internal scratch']
  %s0 = inlined_call_operand.vmem [shape: f32[8,4096], index: 0, kind: input, shape index: {}]
  %s1 = inlined_call_operand.vmem [shape: bf16[4096,1024], index: 1, kind: input, shape index: {}]
  %s2 = inlined_call_operand.vmem [shape: bf16[1024,1024], index: 2, kind: input, shape index: {}]
  %s3 = inlined_call_operand.vmem [shape: bf16[1024,128], index: 3, kind: input, shape index: {}]
  %s4 = inlined_call_operand.vmem [shape: f32[8,1024], index: 4, kind: output, shape index: {0}]
  %s5 = inlined_call_operand.vmem [shape: f32[8,1024], index: 5, kind: output, shape index: {1}]
  %s6 = inlined_call_operand.vmem [shape: f32[8,128], index: 6, kind: output, shape index: {2}]
  %7 = xla_tuple %s4, %s5, %s6
  %s8 = sld [smem:[#allocation0]]
  $region73: #{net_forward.7} parent=0
    _
  %s10 = ssub.s32 1, %s8
  %s11 = scalar_select 0, %s10, %s8
  loop: start=0, step=1, limit=6
  $region2: #{net_forward.7} parent=0 // loop_pre_header
    _
  $region3: #{net_forward.7} parent=0 // loop_header
    %s13 = sphi 0, %s17
    %p14 = scmp.ge.s32.totalorder %s13, 6
    %s23 = sphi 0, %s25
    %s26 = sphi 0, %s23
    %s27 = sphi 0, %s26
    %s43 = sphi 0, %s27
    %s49 = sphi 0, %s51
    %s52 = sphi 0, %s49
    %s53 = sphi 0, %s52
    %s69 = sphi 0, %s53
    %s73 = sphi 0, %s73
    %s75 = sphi 0, %s73
    %s76 = sphi 0, %s75
    %s90 = sphi 0, %s76
    %s94 = sphi 0, %s94
    %s96 = sphi 0, %s94
    %s97 = sphi 0, %s96
    %s111 = sphi 0, %s97
    %s115 = sphi 0, %s115
    %s117 = sphi 0, %s115
    %s118 = sphi 0, %s117
    %s132 = sphi 0, %s118
    %s136 = sphi 0, %s136
    %s138 = sphi 0, %s136
    %s139 = sphi 0, %s138
    %s153 = sphi 0, %s139
    %s157 = sphi 0, %s157
    %s159 = sphi 0, %s157
    %s160 = sphi 0, %s159
    %s174 = sphi 0, %s160
  $region4: #{net_forward.7} parent=0 // loop_header_branch
    %16 = sbr.rel (%p14) target = $region8
  $region5: #{net_forward.7} parent=0 // loop_body
    %s18 = ssub.s32 %s13, 1
    %s19 = ssub.s32 %s13, 2
    %s20 = sadd.s32 %s13, 1
    %s21 = ssub.s32 %s13, %s20
    %p22 = scmp.eq.s32.totalorder %s21, 0
    %s24 = sadd.s32 %s23, 1
    %s25 = scalar_select %p22, %s23, %s24
    %p28 = pneg %p22
    %p29 = scmp.eq.s32.totalorder %s13, 3
    %p30 = por %p28, %p29
    %p31 = scmp.ne.s32.totalorder %s23, %s26
    %p32 = scmp.eq.s32.totalorder %s13, 0
    %p33 = por %p31, %p32
    %p34 = scmp.ne.s32.totalorder %s23, %s26
    %p35 = scmp.eq.s32.totalorder %s18, 3
    %p36 = por %p34, %p35
    %p37 = scmp.ne.s32.totalorder %s26, %s27
    %p38 = scmp.eq.s32.totalorder %s18, 0
    %p39 = por %p37, %p38
    %p40 = scmp.ne.s32.totalorder %s26, %s27
    %p41 = scmp.eq.s32.totalorder %s19, 3
    %p42 = por %p40, %p41
    %p44 = scmp.ne.s32.totalorder %s27, %s43
    %p45 = scmp.eq.s32.totalorder %s19, 0
    %p46 = por %p44, %p45
    %s47 = ssub.s32 %s13, %s20
    %p48 = scmp.eq.s32.totalorder %s47, 0
    %s50 = sadd.s32 %s49, 1
    %s51 = scalar_select %p48, %s49, %s50
    %p54 = pneg %p48
    %p55 = scmp.eq.s32.totalorder %s13, 3
    %p56 = por %p54, %p55
    %p57 = scmp.ne.s32.totalorder %s49, %s52
    %p58 = scmp.eq.s32.totalorder %s13, 0
    %p59 = por %p57, %p58
    %p60 = scmp.ne.s32.totalorder %s49, %s52
    %p61 = scmp.eq.s32.totalorder %s18, 3
    %p62 = por %p60, %p61
    %p63 = scmp.ne.s32.totalorder %s52, %s53
    %p64 = scmp.eq.s32.totalorder %s18, 0
    %p65 = por %p63, %p64
    %p66 = scmp.ne.s32.totalorder %s52, %s53
    %p67 = scmp.eq.s32.totalorder %s19, 3
    %p68 = por %p66, %p67
    %p70 = scmp.ne.s32.totalorder %s53, %s69
    %p71 = scmp.eq.s32.totalorder %s19, 0
    %p72 = por %p70, %p71
    %s74 = sadd.s32 %s73, 1
    %p77 = scmp.eq.s32.totalorder %s13, 3
    %p78 = scmp.ne.s32.totalorder %s73, %s75
    %p79 = scmp.eq.s32.totalorder %s13, 0
    %p80 = por %p78, %p79
    %p81 = scmp.ne.s32.totalorder %s73, %s75
    %p82 = scmp.eq.s32.totalorder %s18, 3
    %p83 = por %p81, %p82
    %p84 = scmp.ne.s32.totalorder %s75, %s76
    %p85 = scmp.eq.s32.totalorder %s18, 0
    %p86 = por %p84, %p85
    %p87 = scmp.ne.s32.totalorder %s75, %s76
    %p88 = scmp.eq.s32.totalorder %s19, 3
    %p89 = por %p87, %p88
    %p91 = scmp.ne.s32.totalorder %s76, %s90
    %p92 = scmp.eq.s32.totalorder %s19, 0
    %p93 = por %p91, %p92
    %s95 = sadd.s32 %s94, 1
    %p98 = scmp.eq.s32.totalorder %s13, 3
    %p99 = scmp.ne.s32.totalorder %s94, %s96
    %p100 = scmp.eq.s32.totalorder %s13, 0
    %p101 = por %p99, %p100
    %p102 = scmp.ne.s32.totalorder %s94, %s96
    %p103 = scmp.eq.s32.totalorder %s18, 3
    %p104 = por %p102, %p103
    %p105 = scmp.ne.s32.totalorder %s96, %s97
    %p106 = scmp.eq.s32.totalorder %s18, 0
    %p107 = por %p105, %p106
    %p108 = scmp.ne.s32.totalorder %s96, %s97
    %p109 = scmp.eq.s32.totalorder %s19, 3
    %p110 = por %p108, %p109
    %p112 = scmp.ne.s32.totalorder %s97, %s111
    %p113 = scmp.eq.s32.totalorder %s19, 0
    %p114 = por %p112, %p113
    %s116 = sadd.s32 %s115, 1
    %p119 = scmp.eq.s32.totalorder %s13, 3
    %p120 = scmp.ne.s32.totalorder %s115, %s117
    %p121 = scmp.eq.s32.totalorder %s13, 0
    %p122 = por %p120, %p121
    %p123 = scmp.ne.s32.totalorder %s115, %s117
    %p124 = scmp.eq.s32.totalorder %s18, 3
    %p125 = por %p123, %p124
    %p126 = scmp.ne.s32.totalorder %s117, %s118
    %p127 = scmp.eq.s32.totalorder %s18, 0
    %p128 = por %p126, %p127
    %p129 = scmp.ne.s32.totalorder %s117, %s118
    %p130 = scmp.eq.s32.totalorder %s19, 3
    %p131 = por %p129, %p130
    %p133 = scmp.ne.s32.totalorder %s118, %s132
    %p134 = scmp.eq.s32.totalorder %s19, 0
    %p135 = por %p133, %p134
    %s137 = sadd.s32 %s136, 1
    %p140 = scmp.eq.s32.totalorder %s13, 3
    %p141 = scmp.ne.s32.totalorder %s136, %s138
    %p142 = scmp.eq.s32.totalorder %s13, 0
    %p143 = por %p141, %p142
    %p144 = scmp.ne.s32.totalorder %s136, %s138
    %p145 = scmp.eq.s32.totalorder %s18, 3
    %p146 = por %p144, %p145
    %p147 = scmp.ne.s32.totalorder %s138, %s139
    %p148 = scmp.eq.s32.totalorder %s18, 0
    %p149 = por %p147, %p148
    %p150 = scmp.ne.s32.totalorder %s138, %s139
    %p151 = scmp.eq.s32.totalorder %s19, 3
    %p152 = por %p150, %p151
    %p154 = scmp.ne.s32.totalorder %s139, %s153
    %p155 = scmp.eq.s32.totalorder %s19, 0
    %p156 = por %p154, %p155
    %s158 = sadd.s32 %s157, 1
    %p161 = scmp.eq.s32.totalorder %s13, 3
    %p162 = scmp.ne.s32.totalorder %s157, %s159
    %p163 = scmp.eq.s32.totalorder %s13, 0
    %p164 = por %p162, %p163
    %p165 = scmp.ne.s32.totalorder %s157, %s159
    %p166 = scmp.eq.s32.totalorder %s18, 3
    %p167 = por %p165, %p166
    %p168 = scmp.ne.s32.totalorder %s159, %s160
    %p169 = scmp.eq.s32.totalorder %s18, 0
    %p170 = por %p168, %p169
    %p171 = scmp.ne.s32.totalorder %s159, %s160
    %p172 = scmp.eq.s32.totalorder %s19, 3
    %p173 = por %p171, %p172
    %p175 = scmp.ne.s32.totalorder %s160, %s174
    %p176 = scmp.eq.s32.totalorder %s19, 0
    %p177 = por %p175, %p176
    %p178 = scmp.le.s32.totalorder 1, %s13
    %p179 = scmp.lt.s32.totalorder %s13, 5
    %p180 = pnand %p178, %p179
    %p181 = pneg %p180
    // Predicated region
    $region9: #{net_forward.7} parent=5 // pred_check
      _
    $region10: #{net_forward.7} parent=5 // pred_check_branch
      %183 = sbr.rel (%p180) target = $region12
    $region11: #{net_forward.7} parent=5 // pred_region
      %s184 = ssub.s32 %s13, 1
      // Predicated region
      $region13: #{net_forward.7} parent=11 // pred_check
        %p185 = pneg %p86
      $region14: #{net_forward.7} parent=11 // pred_check_branch
        %187 = sbr.rel (%p185) target = $region16
      $region15: #{net_forward.7} parent=11 // pred_region
        _
      $region16: #{net_forward.7} parent=11 // pred_fallthru
        _
      // Predicated region
      $region17: #{net_forward.7} parent=11 // pred_check
        %p188 = pneg %p107
      $region18: #{net_forward.7} parent=11 // pred_check_branch
        %190 = sbr.rel (%p188) target = $region20
      $region19: #{net_forward.7} parent=11 // pred_region
        _
      $region20: #{net_forward.7} parent=11 // pred_fallthru
        _
    $region12: #{net_forward.7} parent=5 // pred_fallthru
      _
    %p191 = scmp.lt.s32.totalorder %s13, 4
    // Predicated region
    $region21: #{net_forward.7} parent=5 // pred_check
      %p192 = pneg %p191
    $region22: #{net_forward.7} parent=5 // pred_check_branch
      %194 = sbr.rel (%p192) target = $region24
    $region23: #{net_forward.7} parent=5 // pred_region
      // Predicated region
      $region25: #{net_forward.7} parent=23 // pred_check
        %p195 = pneg %p33
      $region26: #{net_forward.7} parent=23 // pred_check_branch
        %197 = sbr.rel (%p195) target = $region28
      $region27: #{net_forward.7} parent=23 // pred_region
        %s198 = smul.u32 8, %s13
        %p199 = scmp.lt.s32.totalorder %s198, 31
        %s200 = scalar_select %p199, %s198, 31
        %s201 = smul.addr %s200, 8
        %s202 = scalar_lea.vmem %s0, %s201
        %s203 = smul.u32 8, %s13
      $region28: #{net_forward.7} parent=23 // pred_fallthru
        _
      // Predicated region
      $region29: #{net_forward.7} parent=23 // pred_check
        %p204 = pneg %p59
      $region30: #{net_forward.7} parent=23 // pred_check_branch
        %206 = sbr.rel (%p204) target = $region32
      $region31: #{net_forward.7} parent=23 // pred_region
        %s207 = smul.u32 128, %s13
        %p208 = scmp.lt.s32.totalorder %s207, 511
        %s209 = scalar_select %p208, %s207, 511
        %s210 = smul.addr %s209, 8
        %s211 = smul.addr %s210, 4
        %s212 = scalar_lea.vmem %s1, %s211
        %s213 = smul.u32 128, %s13
      $region32: #{net_forward.7} parent=23 // pred_fallthru
        _
    $region24: #{net_forward.7} parent=5 // pred_fallthru
      _
    %p214 = scmp.le.s32.totalorder 1, %s13
    %p215 = scmp.lt.s32.totalorder %s13, 5
    %p216 = pnand %p214, %p215
    %p217 = pneg %p216
    // Predicated region
    $region33: #{net_forward.7} parent=5 // pred_check
      _
    $region34: #{net_forward.7} parent=5 // pred_check_branch
      %219 = sbr.rel (%p216) target = $region36
    $region35: #{net_forward.7} parent=5 // pred_region
      %s220 = ssub.s32 %s13, 1
      %s221 = smul.u32 8, %s18
      %p222 = scmp.lt.s32.totalorder %s221, 31
      %s223 = scalar_select %p222, %s221, 31
      %s224 = smul.addr %s223, 8
      %s225 = scalar_lea.vmem %s0, %s224
      %p226 = pneg %p39
      %p227 = pneg %p36
      %s228 = smul.u32 128, %s18
      %p229 = scmp.lt.s32.totalorder %s228, 511
      %s230 = scalar_select %p229, %s228, 511
      %s231 = smul.addr %s230, 8
      %s232 = smul.addr %s231, 4
      %s233 = scalar_lea.vmem %s1, %s232
      %p234 = pneg %p65
      %p235 = pneg %p62
      %p236 = pneg %p86
      %p237 = pneg %p83
      %p238 = pneg %p107
      %p239 = pneg %p104
      %p240 = pneg %p128
      %p241 = pneg %p125
      %p242 = pneg %p149
      %p243 = pneg %p146
      %p244 = pneg %p170
      %p245 = pneg %p167
      %s246 = smul.u32 8, %s18
      %p247 = scmp.lt.s32.totalorder %s246, 31
      %s248 = scalar_select %p247, %s246, 31
      %s249 = smul.addr %s248, 8
      %s250 = scalar_lea.vmem %s0, %s249
      %s251 = smul.u32 8, %s18
      %s252 = smul.u32 128, %s18
      %p253 = scmp.lt.s32.totalorder %s252, 511
      %s254 = scalar_select %p253, %s252, 511
      %s255 = smul.addr %s254, 8
      %s256 = smul.addr %s255, 4
      %s257 = scalar_lea.vmem %s1, %s256
      %s258 = smul.u32 128, %s18
      %p260 = scmp.eq.s32.totalorder %s18, 0
      // Predicated region
      $region37: #{net_forward.7} parent=35 // pred_check
        %p261 = pneg %p260
      $region38: #{net_forward.7} parent=35 // pred_check_branch
        %263 = sbr.rel (%p261) target = $region40
      $region39: #{net_forward.7} parent=35 // pred_region
        %264 = vst [vmem:[%s4] sm:$0xff] 0.0
        %265 = vst [vmem:[%s4 + $0x8] sm:$0xff] 0.0
        %266 = vst [vmem:[%s4 + $0x10] sm:$0xff] 0.0
        %267 = vst [vmem:[%s4 + $0x18] sm:$0xff] 0.0
        %268 = vst [vmem:[%s4 + $0x20] sm:$0xff] 0.0
        %269 = vst [vmem:[%s4 + $0x28] sm:$0xff] 0.0
        %270 = vst [vmem:[%s4 + $0x30] sm:$0xff] 0.0
        %271 = vst [vmem:[%s4 + $0x38] sm:$0xff] 0.0
      $region40: #{net_forward.7} parent=35 // pred_fallthru
        _
      %v272 = vld [vmem:[%s4] sm:$0xff]
      %v273 = vld [vmem:[%s4 + $0x8] sm:$0xff]
      %v274 = vld [vmem:[%s4 + $0x10] sm:$0xff]
      %v275 = vld [vmem:[%s4 + $0x18] sm:$0xff]
      %v276 = vld [vmem:[%s4 + $0x20] sm:$0xff]
      %v277 = vld [vmem:[%s4 + $0x28] sm:$0xff]
      %v278 = vld [vmem:[%s4 + $0x30] sm:$0xff]
      %v279 = vld [vmem:[%s4 + $0x38] sm:$0xff]
      %v280 = vld [vmem:[%s250] sm:$0xff]
      %v281 = vld [vmem:[%s250 + $0x8] sm:$0xff]
      %v282 = vld [vmem:[%s250 + $0x10] sm:$0xff]
      %v283 = vld [vmem:[%s250 + $0x18] sm:$0xff]
      %v284 = vld [vmem:[%s250 + $0x20] sm:$0xff]
      %v285 = vld [vmem:[%s250 + $0x28] sm:$0xff]
      %v286 = vld [vmem:[%s250 + $0x30] sm:$0xff]
      %v287 = vld [vmem:[%s250 + $0x38] sm:$0xff]
      %v288 = vpack.c.bf16 %v280, %v280
      %v289 = vpack.c.bf16 %v281, %v281
      %v290 = vpack.c.bf16 %v282, %v282
      %v291 = vpack.c.bf16 %v283, %v283
      %v292 = vpack.c.bf16 %v284, %v284
      %v293 = vpack.c.bf16 %v285, %v285
      %v294 = vpack.c.bf16 %v286, %v286
      %v295 = vpack.c.bf16 %v287, %v287
      %v296 = vld [vmem:[%s257] sm:$0xff]
      %v297 = vld [vmem:[%s257 + $0x8] sm:$0xff]
      %v298 = vld [vmem:[%s257 + $0x10] sm:$0xff]
      %v299 = vld [vmem:[%s257 + $0x18] sm:$0xff]
      %v300 = vld [vmem:[%s257 + $0x20] sm:$0xff]
      %v301 = vld [vmem:[%s257 + $0x28] sm:$0xff]
      %v302 = vld [vmem:[%s257 + $0x30] sm:$0xff]
      %v303 = vld [vmem:[%s257 + $0x38] sm:$0xff]
      %v304 = vld [vmem:[%s257 + $0x40] sm:$0xff]
      %v305 = vld [vmem:[%s257 + $0x48] sm:$0xff]
      %v306 = vld [vmem:[%s257 + $0x50] sm:$0xff]
      %v307 = vld [vmem:[%s257 + $0x58] sm:$0xff]
      %v308 = vld [vmem:[%s257 + $0x60] sm:$0xff]
      %v309 = vld [vmem:[%s257 + $0x68] sm:$0xff]
      %v310 = vld [vmem:[%s257 + $0x70] sm:$0xff]
      %v311 = vld [vmem:[%s257 + $0x78] sm:$0xff]
      %v312 = vld [vmem:[%s257 + $0x80] sm:$0xff]
      %v313 = vld [vmem:[%s257 + $0x88] sm:$0xff]
      %v314 = vld [vmem:[%s257 + $0x90] sm:$0xff]
      %v315 = vld [vmem:[%s257 + $0x98] sm:$0xff]
      %v316 = vld [vmem:[%s257 + $0xa0] sm:$0xff]
      %v317 = vld [vmem:[%s257 + $0xa8] sm:$0xff]
      %v318 = vld [vmem:[%s257 + $0xb0] sm:$0xff]
      %v319 = vld [vmem:[%s257 + $0xb8] sm:$0xff]
      %v320 = vld [vmem:[%s257 + $0xc0] sm:$0xff]
      %v321 = vld [vmem:[%s257 + $0xc8] sm:$0xff]
      %v322 = vld [vmem:[%s257 + $0xd0] sm:$0xff]
      %v323 = vld [vmem:[%s257 + $0xd8] sm:$0xff]
      %v324 = vld [vmem:[%s257 + $0xe0] sm:$0xff]
      %v325 = vld [vmem:[%s257 + $0xe8] sm:$0xff]
      %v326 = vld [vmem:[%s257 + $0xf0] sm:$0xff]
      %v327 = vld [vmem:[%s257 + $0xf8] sm:$0xff]
      %v328 = vld [vmem:[%s257 + $0x100] sm:$0xff]
      %v329 = vld [vmem:[%s257 + $0x108] sm:$0xff]
      %v330 = vld [vmem:[%s257 + $0x110] sm:$0xff]
      %v331 = vld [vmem:[%s257 + $0x118] sm:$0xff]
      %v332 = vld [vmem:[%s257 + $0x120] sm:$0xff]
      %v333 = vld [vmem:[%s257 + $0x128] sm:$0xff]
      %v334 = vld [vmem:[%s257 + $0x130] sm:$0xff]
      %v335 = vld [vmem:[%s257 + $0x138] sm:$0xff]
      %v336 = vld [vmem:[%s257 + $0x140] sm:$0xff]
      %v337 = vld [vmem:[%s257 + $0x148] sm:$0xff]
      %v338 = vld [vmem:[%s257 + $0x150] sm:$0xff]
      %v339 = vld [vmem:[%s257 + $0x158] sm:$0xff]
      %v340 = vld [vmem:[%s257 + $0x160] sm:$0xff]
      %v341 = vld [vmem:[%s257 + $0x168] sm:$0xff]
      %v342 = vld [vmem:[%s257 + $0x170] sm:$0xff]
      %v343 = vld [vmem:[%s257 + $0x178] sm:$0xff]
      %v344 = vld [vmem:[%s257 + $0x180] sm:$0xff]
      %v345 = vld [vmem:[%s257 + $0x188] sm:$0xff]
      %v346 = vld [vmem:[%s257 + $0x190] sm:$0xff]
      %v347 = vld [vmem:[%s257 + $0x198] sm:$0xff]
      %v348 = vld [vmem:[%s257 + $0x1a0] sm:$0xff]
      %v349 = vld [vmem:[%s257 + $0x1a8] sm:$0xff]
      %v350 = vld [vmem:[%s257 + $0x1b0] sm:$0xff]
      %v351 = vld [vmem:[%s257 + $0x1b8] sm:$0xff]
      %v352 = vld [vmem:[%s257 + $0x1c0] sm:$0xff]
      %v353 = vld [vmem:[%s257 + $0x1c8] sm:$0xff]
      %v354 = vld [vmem:[%s257 + $0x1d0] sm:$0xff]
      %v355 = vld [vmem:[%s257 + $0x1d8] sm:$0xff]
      %v356 = vld [vmem:[%s257 + $0x1e0] sm:$0xff]
      %v357 = vld [vmem:[%s257 + $0x1e8] sm:$0xff]
      %v358 = vld [vmem:[%s257 + $0x1f0] sm:$0xff]
      %v359 = vld [vmem:[%s257 + $0x1f8] sm:$0xff]
      %v360 = vld [vmem:[%s257 + $0x200] sm:$0xff]
      %v361 = vld [vmem:[%s257 + $0x208] sm:$0xff]
      %v362 = vld [vmem:[%s257 + $0x210] sm:$0xff]
      %v363 = vld [vmem:[%s257 + $0x218] sm:$0xff]
      %v364 = vld [vmem:[%s257 + $0x220] sm:$0xff]
      %v365 = vld [vmem:[%s257 + $0x228] sm:$0xff]
      %v366 = vld [vmem:[%s257 + $0x230] sm:$0xff]
      %v367 = vld [vmem:[%s257 + $0x238] sm:$0xff]
      %v368 = vld [vmem:[%s257 + $0x240] sm:$0xff]
      %v369 = vld [vmem:[%s257 + $0x248] sm:$0xff]
      %v370 = vld [vmem:[%s257 + $0x250] sm:$0xff]
      %v371 = vld [vmem:[%s257 + $0x258] sm:$0xff]
      %v372 = vld [vmem:[%s257 + $0x260] sm:$0xff]
      %v373 = vld [vmem:[%s257 + $0x268] sm:$0xff]
      %v374 = vld [vmem:[%s257 + $0x270] sm:$0xff]
      %v375 = vld [vmem:[%s257 + $0x278] sm:$0xff]
      %v376 = vld [vmem:[%s257 + $0x280] sm:$0xff]
      %v377 = vld [vmem:[%s257 + $0x288] sm:$0xff]
      %v378 = vld [vmem:[%s257 + $0x290] sm:$0xff]
      %v379 = vld [vmem:[%s257 + $0x298] sm:$0xff]
      %v380 = vld [vmem:[%s257 + $0x2a0] sm:$0xff]
      %v381 = vld [vmem:[%s257 + $0x2a8] sm:$0xff]
      %v382 = vld [vmem:[%s257 + $0x2b0] sm:$0xff]
      %v383 = vld [vmem:[%s257 + $0x2b8] sm:$0xff]
      %v384 = vld [vmem:[%s257 + $0x2c0] sm:$0xff]
      %v385 = vld [vmem:[%s257 + $0x2c8] sm:$0xff]
      %v386 = vld [vmem:[%s257 + $0x2d0] sm:$0xff]
      %v387 = vld [vmem:[%s257 + $0x2d8] sm:$0xff]
      %v388 = vld [vmem:[%s257 + $0x2e0] sm:$0xff]
      %v389 = vld [vmem:[%s257 + $0x2e8] sm:$0xff]
      %v390 = vld [vmem:[%s257 + $0x2f0] sm:$0xff]
      %v391 = vld [vmem:[%s257 + $0x2f8] sm:$0xff]
      %v392 = vld [vmem:[%s257 + $0x300] sm:$0xff]
      %v393 = vld [vmem:[%s257 + $0x308] sm:$0xff]
      %v394 = vld [vmem:[%s257 + $0x310] sm:$0xff]
      %v395 = vld [vmem:[%s257 + $0x318] sm:$0xff]
      %v396 = vld [vmem:[%s257 + $0x320] sm:$0xff]
      %v397 = vld [vmem:[%s257 + $0x328] sm:$0xff]
      %v398 = vld [vmem:[%s257 + $0x330] sm:$0xff]
      %v399 = vld [vmem:[%s257 + $0x338] sm:$0xff]
      %v400 = vld [vmem:[%s257 + $0x340] sm:$0xff]
      %v401 = vld [vmem:[%s257 + $0x348] sm:$0xff]
      %v402 = vld [vmem:[%s257 + $0x350] sm:$0xff]
      %v403 = vld [vmem:[%s257 + $0x358] sm:$0xff]
      %v404 = vld [vmem:[%s257 + $0x360] sm:$0xff]
      %v405 = vld [vmem:[%s257 + $0x368] sm:$0xff]
      %v406 = vld [vmem:[%s257 + $0x370] sm:$0xff]
      %v407 = vld [vmem:[%s257 + $0x378] sm:$0xff]
      %v408 = vld [vmem:[%s257 + $0x380] sm:$0xff]
      %v409 = vld [vmem:[%s257 + $0x388] sm:$0xff]
      %v410 = vld [vmem:[%s257 + $0x390] sm:$0xff]
      %v411 = vld [vmem:[%s257 + $0x398] sm:$0xff]
      %v412 = vld [vmem:[%s257 + $0x3a0] sm:$0xff]
      %v413 = vld [vmem:[%s257 + $0x3a8] sm:$0xff]
      %v414 = vld [vmem:[%s257 + $0x3b0] sm:$0xff]
      %v415 = vld [vmem:[%s257 + $0x3b8] sm:$0xff]
      %v416 = vld [vmem:[%s257 + $0x3c0] sm:$0xff]
      %v417 = vld [vmem:[%s257 + $0x3c8] sm:$0xff]
      %v418 = vld [vmem:[%s257 + $0x3d0] sm:$0xff]
      %v419 = vld [vmem:[%s257 + $0x3d8] sm:$0xff]
      %v420 = vld [vmem:[%s257 + $0x3e0] sm:$0xff]
      %v421 = vld [vmem:[%s257 + $0x3e8] sm:$0xff]
      %v422 = vld [vmem:[%s257 + $0x3f0] sm:$0xff]
      %v423 = vld [vmem:[%s257 + $0x3f8] sm:$0xff]
      %v424 = vld [vmem:[%s257 + $0x400] sm:$0xff]
      %v425 = vld [vmem:[%s257 + $0x408] sm:$0xff]
      %v426 = vld [vmem:[%s257 + $0x410] sm:$0xff]
      %v427 = vld [vmem:[%s257 + $0x418] sm:$0xff]
      %v428 = vld [vmem:[%s257 + $0x420] sm:$0xff]
      %v429 = vld [vmem:[%s257 + $0x428] sm:$0xff]
      %v430 = vld [vmem:[%s257 + $0x430] sm:$0xff]
      %v431 = vld [vmem:[%s257 + $0x438] sm:$0xff]
      %v432 = vld [vmem:[%s257 + $0x440] sm:$0xff]
      %v433 = vld [vmem:[%s257 + $0x448] sm:$0xff]
      %v434 = vld [vmem:[%s257 + $0x450] sm:$0xff]
      %v435 = vld [vmem:[%s257 + $0x458] sm:$0xff]
      %v436 = vld [vmem:[%s257 + $0x460] sm:$0xff]
      %v437 = vld [vmem:[%s257 + $0x468] sm:$0xff]
      %v438 = vld [vmem:[%s257 + $0x470] sm:$0xff]
      %v439 = vld [vmem:[%s257 + $0x478] sm:$0xff]
      %v440 = vld [vmem:[%s257 + $0x480] sm:$0xff]
      %v441 = vld [vmem:[%s257 + $0x488] sm:$0xff]
      %v442 = vld [vmem:[%s257 + $0x490] sm:$0xff]
      %v443 = vld [vmem:[%s257 + $0x498] sm:$0xff]
      %v444 = vld [vmem:[%s257 + $0x4a0] sm:$0xff]
      %v445 = vld [vmem:[%s257 + $0x4a8] sm:$0xff]
      %v446 = vld [vmem:[%s257 + $0x4b0] sm:$0xff]
      %v447 = vld [vmem:[%s257 + $0x4b8] sm:$0xff]
      %v448 = vld [vmem:[%s257 + $0x4c0] sm:$0xff]
      %v449 = vld [vmem:[%s257 + $0x4c8] sm:$0xff]
      %v450 = vld [vmem:[%s257 + $0x4d0] sm:$0xff]
      %v451 = vld [vmem:[%s257 + $0x4d8] sm:$0xff]
      %v452 = vld [vmem:[%s257 + $0x4e0] sm:$0xff]
      %v453 = vld [vmem:[%s257 + $0x4e8] sm:$0xff]
      %v454 = vld [vmem:[%s257 + $0x4f0] sm:$0xff]
      %v455 = vld [vmem:[%s257 + $0x4f8] sm:$0xff]
      %v456 = vld [vmem:[%s257 + $0x500] sm:$0xff]
      %v457 = vld [vmem:[%s257 + $0x508] sm:$0xff]
      %v458 = vld [vmem:[%s257 + $0x510] sm:$0xff]
      %v459 = vld [vmem:[%s257 + $0x518] sm:$0xff]
      %v460 = vld [vmem:[%s257 + $0x520] sm:$0xff]
      %v461 = vld [vmem:[%s257 + $0x528] sm:$0xff]
      %v462 = vld [vmem:[%s257 + $0x530] sm:$0xff]
      %v463 = vld [vmem:[%s257 + $0x538] sm:$0xff]
      %v464 = vld [vmem:[%s257 + $0x540] sm:$0xff]
      %v465 = vld [vmem:[%s257 + $0x548] sm:$0xff]
      %v466 = vld [vmem:[%s257 + $0x550] sm:$0xff]
      %v467 = vld [vmem:[%s257 + $0x558] sm:$0xff]
      %v468 = vld [vmem:[%s257 + $0x560] sm:$0xff]
      %v469 = vld [vmem:[%s257 + $0x568] sm:$0xff]
      %v470 = vld [vmem:[%s257 + $0x570] sm:$0xff]
      %v471 = vld [vmem:[%s257 + $0x578] sm:$0xff]
      %v472 = vld [vmem:[%s257 + $0x580] sm:$0xff]
      %v473 = vld [vmem:[%s257 + $0x588] sm:$0xff]
      %v474 = vld [vmem:[%s257 + $0x590] sm:$0xff]
      %v475 = vld [vmem:[%s257 + $0x598] sm:$0xff]
      %v476 = vld [vmem:[%s257 + $0x5a0] sm:$0xff]
      %v477 = vld [vmem:[%s257 + $0x5a8] sm:$0xff]
      %v478 = vld [vmem:[%s257 + $0x5b0] sm:$0xff]
      %v479 = vld [vmem:[%s257 + $0x5b8] sm:$0xff]
      %v480 = vld [vmem:[%s257 + $0x5c0] sm:$0xff]
      %v481 = vld [vmem:[%s257 + $0x5c8] sm:$0xff]
      %v482 = vld [vmem:[%s257 + $0x5d0] sm:$0xff]
      %v483 = vld [vmem:[%s257 + $0x5d8] sm:$0xff]
      %v484 = vld [vmem:[%s257 + $0x5e0] sm:$0xff]
      %v485 = vld [vmem:[%s257 + $0x5e8] sm:$0xff]
      %v486 = vld [vmem:[%s257 + $0x5f0] sm:$0xff]
      %v487 = vld [vmem:[%s257 + $0x5f8] sm:$0xff]
      %v488 = vld [vmem:[%s257 + $0x600] sm:$0xff]
      %v489 = vld [vmem:[%s257 + $0x608] sm:$0xff]
      %v490 = vld [vmem:[%s257 + $0x610] sm:$0xff]
      %v491 = vld [vmem:[%s257 + $0x618] sm:$0xff]
      %v492 = vld [vmem:[%s257 + $0x620] sm:$0xff]
      %v493 = vld [vmem:[%s257 + $0x628] sm:$0xff]
      %v494 = vld [vmem:[%s257 + $0x630] sm:$0xff]
      %v495 = vld [vmem:[%s257 + $0x638] sm:$0xff]
      %v496 = vld [vmem:[%s257 + $0x640] sm:$0xff]
      %v497 = vld [vmem:[%s257 + $0x648] sm:$0xff]
      %v498 = vld [vmem:[%s257 + $0x650] sm:$0xff]
      %v499 = vld [vmem:[%s257 + $0x658] sm:$0xff]
      %v500 = vld [vmem:[%s257 + $0x660] sm:$0xff]
      %v501 = vld [vmem:[%s257 + $0x668] sm:$0xff]
      %v502 = vld [vmem:[%s257 + $0x670] sm:$0xff]
      %v503 = vld [vmem:[%s257 + $0x678] sm:$0xff]
      %v504 = vld [vmem:[%s257 + $0x680] sm:$0xff]
      %v505 = vld [vmem:[%s257 + $0x688] sm:$0xff]
      %v506 = vld [vmem:[%s257 + $0x690] sm:$0xff]
      %v507 = vld [vmem:[%s257 + $0x698] sm:$0xff]
      %v508 = vld [vmem:[%s257 + $0x6a0] sm:$0xff]
      %v509 = vld [vmem:[%s257 + $0x6a8] sm:$0xff]
      %v510 = vld [vmem:[%s257 + $0x6b0] sm:$0xff]
      %v511 = vld [vmem:[%s257 + $0x6b8] sm:$0xff]
      %v512 = vld [vmem:[%s257 + $0x6c0] sm:$0xff]
      %v513 = vld [vmem:[%s257 + $0x6c8] sm:$0xff]
      %v514 = vld [vmem:[%s257 + $0x6d0] sm:$0xff]
      %v515 = vld [vmem:[%s257 + $0x6d8] sm:$0xff]
      %v516 = vld [vmem:[%s257 + $0x6e0] sm:$0xff]
      %v517 = vld [vmem:[%s257 + $0x6e8] sm:$0xff]
      %v518 = vld [vmem:[%s257 + $0x6f0] sm:$0xff]
      %v519 = vld [vmem:[%s257 + $0x6f8] sm:$0xff]
      %v520 = vld [vmem:[%s257 + $0x700] sm:$0xff]
      %v521 = vld [vmem:[%s257 + $0x708] sm:$0xff]
      %v522 = vld [vmem:[%s257 + $0x710] sm:$0xff]
      %v523 = vld [vmem:[%s257 + $0x718] sm:$0xff]
      %v524 = vld [vmem:[%s257 + $0x720] sm:$0xff]
      %v525 = vld [vmem:[%s257 + $0x728] sm:$0xff]
      %v526 = vld [vmem:[%s257 + $0x730] sm:$0xff]
      %v527 = vld [vmem:[%s257 + $0x738] sm:$0xff]
      %v528 = vld [vmem:[%s257 + $0x740] sm:$0xff]
      %v529 = vld [vmem:[%s257 + $0x748] sm:$0xff]
      %v530 = vld [vmem:[%s257 + $0x750] sm:$0xff]
      %v531 = vld [vmem:[%s257 + $0x758] sm:$0xff]
      %v532 = vld [vmem:[%s257 + $0x760] sm:$0xff]
      %v533 = vld [vmem:[%s257 + $0x768] sm:$0xff]
      %v534 = vld [vmem:[%s257 + $0x770] sm:$0xff]
      %v535 = vld [vmem:[%s257 + $0x778] sm:$0xff]
      %v536 = vld [vmem:[%s257 + $0x780] sm:$0xff]
      %v537 = vld [vmem:[%s257 + $0x788] sm:$0xff]
      %v538 = vld [vmem:[%s257 + $0x790] sm:$0xff]
      %v539 = vld [vmem:[%s257 + $0x798] sm:$0xff]
      %v540 = vld [vmem:[%s257 + $0x7a0] sm:$0xff]
      %v541 = vld [vmem:[%s257 + $0x7a8] sm:$0xff]
      %v542 = vld [vmem:[%s257 + $0x7b0] sm:$0xff]
      %v543 = vld [vmem:[%s257 + $0x7b8] sm:$0xff]
      %v544 = vld [vmem:[%s257 + $0x7c0] sm:$0xff]
      %v545 = vld [vmem:[%s257 + $0x7c8] sm:$0xff]
      %v546 = vld [vmem:[%s257 + $0x7d0] sm:$0xff]
      %v547 = vld [vmem:[%s257 + $0x7d8] sm:$0xff]
      %v548 = vld [vmem:[%s257 + $0x7e0] sm:$0xff]
      %v549 = vld [vmem:[%s257 + $0x7e8] sm:$0xff]
      %v550 = vld [vmem:[%s257 + $0x7f0] sm:$0xff]
      %v551 = vld [vmem:[%s257 + $0x7f8] sm:$0xff]
      %v552 = vld [vmem:[%s257 + $0x800] sm:$0xff]
      %v553 = vld [vmem:[%s257 + $0x808] sm:$0xff]
      %v554 = vld [vmem:[%s257 + $0x810] sm:$0xff]
      %v555 = vld [vmem:[%s257 + $0x818] sm:$0xff]
      %v556 = vld [vmem:[%s257 + $0x820] sm:$0xff]
      %v557 = vld [vmem:[%s257 + $0x828] sm:$0xff]
      %v558 = vld [vmem:[%s257 + $0x830] sm:$0xff]
      %v559 = vld [vmem:[%s257 + $0x838] sm:$0xff]
      %v560 = vld [vmem:[%s257 + $0x840] sm:$0xff]
      %v561 = vld [vmem:[%s257 + $0x848] sm:$0xff]
      %v562 = vld [vmem:[%s257 + $0x850] sm:$0xff]
      %v563 = vld [vmem:[%s257 + $0x858] sm:$0xff]
      %v564 = vld [vmem:[%s257 + $0x860] sm:$0xff]
      %v565 = vld [vmem:[%s257 + $0x868] sm:$0xff]
      %v566 = vld [vmem:[%s257 + $0x870] sm:$0xff]
      %v567 = vld [vmem:[%s257 + $0x878] sm:$0xff]
      %v568 = vld [vmem:[%s257 + $0x880] sm:$0xff]
      %v569 = vld [vmem:[%s257 + $0x888] sm:$0xff]
      %v570 = vld [vmem:[%s257 + $0x890] sm:$0xff]
      %v571 = vld [vmem:[%s257 + $0x898] sm:$0xff]
      %v572 = vld [vmem:[%s257 + $0x8a0] sm:$0xff]
      %v573 = vld [vmem:[%s257 + $0x8a8] sm:$0xff]
      %v574 = vld [vmem:[%s257 + $0x8b0] sm:$0xff]
      %v575 = vld [vmem:[%s257 + $0x8b8] sm:$0xff]
      %v576 = vld [vmem:[%s257 + $0x8c0] sm:$0xff]
      %v577 = vld [vmem:[%s257 + $0x8c8] sm:$0xff]
      %v578 = vld [vmem:[%s257 + $0x8d0] sm:$0xff]
      %v579 = vld [vmem:[%s257 + $0x8d8] sm:$0xff]
      %v580 = vld [vmem:[%s257 + $0x8e0] sm:$0xff]
      %v581 = vld [vmem:[%s257 + $0x8e8] sm:$0xff]
      %v582 = vld [vmem:[%s257 + $0x8f0] sm:$0xff]
      %v583 = vld [vmem:[%s257 + $0x8f8] sm:$0xff]
      %v584 = vld [vmem:[%s257 + $0x900] sm:$0xff]
      %v585 = vld [vmem:[%s257 + $0x908] sm:$0xff]
      %v586 = vld [vmem:[%s257 + $0x910] sm:$0xff]
      %v587 = vld [vmem:[%s257 + $0x918] sm:$0xff]
      %v588 = vld [vmem:[%s257 + $0x920] sm:$0xff]
      %v589 = vld [vmem:[%s257 + $0x928] sm:$0xff]
      %v590 = vld [vmem:[%s257 + $0x930] sm:$0xff]
      %v591 = vld [vmem:[%s257 + $0x938] sm:$0xff]
      %v592 = vld [vmem:[%s257 + $0x940] sm:$0xff]
      %v593 = vld [vmem:[%s257 + $0x948] sm:$0xff]
      %v594 = vld [vmem:[%s257 + $0x950] sm:$0xff]
      %v595 = vld [vmem:[%s257 + $0x958] sm:$0xff]
      %v596 = vld [vmem:[%s257 + $0x960] sm:$0xff]
      %v597 = vld [vmem:[%s257 + $0x968] sm:$0xff]
      %v598 = vld [vmem:[%s257 + $0x970] sm:$0xff]
      %v599 = vld [vmem:[%s257 + $0x978] sm:$0xff]
      %v600 = vld [vmem:[%s257 + $0x980] sm:$0xff]
      %v601 = vld [vmem:[%s257 + $0x988] sm:$0xff]
      %v602 = vld [vmem:[%s257 + $0x990] sm:$0xff]
      %v603 = vld [vmem:[%s257 + $0x998] sm:$0xff]
      %v604 = vld [vmem:[%s257 + $0x9a0] sm:$0xff]
      %v605 = vld [vmem:[%s257 + $0x9a8] sm:$0xff]
      %v606 = vld [vmem:[%s257 + $0x9b0] sm:$0xff]
      %v607 = vld [vmem:[%s257 + $0x9b8] sm:$0xff]
      %v608 = vld [vmem:[%s257 + $0x9c0] sm:$0xff]
      %v609 = vld [vmem:[%s257 + $0x9c8] sm:$0xff]
      %v610 = vld [vmem:[%s257 + $0x9d0] sm:$0xff]
      %v611 = vld [vmem:[%s257 + $0x9d8] sm:$0xff]
      %v612 = vld [vmem:[%s257 + $0x9e0] sm:$0xff]
      %v613 = vld [vmem:[%s257 + $0x9e8] sm:$0xff]
      %v614 = vld [vmem:[%s257 + $0x9f0] sm:$0xff]
      %v615 = vld [vmem:[%s257 + $0x9f8] sm:$0xff]
      %v616 = vld [vmem:[%s257 + $0xa00] sm:$0xff]
      %v617 = vld [vmem:[%s257 + $0xa08] sm:$0xff]
      %v618 = vld [vmem:[%s257 + $0xa10] sm:$0xff]
      %v619 = vld [vmem:[%s257 + $0xa18] sm:$0xff]
      %v620 = vld [vmem:[%s257 + $0xa20] sm:$0xff]
      %v621 = vld [vmem:[%s257 + $0xa28] sm:$0xff]
      %v622 = vld [vmem:[%s257 + $0xa30] sm:$0xff]
      %v623 = vld [vmem:[%s257 + $0xa38] sm:$0xff]
      %v624 = vld [vmem:[%s257 + $0xa40] sm:$0xff]
      %v625 = vld [vmem:[%s257 + $0xa48] sm:$0xff]
      %v626 = vld [vmem:[%s257 + $0xa50] sm:$0xff]
      %v627 = vld [vmem:[%s257 + $0xa58] sm:$0xff]
      %v628 = vld [vmem:[%s257 + $0xa60] sm:$0xff]
      %v629 = vld [vmem:[%s257 + $0xa68] sm:$0xff]
      %v630 = vld [vmem:[%s257 + $0xa70] sm:$0xff]
      %v631 = vld [vmem:[%s257 + $0xa78] sm:$0xff]
      %v632 = vld [vmem:[%s257 + $0xa80] sm:$0xff]
      %v633 = vld [vmem:[%s257 + $0xa88] sm:$0xff]
      %v634 = vld [vmem:[%s257 + $0xa90] sm:$0xff]
      %v635 = vld [vmem:[%s257 + $0xa98] sm:$0xff]
      %v636 = vld [vmem:[%s257 + $0xaa0] sm:$0xff]
      %v637 = vld [vmem:[%s257 + $0xaa8] sm:$0xff]
      %v638 = vld [vmem:[%s257 + $0xab0] sm:$0xff]
      %v639 = vld [vmem:[%s257 + $0xab8] sm:$0xff]
      %v640 = vld [vmem:[%s257 + $0xac0] sm:$0xff]
      %v641 = vld [vmem:[%s257 + $0xac8] sm:$0xff]
      %v642 = vld [vmem:[%s257 + $0xad0] sm:$0xff]
      %v643 = vld [vmem:[%s257 + $0xad8] sm:$0xff]
      %v644 = vld [vmem:[%s257 + $0xae0] sm:$0xff]
      %v645 = vld [vmem:[%s257 + $0xae8] sm:$0xff]
      %v646 = vld [vmem:[%s257 + $0xaf0] sm:$0xff]
      %v647 = vld [vmem:[%s257 + $0xaf8] sm:$0xff]
      %v648 = vld [vmem:[%s257 + $0xb00] sm:$0xff]
      %v649 = vld [vmem:[%s257 + $0xb08] sm:$0xff]
      %v650 = vld [vmem:[%s257 + $0xb10] sm:$0xff]
      %v651 = vld [vmem:[%s257 + $0xb18] sm:$0xff]
      %v652 = vld [vmem:[%s257 + $0xb20] sm:$0xff]
      %v653 = vld [vmem:[%s257 + $0xb28] sm:$0xff]
      %v654 = vld [vmem:[%s257 + $0xb30] sm:$0xff]
      %v655 = vld [vmem:[%s257 + $0xb38] sm:$0xff]
      %v656 = vld [vmem:[%s257 + $0xb40] sm:$0xff]
      %v657 = vld [vmem:[%s257 + $0xb48] sm:$0xff]
      %v658 = vld [vmem:[%s257 + $0xb50] sm:$0xff]
      %v659 = vld [vmem:[%s257 + $0xb58] sm:$0xff]
      %v660 = vld [vmem:[%s257 + $0xb60] sm:$0xff]
      %v661 = vld [vmem:[%s257 + $0xb68] sm:$0xff]
      %v662 = vld [vmem:[%s257 + $0xb70] sm:$0xff]
      %v663 = vld [vmem:[%s257 + $0xb78] sm:$0xff]
      %v664 = vld [vmem:[%s257 + $0xb80] sm:$0xff]
      %v665 = vld [vmem:[%s257 + $0xb88] sm:$0xff]
      %v666 = vld [vmem:[%s257 + $0xb90] sm:$0xff]
      %v667 = vld [vmem:[%s257 + $0xb98] sm:$0xff]
      %v668 = vld [vmem:[%s257 + $0xba0] sm:$0xff]
      %v669 = vld [vmem:[%s257 + $0xba8] sm:$0xff]
      %v670 = vld [vmem:[%s257 + $0xbb0] sm:$0xff]
      %v671 = vld [vmem:[%s257 + $0xbb8] sm:$0xff]
      %v672 = vld [vmem:[%s257 + $0xbc0] sm:$0xff]
      %v673 = vld [vmem:[%s257 + $0xbc8] sm:$0xff]
      %v674 = vld [vmem:[%s257 + $0xbd0] sm:$0xff]
      %v675 = vld [vmem:[%s257 + $0xbd8] sm:$0xff]
      %v676 = vld [vmem:[%s257 + $0xbe0] sm:$0xff]
      %v677 = vld [vmem:[%s257 + $0xbe8] sm:$0xff]
      %v678 = vld [vmem:[%s257 + $0xbf0] sm:$0xff]
      %v679 = vld [vmem:[%s257 + $0xbf8] sm:$0xff]
      %v680 = vld [vmem:[%s257 + $0xc00] sm:$0xff]
      %v681 = vld [vmem:[%s257 + $0xc08] sm:$0xff]
      %v682 = vld [vmem:[%s257 + $0xc10] sm:$0xff]
      %v683 = vld [vmem:[%s257 + $0xc18] sm:$0xff]
      %v684 = vld [vmem:[%s257 + $0xc20] sm:$0xff]
      %v685 = vld [vmem:[%s257 + $0xc28] sm:$0xff]
      %v686 = vld [vmem:[%s257 + $0xc30] sm:$0xff]
      %v687 = vld [vmem:[%s257 + $0xc38] sm:$0xff]
      %v688 = vld [vmem:[%s257 + $0xc40] sm:$0xff]
      %v689 = vld [vmem:[%s257 + $0xc48] sm:$0xff]
      %v690 = vld [vmem:[%s257 + $0xc50] sm:$0xff]
      %v691 = vld [vmem:[%s257 + $0xc58] sm:$0xff]
      %v692 = vld [vmem:[%s257 + $0xc60] sm:$0xff]
      %v693 = vld [vmem:[%s257 + $0xc68] sm:$0xff]
      %v694 = vld [vmem:[%s257 + $0xc70] sm:$0xff]
      %v695 = vld [vmem:[%s257 + $0xc78] sm:$0xff]
      %v696 = vld [vmem:[%s257 + $0xc80] sm:$0xff]
      %v697 = vld [vmem:[%s257 + $0xc88] sm:$0xff]
      %v698 = vld [vmem:[%s257 + $0xc90] sm:$0xff]
      %v699 = vld [vmem:[%s257 + $0xc98] sm:$0xff]
      %v700 = vld [vmem:[%s257 + $0xca0] sm:$0xff]
      %v701 = vld [vmem:[%s257 + $0xca8] sm:$0xff]
      %v702 = vld [vmem:[%s257 + $0xcb0] sm:$0xff]
      %v703 = vld [vmem:[%s257 + $0xcb8] sm:$0xff]
      %v704 = vld [vmem:[%s257 + $0xcc0] sm:$0xff]
      %v705 = vld [vmem:[%s257 + $0xcc8] sm:$0xff]
      %v706 = vld [vmem:[%s257 + $0xcd0] sm:$0xff]
      %v707 = vld [vmem:[%s257 + $0xcd8] sm:$0xff]
      %v708 = vld [vmem:[%s257 + $0xce0] sm:$0xff]
      %v709 = vld [vmem:[%s257 + $0xce8] sm:$0xff]
      %v710 = vld [vmem:[%s257 + $0xcf0] sm:$0xff]
      %v711 = vld [vmem:[%s257 + $0xcf8] sm:$0xff]
      %v712 = vld [vmem:[%s257 + $0xd00] sm:$0xff]
      %v713 = vld [vmem:[%s257 + $0xd08] sm:$0xff]
      %v714 = vld [vmem:[%s257 + $0xd10] sm:$0xff]
      %v715 = vld [vmem:[%s257 + $0xd18] sm:$0xff]
      %v716 = vld [vmem:[%s257 + $0xd20] sm:$0xff]
      %v717 = vld [vmem:[%s257 + $0xd28] sm:$0xff]
      %v718 = vld [vmem:[%s257 + $0xd30] sm:$0xff]
      %v719 = vld [vmem:[%s257 + $0xd38] sm:$0xff]
      %v720 = vld [vmem:[%s257 + $0xd40] sm:$0xff]
      %v721 = vld [vmem:[%s257 + $0xd48] sm:$0xff]
      %v722 = vld [vmem:[%s257 + $0xd50] sm:$0xff]
      %v723 = vld [vmem:[%s257 + $0xd58] sm:$0xff]
      %v724 = vld [vmem:[%s257 + $0xd60] sm:$0xff]
      %v725 = vld [vmem:[%s257 + $0xd68] sm:$0xff]
      %v726 = vld [vmem:[%s257 + $0xd70] sm:$0xff]
      %v727 = vld [vmem:[%s257 + $0xd78] sm:$0xff]
      %v728 = vld [vmem:[%s257 + $0xd80] sm:$0xff]
      %v729 = vld [vmem:[%s257 + $0xd88] sm:$0xff]
      %v730 = vld [vmem:[%s257 + $0xd90] sm:$0xff]
      %v731 = vld [vmem:[%s257 + $0xd98] sm:$0xff]
      %v732 = vld [vmem:[%s257 + $0xda0] sm:$0xff]
      %v733 = vld [vmem:[%s257 + $0xda8] sm:$0xff]
      %v734 = vld [vmem:[%s257 + $0xdb0] sm:$0xff]
      %v735 = vld [vmem:[%s257 + $0xdb8] sm:$0xff]
      %v736 = vld [vmem:[%s257 + $0xdc0] sm:$0xff]
      %v737 = vld [vmem:[%s257 + $0xdc8] sm:$0xff]
      %v738 = vld [vmem:[%s257 + $0xdd0] sm:$0xff]
      %v739 = vld [vmem:[%s257 + $0xdd8] sm:$0xff]
      %v740 = vld [vmem:[%s257 + $0xde0] sm:$0xff]
      %v741 = vld [vmem:[%s257 + $0xde8] sm:$0xff]
      %v742 = vld [vmem:[%s257 + $0xdf0] sm:$0xff]
      %v743 = vld [vmem:[%s257 + $0xdf8] sm:$0xff]
      %v744 = vld [vmem:[%s257 + $0xe00] sm:$0xff]
      %v745 = vld [vmem:[%s257 + $0xe08] sm:$0xff]
      %v746 = vld [vmem:[%s257 + $0xe10] sm:$0xff]
      %v747 = vld [vmem:[%s257 + $0xe18] sm:$0xff]
      %v748 = vld [vmem:[%s257 + $0xe20] sm:$0xff]
      %v749 = vld [vmem:[%s257 + $0xe28] sm:$0xff]
      %v750 = vld [vmem:[%s257 + $0xe30] sm:$0xff]
      %v751 = vld [vmem:[%s257 + $0xe38] sm:$0xff]
      %v752 = vld [vmem:[%s257 + $0xe40] sm:$0xff]
      %v753 = vld [vmem:[%s257 + $0xe48] sm:$0xff]
      %v754 = vld [vmem:[%s257 + $0xe50] sm:$0xff]
      %v755 = vld [vmem:[%s257 + $0xe58] sm:$0xff]
      %v756 = vld [vmem:[%s257 + $0xe60] sm:$0xff]
      %v757 = vld [vmem:[%s257 + $0xe68] sm:$0xff]
      %v758 = vld [vmem:[%s257 + $0xe70] sm:$0xff]
      %v759 = vld [vmem:[%s257 + $0xe78] sm:$0xff]
      %v760 = vld [vmem:[%s257 + $0xe80] sm:$0xff]
      %v761 = vld [vmem:[%s257 + $0xe88] sm:$0xff]
      %v762 = vld [vmem:[%s257 + $0xe90] sm:$0xff]
      %v763 = vld [vmem:[%s257 + $0xe98] sm:$0xff]
      %v764 = vld [vmem:[%s257 + $0xea0] sm:$0xff]
      %v765 = vld [vmem:[%s257 + $0xea8] sm:$0xff]
      %v766 = vld [vmem:[%s257 + $0xeb0] sm:$0xff]
      %v767 = vld [vmem:[%s257 + $0xeb8] sm:$0xff]
      %v768 = vld [vmem:[%s257 + $0xec0] sm:$0xff]
      %v769 = vld [vmem:[%s257 + $0xec8] sm:$0xff]
      %v770 = vld [vmem:[%s257 + $0xed0] sm:$0xff]
      %v771 = vld [vmem:[%s257 + $0xed8] sm:$0xff]
      %v772 = vld [vmem:[%s257 + $0xee0] sm:$0xff]
      %v773 = vld [vmem:[%s257 + $0xee8] sm:$0xff]
      %v774 = vld [vmem:[%s257 + $0xef0] sm:$0xff]
      %v775 = vld [vmem:[%s257 + $0xef8] sm:$0xff]
      %v776 = vld [vmem:[%s257 + $0xf00] sm:$0xff]
      %v777 = vld [vmem:[%s257 + $0xf08] sm:$0xff]
      %v778 = vld [vmem:[%s257 + $0xf10] sm:$0xff]
      %v779 = vld [vmem:[%s257 + $0xf18] sm:$0xff]
      %v780 = vld [vmem:[%s257 + $0xf20] sm:$0xff]
      %v781 = vld [vmem:[%s257 + $0xf28] sm:$0xff]
      %v782 = vld [vmem:[%s257 + $0xf30] sm:$0xff]
      %v783 = vld [vmem:[%s257 + $0xf38] sm:$0xff]
      %v784 = vld [vmem:[%s257 + $0xf40] sm:$0xff]
      %v785 = vld [vmem:[%s257 + $0xf48] sm:$0xff]
      %v786 = vld [vmem:[%s257 + $0xf50] sm:$0xff]
      %v787 = vld [vmem:[%s257 + $0xf58] sm:$0xff]
      %v788 = vld [vmem:[%s257 + $0xf60] sm:$0xff]
      %v789 = vld [vmem:[%s257 + $0xf68] sm:$0xff]
      %v790 = vld [vmem:[%s257 + $0xf70] sm:$0xff]
      %v791 = vld [vmem:[%s257 + $0xf78] sm:$0xff]
      %v792 = vld [vmem:[%s257 + $0xf80] sm:$0xff]
      %v793 = vld [vmem:[%s257 + $0xf88] sm:$0xff]
      %v794 = vld [vmem:[%s257 + $0xf90] sm:$0xff]
      %v795 = vld [vmem:[%s257 + $0xf98] sm:$0xff]
      %v796 = vld [vmem:[%s257 + $0xfa0] sm:$0xff]
      %v797 = vld [vmem:[%s257 + $0xfa8] sm:$0xff]
      %v798 = vld [vmem:[%s257 + $0xfb0] sm:$0xff]
      %v799 = vld [vmem:[%s257 + $0xfb8] sm:$0xff]
      %v800 = vld [vmem:[%s257 + $0xfc0] sm:$0xff]
      %v801 = vld [vmem:[%s257 + $0xfc8] sm:$0xff]
      %v802 = vld [vmem:[%s257 + $0xfd0] sm:$0xff]
      %v803 = vld [vmem:[%s257 + $0xfd8] sm:$0xff]
      %v804 = vld [vmem:[%s257 + $0xfe0] sm:$0xff]
      %v805 = vld [vmem:[%s257 + $0xfe8] sm:$0xff]
      %v806 = vld [vmem:[%s257 + $0xff0] sm:$0xff]
      %v807 = vld [vmem:[%s257 + $0xff8] sm:$0xff]
      %v1320 = vunpack.c.l.b16 %v296
      %v1321 = vunpack.c.h.b16 %v296
      %v1322 = vunpack.c.l.b16 %v297
      %v1323 = vunpack.c.h.b16 %v297
      %v1324 = vunpack.c.l.b16 %v298
      %v1325 = vunpack.c.h.b16 %v298
      %v1326 = vunpack.c.l.b16 %v299
      %v1327 = vunpack.c.h.b16 %v299
      %v1328 = vunpack.c.l.b16 %v300
      %v1329 = vunpack.c.h.b16 %v300
      %v1330 = vunpack.c.l.b16 %v301
      %v1331 = vunpack.c.h.b16 %v301
      %v1332 = vunpack.c.l.b16 %v302
      %v1333 = vunpack.c.h.b16 %v302
      %v1334 = vunpack.c.l.b16 %v303
      %v1335 = vunpack.c.h.b16 %v303
      %v1336 = vunpack.c.l.b16 %v304
      %v1337 = vunpack.c.h.b16 %v304
      %v1338 = vunpack.c.l.b16 %v305
      %v1339 = vunpack.c.h.b16 %v305
      %v1340 = vunpack.c.l.b16 %v306
      %v1341 = vunpack.c.h.b16 %v306
      %v1342 = vunpack.c.l.b16 %v307
      %v1343 = vunpack.c.h.b16 %v307
      %v1344 = vunpack.c.l.b16 %v308
      %v1345 = vunpack.c.h.b16 %v308
      %v1346 = vunpack.c.l.b16 %v309
      %v1347 = vunpack.c.h.b16 %v309
      %v1348 = vunpack.c.l.b16 %v310
      %v1349 = vunpack.c.h.b16 %v310
      %v1350 = vunpack.c.l.b16 %v311
      %v1351 = vunpack.c.h.b16 %v311
      %v1352 = vunpack.c.l.b16 %v312
      %v1353 = vunpack.c.h.b16 %v312
      %v1354 = vunpack.c.l.b16 %v313
      %v1355 = vunpack.c.h.b16 %v313
      %v1356 = vunpack.c.l.b16 %v314
      %v1357 = vunpack.c.h.b16 %v314
      %v1358 = vunpack.c.l.b16 %v315
      %v1359 = vunpack.c.h.b16 %v315
      %v1360 = vunpack.c.l.b16 %v316
      %v1361 = vunpack.c.h.b16 %v316
      %v1362 = vunpack.c.l.b16 %v317
      %v1363 = vunpack.c.h.b16 %v317
      %v1364 = vunpack.c.l.b16 %v318
      %v1365 = vunpack.c.h.b16 %v318
      %v1366 = vunpack.c.l.b16 %v319
      %v1367 = vunpack.c.h.b16 %v319
      %v1368 = vunpack.c.l.b16 %v320
      %v1369 = vunpack.c.h.b16 %v320
      %v1370 = vunpack.c.l.b16 %v321
      %v1371 = vunpack.c.h.b16 %v321
      %v1372 = vunpack.c.l.b16 %v322
      %v1373 = vunpack.c.h.b16 %v322
      %v1374 = vunpack.c.l.b16 %v323
      %v1375 = vunpack.c.h.b16 %v323
      %v1376 = vunpack.c.l.b16 %v324
      %v1377 = vunpack.c.h.b16 %v324
      %v1378 = vunpack.c.l.b16 %v325
      %v1379 = vunpack.c.h.b16 %v325
      %v1380 = vunpack.c.l.b16 %v326
      %v1381 = vunpack.c.h.b16 %v326
      %v1382 = vunpack.c.l.b16 %v327
      %v1383 = vunpack.c.h.b16 %v327
      %v1384 = vunpack.c.l.b16 %v328
      %v1385 = vunpack.c.h.b16 %v328
      %v1386 = vunpack.c.l.b16 %v329
      %v1387 = vunpack.c.h.b16 %v329
      %v1388 = vunpack.c.l.b16 %v330
      %v1389 = vunpack.c.h.b16 %v330
      %v1390 = vunpack.c.l.b16 %v331
      %v1391 = vunpack.c.h.b16 %v331
      %v1392 = vunpack.c.l.b16 %v332
      %v1393 = vunpack.c.h.b16 %v332
      %v1394 = vunpack.c.l.b16 %v333
      %v1395 = vunpack.c.h.b16 %v333
      %v1396 = vunpack.c.l.b16 %v334
      %v1397 = vunpack.c.h.b16 %v334
      %v1398 = vunpack.c.l.b16 %v335
      %v1399 = vunpack.c.h.b16 %v335
      %v1400 = vunpack.c.l.b16 %v336
      %v1401 = vunpack.c.h.b16 %v336
      %v1402 = vunpack.c.l.b16 %v337
      %v1403 = vunpack.c.h.b16 %v337
      %v1404 = vunpack.c.l.b16 %v338
      %v1405 = vunpack.c.h.b16 %v338
      %v1406 = vunpack.c.l.b16 %v339
      %v1407 = vunpack.c.h.b16 %v339
      %v1408 = vunpack.c.l.b16 %v340
      %v1409 = vunpack.c.h.b16 %v340
      %v1410 = vunpack.c.l.b16 %v341
      %v1411 = vunpack.c.h.b16 %v341
      %v1412 = vunpack.c.l.b16 %v342
      %v1413 = vunpack.c.h.b16 %v342
      %v1414 = vunpack.c.l.b16 %v343
      %v1415 = vunpack.c.h.b16 %v343
      %v1416 = vunpack.c.l.b16 %v344
      %v1417 = vunpack.c.h.b16 %v344
      %v1418 = vunpack.c.l.b16 %v345
      %v1419 = vunpack.c.h.b16 %v345
      %v1420 = vunpack.c.l.b16 %v346
      %v1421 = vunpack.c.h.b16 %v346
      %v1422 = vunpack.c.l.b16 %v347
      %v1423 = vunpack.c.h.b16 %v347
      %v1424 = vunpack.c.l.b16 %v348
      %v1425 = vunpack.c.h.b16 %v348
      %v1426 = vunpack.c.l.b16 %v349
      %v1427 = vunpack.c.h.b16 %v349
      %v1428 = vunpack.c.l.b16 %v350
      %v1429 = vunpack.c.h.b16 %v350
      %v1430 = vunpack.c.l.b16 %v351
      %v1431 = vunpack.c.h.b16 %v351
      %v1432 = vunpack.c.l.b16 %v352
      %v1433 = vunpack.c.h.b16 %v352
      %v1434 = vunpack.c.l.b16 %v353
      %v1435 = vunpack.c.h.b16 %v353
      %v1436 = vunpack.c.l.b16 %v354
      %v1437 = vunpack.c.h.b16 %v354
      %v1438 = vunpack.c.l.b16 %v355
      %v1439 = vunpack.c.h.b16 %v355
      %v1440 = vunpack.c.l.b16 %v356
      %v1441 = vunpack.c.h.b16 %v356
      %v1442 = vunpack.c.l.b16 %v357
      %v1443 = vunpack.c.h.b16 %v357
      %v1444 = vunpack.c.l.b16 %v358
      %v1445 = vunpack.c.h.b16 %v358
      %v1446 = vunpack.c.l.b16 %v359
      %v1447 = vunpack.c.h.b16 %v359
      %v1448 = vunpack.c.l.b16 %v360
      %v1449 = vunpack.c.h.b16 %v360
      %v1450 = vunpack.c.l.b16 %v361
      %v1451 = vunpack.c.h.b16 %v361
      %v1452 = vunpack.c.l.b16 %v362
      %v1453 = vunpack.c.h.b16 %v362
      %v1454 = vunpack.c.l.b16 %v363
      %v1455 = vunpack.c.h.b16 %v363
      %v1456 = vunpack.c.l.b16 %v364
      %v1457 = vunpack.c.h.b16 %v364
      %v1458 = vunpack.c.l.b16 %v365
      %v1459 = vunpack.c.h.b16 %v365
      %v1460 = vunpack.c.l.b16 %v366
      %v1461 = vunpack.c.h.b16 %v366
      %v1462 = vunpack.c.l.b16 %v367
      %v1463 = vunpack.c.h.b16 %v367
      %v1464 = vunpack.c.l.b16 %v368
      %v1465 = vunpack.c.h.b16 %v368
      %v1466 = vunpack.c.l.b16 %v369
      %v1467 = vunpack.c.h.b16 %v369
      %v1468 = vunpack.c.l.b16 %v370
      %v1469 = vunpack.c.h.b16 %v370
      %v1470 = vunpack.c.l.b16 %v371
      %v1471 = vunpack.c.h.b16 %v371
      %v1472 = vunpack.c.l.b16 %v372
      %v1473 = vunpack.c.h.b16 %v372
      %v1474 = vunpack.c.l.b16 %v373
      %v1475 = vunpack.c.h.b16 %v373
      %v1476 = vunpack.c.l.b16 %v374
      %v1477 = vunpack.c.h.b16 %v374
      %v1478 = vunpack.c.l.b16 %v375
      %v1479 = vunpack.c.h.b16 %v375
      %v1480 = vunpack.c.l.b16 %v376
      %v1481 = vunpack.c.h.b16 %v376
      %v1482 = vunpack.c.l.b16 %v377
      %v1483 = vunpack.c.h.b16 %v377
      %v1484 = vunpack.c.l.b16 %v378
      %v1485 = vunpack.c.h.b16 %v378
      %v1486 = vunpack.c.l.b16 %v379
      %v1487 = vunpack.c.h.b16 %v379
      %v1488 = vunpack.c.l.b16 %v380
      %v1489 = vunpack.c.h.b16 %v380
      %v1490 = vunpack.c.l.b16 %v381
      %v1491 = vunpack.c.h.b16 %v381
      %v1492 = vunpack.c.l.b16 %v382
      %v1493 = vunpack.c.h.b16 %v382
      %v1494 = vunpack.c.l.b16 %v383
      %v1495 = vunpack.c.h.b16 %v383
      %v1496 = vunpack.c.l.b16 %v384
      %v1497 = vunpack.c.h.b16 %v384
      %v1498 = vunpack.c.l.b16 %v385
      %v1499 = vunpack.c.h.b16 %v385
      %v1500 = vunpack.c.l.b16 %v386
      %v1501 = vunpack.c.h.b16 %v386
      %v1502 = vunpack.c.l.b16 %v387
      %v1503 = vunpack.c.h.b16 %v387
      %v1504 = vunpack.c.l.b16 %v388
      %v1505 = vunpack.c.h.b16 %v388
      %v1506 = vunpack.c.l.b16 %v389
      %v1507 = vunpack.c.h.b16 %v389
      %v1508 = vunpack.c.l.b16 %v390
      %v1509 = vunpack.c.h.b16 %v390
      %v1510 = vunpack.c.l.b16 %v391
      %v1511 = vunpack.c.h.b16 %v391
      %v1512 = vunpack.c.l.b16 %v392
      %v1513 = vunpack.c.h.b16 %v392
      %v1514 = vunpack.c.l.b16 %v393
      %v1515 = vunpack.c.h.b16 %v393
      %v1516 = vunpack.c.l.b16 %v394
      %v1517 = vunpack.c.h.b16 %v394
      %v1518 = vunpack.c.l.b16 %v395
      %v1519 = vunpack.c.h.b16 %v395
      %v1520 = vunpack.c.l.b16 %v396
      %v1521 = vunpack.c.h.b16 %v396
      %v1522 = vunpack.c.l.b16 %v397
      %v1523 = vunpack.c.h.b16 %v397
      %v1524 = vunpack.c.l.b16 %v398
      %v1525 = vunpack.c.h.b16 %v398
      %v1526 = vunpack.c.l.b16 %v399
      %v1527 = vunpack.c.h.b16 %v399
      %v1528 = vunpack.c.l.b16 %v400
      %v1529 = vunpack.c.h.b16 %v400
      %v1530 = vunpack.c.l.b16 %v401
      %v1531 = vunpack.c.h.b16 %v401
      %v1532 = vunpack.c.l.b16 %v402
      %v1533 = vunpack.c.h.b16 %v402
      %v1534 = vunpack.c.l.b16 %v403
      %v1535 = vunpack.c.h.b16 %v403
      %v1536 = vunpack.c.l.b16 %v404
      %v1537 = vunpack.c.h.b16 %v404
      %v1538 = vunpack.c.l.b16 %v405
      %v1539 = vunpack.c.h.b16 %v405
      %v1540 = vunpack.c.l.b16 %v406
      %v1541 = vunpack.c.h.b16 %v406
      %v1542 = vunpack.c.l.b16 %v407
      %v1543 = vunpack.c.h.b16 %v407
      %v1544 = vunpack.c.l.b16 %v408
      %v1545 = vunpack.c.h.b16 %v408
      %v1546 = vunpack.c.l.b16 %v409
      %v1547 = vunpack.c.h.b16 %v409
      %v1548 = vunpack.c.l.b16 %v410
      %v1549 = vunpack.c.h.b16 %v410
      %v1550 = vunpack.c.l.b16 %v411
      %v1551 = vunpack.c.h.b16 %v411
      %v1552 = vunpack.c.l.b16 %v412
      %v1553 = vunpack.c.h.b16 %v412
      %v1554 = vunpack.c.l.b16 %v413
      %v1555 = vunpack.c.h.b16 %v413
      %v1556 = vunpack.c.l.b16 %v414
      %v1557 = vunpack.c.h.b16 %v414
      %v1558 = vunpack.c.l.b16 %v415
      %v1559 = vunpack.c.h.b16 %v415
      %v1560 = vunpack.c.l.b16 %v416
      %v1561 = vunpack.c.h.b16 %v416
      %v1562 = vunpack.c.l.b16 %v417
      %v1563 = vunpack.c.h.b16 %v417
      %v1564 = vunpack.c.l.b16 %v418
      %v1565 = vunpack.c.h.b16 %v418
      %v1566 = vunpack.c.l.b16 %v419
      %v1567 = vunpack.c.h.b16 %v419
      %v1568 = vunpack.c.l.b16 %v420
      %v1569 = vunpack.c.h.b16 %v420
      %v1570 = vunpack.c.l.b16 %v421
      %v1571 = vunpack.c.h.b16 %v421
      %v1572 = vunpack.c.l.b16 %v422
      %v1573 = vunpack.c.h.b16 %v422
      %v1574 = vunpack.c.l.b16 %v423
      %v1575 = vunpack.c.h.b16 %v423
      %v1576 = vunpack.c.l.b16 %v424
      %v1577 = vunpack.c.h.b16 %v424
      %v1578 = vunpack.c.l.b16 %v425
      %v1579 = vunpack.c.h.b16 %v425
      %v1580 = vunpack.c.l.b16 %v426
      %v1581 = vunpack.c.h.b16 %v426
      %v1582 = vunpack.c.l.b16 %v427
      %v1583 = vunpack.c.h.b16 %v427
      %v1584 = vunpack.c.l.b16 %v428
      %v1585 = vunpack.c.h.b16 %v428
      %v1586 = vunpack.c.l.b16 %v429
      %v1587 = vunpack.c.h.b16 %v429
      %v1588 = vunpack.c.l.b16 %v430
      %v1589 = vunpack.c.h.b16 %v430
      %v1590 = vunpack.c.l.b16 %v431
      %v1591 = vunpack.c.h.b16 %v431
      %v1592 = vunpack.c.l.b16 %v432
      %v1593 = vunpack.c.h.b16 %v432
      %v1594 = vunpack.c.l.b16 %v433
      %v1595 = vunpack.c.h.b16 %v433
      %v1596 = vunpack.c.l.b16 %v434
      %v1597 = vunpack.c.h.b16 %v434
      %v1598 = vunpack.c.l.b16 %v435
      %v1599 = vunpack.c.h.b16 %v435
      %v1600 = vunpack.c.l.b16 %v436
      %v1601 = vunpack.c.h.b16 %v436
      %v1602 = vunpack.c.l.b16 %v437
      %v1603 = vunpack.c.h.b16 %v437
      %v1604 = vunpack.c.l.b16 %v438
      %v1605 = vunpack.c.h.b16 %v438
      %v1606 = vunpack.c.l.b16 %v439
      %v1607 = vunpack.c.h.b16 %v439
      %v1608 = vunpack.c.l.b16 %v440
      %v1609 = vunpack.c.h.b16 %v440
      %v1610 = vunpack.c.l.b16 %v441
      %v1611 = vunpack.c.h.b16 %v441
      %v1612 = vunpack.c.l.b16 %v442
      %v1613 = vunpack.c.h.b16 %v442
      %v1614 = vunpack.c.l.b16 %v443
      %v1615 = vunpack.c.h.b16 %v443
      %v1616 = vunpack.c.l.b16 %v444
      %v1617 = vunpack.c.h.b16 %v444
      %v1618 = vunpack.c.l.b16 %v445
      %v1619 = vunpack.c.h.b16 %v445
      %v1620 = vunpack.c.l.b16 %v446
      %v1621 = vunpack.c.h.b16 %v446
      %v1622 = vunpack.c.l.b16 %v447
      %v1623 = vunpack.c.h.b16 %v447
      %v1624 = vunpack.c.l.b16 %v448
      %v1625 = vunpack.c.h.b16 %v448
      %v1626 = vunpack.c.l.b16 %v449
      %v1627 = vunpack.c.h.b16 %v449
      %v1628 = vunpack.c.l.b16 %v450
      %v1629 = vunpack.c.h.b16 %v450
      %v1630 = vunpack.c.l.b16 %v451
      %v1631 = vunpack.c.h.b16 %v451
      %v1632 = vunpack.c.l.b16 %v452
      %v1633 = vunpack.c.h.b16 %v452
      %v1634 = vunpack.c.l.b16 %v453
      %v1635 = vunpack.c.h.b16 %v453
      %v1636 = vunpack.c.l.b16 %v454
      %v1637 = vunpack.c.h.b16 %v454
      %v1638 = vunpack.c.l.b16 %v455
      %v1639 = vunpack.c.h.b16 %v455
      %v1640 = vunpack.c.l.b16 %v456
      %v1641 = vunpack.c.h.b16 %v456
      %v1642 = vunpack.c.l.b16 %v457
      %v1643 = vunpack.c.h.b16 %v457
      %v1644 = vunpack.c.l.b16 %v458
      %v1645 = vunpack.c.h.b16 %v458
      %v1646 = vunpack.c.l.b16 %v459
      %v1647 = vunpack.c.h.b16 %v459
      %v1648 = vunpack.c.l.b16 %v460
      %v1649 = vunpack.c.h.b16 %v460
      %v1650 = vunpack.c.l.b16 %v461
      %v1651 = vunpack.c.h.b16 %v461
      %v1652 = vunpack.c.l.b16 %v462
      %v1653 = vunpack.c.h.b16 %v462
      %v1654 = vunpack.c.l.b16 %v463
      %v1655 = vunpack.c.h.b16 %v463
      %v1656 = vunpack.c.l.b16 %v464
      %v1657 = vunpack.c.h.b16 %v464
      %v1658 = vunpack.c.l.b16 %v465
      %v1659 = vunpack.c.h.b16 %v465
      %v1660 = vunpack.c.l.b16 %v466
      %v1661 = vunpack.c.h.b16 %v466
      %v1662 = vunpack.c.l.b16 %v467
      %v1663 = vunpack.c.h.b16 %v467
      %v1664 = vunpack.c.l.b16 %v468
      %v1665 = vunpack.c.h.b16 %v468
      %v1666 = vunpack.c.l.b16 %v469
      %v1667 = vunpack.c.h.b16 %v469
      %v1668 = vunpack.c.l.b16 %v470
      %v1669 = vunpack.c.h.b16 %v470
      %v1670 = vunpack.c.l.b16 %v471
      %v1671 = vunpack.c.h.b16 %v471
      %v1672 = vunpack.c.l.b16 %v472
      %v1673 = vunpack.c.h.b16 %v472
      %v1674 = vunpack.c.l.b16 %v473
      %v1675 = vunpack.c.h.b16 %v473
      %v1676 = vunpack.c.l.b16 %v474
      %v1677 = vunpack.c.h.b16 %v474
      %v1678 = vunpack.c.l.b16 %v475
      %v1679 = vunpack.c.h.b16 %v475
      %v1680 = vunpack.c.l.b16 %v476
      %v1681 = vunpack.c.h.b16 %v476
      %v1682 = vunpack.c.l.b16 %v477
      %v1683 = vunpack.c.h.b16 %v477
      %v1684 = vunpack.c.l.b16 %v478
      %v1685 = vunpack.c.h.b16 %v478
      %v1686 = vunpack.c.l.b16 %v479
      %v1687 = vunpack.c.h.b16 %v479
      %v1688 = vunpack.c.l.b16 %v480
      %v1689 = vunpack.c.h.b16 %v480
      %v1690 = vunpack.c.l.b16 %v481
      %v1691 = vunpack.c.h.b16 %v481
      %v1692 = vunpack.c.l.b16 %v482
      %v1693 = vunpack.c.h.b16 %v482
      %v1694 = vunpack.c.l.b16 %v483
      %v1695 = vunpack.c.h.b16 %v483
      %v1696 = vunpack.c.l.b16 %v484
      %v1697 = vunpack.c.h.b16 %v484
      %v1698 = vunpack.c.l.b16 %v485
      %v1699 = vunpack.c.h.b16 %v485
      %v1700 = vunpack.c.l.b16 %v486
      %v1701 = vunpack.c.h.b16 %v486
      %v1702 = vunpack.c.l.b16 %v487
      %v1703 = vunpack.c.h.b16 %v487
      %v1704 = vunpack.c.l.b16 %v488
      %v1705 = vunpack.c.h.b16 %v488
      %v1706 = vunpack.c.l.b16 %v489
      %v1707 = vunpack.c.h.b16 %v489
      %v1708 = vunpack.c.l.b16 %v490
      %v1709 = vunpack.c.h.b16 %v490
      %v1710 = vunpack.c.l.b16 %v491
      %v1711 = vunpack.c.h.b16 %v491
      %v1712 = vunpack.c.l.b16 %v492
      %v1713 = vunpack.c.h.b16 %v492
      %v1714 = vunpack.c.l.b16 %v493
      %v1715 = vunpack.c.h.b16 %v493
      %v1716 = vunpack.c.l.b16 %v494
      %v1717 = vunpack.c.h.b16 %v494
      %v1718 = vunpack.c.l.b16 %v495
      %v1719 = vunpack.c.h.b16 %v495
      %v1720 = vunpack.c.l.b16 %v496
      %v1721 = vunpack.c.h.b16 %v496
      %v1722 = vunpack.c.l.b16 %v497
      %v1723 = vunpack.c.h.b16 %v497
      %v1724 = vunpack.c.l.b16 %v498
      %v1725 = vunpack.c.h.b16 %v498
      %v1726 = vunpack.c.l.b16 %v499
      %v1727 = vunpack.c.h.b16 %v499
      %v1728 = vunpack.c.l.b16 %v500
      %v1729 = vunpack.c.h.b16 %v500
      %v1730 = vunpack.c.l.b16 %v501
      %v1731 = vunpack.c.h.b16 %v501
      %v1732 = vunpack.c.l.b16 %v502
      %v1733 = vunpack.c.h.b16 %v502
      %v1734 = vunpack.c.l.b16 %v503
      %v1735 = vunpack.c.h.b16 %v503
      %v1736 = vunpack.c.l.b16 %v504
      %v1737 = vunpack.c.h.b16 %v504
      %v1738 = vunpack.c.l.b16 %v505
      %v1739 = vunpack.c.h.b16 %v505
      %v1740 = vunpack.c.l.b16 %v506
      %v1741 = vunpack.c.h.b16 %v506
      %v1742 = vunpack.c.l.b16 %v507
      %v1743 = vunpack.c.h.b16 %v507
      %v1744 = vunpack.c.l.b16 %v508
      %v1745 = vunpack.c.h.b16 %v508
      %v1746 = vunpack.c.l.b16 %v509
      %v1747 = vunpack.c.h.b16 %v509
      %v1748 = vunpack.c.l.b16 %v510
      %v1749 = vunpack.c.h.b16 %v510
      %v1750 = vunpack.c.l.b16 %v511
      %v1751 = vunpack.c.h.b16 %v511
      %v1752 = vunpack.c.l.b16 %v512
      %v1753 = vunpack.c.h.b16 %v512
      %v1754 = vunpack.c.l.b16 %v513
      %v1755 = vunpack.c.h.b16 %v513
      %v1756 = vunpack.c.l.b16 %v514
      %v1757 = vunpack.c.h.b16 %v514
      %v1758 = vunpack.c.l.b16 %v515
      %v1759 = vunpack.c.h.b16 %v515
      %v1760 = vunpack.c.l.b16 %v516
      %v1761 = vunpack.c.h.b16 %v516
      %v1762 = vunpack.c.l.b16 %v517
      %v1763 = vunpack.c.h.b16 %v517
      %v1764 = vunpack.c.l.b16 %v518
      %v1765 = vunpack.c.h.b16 %v518
      %v1766 = vunpack.c.l.b16 %v519
      %v1767 = vunpack.c.h.b16 %v519
      %v1768 = vunpack.c.l.b16 %v520
      %v1769 = vunpack.c.h.b16 %v520
      %v1770 = vunpack.c.l.b16 %v521
      %v1771 = vunpack.c.h.b16 %v521
      %v1772 = vunpack.c.l.b16 %v522
      %v1773 = vunpack.c.h.b16 %v522
      %v1774 = vunpack.c.l.b16 %v523
      %v1775 = vunpack.c.h.b16 %v523
      %v1776 = vunpack.c.l.b16 %v524
      %v1777 = vunpack.c.h.b16 %v524
      %v1778 = vunpack.c.l.b16 %v525
      %v1779 = vunpack.c.h.b16 %v525
      %v1780 = vunpack.c.l.b16 %v526
      %v1781 = vunpack.c.h.b16 %v526
      %v1782 = vunpack.c.l.b16 %v527
      %v1783 = vunpack.c.h.b16 %v527
      %v1784 = vunpack.c.l.b16 %v528
      %v1785 = vunpack.c.h.b16 %v528
      %v1786 = vunpack.c.l.b16 %v529
      %v1787 = vunpack.c.h.b16 %v529
      %v1788 = vunpack.c.l.b16 %v530
      %v1789 = vunpack.c.h.b16 %v530
      %v1790 = vunpack.c.l.b16 %v531
      %v1791 = vunpack.c.h.b16 %v531
      %v1792 = vunpack.c.l.b16 %v532
      %v1793 = vunpack.c.h.b16 %v532
      %v1794 = vunpack.c.l.b16 %v533
      %v1795 = vunpack.c.h.b16 %v533
      %v1796 = vunpack.c.l.b16 %v534
      %v1797 = vunpack.c.h.b16 %v534
      %v1798 = vunpack.c.l.b16 %v535
      %v1799 = vunpack.c.h.b16 %v535
      %v1800 = vunpack.c.l.b16 %v536
      %v1801 = vunpack.c.h.b16 %v536
      %v1802 = vunpack.c.l.b16 %v537
      %v1803 = vunpack.c.h.b16 %v537
      %v1804 = vunpack.c.l.b16 %v538
      %v1805 = vunpack.c.h.b16 %v538
      %v1806 = vunpack.c.l.b16 %v539
      %v1807 = vunpack.c.h.b16 %v539
      %v1808 = vunpack.c.l.b16 %v540
      %v1809 = vunpack.c.h.b16 %v540
      %v1810 = vunpack.c.l.b16 %v541
      %v1811 = vunpack.c.h.b16 %v541
      %v1812 = vunpack.c.l.b16 %v542
      %v1813 = vunpack.c.h.b16 %v542
      %v1814 = vunpack.c.l.b16 %v543
      %v1815 = vunpack.c.h.b16 %v543
      %v1816 = vunpack.c.l.b16 %v544
      %v1817 = vunpack.c.h.b16 %v544
      %v1818 = vunpack.c.l.b16 %v545
      %v1819 = vunpack.c.h.b16 %v545
      %v1820 = vunpack.c.l.b16 %v546
      %v1821 = vunpack.c.h.b16 %v546
      %v1822 = vunpack.c.l.b16 %v547
      %v1823 = vunpack.c.h.b16 %v547
      %v1824 = vunpack.c.l.b16 %v548
      %v1825 = vunpack.c.h.b16 %v548
      %v1826 = vunpack.c.l.b16 %v549
      %v1827 = vunpack.c.h.b16 %v549
      %v1828 = vunpack.c.l.b16 %v550
      %v1829 = vunpack.c.h.b16 %v550
      %v1830 = vunpack.c.l.b16 %v551
      %v1831 = vunpack.c.h.b16 %v551
      %v1832 = vunpack.c.l.b16 %v552
      %v1833 = vunpack.c.h.b16 %v552
      %v1834 = vunpack.c.l.b16 %v553
      %v1835 = vunpack.c.h.b16 %v553
      %v1836 = vunpack.c.l.b16 %v554
      %v1837 = vunpack.c.h.b16 %v554
      %v1838 = vunpack.c.l.b16 %v555
      %v1839 = vunpack.c.h.b16 %v555
      %v1840 = vunpack.c.l.b16 %v556
      %v1841 = vunpack.c.h.b16 %v556
      %v1842 = vunpack.c.l.b16 %v557
      %v1843 = vunpack.c.h.b16 %v557
      %v1844 = vunpack.c.l.b16 %v558
      %v1845 = vunpack.c.h.b16 %v558
      %v1846 = vunpack.c.l.b16 %v559
      %v1847 = vunpack.c.h.b16 %v559
      %v1848 = vunpack.c.l.b16 %v560
      %v1849 = vunpack.c.h.b16 %v560
      %v1850 = vunpack.c.l.b16 %v561
      %v1851 = vunpack.c.h.b16 %v561
      %v1852 = vunpack.c.l.b16 %v562
      %v1853 = vunpack.c.h.b16 %v562
      %v1854 = vunpack.c.l.b16 %v563
      %v1855 = vunpack.c.h.b16 %v563
      %v1856 = vunpack.c.l.b16 %v564
      %v1857 = vunpack.c.h.b16 %v564
      %v1858 = vunpack.c.l.b16 %v565
      %v1859 = vunpack.c.h.b16 %v565
      %v1860 = vunpack.c.l.b16 %v566
      %v1861 = vunpack.c.h.b16 %v566
      %v1862 = vunpack.c.l.b16 %v567
      %v1863 = vunpack.c.h.b16 %v567
      %v1864 = vunpack.c.l.b16 %v568
      %v1865 = vunpack.c.h.b16 %v568
      %v1866 = vunpack.c.l.b16 %v569
      %v1867 = vunpack.c.h.b16 %v569
      %v1868 = vunpack.c.l.b16 %v570
      %v1869 = vunpack.c.h.b16 %v570
      %v1870 = vunpack.c.l.b16 %v571
      %v1871 = vunpack.c.h.b16 %v571
      %v1872 = vunpack.c.l.b16 %v572
      %v1873 = vunpack.c.h.b16 %v572
      %v1874 = vunpack.c.l.b16 %v573
      %v1875 = vunpack.c.h.b16 %v573
      %v1876 = vunpack.c.l.b16 %v574
      %v1877 = vunpack.c.h.b16 %v574
      %v1878 = vunpack.c.l.b16 %v575
      %v1879 = vunpack.c.h.b16 %v575
      %v1880 = vunpack.c.l.b16 %v576
      %v1881 = vunpack.c.h.b16 %v576
      %v1882 = vunpack.c.l.b16 %v577
      %v1883 = vunpack.c.h.b16 %v577
      %v1884 = vunpack.c.l.b16 %v578
      %v1885 = vunpack.c.h.b16 %v578
      %v1886 = vunpack.c.l.b16 %v579
      %v1887 = vunpack.c.h.b16 %v579
      %v1888 = vunpack.c.l.b16 %v580
      %v1889 = vunpack.c.h.b16 %v580
      %v1890 = vunpack.c.l.b16 %v581
      %v1891 = vunpack.c.h.b16 %v581
      %v1892 = vunpack.c.l.b16 %v582
      %v1893 = vunpack.c.h.b16 %v582
      %v1894 = vunpack.c.l.b16 %v583
      %v1895 = vunpack.c.h.b16 %v583
      %v1896 = vunpack.c.l.b16 %v584
      %v1897 = vunpack.c.h.b16 %v584
      %v1898 = vunpack.c.l.b16 %v585
      %v1899 = vunpack.c.h.b16 %v585
      %v1900 = vunpack.c.l.b16 %v586
      %v1901 = vunpack.c.h.b16 %v586
      %v1902 = vunpack.c.l.b16 %v587
      %v1903 = vunpack.c.h.b16 %v587
      %v1904 = vunpack.c.l.b16 %v588
      %v1905 = vunpack.c.h.b16 %v588
      %v1906 = vunpack.c.l.b16 %v589
      %v1907 = vunpack.c.h.b16 %v589
      %v1908 = vunpack.c.l.b16 %v590
      %v1909 = vunpack.c.h.b16 %v590
      %v1910 = vunpack.c.l.b16 %v591
      %v1911 = vunpack.c.h.b16 %v591
      %v1912 = vunpack.c.l.b16 %v592
      %v1913 = vunpack.c.h.b16 %v592
      %v1914 = vunpack.c.l.b16 %v593
      %v1915 = vunpack.c.h.b16 %v593
      %v1916 = vunpack.c.l.b16 %v594
      %v1917 = vunpack.c.h.b16 %v594
      %v1918 = vunpack.c.l.b16 %v595
      %v1919 = vunpack.c.h.b16 %v595
      %v1920 = vunpack.c.l.b16 %v596
      %v1921 = vunpack.c.h.b16 %v596
      %v1922 = vunpack.c.l.b16 %v597
      %v1923 = vunpack.c.h.b16 %v597
      %v1924 = vunpack.c.l.b16 %v598
      %v1925 = vunpack.c.h.b16 %v598
      %v1926 = vunpack.c.l.b16 %v599
      %v1927 = vunpack.c.h.b16 %v599
      %v1928 = vunpack.c.l.b16 %v600
      %v1929 = vunpack.c.h.b16 %v600
      %v1930 = vunpack.c.l.b16 %v601
      %v1931 = vunpack.c.h.b16 %v601
      %v1932 = vunpack.c.l.b16 %v602
      %v1933 = vunpack.c.h.b16 %v602
      %v1934 = vunpack.c.l.b16 %v603
      %v1935 = vunpack.c.h.b16 %v603
      %v1936 = vunpack.c.l.b16 %v604
      %v1937 = vunpack.c.h.b16 %v604
      %v1938 = vunpack.c.l.b16 %v605
      %v1939 = vunpack.c.h.b16 %v605
      %v1940 = vunpack.c.l.b16 %v606
      %v1941 = vunpack.c.h.b16 %v606
      %v1942 = vunpack.c.l.b16 %v607
      %v1943 = vunpack.c.h.b16 %v607
      %v1944 = vunpack.c.l.b16 %v608
      %v1945 = vunpack.c.h.b16 %v608
      %v1946 = vunpack.c.l.b16 %v609
      %v1947 = vunpack.c.h.b16 %v609
      %v1948 = vunpack.c.l.b16 %v610
      %v1949 = vunpack.c.h.b16 %v610
      %v1950 = vunpack.c.l.b16 %v611
      %v1951 = vunpack.c.h.b16 %v611
      %v1952 = vunpack.c.l.b16 %v612
      %v1953 = vunpack.c.h.b16 %v612
      %v1954 = vunpack.c.l.b16 %v613
      %v1955 = vunpack.c.h.b16 %v613
      %v1956 = vunpack.c.l.b16 %v614
      %v1957 = vunpack.c.h.b16 %v614
      %v1958 = vunpack.c.l.b16 %v615
      %v1959 = vunpack.c.h.b16 %v615
      %v1960 = vunpack.c.l.b16 %v616
      %v1961 = vunpack.c.h.b16 %v616
      %v1962 = vunpack.c.l.b16 %v617
      %v1963 = vunpack.c.h.b16 %v617
      %v1964 = vunpack.c.l.b16 %v618
      %v1965 = vunpack.c.h.b16 %v618
      %v1966 = vunpack.c.l.b16 %v619
      %v1967 = vunpack.c.h.b16 %v619
      %v1968 = vunpack.c.l.b16 %v620
      %v1969 = vunpack.c.h.b16 %v620
      %v1970 = vunpack.c.l.b16 %v621
      %v1971 = vunpack.c.h.b16 %v621
      %v1972 = vunpack.c.l.b16 %v622
      %v1973 = vunpack.c.h.b16 %v622
      %v1974 = vunpack.c.l.b16 %v623
      %v1975 = vunpack.c.h.b16 %v623
      %v1976 = vunpack.c.l.b16 %v624
      %v1977 = vunpack.c.h.b16 %v624
      %v1978 = vunpack.c.l.b16 %v625
      %v1979 = vunpack.c.h.b16 %v625
      %v1980 = vunpack.c.l.b16 %v626
      %v1981 = vunpack.c.h.b16 %v626
      %v1982 = vunpack.c.l.b16 %v627
      %v1983 = vunpack.c.h.b16 %v627
      %v1984 = vunpack.c.l.b16 %v628
      %v1985 = vunpack.c.h.b16 %v628
      %v1986 = vunpack.c.l.b16 %v629
      %v1987 = vunpack.c.h.b16 %v629
      %v1988 = vunpack.c.l.b16 %v630
      %v1989 = vunpack.c.h.b16 %v630
      %v1990 = vunpack.c.l.b16 %v631
      %v1991 = vunpack.c.h.b16 %v631
      %v1992 = vunpack.c.l.b16 %v632
      %v1993 = vunpack.c.h.b16 %v632
      %v1994 = vunpack.c.l.b16 %v633
      %v1995 = vunpack.c.h.b16 %v633
      %v1996 = vunpack.c.l.b16 %v634
      %v1997 = vunpack.c.h.b16 %v634
      %v1998 = vunpack.c.l.b16 %v635
      %v1999 = vunpack.c.h.b16 %v635
      %v2000 = vunpack.c.l.b16 %v636
      %v2001 = vunpack.c.h.b16 %v636
      %v2002 = vunpack.c.l.b16 %v637
      %v2003 = vunpack.c.h.b16 %v637
      %v2004 = vunpack.c.l.b16 %v638
      %v2005 = vunpack.c.h.b16 %v638
      %v2006 = vunpack.c.l.b16 %v639
      %v2007 = vunpack.c.h.b16 %v639
      %v2008 = vunpack.c.l.b16 %v640
      %v2009 = vunpack.c.h.b16 %v640
      %v2010 = vunpack.c.l.b16 %v641
      %v2011 = vunpack.c.h.b16 %v641
      %v2012 = vunpack.c.l.b16 %v642
      %v2013 = vunpack.c.h.b16 %v642
      %v2014 = vunpack.c.l.b16 %v643
      %v2015 = vunpack.c.h.b16 %v643
      %v2016 = vunpack.c.l.b16 %v644
      %v2017 = vunpack.c.h.b16 %v644
      %v2018 = vunpack.c.l.b16 %v645
      %v2019 = vunpack.c.h.b16 %v645
      %v2020 = vunpack.c.l.b16 %v646
      %v2021 = vunpack.c.h.b16 %v646
      %v2022 = vunpack.c.l.b16 %v647
      %v2023 = vunpack.c.h.b16 %v647
      %v2024 = vunpack.c.l.b16 %v648
      %v2025 = vunpack.c.h.b16 %v648
      %v2026 = vunpack.c.l.b16 %v649
      %v2027 = vunpack.c.h.b16 %v649
      %v2028 = vunpack.c.l.b16 %v650
      %v2029 = vunpack.c.h.b16 %v650
      %v2030 = vunpack.c.l.b16 %v651
      %v2031 = vunpack.c.h.b16 %v651
      %v2032 = vunpack.c.l.b16 %v652
      %v2033 = vunpack.c.h.b16 %v652
      %v2034 = vunpack.c.l.b16 %v653
      %v2035 = vunpack.c.h.b16 %v653
      %v2036 = vunpack.c.l.b16 %v654
      %v2037 = vunpack.c.h.b16 %v654
      %v2038 = vunpack.c.l.b16 %v655
      %v2039 = vunpack.c.h.b16 %v655
      %v2040 = vunpack.c.l.b16 %v656
      %v2041 = vunpack.c.h.b16 %v656
      %v2042 = vunpack.c.l.b16 %v657
      %v2043 = vunpack.c.h.b16 %v657
      %v2044 = vunpack.c.l.b16 %v658
      %v2045 = vunpack.c.h.b16 %v658
      %v2046 = vunpack.c.l.b16 %v659
      %v2047 = vunpack.c.h.b16 %v659
      %v2048 = vunpack.c.l.b16 %v660
      %v2049 = vunpack.c.h.b16 %v660
      %v2050 = vunpack.c.l.b16 %v661
      %v2051 = vunpack.c.h.b16 %v661
      %v2052 = vunpack.c.l.b16 %v662
      %v2053 = vunpack.c.h.b16 %v662
      %v2054 = vunpack.c.l.b16 %v663
      %v2055 = vunpack.c.h.b16 %v663
      %v2056 = vunpack.c.l.b16 %v664
      %v2057 = vunpack.c.h.b16 %v664
      %v2058 = vunpack.c.l.b16 %v665
      %v2059 = vunpack.c.h.b16 %v665
      %v2060 = vunpack.c.l.b16 %v666
      %v2061 = vunpack.c.h.b16 %v666
      %v2062 = vunpack.c.l.b16 %v667
      %v2063 = vunpack.c.h.b16 %v667
      %v2064 = vunpack.c.l.b16 %v668
      %v2065 = vunpack.c.h.b16 %v668
      %v2066 = vunpack.c.l.b16 %v669
      %v2067 = vunpack.c.h.b16 %v669
      %v2068 = vunpack.c.l.b16 %v670
      %v2069 = vunpack.c.h.b16 %v670
      %v2070 = vunpack.c.l.b16 %v671
      %v2071 = vunpack.c.h.b16 %v671
      %v2072 = vunpack.c.l.b16 %v672
      %v2073 = vunpack.c.h.b16 %v672
      %v2074 = vunpack.c.l.b16 %v673
      %v2075 = vunpack.c.h.b16 %v673
      %v2076 = vunpack.c.l.b16 %v674
      %v2077 = vunpack.c.h.b16 %v674
      %v2078 = vunpack.c.l.b16 %v675
      %v2079 = vunpack.c.h.b16 %v675
      %v2080 = vunpack.c.l.b16 %v676
      %v2081 = vunpack.c.h.b16 %v676
      %v2082 = vunpack.c.l.b16 %v677
      %v2083 = vunpack.c.h.b16 %v677
      %v2084 = vunpack.c.l.b16 %v678
      %v2085 = vunpack.c.h.b16 %v678
      %v2086 = vunpack.c.l.b16 %v679
      %v2087 = vunpack.c.h.b16 %v679
      %v2088 = vunpack.c.l.b16 %v680
      %v2089 = vunpack.c.h.b16 %v680
      %v2090 = vunpack.c.l.b16 %v681
      %v2091 = vunpack.c.h.b16 %v681
      %v2092 = vunpack.c.l.b16 %v682
      %v2093 = vunpack.c.h.b16 %v682
      %v2094 = vunpack.c.l.b16 %v683
      %v2095 = vunpack.c.h.b16 %v683
      %v2096 = vunpack.c.l.b16 %v684
      %v2097 = vunpack.c.h.b16 %v684
      %v2098 = vunpack.c.l.b16 %v685
      %v2099 = vunpack.c.h.b16 %v685
      %v2100 = vunpack.c.l.b16 %v686
      %v2101 = vunpack.c.h.b16 %v686
      %v2102 = vunpack.c.l.b16 %v687
      %v2103 = vunpack.c.h.b16 %v687
      %v2104 = vunpack.c.l.b16 %v688
      %v2105 = vunpack.c.h.b16 %v688
      %v2106 = vunpack.c.l.b16 %v689
      %v2107 = vunpack.c.h.b16 %v689
      %v2108 = vunpack.c.l.b16 %v690
      %v2109 = vunpack.c.h.b16 %v690
      %v2110 = vunpack.c.l.b16 %v691
      %v2111 = vunpack.c.h.b16 %v691
      %v2112 = vunpack.c.l.b16 %v692
      %v2113 = vunpack.c.h.b16 %v692
      %v2114 = vunpack.c.l.b16 %v693
      %v2115 = vunpack.c.h.b16 %v693
      %v2116 = vunpack.c.l.b16 %v694
      %v2117 = vunpack.c.h.b16 %v694
      %v2118 = vunpack.c.l.b16 %v695
      %v2119 = vunpack.c.h.b16 %v695
      %v2120 = vunpack.c.l.b16 %v696
      %v2121 = vunpack.c.h.b16 %v696
      %v2122 = vunpack.c.l.b16 %v697
      %v2123 = vunpack.c.h.b16 %v697
      %v2124 = vunpack.c.l.b16 %v698
      %v2125 = vunpack.c.h.b16 %v698
      %v2126 = vunpack.c.l.b16 %v699
      %v2127 = vunpack.c.h.b16 %v699
      %v2128 = vunpack.c.l.b16 %v700
      %v2129 = vunpack.c.h.b16 %v700
      %v2130 = vunpack.c.l.b16 %v701
      %v2131 = vunpack.c.h.b16 %v701
      %v2132 = vunpack.c.l.b16 %v702
      %v2133 = vunpack.c.h.b16 %v702
      %v2134 = vunpack.c.l.b16 %v703
      %v2135 = vunpack.c.h.b16 %v703
      %v2136 = vunpack.c.l.b16 %v704
      %v2137 = vunpack.c.h.b16 %v704
      %v2138 = vunpack.c.l.b16 %v705
      %v2139 = vunpack.c.h.b16 %v705
      %v2140 = vunpack.c.l.b16 %v706
      %v2141 = vunpack.c.h.b16 %v706
      %v2142 = vunpack.c.l.b16 %v707
      %v2143 = vunpack.c.h.b16 %v707
      %v2144 = vunpack.c.l.b16 %v708
      %v2145 = vunpack.c.h.b16 %v708
      %v2146 = vunpack.c.l.b16 %v709
      %v2147 = vunpack.c.h.b16 %v709
      %v2148 = vunpack.c.l.b16 %v710
      %v2149 = vunpack.c.h.b16 %v710
      %v2150 = vunpack.c.l.b16 %v711
      %v2151 = vunpack.c.h.b16 %v711
      %v2152 = vunpack.c.l.b16 %v712
      %v2153 = vunpack.c.h.b16 %v712
      %v2154 = vunpack.c.l.b16 %v713
      %v2155 = vunpack.c.h.b16 %v713
      %v2156 = vunpack.c.l.b16 %v714
      %v2157 = vunpack.c.h.b16 %v714
      %v2158 = vunpack.c.l.b16 %v715
      %v2159 = vunpack.c.h.b16 %v715
      %v2160 = vunpack.c.l.b16 %v716
      %v2161 = vunpack.c.h.b16 %v716
      %v2162 = vunpack.c.l.b16 %v717
      %v2163 = vunpack.c.h.b16 %v717
      %v2164 = vunpack.c.l.b16 %v718
      %v2165 = vunpack.c.h.b16 %v718
      %v2166 = vunpack.c.l.b16 %v719
      %v2167 = vunpack.c.h.b16 %v719
      %v2168 = vunpack.c.l.b16 %v720
      %v2169 = vunpack.c.h.b16 %v720
      %v2170 = vunpack.c.l.b16 %v721
      %v2171 = vunpack.c.h.b16 %v721
      %v2172 = vunpack.c.l.b16 %v722
      %v2173 = vunpack.c.h.b16 %v722
      %v2174 = vunpack.c.l.b16 %v723
      %v2175 = vunpack.c.h.b16 %v723
      %v2176 = vunpack.c.l.b16 %v724
      %v2177 = vunpack.c.h.b16 %v724
      %v2178 = vunpack.c.l.b16 %v725
      %v2179 = vunpack.c.h.b16 %v725
      %v2180 = vunpack.c.l.b16 %v726
      %v2181 = vunpack.c.h.b16 %v726
      %v2182 = vunpack.c.l.b16 %v727
      %v2183 = vunpack.c.h.b16 %v727
      %v2184 = vunpack.c.l.b16 %v728
      %v2185 = vunpack.c.h.b16 %v728
      %v2186 = vunpack.c.l.b16 %v729
      %v2187 = vunpack.c.h.b16 %v729
      %v2188 = vunpack.c.l.b16 %v730
      %v2189 = vunpack.c.h.b16 %v730
      %v2190 = vunpack.c.l.b16 %v731
      %v2191 = vunpack.c.h.b16 %v731
      %v2192 = vunpack.c.l.b16 %v732
      %v2193 = vunpack.c.h.b16 %v732
      %v2194 = vunpack.c.l.b16 %v733
      %v2195 = vunpack.c.h.b16 %v733
      %v2196 = vunpack.c.l.b16 %v734
      %v2197 = vunpack.c.h.b16 %v734
      %v2198 = vunpack.c.l.b16 %v735
      %v2199 = vunpack.c.h.b16 %v735
      %v2200 = vunpack.c.l.b16 %v736
      %v2201 = vunpack.c.h.b16 %v736
      %v2202 = vunpack.c.l.b16 %v737
      %v2203 = vunpack.c.h.b16 %v737
      %v2204 = vunpack.c.l.b16 %v738
      %v2205 = vunpack.c.h.b16 %v738
      %v2206 = vunpack.c.l.b16 %v739
      %v2207 = vunpack.c.h.b16 %v739
      %v2208 = vunpack.c.l.b16 %v740
      %v2209 = vunpack.c.h.b16 %v740
      %v2210 = vunpack.c.l.b16 %v741
      %v2211 = vunpack.c.h.b16 %v741
      %v2212 = vunpack.c.l.b16 %v742
      %v2213 = vunpack.c.h.b16 %v742
      %v2214 = vunpack.c.l.b16 %v743
      %v2215 = vunpack.c.h.b16 %v743
      %v2216 = vunpack.c.l.b16 %v744
      %v2217 = vunpack.c.h.b16 %v744
      %v2218 = vunpack.c.l.b16 %v745
      %v2219 = vunpack.c.h.b16 %v745
      %v2220 = vunpack.c.l.b16 %v746
      %v2221 = vunpack.c.h.b16 %v746
      %v2222 = vunpack.c.l.b16 %v747
      %v2223 = vunpack.c.h.b16 %v747
      %v2224 = vunpack.c.l.b16 %v748
      %v2225 = vunpack.c.h.b16 %v748
      %v2226 = vunpack.c.l.b16 %v749
      %v2227 = vunpack.c.h.b16 %v749
      %v2228 = vunpack.c.l.b16 %v750
      %v2229 = vunpack.c.h.b16 %v750
      %v2230 = vunpack.c.l.b16 %v751
      %v2231 = vunpack.c.h.b16 %v751
      %v2232 = vunpack.c.l.b16 %v752
      %v2233 = vunpack.c.h.b16 %v752
      %v2234 = vunpack.c.l.b16 %v753
      %v2235 = vunpack.c.h.b16 %v753
      %v2236 = vunpack.c.l.b16 %v754
      %v2237 = vunpack.c.h.b16 %v754
      %v2238 = vunpack.c.l.b16 %v755
      %v2239 = vunpack.c.h.b16 %v755
      %v2240 = vunpack.c.l.b16 %v756
      %v2241 = vunpack.c.h.b16 %v756
      %v2242 = vunpack.c.l.b16 %v757
      %v2243 = vunpack.c.h.b16 %v757
      %v2244 = vunpack.c.l.b16 %v758
      %v2245 = vunpack.c.h.b16 %v758
      %v2246 = vunpack.c.l.b16 %v759
      %v2247 = vunpack.c.h.b16 %v759
      %v2248 = vunpack.c.l.b16 %v760
      %v2249 = vunpack.c.h.b16 %v760
      %v2250 = vunpack.c.l.b16 %v761
      %v2251 = vunpack.c.h.b16 %v761
      %v2252 = vunpack.c.l.b16 %v762
      %v2253 = vunpack.c.h.b16 %v762
      %v2254 = vunpack.c.l.b16 %v763
      %v2255 = vunpack.c.h.b16 %v763
      %v2256 = vunpack.c.l.b16 %v764
      %v2257 = vunpack.c.h.b16 %v764
      %v2258 = vunpack.c.l.b16 %v765
      %v2259 = vunpack.c.h.b16 %v765
      %v2260 = vunpack.c.l.b16 %v766
      %v2261 = vunpack.c.h.b16 %v766
      %v2262 = vunpack.c.l.b16 %v767
      %v2263 = vunpack.c.h.b16 %v767
      %v2264 = vunpack.c.l.b16 %v768
      %v2265 = vunpack.c.h.b16 %v768
      %v2266 = vunpack.c.l.b16 %v769
      %v2267 = vunpack.c.h.b16 %v769
      %v2268 = vunpack.c.l.b16 %v770
      %v2269 = vunpack.c.h.b16 %v770
      %v2270 = vunpack.c.l.b16 %v771
      %v2271 = vunpack.c.h.b16 %v771
      %v2272 = vunpack.c.l.b16 %v772
      %v2273 = vunpack.c.h.b16 %v772
      %v2274 = vunpack.c.l.b16 %v773
      %v2275 = vunpack.c.h.b16 %v773
      %v2276 = vunpack.c.l.b16 %v774
      %v2277 = vunpack.c.h.b16 %v774
      %v2278 = vunpack.c.l.b16 %v775
      %v2279 = vunpack.c.h.b16 %v775
      %v2280 = vunpack.c.l.b16 %v776
      %v2281 = vunpack.c.h.b16 %v776
      %v2282 = vunpack.c.l.b16 %v777
      %v2283 = vunpack.c.h.b16 %v777
      %v2284 = vunpack.c.l.b16 %v778
      %v2285 = vunpack.c.h.b16 %v778
      %v2286 = vunpack.c.l.b16 %v779
      %v2287 = vunpack.c.h.b16 %v779
      %v2288 = vunpack.c.l.b16 %v780
      %v2289 = vunpack.c.h.b16 %v780
      %v2290 = vunpack.c.l.b16 %v781
      %v2291 = vunpack.c.h.b16 %v781
      %v2292 = vunpack.c.l.b16 %v782
      %v2293 = vunpack.c.h.b16 %v782
      %v2294 = vunpack.c.l.b16 %v783
      %v2295 = vunpack.c.h.b16 %v783
      %v2296 = vunpack.c.l.b16 %v784
      %v2297 = vunpack.c.h.b16 %v784
      %v2298 = vunpack.c.l.b16 %v785
      %v2299 = vunpack.c.h.b16 %v785
      %v2300 = vunpack.c.l.b16 %v786
      %v2301 = vunpack.c.h.b16 %v786
      %v2302 = vunpack.c.l.b16 %v787
      %v2303 = vunpack.c.h.b16 %v787
      %v2304 = vunpack.c.l.b16 %v788
      %v2305 = vunpack.c.h.b16 %v788
      %v2306 = vunpack.c.l.b16 %v789
      %v2307 = vunpack.c.h.b16 %v789
      %v2308 = vunpack.c.l.b16 %v790
      %v2309 = vunpack.c.h.b16 %v790
      %v2310 = vunpack.c.l.b16 %v791
      %v2311 = vunpack.c.h.b16 %v791
      %v2312 = vunpack.c.l.b16 %v792
      %v2313 = vunpack.c.h.b16 %v792
      %v2314 = vunpack.c.l.b16 %v793
      %v2315 = vunpack.c.h.b16 %v793
      %v2316 = vunpack.c.l.b16 %v794
      %v2317 = vunpack.c.h.b16 %v794
      %v2318 = vunpack.c.l.b16 %v795
      %v2319 = vunpack.c.h.b16 %v795
      %v2320 = vunpack.c.l.b16 %v796
      %v2321 = vunpack.c.h.b16 %v796
      %v2322 = vunpack.c.l.b16 %v797
      %v2323 = vunpack.c.h.b16 %v797
      %v2324 = vunpack.c.l.b16 %v798
      %v2325 = vunpack.c.h.b16 %v798
      %v2326 = vunpack.c.l.b16 %v799
      %v2327 = vunpack.c.h.b16 %v799
      %v2328 = vunpack.c.l.b16 %v800
      %v2329 = vunpack.c.h.b16 %v800
      %v2330 = vunpack.c.l.b16 %v801
      %v2331 = vunpack.c.h.b16 %v801
      %v2332 = vunpack.c.l.b16 %v802
      %v2333 = vunpack.c.h.b16 %v802
      %v2334 = vunpack.c.l.b16 %v803
      %v2335 = vunpack.c.h.b16 %v803
      %v2336 = vunpack.c.l.b16 %v804
      %v2337 = vunpack.c.h.b16 %v804
      %v2338 = vunpack.c.l.b16 %v805
      %v2339 = vunpack.c.h.b16 %v805
      %v2340 = vunpack.c.l.b16 %v806
      %v2341 = vunpack.c.h.b16 %v806
      %v2342 = vunpack.c.l.b16 %v807
      %v2343 = vunpack.c.h.b16 %v807
      %v2344 = vpack.c.b16 %v1328, %v1320
      %v2345 = vpack.c.b16 %v1329, %v1321
      %v2346 = vpack.c.b16 %v1330, %v1322
      %v2347 = vpack.c.b16 %v1331, %v1323
      %v2348 = vpack.c.b16 %v1332, %v1324
      %v2349 = vpack.c.b16 %v1333, %v1325
      %v2350 = vpack.c.b16 %v1334, %v1326
      %v2351 = vpack.c.b16 %v1335, %v1327
      %v2352 = vpack.c.b16 %v1344, %v1336
      %v2353 = vpack.c.b16 %v1345, %v1337
      %v2354 = vpack.c.b16 %v1346, %v1338
      %v2355 = vpack.c.b16 %v1347, %v1339
      %v2356 = vpack.c.b16 %v1348, %v1340
      %v2357 = vpack.c.b16 %v1349, %v1341
      %v2358 = vpack.c.b16 %v1350, %v1342
      %v2359 = vpack.c.b16 %v1351, %v1343
      %v2360 = vpack.c.b16 %v1360, %v1352
      %v2361 = vpack.c.b16 %v1361, %v1353
      %v2362 = vpack.c.b16 %v1362, %v1354
      %v2363 = vpack.c.b16 %v1363, %v1355
      %v2364 = vpack.c.b16 %v1364, %v1356
      %v2365 = vpack.c.b16 %v1365, %v1357
      %v2366 = vpack.c.b16 %v1366, %v1358
      %v2367 = vpack.c.b16 %v1367, %v1359
      %v2368 = vpack.c.b16 %v1376, %v1368
      %v2369 = vpack.c.b16 %v1377, %v1369
      %v2370 = vpack.c.b16 %v1378, %v1370
      %v2371 = vpack.c.b16 %v1379, %v1371
      %v2372 = vpack.c.b16 %v1380, %v1372
      %v2373 = vpack.c.b16 %v1381, %v1373
      %v2374 = vpack.c.b16 %v1382, %v1374
      %v2375 = vpack.c.b16 %v1383, %v1375
      %v2376 = vpack.c.b16 %v1392, %v1384
      %v2377 = vpack.c.b16 %v1393, %v1385
      %v2378 = vpack.c.b16 %v1394, %v1386
      %v2379 = vpack.c.b16 %v1395, %v1387
      %v2380 = vpack.c.b16 %v1396, %v1388
      %v2381 = vpack.c.b16 %v1397, %v1389
      %v2382 = vpack.c.b16 %v1398, %v1390
      %v2383 = vpack.c.b16 %v1399, %v1391
      %v2384 = vpack.c.b16 %v1408, %v1400
      %v2385 = vpack.c.b16 %v1409, %v1401
      %v2386 = vpack.c.b16 %v1410, %v1402
      %v2387 = vpack.c.b16 %v1411, %v1403
      %v2388 = vpack.c.b16 %v1412, %v1404
      %v2389 = vpack.c.b16 %v1413, %v1405
      %v2390 = vpack.c.b16 %v1414, %v1406
      %v2391 = vpack.c.b16 %v1415, %v1407
      %v2392 = vpack.c.b16 %v1424, %v1416
      %v2393 = vpack.c.b16 %v1425, %v1417
      %v2394 = vpack.c.b16 %v1426, %v1418
      %v2395 = vpack.c.b16 %v1427, %v1419
      %v2396 = vpack.c.b16 %v1428, %v1420
      %v2397 = vpack.c.b16 %v1429, %v1421
      %v2398 = vpack.c.b16 %v1430, %v1422
      %v2399 = vpack.c.b16 %v1431, %v1423
      %v2400 = vpack.c.b16 %v1440, %v1432
      %v2401 = vpack.c.b16 %v1441, %v1433
      %v2402 = vpack.c.b16 %v1442, %v1434
      %v2403 = vpack.c.b16 %v1443, %v1435
      %v2404 = vpack.c.b16 %v1444, %v1436
      %v2405 = vpack.c.b16 %v1445, %v1437
      %v2406 = vpack.c.b16 %v1446, %v1438
      %v2407 = vpack.c.b16 %v1447, %v1439
      %v2408 = vpack.c.b16 %v1456, %v1448
      %v2409 = vpack.c.b16 %v1457, %v1449
      %v2410 = vpack.c.b16 %v1458, %v1450
      %v2411 = vpack.c.b16 %v1459, %v1451
      %v2412 = vpack.c.b16 %v1460, %v1452
      %v2413 = vpack.c.b16 %v1461, %v1453
      %v2414 = vpack.c.b16 %v1462, %v1454
      %v2415 = vpack.c.b16 %v1463, %v1455
      %v2416 = vpack.c.b16 %v1472, %v1464
      %v2417 = vpack.c.b16 %v1473, %v1465
      %v2418 = vpack.c.b16 %v1474, %v1466
      %v2419 = vpack.c.b16 %v1475, %v1467
      %v2420 = vpack.c.b16 %v1476, %v1468
      %v2421 = vpack.c.b16 %v1477, %v1469
      %v2422 = vpack.c.b16 %v1478, %v1470
      %v2423 = vpack.c.b16 %v1479, %v1471
      %v2424 = vpack.c.b16 %v1488, %v1480
      %v2425 = vpack.c.b16 %v1489, %v1481
      %v2426 = vpack.c.b16 %v1490, %v1482
      %v2427 = vpack.c.b16 %v1491, %v1483
      %v2428 = vpack.c.b16 %v1492, %v1484
      %v2429 = vpack.c.b16 %v1493, %v1485
      %v2430 = vpack.c.b16 %v1494, %v1486
      %v2431 = vpack.c.b16 %v1495, %v1487
      %v2432 = vpack.c.b16 %v1504, %v1496
      %v2433 = vpack.c.b16 %v1505, %v1497
      %v2434 = vpack.c.b16 %v1506, %v1498
      %v2435 = vpack.c.b16 %v1507, %v1499
      %v2436 = vpack.c.b16 %v1508, %v1500
      %v2437 = vpack.c.b16 %v1509, %v1501
      %v2438 = vpack.c.b16 %v1510, %v1502
      %v2439 = vpack.c.b16 %v1511, %v1503
      %v2440 = vpack.c.b16 %v1520, %v1512
      %v2441 = vpack.c.b16 %v1521, %v1513
      %v2442 = vpack.c.b16 %v1522, %v1514
      %v2443 = vpack.c.b16 %v1523, %v1515
      %v2444 = vpack.c.b16 %v1524, %v1516
      %v2445 = vpack.c.b16 %v1525, %v1517
      %v2446 = vpack.c.b16 %v1526, %v1518
      %v2447 = vpack.c.b16 %v1527, %v1519
      %v2448 = vpack.c.b16 %v1536, %v1528
      %v2449 = vpack.c.b16 %v1537, %v1529
      %v2450 = vpack.c.b16 %v1538, %v1530
      %v2451 = vpack.c.b16 %v1539, %v1531
      %v2452 = vpack.c.b16 %v1540, %v1532
      %v2453 = vpack.c.b16 %v1541, %v1533
      %v2454 = vpack.c.b16 %v1542, %v1534
      %v2455 = vpack.c.b16 %v1543, %v1535
      %v2456 = vpack.c.b16 %v1552, %v1544
      %v2457 = vpack.c.b16 %v1553, %v1545
      %v2458 = vpack.c.b16 %v1554, %v1546
      %v2459 = vpack.c.b16 %v1555, %v1547
      %v2460 = vpack.c.b16 %v1556, %v1548
      %v2461 = vpack.c.b16 %v1557, %v1549
      %v2462 = vpack.c.b16 %v1558, %v1550
      %v2463 = vpack.c.b16 %v1559, %v1551
      %v2464 = vpack.c.b16 %v1568, %v1560
      %v2465 = vpack.c.b16 %v1569, %v1561
      %v2466 = vpack.c.b16 %v1570, %v1562
      %v2467 = vpack.c.b16 %v1571, %v1563
      %v2468 = vpack.c.b16 %v1572, %v1564
      %v2469 = vpack.c.b16 %v1573, %v1565
      %v2470 = vpack.c.b16 %v1574, %v1566
      %v2471 = vpack.c.b16 %v1575, %v1567
      %v2472 = vpack.c.b16 %v1584, %v1576
      %v2473 = vpack.c.b16 %v1585, %v1577
      %v2474 = vpack.c.b16 %v1586, %v1578
      %v2475 = vpack.c.b16 %v1587, %v1579
      %v2476 = vpack.c.b16 %v1588, %v1580
      %v2477 = vpack.c.b16 %v1589, %v1581
      %v2478 = vpack.c.b16 %v1590, %v1582
      %v2479 = vpack.c.b16 %v1591, %v1583
      %v2480 = vpack.c.b16 %v1600, %v1592
      %v2481 = vpack.c.b16 %v1601, %v1593
      %v2482 = vpack.c.b16 %v1602, %v1594
      %v2483 = vpack.c.b16 %v1603, %v1595
      %v2484 = vpack.c.b16 %v1604, %v1596
      %v2485 = vpack.c.b16 %v1605, %v1597
      %v2486 = vpack.c.b16 %v1606, %v1598
      %v2487 = vpack.c.b16 %v1607, %v1599
      %v2488 = vpack.c.b16 %v1616, %v1608
      %v2489 = vpack.c.b16 %v1617, %v1609
      %v2490 = vpack.c.b16 %v1618, %v1610
      %v2491 = vpack.c.b16 %v1619, %v1611
      %v2492 = vpack.c.b16 %v1620, %v1612
      %v2493 = vpack.c.b16 %v1621, %v1613
      %v2494 = vpack.c.b16 %v1622, %v1614
      %v2495 = vpack.c.b16 %v1623, %v1615
      %v2496 = vpack.c.b16 %v1632, %v1624
      %v2497 = vpack.c.b16 %v1633, %v1625
      %v2498 = vpack.c.b16 %v1634, %v1626
      %v2499 = vpack.c.b16 %v1635, %v1627
      %v2500 = vpack.c.b16 %v1636, %v1628
      %v2501 = vpack.c.b16 %v1637, %v1629
      %v2502 = vpack.c.b16 %v1638, %v1630
      %v2503 = vpack.c.b16 %v1639, %v1631
      %v2504 = vpack.c.b16 %v1648, %v1640
      %v2505 = vpack.c.b16 %v1649, %v1641
      %v2506 = vpack.c.b16 %v1650, %v1642
      %v2507 = vpack.c.b16 %v1651, %v1643
      %v2508 = vpack.c.b16 %v1652, %v1644
      %v2509 = vpack.c.b16 %v1653, %v1645
      %v2510 = vpack.c.b16 %v1654, %v1646
      %v2511 = vpack.c.b16 %v1655, %v1647
      %v2512 = vpack.c.b16 %v1664, %v1656
      %v2513 = vpack.c.b16 %v1665, %v1657
      %v2514 = vpack.c.b16 %v1666, %v1658
      %v2515 = vpack.c.b16 %v1667, %v1659
      %v2516 = vpack.c.b16 %v1668, %v1660
      %v2517 = vpack.c.b16 %v1669, %v1661
      %v2518 = vpack.c.b16 %v1670, %v1662
      %v2519 = vpack.c.b16 %v1671, %v1663
      %v2520 = vpack.c.b16 %v1680, %v1672
      %v2521 = vpack.c.b16 %v1681, %v1673
      %v2522 = vpack.c.b16 %v1682, %v1674
      %v2523 = vpack.c.b16 %v1683, %v1675
      %v2524 = vpack.c.b16 %v1684, %v1676
      %v2525 = vpack.c.b16 %v1685, %v1677
      %v2526 = vpack.c.b16 %v1686, %v1678
      %v2527 = vpack.c.b16 %v1687, %v1679
      %v2528 = vpack.c.b16 %v1696, %v1688
      %v2529 = vpack.c.b16 %v1697, %v1689
      %v2530 = vpack.c.b16 %v1698, %v1690
      %v2531 = vpack.c.b16 %v1699, %v1691
      %v2532 = vpack.c.b16 %v1700, %v1692
      %v2533 = vpack.c.b16 %v1701, %v1693
      %v2534 = vpack.c.b16 %v1702, %v1694
      %v2535 = vpack.c.b16 %v1703, %v1695
      %v2536 = vpack.c.b16 %v1712, %v1704
      %v2537 = vpack.c.b16 %v1713, %v1705
      %v2538 = vpack.c.b16 %v1714, %v1706
      %v2539 = vpack.c.b16 %v1715, %v1707
      %v2540 = vpack.c.b16 %v1716, %v1708
      %v2541 = vpack.c.b16 %v1717, %v1709
      %v2542 = vpack.c.b16 %v1718, %v1710
      %v2543 = vpack.c.b16 %v1719, %v1711
      %v2544 = vpack.c.b16 %v1728, %v1720
      %v2545 = vpack.c.b16 %v1729, %v1721
      %v2546 = vpack.c.b16 %v1730, %v1722
      %v2547 = vpack.c.b16 %v1731, %v1723
      %v2548 = vpack.c.b16 %v1732, %v1724
      %v2549 = vpack.c.b16 %v1733, %v1725
      %v2550 = vpack.c.b16 %v1734, %v1726
      %v2551 = vpack.c.b16 %v1735, %v1727
      %v2552 = vpack.c.b16 %v1744, %v1736
      %v2553 = vpack.c.b16 %v1745, %v1737
      %v2554 = vpack.c.b16 %v1746, %v1738
      %v2555 = vpack.c.b16 %v1747, %v1739
      %v2556 = vpack.c.b16 %v1748, %v1740
      %v2557 = vpack.c.b16 %v1749, %v1741
      %v2558 = vpack.c.b16 %v1750, %v1742
      %v2559 = vpack.c.b16 %v1751, %v1743
      %v2560 = vpack.c.b16 %v1760, %v1752
      %v2561 = vpack.c.b16 %v1761, %v1753
      %v2562 = vpack.c.b16 %v1762, %v1754
      %v2563 = vpack.c.b16 %v1763, %v1755
      %v2564 = vpack.c.b16 %v1764, %v1756
      %v2565 = vpack.c.b16 %v1765, %v1757
      %v2566 = vpack.c.b16 %v1766, %v1758
      %v2567 = vpack.c.b16 %v1767, %v1759
      %v2568 = vpack.c.b16 %v1776, %v1768
      %v2569 = vpack.c.b16 %v1777, %v1769
      %v2570 = vpack.c.b16 %v1778, %v1770
      %v2571 = vpack.c.b16 %v1779, %v1771
      %v2572 = vpack.c.b16 %v1780, %v1772
      %v2573 = vpack.c.b16 %v1781, %v1773
      %v2574 = vpack.c.b16 %v1782, %v1774
      %v2575 = vpack.c.b16 %v1783, %v1775
      %v2576 = vpack.c.b16 %v1792, %v1784
      %v2577 = vpack.c.b16 %v1793, %v1785
      %v2578 = vpack.c.b16 %v1794, %v1786
      %v2579 = vpack.c.b16 %v1795, %v1787
      %v2580 = vpack.c.b16 %v1796, %v1788
      %v2581 = vpack.c.b16 %v1797, %v1789
      %v2582 = vpack.c.b16 %v1798, %v1790
      %v2583 = vpack.c.b16 %v1799, %v1791
      %v2584 = vpack.c.b16 %v1808, %v1800
      %v2585 = vpack.c.b16 %v1809, %v1801
      %v2586 = vpack.c.b16 %v1810, %v1802
      %v2587 = vpack.c.b16 %v1811, %v1803
      %v2588 = vpack.c.b16 %v1812, %v1804
      %v2589 = vpack.c.b16 %v1813, %v1805
      %v2590 = vpack.c.b16 %v1814, %v1806
      %v2591 = vpack.c.b16 %v1815, %v1807
      %v2592 = vpack.c.b16 %v1824, %v1816
      %v2593 = vpack.c.b16 %v1825, %v1817
      %v2594 = vpack.c.b16 %v1826, %v1818
      %v2595 = vpack.c.b16 %v1827, %v1819
      %v2596 = vpack.c.b16 %v1828, %v1820
      %v2597 = vpack.c.b16 %v1829, %v1821
      %v2598 = vpack.c.b16 %v1830, %v1822
      %v2599 = vpack.c.b16 %v1831, %v1823
      %v2600 = vpack.c.b16 %v1840, %v1832
      %v2601 = vpack.c.b16 %v1841, %v1833
      %v2602 = vpack.c.b16 %v1842, %v1834
      %v2603 = vpack.c.b16 %v1843, %v1835
      %v2604 = vpack.c.b16 %v1844, %v1836
      %v2605 = vpack.c.b16 %v1845, %v1837
      %v2606 = vpack.c.b16 %v1846, %v1838
      %v2607 = vpack.c.b16 %v1847, %v1839
      %v2608 = vpack.c.b16 %v1856, %v1848
      %v2609 = vpack.c.b16 %v1857, %v1849
      %v2610 = vpack.c.b16 %v1858, %v1850
      %v2611 = vpack.c.b16 %v1859, %v1851
      %v2612 = vpack.c.b16 %v1860, %v1852
      %v2613 = vpack.c.b16 %v1861, %v1853
      %v2614 = vpack.c.b16 %v1862, %v1854
      %v2615 = vpack.c.b16 %v1863, %v1855
      %v2616 = vpack.c.b16 %v1872, %v1864
      %v2617 = vpack.c.b16 %v1873, %v1865
      %v2618 = vpack.c.b16 %v1874, %v1866
      %v2619 = vpack.c.b16 %v1875, %v1867
      %v2620 = vpack.c.b16 %v1876, %v1868
      %v2621 = vpack.c.b16 %v1877, %v1869
      %v2622 = vpack.c.b16 %v1878, %v1870
      %v2623 = vpack.c.b16 %v1879, %v1871
      %v2624 = vpack.c.b16 %v1888, %v1880
      %v2625 = vpack.c.b16 %v1889, %v1881
      %v2626 = vpack.c.b16 %v1890, %v1882
      %v2627 = vpack.c.b16 %v1891, %v1883
      %v2628 = vpack.c.b16 %v1892, %v1884
      %v2629 = vpack.c.b16 %v1893, %v1885
      %v2630 = vpack.c.b16 %v1894, %v1886
      %v2631 = vpack.c.b16 %v1895, %v1887
      %v2632 = vpack.c.b16 %v1904, %v1896
      %v2633 = vpack.c.b16 %v1905, %v1897
      %v2634 = vpack.c.b16 %v1906, %v1898
      %v2635 = vpack.c.b16 %v1907, %v1899
      %v2636 = vpack.c.b16 %v1908, %v1900
      %v2637 = vpack.c.b16 %v1909, %v1901
      %v2638 = vpack.c.b16 %v1910, %v1902
      %v2639 = vpack.c.b16 %v1911, %v1903
      %v2640 = vpack.c.b16 %v1920, %v1912
      %v2641 = vpack.c.b16 %v1921, %v1913
      %v2642 = vpack.c.b16 %v1922, %v1914
      %v2643 = vpack.c.b16 %v1923, %v1915
      %v2644 = vpack.c.b16 %v1924, %v1916
      %v2645 = vpack.c.b16 %v1925, %v1917
      %v2646 = vpack.c.b16 %v1926, %v1918
      %v2647 = vpack.c.b16 %v1927, %v1919
      %v2648 = vpack.c.b16 %v1936, %v1928
      %v2649 = vpack.c.b16 %v1937, %v1929
      %v2650 = vpack.c.b16 %v1938, %v1930
      %v2651 = vpack.c.b16 %v1939, %v1931
      %v2652 = vpack.c.b16 %v1940, %v1932
      %v2653 = vpack.c.b16 %v1941, %v1933
      %v2654 = vpack.c.b16 %v1942, %v1934
      %v2655 = vpack.c.b16 %v1943, %v1935
      %v2656 = vpack.c.b16 %v1952, %v1944
      %v2657 = vpack.c.b16 %v1953, %v1945
      %v2658 = vpack.c.b16 %v1954, %v1946
      %v2659 = vpack.c.b16 %v1955, %v1947
      %v2660 = vpack.c.b16 %v1956, %v1948
      %v2661 = vpack.c.b16 %v1957, %v1949
      %v2662 = vpack.c.b16 %v1958, %v1950
      %v2663 = vpack.c.b16 %v1959, %v1951
      %v2664 = vpack.c.b16 %v1968, %v1960
      %v2665 = vpack.c.b16 %v1969, %v1961
      %v2666 = vpack.c.b16 %v1970, %v1962
      %v2667 = vpack.c.b16 %v1971, %v1963
      %v2668 = vpack.c.b16 %v1972, %v1964
      %v2669 = vpack.c.b16 %v1973, %v1965
      %v2670 = vpack.c.b16 %v1974, %v1966
      %v2671 = vpack.c.b16 %v1975, %v1967
      %v2672 = vpack.c.b16 %v1984, %v1976
      %v2673 = vpack.c.b16 %v1985, %v1977
      %v2674 = vpack.c.b16 %v1986, %v1978
      %v2675 = vpack.c.b16 %v1987, %v1979
      %v2676 = vpack.c.b16 %v1988, %v1980
      %v2677 = vpack.c.b16 %v1989, %v1981
      %v2678 = vpack.c.b16 %v1990, %v1982
      %v2679 = vpack.c.b16 %v1991, %v1983
      %v2680 = vpack.c.b16 %v2000, %v1992
      %v2681 = vpack.c.b16 %v2001, %v1993
      %v2682 = vpack.c.b16 %v2002, %v1994
      %v2683 = vpack.c.b16 %v2003, %v1995
      %v2684 = vpack.c.b16 %v2004, %v1996
      %v2685 = vpack.c.b16 %v2005, %v1997
      %v2686 = vpack.c.b16 %v2006, %v1998
      %v2687 = vpack.c.b16 %v2007, %v1999
      %v2688 = vpack.c.b16 %v2016, %v2008
      %v2689 = vpack.c.b16 %v2017, %v2009
      %v2690 = vpack.c.b16 %v2018, %v2010
      %v2691 = vpack.c.b16 %v2019, %v2011
      %v2692 = vpack.c.b16 %v2020, %v2012
      %v2693 = vpack.c.b16 %v2021, %v2013
      %v2694 = vpack.c.b16 %v2022, %v2014
      %v2695 = vpack.c.b16 %v2023, %v2015
      %v2696 = vpack.c.b16 %v2032, %v2024
      %v2697 = vpack.c.b16 %v2033, %v2025
      %v2698 = vpack.c.b16 %v2034, %v2026
      %v2699 = vpack.c.b16 %v2035, %v2027
      %v2700 = vpack.c.b16 %v2036, %v2028
      %v2701 = vpack.c.b16 %v2037, %v2029
      %v2702 = vpack.c.b16 %v2038, %v2030
      %v2703 = vpack.c.b16 %v2039, %v2031
      %v2704 = vpack.c.b16 %v2048, %v2040
      %v2705 = vpack.c.b16 %v2049, %v2041
      %v2706 = vpack.c.b16 %v2050, %v2042
      %v2707 = vpack.c.b16 %v2051, %v2043
      %v2708 = vpack.c.b16 %v2052, %v2044
      %v2709 = vpack.c.b16 %v2053, %v2045
      %v2710 = vpack.c.b16 %v2054, %v2046
      %v2711 = vpack.c.b16 %v2055, %v2047
      %v2712 = vpack.c.b16 %v2064, %v2056
      %v2713 = vpack.c.b16 %v2065, %v2057
      %v2714 = vpack.c.b16 %v2066, %v2058
      %v2715 = vpack.c.b16 %v2067, %v2059
      %v2716 = vpack.c.b16 %v2068, %v2060
      %v2717 = vpack.c.b16 %v2069, %v2061
      %v2718 = vpack.c.b16 %v2070, %v2062
      %v2719 = vpack.c.b16 %v2071, %v2063
      %v2720 = vpack.c.b16 %v2080, %v2072
      %v2721 = vpack.c.b16 %v2081, %v2073
      %v2722 = vpack.c.b16 %v2082, %v2074
      %v2723 = vpack.c.b16 %v2083, %v2075
      %v2724 = vpack.c.b16 %v2084, %v2076
      %v2725 = vpack.c.b16 %v2085, %v2077
      %v2726 = vpack.c.b16 %v2086, %v2078
      %v2727 = vpack.c.b16 %v2087, %v2079
      %v2728 = vpack.c.b16 %v2096, %v2088
      %v2729 = vpack.c.b16 %v2097, %v2089
      %v2730 = vpack.c.b16 %v2098, %v2090
      %v2731 = vpack.c.b16 %v2099, %v2091
      %v2732 = vpack.c.b16 %v2100, %v2092
      %v2733 = vpack.c.b16 %v2101, %v2093
      %v2734 = vpack.c.b16 %v2102, %v2094
      %v2735 = vpack.c.b16 %v2103, %v2095
      %v2736 = vpack.c.b16 %v2112, %v2104
      %v2737 = vpack.c.b16 %v2113, %v2105
      %v2738 = vpack.c.b16 %v2114, %v2106
      %v2739 = vpack.c.b16 %v2115, %v2107
      %v2740 = vpack.c.b16 %v2116, %v2108
      %v2741 = vpack.c.b16 %v2117, %v2109
      %v2742 = vpack.c.b16 %v2118, %v2110
      %v2743 = vpack.c.b16 %v2119, %v2111
      %v2744 = vpack.c.b16 %v2128, %v2120
      %v2745 = vpack.c.b16 %v2129, %v2121
      %v2746 = vpack.c.b16 %v2130, %v2122
      %v2747 = vpack.c.b16 %v2131, %v2123
      %v2748 = vpack.c.b16 %v2132, %v2124
      %v2749 = vpack.c.b16 %v2133, %v2125
      %v2750 = vpack.c.b16 %v2134, %v2126
      %v2751 = vpack.c.b16 %v2135, %v2127
      %v2752 = vpack.c.b16 %v2144, %v2136
      %v2753 = vpack.c.b16 %v2145, %v2137
      %v2754 = vpack.c.b16 %v2146, %v2138
      %v2755 = vpack.c.b16 %v2147, %v2139
      %v2756 = vpack.c.b16 %v2148, %v2140
      %v2757 = vpack.c.b16 %v2149, %v2141
      %v2758 = vpack.c.b16 %v2150, %v2142
      %v2759 = vpack.c.b16 %v2151, %v2143
      %v2760 = vpack.c.b16 %v2160, %v2152
      %v2761 = vpack.c.b16 %v2161, %v2153
      %v2762 = vpack.c.b16 %v2162, %v2154
      %v2763 = vpack.c.b16 %v2163, %v2155
      %v2764 = vpack.c.b16 %v2164, %v2156
      %v2765 = vpack.c.b16 %v2165, %v2157
      %v2766 = vpack.c.b16 %v2166, %v2158
      %v2767 = vpack.c.b16 %v2167, %v2159
      %v2768 = vpack.c.b16 %v2176, %v2168
      %v2769 = vpack.c.b16 %v2177, %v2169
      %v2770 = vpack.c.b16 %v2178, %v2170
      %v2771 = vpack.c.b16 %v2179, %v2171
      %v2772 = vpack.c.b16 %v2180, %v2172
      %v2773 = vpack.c.b16 %v2181, %v2173
      %v2774 = vpack.c.b16 %v2182, %v2174
      %v2775 = vpack.c.b16 %v2183, %v2175
      %v2776 = vpack.c.b16 %v2192, %v2184
      %v2777 = vpack.c.b16 %v2193, %v2185
      %v2778 = vpack.c.b16 %v2194, %v2186
      %v2779 = vpack.c.b16 %v2195, %v2187
      %v2780 = vpack.c.b16 %v2196, %v2188
      %v2781 = vpack.c.b16 %v2197, %v2189
      %v2782 = vpack.c.b16 %v2198, %v2190
      %v2783 = vpack.c.b16 %v2199, %v2191
      %v2784 = vpack.c.b16 %v2208, %v2200
      %v2785 = vpack.c.b16 %v2209, %v2201
      %v2786 = vpack.c.b16 %v2210, %v2202
      %v2787 = vpack.c.b16 %v2211, %v2203
      %v2788 = vpack.c.b16 %v2212, %v2204
      %v2789 = vpack.c.b16 %v2213, %v2205
      %v2790 = vpack.c.b16 %v2214, %v2206
      %v2791 = vpack.c.b16 %v2215, %v2207
      %v2792 = vpack.c.b16 %v2224, %v2216
      %v2793 = vpack.c.b16 %v2225, %v2217
      %v2794 = vpack.c.b16 %v2226, %v2218
      %v2795 = vpack.c.b16 %v2227, %v2219
      %v2796 = vpack.c.b16 %v2228, %v2220
      %v2797 = vpack.c.b16 %v2229, %v2221
      %v2798 = vpack.c.b16 %v2230, %v2222
      %v2799 = vpack.c.b16 %v2231, %v2223
      %v2800 = vpack.c.b16 %v2240, %v2232
      %v2801 = vpack.c.b16 %v2241, %v2233
      %v2802 = vpack.c.b16 %v2242, %v2234
      %v2803 = vpack.c.b16 %v2243, %v2235
      %v2804 = vpack.c.b16 %v2244, %v2236
      %v2805 = vpack.c.b16 %v2245, %v2237
      %v2806 = vpack.c.b16 %v2246, %v2238
      %v2807 = vpack.c.b16 %v2247, %v2239
      %v2808 = vpack.c.b16 %v2256, %v2248
      %v2809 = vpack.c.b16 %v2257, %v2249
      %v2810 = vpack.c.b16 %v2258, %v2250
      %v2811 = vpack.c.b16 %v2259, %v2251
      %v2812 = vpack.c.b16 %v2260, %v2252
      %v2813 = vpack.c.b16 %v2261, %v2253
      %v2814 = vpack.c.b16 %v2262, %v2254
      %v2815 = vpack.c.b16 %v2263, %v2255
      %v2816 = vpack.c.b16 %v2272, %v2264
      %v2817 = vpack.c.b16 %v2273, %v2265
      %v2818 = vpack.c.b16 %v2274, %v2266
      %v2819 = vpack.c.b16 %v2275, %v2267
      %v2820 = vpack.c.b16 %v2276, %v2268
      %v2821 = vpack.c.b16 %v2277, %v2269
      %v2822 = vpack.c.b16 %v2278, %v2270
      %v2823 = vpack.c.b16 %v2279, %v2271
      %v2824 = vpack.c.b16 %v2288, %v2280
      %v2825 = vpack.c.b16 %v2289, %v2281
      %v2826 = vpack.c.b16 %v2290, %v2282
      %v2827 = vpack.c.b16 %v2291, %v2283
      %v2828 = vpack.c.b16 %v2292, %v2284
      %v2829 = vpack.c.b16 %v2293, %v2285
      %v2830 = vpack.c.b16 %v2294, %v2286
      %v2831 = vpack.c.b16 %v2295, %v2287
      %v2832 = vpack.c.b16 %v2304, %v2296
      %v2833 = vpack.c.b16 %v2305, %v2297
      %v2834 = vpack.c.b16 %v2306, %v2298
      %v2835 = vpack.c.b16 %v2307, %v2299
      %v2836 = vpack.c.b16 %v2308, %v2300
      %v2837 = vpack.c.b16 %v2309, %v2301
      %v2838 = vpack.c.b16 %v2310, %v2302
      %v2839 = vpack.c.b16 %v2311, %v2303
      %v2840 = vpack.c.b16 %v2320, %v2312
      %v2841 = vpack.c.b16 %v2321, %v2313
      %v2842 = vpack.c.b16 %v2322, %v2314
      %v2843 = vpack.c.b16 %v2323, %v2315
      %v2844 = vpack.c.b16 %v2324, %v2316
      %v2845 = vpack.c.b16 %v2325, %v2317
      %v2846 = vpack.c.b16 %v2326, %v2318
      %v2847 = vpack.c.b16 %v2327, %v2319
      %v2848 = vpack.c.b16 %v2336, %v2328
      %v2849 = vpack.c.b16 %v2337, %v2329
      %v2850 = vpack.c.b16 %v2338, %v2330
      %v2851 = vpack.c.b16 %v2339, %v2331
      %v2852 = vpack.c.b16 %v2340, %v2332
      %v2853 = vpack.c.b16 %v2341, %v2333
      %v2854 = vpack.c.b16 %v2342, %v2334
      %v2855 = vpack.c.b16 %v2343, %v2335
      %3368 = vmatprep.subr.bf16.mxu0 %v2345
      %3369 = vmatpush1.bf16.msra.mxu0 %v2344
      %3370 = vmatprep.subr.bf16.mxu0 %v2353
      %3371 = vmatpush1.bf16.msra.mxu0 %v2352
      %3372 = vmatprep.subr.bf16.mxu0 %v2361
      %3373 = vmatpush1.bf16.msra.mxu0 %v2360
      %3374 = vmatprep.subr.bf16.mxu0 %v2369
      %3375 = vmatpush1.bf16.msra.mxu0 %v2368
      %3376 = vmatprep.subr.bf16.mxu0 %v2377
      %3377 = vmatpush1.bf16.msra.mxu0 %v2376
      %3378 = vmatprep.subr.bf16.mxu0 %v2385
      %3379 = vmatpush1.bf16.msra.mxu0 %v2384
      %3380 = vmatprep.subr.bf16.mxu0 %v2393
      %3381 = vmatpush1.bf16.msra.mxu0 %v2392
      %3382 = vmatprep.subr.bf16.mxu0 %v2401
      %3383 = vmatpush1.bf16.msra.mxu0 %v2400
      %3384 = vmatprep.subr.bf16.mxu0 %v2409
      %3385 = vmatpush1.bf16.msra.mxu0 %v2408
      %3386 = vmatprep.subr.bf16.mxu0 %v2417
      %3387 = vmatpush1.bf16.msra.mxu0 %v2416
      %3388 = vmatprep.subr.bf16.mxu0 %v2425
      %3389 = vmatpush1.bf16.msra.mxu0 %v2424
      %3390 = vmatprep.subr.bf16.mxu0 %v2433
      %3391 = vmatpush1.bf16.msra.mxu0 %v2432
      %3392 = vmatprep.subr.bf16.mxu0 %v2441
      %3393 = vmatpush1.bf16.msra.mxu0 %v2440
      %3394 = vmatprep.subr.bf16.mxu0 %v2449
      %3395 = vmatpush1.bf16.msra.mxu0 %v2448
      %3396 = vmatprep.subr.bf16.mxu0 %v2457
      %3397 = vmatpush1.bf16.msra.mxu0 %v2456
      %3398 = vmatprep.subr.bf16.mxu0 %v2465
      %3399 = vmatpush1.bf16.msra.mxu0 %v2464
      %3400 = vmatprep.mubr.bf16.mxu0 %v289
      %3401 = vmatmul.mubr.bf16.gmra.mrb[0].mxu0 %v288
      %v3402 = vpop.f32.mrb[0].mxu0
      %v3403 = vadd.f32 0.0, %v3402
      %v3404 = vpop.f32.mrb[0].mxu0
      %v3405 = vadd.f32 0.0, %v3404
      %v3406 = vpop.f32.mrb[0].mxu0
      %v3407 = vpop.f32.mrb[0].mxu0
      %3408 = vdwg.mxu0
      %3409 = vmatprep.subr.bf16.mxu0 %v2473
      %3410 = vmatpush1.bf16.msra.mxu0 %v2472
      %3411 = vmatprep.subr.bf16.mxu0 %v2481
      %3412 = vmatpush1.bf16.msra.mxu0 %v2480
      %3413 = vmatprep.subr.bf16.mxu0 %v2489
      %3414 = vmatpush1.bf16.msra.mxu0 %v2488
      %3415 = vmatprep.subr.bf16.mxu0 %v2497
      %3416 = vmatpush1.bf16.msra.mxu0 %v2496
      %3417 = vmatprep.subr.bf16.mxu0 %v2505
      %3418 = vmatpush1.bf16.msra.mxu0 %v2504
      %3419 = vmatprep.subr.bf16.mxu0 %v2513
      %3420 = vmatpush1.bf16.msra.mxu0 %v2512
      %3421 = vmatprep.subr.bf16.mxu0 %v2521
      %3422 = vmatpush1.bf16.msra.mxu0 %v2520
      %3423 = vmatprep.subr.bf16.mxu0 %v2529
      %3424 = vmatpush1.bf16.msra.mxu0 %v2528
      %3425 = vmatprep.subr.bf16.mxu0 %v2537
      %3426 = vmatpush1.bf16.msra.mxu0 %v2536
      %3427 = vmatprep.subr.bf16.mxu0 %v2545
      %3428 = vmatpush1.bf16.msra.mxu0 %v2544
      %3429 = vmatprep.subr.bf16.mxu0 %v2553
      %3430 = vmatpush1.bf16.msra.mxu0 %v2552
      %3431 = vmatprep.subr.bf16.mxu0 %v2561
      %3432 = vmatpush1.bf16.msra.mxu0 %v2560
      %3433 = vmatprep.subr.bf16.mxu0 %v2569
      %3434 = vmatpush1.bf16.msra.mxu0 %v2568
      %3435 = vmatprep.subr.bf16.mxu0 %v2577
      %3436 = vmatpush1.bf16.msra.mxu0 %v2576
      %3437 = vmatprep.subr.bf16.mxu0 %v2585
      %3438 = vmatpush1.bf16.msra.mxu0 %v2584
      %3439 = vmatprep.subr.bf16.mxu0 %v2593
      %3440 = vmatpush1.bf16.msra.mxu0 %v2592
      %3441 = vmatprep.mubr.bf16.mxu0 %v291
      %3442 = vmatmul.mubr.bf16.gmra.mrb[0].mxu0 %v290
      %v3443 = vpop.f32.mrb[0].mxu0
      %v3444 = vadd.f32 %v3403, %v3443
      %v3445 = vpop.f32.mrb[0].mxu0
      %v3446 = vadd.f32 %v3405, %v3445
      %v3447 = vpop.f32.mrb[0].mxu0
      %v3448 = vpop.f32.mrb[0].mxu0
      %3449 = vdwg.mxu0
      %3450 = vmatprep.subr.bf16.mxu0 %v2601
      %3451 = vmatpush1.bf16.msra.mxu0 %v2600
      %3452 = vmatprep.subr.bf16.mxu0 %v2609
      %3453 = vmatpush1.bf16.msra.mxu0 %v2608
      %3454 = vmatprep.subr.bf16.mxu0 %v2617
      %3455 = vmatpush1.bf16.msra.mxu0 %v2616
      %3456 = vmatprep.subr.bf16.mxu0 %v2625
      %3457 = vmatpush1.bf16.msra.mxu0 %v2624
      %3458 = vmatprep.subr.bf16.mxu0 %v2633
      %3459 = vmatpush1.bf16.msra.mxu0 %v2632
      %3460 = vmatprep.subr.bf16.mxu0 %v2641
      %3461 = vmatpush1.bf16.msra.mxu0 %v2640
      %3462 = vmatprep.subr.bf16.mxu0 %v2649
      %3463 = vmatpush1.bf16.msra.mxu0 %v2648
      %3464 = vmatprep.subr.bf16.mxu0 %v2657
      %3465 = vmatpush1.bf16.msra.mxu0 %v2656
      %3466 = vmatprep.subr.bf16.mxu0 %v2665
      %3467 = vmatpush1.bf16.msra.mxu0 %v2664
      %3468 = vmatprep.subr.bf16.mxu0 %v2673
      %3469 = vmatpush1.bf16.msra.mxu0 %v2672
      %3470 = vmatprep.subr.bf16.mxu0 %v2681
      %3471 = vmatpush1.bf16.msra.mxu0 %v2680
      %3472 = vmatprep.subr.bf16.mxu0 %v2689
      %3473 = vmatpush1.bf16.msra.mxu0 %v2688
      %3474 = vmatprep.subr.bf16.mxu0 %v2697
      %3475 = vmatpush1.bf16.msra.mxu0 %v2696
      %3476 = vmatprep.subr.bf16.mxu0 %v2705
      %3477 = vmatpush1.bf16.msra.mxu0 %v2704
      %3478 = vmatprep.subr.bf16.mxu0 %v2713
      %3479 = vmatpush1.bf16.msra.mxu0 %v2712
      %3480 = vmatprep.subr.bf16.mxu0 %v2721
      %3481 = vmatpush1.bf16.msra.mxu0 %v2720
      %3482 = vmatprep.mubr.bf16.mxu0 %v293
      %3483 = vmatmul.mubr.bf16.gmra.mrb[0].mxu0 %v292
      %v3484 = vpop.f32.mrb[0].mxu0
      %v3485 = vadd.f32 %v3444, %v3484
      %v3486 = vpop.f32.mrb[0].mxu0
      %v3487 = vadd.f32 %v3446, %v3486
      %v3488 = vpop.f32.mrb[0].mxu0
      %v3489 = vpop.f32.mrb[0].mxu0
      %3490 = vdwg.mxu0
      %3491 = vmatprep.subr.bf16.mxu0 %v2729
      %3492 = vmatpush1.bf16.msra.mxu0 %v2728
      %3493 = vmatprep.subr.bf16.mxu0 %v2737
      %3494 = vmatpush1.bf16.msra.mxu0 %v2736
      %3495 = vmatprep.subr.bf16.mxu0 %v2745
      %3496 = vmatpush1.bf16.msra.mxu0 %v2744
      %3497 = vmatprep.subr.bf16.mxu0 %v2753
      %3498 = vmatpush1.bf16.msra.mxu0 %v2752
      %3499 = vmatprep.subr.bf16.mxu0 %v2761
      %3500 = vmatpush1.bf16.msra.mxu0 %v2760
      %3501 = vmatprep.subr.bf16.mxu0 %v2769
      %3502 = vmatpush1.bf16.msra.mxu0 %v2768
      %3503 = vmatprep.subr.bf16.mxu0 %v2777
      %3504 = vmatpush1.bf16.msra.mxu0 %v2776
      %3505 = vmatprep.subr.bf16.mxu0 %v2785
      %3506 = vmatpush1.bf16.msra.mxu0 %v2784
      %3507 = vmatprep.subr.bf16.mxu0 %v2793
      %3508 = vmatpush1.bf16.msra.mxu0 %v2792
      %3509 = vmatprep.subr.bf16.mxu0 %v2801
      %3510 = vmatpush1.bf16.msra.mxu0 %v2800
      %3511 = vmatprep.subr.bf16.mxu0 %v2809
      %3512 = vmatpush1.bf16.msra.mxu0 %v2808
      %3513 = vmatprep.subr.bf16.mxu0 %v2817
      %3514 = vmatpush1.bf16.msra.mxu0 %v2816
      %3515 = vmatprep.subr.bf16.mxu0 %v2825
      %3516 = vmatpush1.bf16.msra.mxu0 %v2824
      %3517 = vmatprep.subr.bf16.mxu0 %v2833
      %3518 = vmatpush1.bf16.msra.mxu0 %v2832
      %3519 = vmatprep.subr.bf16.mxu0 %v2841
      %3520 = vmatpush1.bf16.msra.mxu0 %v2840
      %3521 = vmatprep.subr.bf16.mxu0 %v2849
      %3522 = vmatpush1.bf16.msra.mxu0 %v2848
      %3523 = vmatprep.mubr.bf16.mxu0 %v295
      %3524 = vmatmul.mubr.bf16.gmra.mrb[0].mxu0 %v294
      %v3525 = vpop.f32.mrb[0].mxu0
      %v3526 = vadd.f32 %v3485, %v3525
      %v3527 = vpop.f32.mrb[0].mxu0
      %v3528 = vadd.f32 %v3487, %v3527
      %v3529 = vpop.f32.mrb[0].mxu0
      %v3530 = vpop.f32.mrb[0].mxu0
      %3531 = vdwg.mxu0
      %3532 = vmatprep.subr.bf16.mxu0 %v2347
      %3533 = vmatpush1.bf16.msra.mxu0 %v2346
      %3534 = vmatprep.subr.bf16.mxu0 %v2355
      %3535 = vmatpush1.bf16.msra.mxu0 %v2354
      %3536 = vmatprep.subr.bf16.mxu0 %v2363
      %3537 = vmatpush1.bf16.msra.mxu0 %v2362
      %3538 = vmatprep.subr.bf16.mxu0 %v2371
      %3539 = vmatpush1.bf16.msra.mxu0 %v2370
      %3540 = vmatprep.subr.bf16.mxu0 %v2379
      %3541 = vmatpush1.bf16.msra.mxu0 %v2378
      %3542 = vmatprep.subr.bf16.mxu0 %v2387
      %3543 = vmatpush1.bf16.msra.mxu0 %v2386
      %3544 = vmatprep.subr.bf16.mxu0 %v2395
      %3545 = vmatpush1.bf16.msra.mxu0 %v2394
      %3546 = vmatprep.subr.bf16.mxu0 %v2403
      %3547 = vmatpush1.bf16.msra.mxu0 %v2402
      %3548 = vmatprep.subr.bf16.mxu0 %v2411
      %3549 = vmatpush1.bf16.msra.mxu0 %v2410
      %3550 = vmatprep.subr.bf16.mxu0 %v2419
      %3551 = vmatpush1.bf16.msra.mxu0 %v2418
      %3552 = vmatprep.subr.bf16.mxu0 %v2427
      %3553 = vmatpush1.bf16.msra.mxu0 %v2426
      %3554 = vmatprep.subr.bf16.mxu0 %v2435
      %3555 = vmatpush1.bf16.msra.mxu0 %v2434
      %3556 = vmatprep.subr.bf16.mxu0 %v2443
      %3557 = vmatpush1.bf16.msra.mxu0 %v2442
      %3558 = vmatprep.subr.bf16.mxu0 %v2451
      %3559 = vmatpush1.bf16.msra.mxu0 %v2450
      %3560 = vmatprep.subr.bf16.mxu0 %v2459
      %3561 = vmatpush1.bf16.msra.mxu0 %v2458
      %3562 = vmatprep.subr.bf16.mxu0 %v2467
      %3563 = vmatpush1.bf16.msra.mxu0 %v2466
      %3564 = vmatprep.mubr.bf16.mxu0 %v289
      %3565 = vmatmul.mubr.bf16.gmra.mrb[0].mxu0 %v288
      %v3566 = vpop.f32.mrb[0].mxu0
      %v3567 = vadd.f32 0.0, %v3566
      %v3568 = vpop.f32.mrb[0].mxu0
      %v3569 = vadd.f32 0.0, %v3568
      %v3570 = vpop.f32.mrb[0].mxu0
      %v3571 = vpop.f32.mrb[0].mxu0
      %3572 = vdwg.mxu0
      %3573 = vmatprep.subr.bf16.mxu0 %v2475
      %3574 = vmatpush1.bf16.msra.mxu0 %v2474
      %3575 = vmatprep.subr.bf16.mxu0 %v2483
      %3576 = vmatpush1.bf16.msra.mxu0 %v2482
      %3577 = vmatprep.subr.bf16.mxu0 %v2491
      %3578 = vmatpush1.bf16.msra.mxu0 %v2490
      %3579 = vmatprep.subr.bf16.mxu0 %v2499
      %3580 = vmatpush1.bf16.msra.mxu0 %v2498
      %3581 = vmatprep.subr.bf16.mxu0 %v2507
      %3582 = vmatpush1.bf16.msra.mxu0 %v2506
      %3583 = vmatprep.subr.bf16.mxu0 %v2515
      %3584 = vmatpush1.bf16.msra.mxu0 %v2514
      %3585 = vmatprep.subr.bf16.mxu0 %v2523
      %3586 = vmatpush1.bf16.msra.mxu0 %v2522
      %3587 = vmatprep.subr.bf16.mxu0 %v2531
      %3588 = vmatpush1.bf16.msra.mxu0 %v2530
      %3589 = vmatprep.subr.bf16.mxu0 %v2539
      %3590 = vmatpush1.bf16.msra.mxu0 %v2538
      %3591 = vmatprep.subr.bf16.mxu0 %v2547
      %3592 = vmatpush1.bf16.msra.mxu0 %v2546
      %3593 = vmatprep.subr.bf16.mxu0 %v2555
      %3594 = vmatpush1.bf16.msra.mxu0 %v2554
      %3595 = vmatprep.subr.bf16.mxu0 %v2563
      %3596 = vmatpush1.bf16.msra.mxu0 %v2562
      %3597 = vmatprep.subr.bf16.mxu0 %v2571
      %3598 = vmatpush1.bf16.msra.mxu0 %v2570
      %3599 = vmatprep.subr.bf16.mxu0 %v2579
      %3600 = vmatpush1.bf16.msra.mxu0 %v2578
      %3601 = vmatprep.subr.bf16.mxu0 %v2587
      %3602 = vmatpush1.bf16.msra.mxu0 %v2586
      %3603 = vmatprep.subr.bf16.mxu0 %v2595
      %3604 = vmatpush1.bf16.msra.mxu0 %v2594
      %3605 = vmatprep.mubr.bf16.mxu0 %v291
      %3606 = vmatmul.mubr.bf16.gmra.mrb[0].mxu0 %v290
      %v3607 = vpop.f32.mrb[0].mxu0
      %v3608 = vadd.f32 %v3567, %v3607
      %v3609 = vpop.f32.mrb[0].mxu0
      %v3610 = vadd.f32 %v3569, %v3609
      %v3611 = vpop.f32.mrb[0].mxu0
      %v3612 = vpop.f32.mrb[0].mxu0
      %3613 = vdwg.mxu0
      %3614 = vmatprep.subr.bf16.mxu0 %v2603
      %3615 = vmatpush1.bf16.msra.mxu0 %v2602
      %3616 = vmatprep.subr.bf16.mxu0 %v2611
      %3617 = vmatpush1.bf16.msra.mxu0 %v2610
      %3618 = vmatprep.subr.bf16.mxu0 %v2619
      %3619 = vmatpush1.bf16.msra.mxu0 %v2618
      %3620 = vmatprep.subr.bf16.mxu0 %v2627
      %3621 = vmatpush1.bf16.msra.mxu0 %v2626
      %3622 = vmatprep.subr.bf16.mxu0 %v2635
      %3623 = vmatpush1.bf16.msra.mxu0 %v2634
      %3624 = vmatprep.subr.bf16.mxu0 %v2643
      %3625 = vmatpush1.bf16.msra.mxu0 %v2642
      %3626 = vmatprep.subr.bf16.mxu0 %v2651
      %3627 = vmatpush1.bf16.msra.mxu0 %v2650
      %3628 = vmatprep.subr.bf16.mxu0 %v2659
      %3629 = vmatpush1.bf16.msra.mxu0 %v2658
      %3630 = vmatprep.subr.bf16.mxu0 %v2667
      %3631 = vmatpush1.bf16.msra.mxu0 %v2666
      %3632 = vmatprep.subr.bf16.mxu0 %v2675
      %3633 = vmatpush1.bf16.msra.mxu0 %v2674
      %3634 = vmatprep.subr.bf16.mxu0 %v2683
      %3635 = vmatpush1.bf16.msra.mxu0 %v2682
      %3636 = vmatprep.subr.bf16.mxu0 %v2691
      %3637 = vmatpush1.bf16.msra.mxu0 %v2690
      %3638 = vmatprep.subr.bf16.mxu0 %v2699
      %3639 = vmatpush1.bf16.msra.mxu0 %v2698
      %3640 = vmatprep.subr.bf16.mxu0 %v2707
      %3641 = vmatpush1.bf16.msra.mxu0 %v2706
      %3642 = vmatprep.subr.bf16.mxu0 %v2715
      %3643 = vmatpush1.bf16.msra.mxu0 %v2714
      %3644 = vmatprep.subr.bf16.mxu0 %v2723
      %3645 = vmatpush1.bf16.msra.mxu0 %v2722
      %3646 = vmatprep.mubr.bf16.mxu0 %v293
      %3647 = vmatmul.mubr.bf16.gmra.mrb[0].mxu0 %v292
      %v3648 = vpop.f32.mrb[0].mxu0
      %v3649 = vadd.f32 %v3608, %v3648
      %v3650 = vpop.f32.mrb[0].mxu0
      %v3651 = vadd.f32 %v3610, %v3650
      %v3652 = vpop.f32.mrb[0].mxu0
      %v3653 = vpop.f32.mrb[0].mxu0
      %3654 = vdwg.mxu0
      %3655 = vmatprep.subr.bf16.mxu0 %v2731
      %3656 = vmatpush1.bf16.msra.mxu0 %v2730
      %3657 = vmatprep.subr.bf16.mxu0 %v2739
      %3658 = vmatpush1.bf16.msra.mxu0 %v2738
      %3659 = vmatprep.subr.bf16.mxu0 %v2747
      %3660 = vmatpush1.bf16.msra.mxu0 %v2746
      %3661 = vmatprep.subr.bf16.mxu0 %v2755
      %3662 = vmatpush1.bf16.msra.mxu0 %v2754
      %3663 = vmatprep.subr.bf16.mxu0 %v2763
      %3664 = vmatpush1.bf16.msra.mxu0 %v2762
      %3665 = vmatprep.subr.bf16.mxu0 %v2771
      %3666 = vmatpush1.bf16.msra.mxu0 %v2770
      %3667 = vmatprep.subr.bf16.mxu0 %v2779
      %3668 = vmatpush1.bf16.msra.mxu0 %v2778
      %3669 = vmatprep.subr.bf16.mxu0 %v2787
      %3670 = vmatpush1.bf16.msra.mxu0 %v2786
      %3671 = vmatprep.subr.bf16.mxu0 %v2795
      %3672 = vmatpush1.bf16.msra.mxu0 %v2794
      %3673 = vmatprep.subr.bf16.mxu0 %v2803
      %3674 = vmatpush1.bf16.msra.mxu0 %v2802
      %3675 = vmatprep.subr.bf16.mxu0 %v2811
      %3676 = vmatpush1.bf16.msra.mxu0 %v2810
      %3677 = vmatprep.subr.bf16.mxu0 %v2819
      %3678 = vmatpush1.bf16.msra.mxu0 %v2818
      %3679 = vmatprep.subr.bf16.mxu0 %v2827
      %3680 = vmatpush1.bf16.msra.mxu0 %v2826
      %3681 = vmatprep.subr.bf16.mxu0 %v2835
      %3682 = vmatpush1.bf16.msra.mxu0 %v2834
      %3683 = vmatprep.subr.bf16.mxu0 %v2843
      %3684 = vmatpush1.bf16.msra.mxu0 %v2842
      %3685 = vmatprep.subr.bf16.mxu0 %v2851
      %3686 = vmatpush1.bf16.msra.mxu0 %v2850
      %3687 = vmatprep.mubr.bf16.mxu0 %v295
      %3688 = vmatmul.mubr.bf16.gmra.mrb[0].mxu0 %v294
      %v3689 = vpop.f32.mrb[0].mxu0
      %v3690 = vadd.f32 %v3649, %v3689
      %v3691 = vpop.f32.mrb[0].mxu0
      %v3692 = vadd.f32 %v3651, %v3691
      %v3693 = vpop.f32.mrb[0].mxu0
      %v3694 = vpop.f32.mrb[0].mxu0
      %3695 = vdwg.mxu0
      %3696 = vmatprep.subr.bf16.mxu0 %v2349
      %3697 = vmatpush1.bf16.msra.mxu0 %v2348
      %3698 = vmatprep.subr.bf16.mxu0 %v2357
      %3699 = vmatpush1.bf16.msra.mxu0 %v2356
      %3700 = vmatprep.subr.bf16.mxu0 %v2365
      %3701 = vmatpush1.bf16.msra.mxu0 %v2364
      %3702 = vmatprep.subr.bf16.mxu0 %v2373
      %3703 = vmatpush1.bf16.msra.mxu0 %v2372
      %3704 = vmatprep.subr.bf16.mxu0 %v2381
      %3705 = vmatpush1.bf16.msra.mxu0 %v2380
      %3706 = vmatprep.subr.bf16.mxu0 %v2389
      %3707 = vmatpush1.bf16.msra.mxu0 %v2388
      %3708 = vmatprep.subr.bf16.mxu0 %v2397
      %3709 = vmatpush1.bf16.msra.mxu0 %v2396
      %3710 = vmatprep.subr.bf16.mxu0 %v2405
      %3711 = vmatpush1.bf16.msra.mxu0 %v2404
      %3712 = vmatprep.subr.bf16.mxu0 %v2413
      %3713 = vmatpush1.bf16.msra.mxu0 %v2412
      %3714 = vmatprep.subr.bf16.mxu0 %v2421
      %3715 = vmatpush1.bf16.msra.mxu0 %v2420
      %3716 = vmatprep.subr.bf16.mxu0 %v2429
      %3717 = vmatpush1.bf16.msra.mxu0 %v2428
      %3718 = vmatprep.subr.bf16.mxu0 %v2437
      %3719 = vmatpush1.bf16.msra.mxu0 %v2436
      %3720 = vmatprep.subr.bf16.mxu0 %v2445
      %3721 = vmatpush1.bf16.msra.mxu0 %v2444
      %3722 = vmatprep.subr.bf16.mxu0 %v2453
      %3723 = vmatpush1.bf16.msra.mxu0 %v2452
      %3724 = vmatprep.subr.bf16.mxu0 %v2461
      %3725 = vmatpush1.bf16.msra.mxu0 %v2460
      %3726 = vmatprep.subr.bf16.mxu0 %v2469
      %3727 = vmatpush1.bf16.msra.mxu0 %v2468
      %3728 = vmatprep.mubr.bf16.mxu0 %v289
      %3729 = vmatmul.mubr.bf16.gmra.mrb[0].mxu0 %v288
      %v3730 = vpop.f32.mrb[0].mxu0
      %v3731 = vadd.f32 0.0, %v3730
      %v3732 = vpop.f32.mrb[0].mxu0
      %v3733 = vadd.f32 0.0, %v3732
      %v3734 = vpop.f32.mrb[0].mxu0
      %v3735 = vpop.f32.mrb[0].mxu0
      %3736 = vdwg.mxu0
      %3737 = vmatprep.subr.bf16.mxu0 %v2477
      %3738 = vmatpush1.bf16.msra.mxu0 %v2476
      %3739 = vmatprep.subr.bf16.mxu0 %v2485
      %3740 = vmatpush1.bf16.msra.mxu0 %v2484
      %3741 = vmatprep.subr.bf16.mxu0 %v2493
      %3742 = vmatpush1.bf16.msra.mxu0 %v2492
      %3743 = vmatprep.subr.bf16.mxu0 %v2501
      %3744 = vmatpush1.bf16.msra.mxu0 %v2500
      %3745 = vmatprep.subr.bf16.mxu0 %v2509
      %3746 = vmatpush1.bf16.msra.mxu0 %v2508
      %3747 = vmatprep.subr.bf16.mxu0 %v2517
      %3748 = vmatpush1.bf16.msra.mxu0 %v2516
      %3749 = vmatprep.subr.bf16.mxu0 %v2525
      %3750 = vmatpush1.bf16.msra.mxu0 %v2524
      %3751 = vmatprep.subr.bf16.mxu0 %v2533
      %3752 = vmatpush1.bf16.msra.mxu0 %v2532
      %3753 = vmatprep.subr.bf16.mxu0 %v2541
      %3754 = vmatpush1.bf16.msra.mxu0 %v2540
      %3755 = vmatprep.subr.bf16.mxu0 %v2549
      %3756 = vmatpush1.bf16.msra.mxu0 %v2548
      %3757 = vmatprep.subr.bf16.mxu0 %v2557
      %3758 = vmatpush1.bf16.msra.mxu0 %v2556
      %3759 = vmatprep.subr.bf16.mxu0 %v2565
      %3760 = vmatpush1.bf16.msra.mxu0 %v2564
      %3761 = vmatprep.subr.bf16.mxu0 %v2573
      %3762 = vmatpush1.bf16.msra.mxu0 %v2572
      %3763 = vmatprep.subr.bf16.mxu0 %v2581
      %3764 = vmatpush1.bf16.msra.mxu0 %v2580
      %3765 = vmatprep.subr.bf16.mxu0 %v2589
      %3766 = vmatpush1.bf16.msra.mxu0 %v2588
      %3767 = vmatprep.subr.bf16.mxu0 %v2597
      %3768 = vmatpush1.bf16.msra.mxu0 %v2596
      %3769 = vmatprep.mubr.bf16.mxu0 %v291
      %3770 = vmatmul.mubr.bf16.gmra.mrb[0].mxu0 %v290
      %v3771 = vpop.f32.mrb[0].mxu0
      %v3772 = vadd.f32 %v3731, %v3771
      %v3773 = vpop.f32.mrb[0].mxu0
      %v3774 = vadd.f32 %v3733, %v3773
      %v3775 = vpop.f32.mrb[0].mxu0
      %v3776 = vpop.f32.mrb[0].mxu0
      %3777 = vdwg.mxu0
      %3778 = vmatprep.subr.bf16.mxu0 %v2605
      %3779 = vmatpush1.bf16.msra.mxu0 %v2604
      %3780 = vmatprep.subr.bf16.mxu0 %v2613
      %3781 = vmatpush1.bf16.msra.mxu0 %v2612
      %3782 = vmatprep.subr.bf16.mxu0 %v2621
      %3783 = vmatpush1.bf16.msra.mxu0 %v2620
      %3784 = vmatprep.subr.bf16.mxu0 %v2629
      %3785 = vmatpush1.bf16.msra.mxu0 %v2628
      %3786 = vmatprep.subr.bf16.mxu0 %v2637
      %3787 = vmatpush1.bf16.msra.mxu0 %v2636
      %3788 = vmatprep.subr.bf16.mxu0 %v2645
      %3789 = vmatpush1.bf16.msra.mxu0 %v2644
      %3790 = vmatprep.subr.bf16.mxu0 %v2653
      %3791 = vmatpush1.bf16.msra.mxu0 %v2652
      %3792 = vmatprep.subr.bf16.mxu0 %v2661
      %3793 = vmatpush1.bf16.msra.mxu0 %v2660
      %3794 = vmatprep.subr.bf16.mxu0 %v2669
      %3795 = vmatpush1.bf16.msra.mxu0 %v2668
      %3796 = vmatprep.subr.bf16.mxu0 %v2677
      %3797 = vmatpush1.bf16.msra.mxu0 %v2676
      %3798 = vmatprep.subr.bf16.mxu0 %v2685
      %3799 = vmatpush1.bf16.msra.mxu0 %v2684
      %3800 = vmatprep.subr.bf16.mxu0 %v2693
      %3801 = vmatpush1.bf16.msra.mxu0 %v2692
      %3802 = vmatprep.subr.bf16.mxu0 %v2701
      %3803 = vmatpush1.bf16.msra.mxu0 %v2700
      %3804 = vmatprep.subr.bf16.mxu0 %v2709
      %3805 = vmatpush1.bf16.msra.mxu0 %v2708
      %3806 = vmatprep.subr.bf16.mxu0 %v2717
      %3807 = vmatpush1.bf16.msra.mxu0 %v2716
      %3808 = vmatprep.subr.bf16.mxu0 %v2725
      %3809 = vmatpush1.bf16.msra.mxu0 %v2724
      %3810 = vmatprep.mubr.bf16.mxu0 %v293
      %3811 = vmatmul.mubr.bf16.gmra.mrb[0].mxu0 %v292
      %v3812 = vpop.f32.mrb[0].mxu0
      %v3813 = vadd.f32 %v3772, %v3812
      %v3814 = vpop.f32.mrb[0].mxu0
      %v3815 = vadd.f32 %v3774, %v3814
      %v3816 = vpop.f32.mrb[0].mxu0
      %v3817 = vpop.f32.mrb[0].mxu0
      %3818 = vdwg.mxu0
      %3819 = vmatprep.subr.bf16.mxu0 %v2733
      %3820 = vmatpush1.bf16.msra.mxu0 %v2732
      %3821 = vmatprep.subr.bf16.mxu0 %v2741
      %3822 = vmatpush1.bf16.msra.mxu0 %v2740
      %3823 = vmatprep.subr.bf16.mxu0 %v2749
      %3824 = vmatpush1.bf16.msra.mxu0 %v2748
      %3825 = vmatprep.subr.bf16.mxu0 %v2757
      %3826 = vmatpush1.bf16.msra.mxu0 %v2756
      %3827 = vmatprep.subr.bf16.mxu0 %v2765
      %3828 = vmatpush1.bf16.msra.mxu0 %v2764
      %3829 = vmatprep.subr.bf16.mxu0 %v2773
      %3830 = vmatpush1.bf16.msra.mxu0 %v2772
      %3831 = vmatprep.subr.bf16.mxu0 %v2781
      %3832 = vmatpush1.bf16.msra.mxu0 %v2780
      %3833 = vmatprep.subr.bf16.mxu0 %v2789
      %3834 = vmatpush1.bf16.msra.mxu0 %v2788
      %3835 = vmatprep.subr.bf16.mxu0 %v2797
      %3836 = vmatpush1.bf16.msra.mxu0 %v2796
      %3837 = vmatprep.subr.bf16.mxu0 %v2805
      %3838 = vmatpush1.bf16.msra.mxu0 %v2804
      %3839 = vmatprep.subr.bf16.mxu0 %v2813
      %3840 = vmatpush1.bf16.msra.mxu0 %v2812
      %3841 = vmatprep.subr.bf16.mxu0 %v2821
      %3842 = vmatpush1.bf16.msra.mxu0 %v2820
      %3843 = vmatprep.subr.bf16.mxu0 %v2829
      %3844 = vmatpush1.bf16.msra.mxu0 %v2828
      %3845 = vmatprep.subr.bf16.mxu0 %v2837
      %3846 = vmatpush1.bf16.msra.mxu0 %v2836
      %3847 = vmatprep.subr.bf16.mxu0 %v2845
      %3848 = vmatpush1.bf16.msra.mxu0 %v2844
      %3849 = vmatprep.subr.bf16.mxu0 %v2853
      %3850 = vmatpush1.bf16.msra.mxu0 %v2852
      %3851 = vmatprep.mubr.bf16.mxu0 %v295
      %3852 = vmatmul.mubr.bf16.gmra.mrb[0].mxu0 %v294
      %v3853 = vpop.f32.mrb[0].mxu0
      %v3854 = vadd.f32 %v3813, %v3853
      %v3855 = vpop.f32.mrb[0].mxu0
      %v3856 = vadd.f32 %v3815, %v3855
      %v3857 = vpop.f32.mrb[0].mxu0
      %v3858 = vpop.f32.mrb[0].mxu0
      %3859 = vdwg.mxu0
      %3860 = vmatprep.subr.bf16.mxu0 %v2351
      %3861 = vmatpush1.bf16.msra.mxu0 %v2350
      %3862 = vmatprep.subr.bf16.mxu0 %v2359
      %3863 = vmatpush1.bf16.msra.mxu0 %v2358
      %3864 = vmatprep.subr.bf16.mxu0 %v2367
      %3865 = vmatpush1.bf16.msra.mxu0 %v2366
      %3866 = vmatprep.subr.bf16.mxu0 %v2375
      %3867 = vmatpush1.bf16.msra.mxu0 %v2374
      %3868 = vmatprep.subr.bf16.mxu0 %v2383
      %3869 = vmatpush1.bf16.msra.mxu0 %v2382
      %3870 = vmatprep.subr.bf16.mxu0 %v2391
      %3871 = vmatpush1.bf16.msra.mxu0 %v2390
      %3872 = vmatprep.subr.bf16.mxu0 %v2399
      %3873 = vmatpush1.bf16.msra.mxu0 %v2398
      %3874 = vmatprep.subr.bf16.mxu0 %v2407
      %3875 = vmatpush1.bf16.msra.mxu0 %v2406
      %3876 = vmatprep.subr.bf16.mxu0 %v2415
      %3877 = vmatpush1.bf16.msra.mxu0 %v2414
      %3878 = vmatprep.subr.bf16.mxu0 %v2423
      %3879 = vmatpush1.bf16.msra.mxu0 %v2422
      %3880 = vmatprep.subr.bf16.mxu0 %v2431
      %3881 = vmatpush1.bf16.msra.mxu0 %v2430
      %3882 = vmatprep.subr.bf16.mxu0 %v2439
      %3883 = vmatpush1.bf16.msra.mxu0 %v2438
      %3884 = vmatprep.subr.bf16.mxu0 %v2447
      %3885 = vmatpush1.bf16.msra.mxu0 %v2446
      %3886 = vmatprep.subr.bf16.mxu0 %v2455
      %3887 = vmatpush1.bf16.msra.mxu0 %v2454
      %3888 = vmatprep.subr.bf16.mxu0 %v2463
      %3889 = vmatpush1.bf16.msra.mxu0 %v2462
      %3890 = vmatprep.subr.bf16.mxu0 %v2471
      %3891 = vmatpush1.bf16.msra.mxu0 %v2470
      %3892 = vmatprep.mubr.bf16.mxu0 %v289
      %3893 = vmatmul.mubr.bf16.gmra.mrb[0].mxu0 %v288
      %v3894 = vpop.f32.mrb[0].mxu0
      %v3895 = vadd.f32 0.0, %v3894
      %v3896 = vpop.f32.mrb[0].mxu0
      %v3897 = vadd.f32 0.0, %v3896
      %v3898 = vpop.f32.mrb[0].mxu0
      %v3899 = vpop.f32.mrb[0].mxu0
      %3900 = vdwg.mxu0
      %3901 = vmatprep.subr.bf16.mxu0 %v2479
      %3902 = vmatpush1.bf16.msra.mxu0 %v2478
      %3903 = vmatprep.subr.bf16.mxu0 %v2487
      %3904 = vmatpush1.bf16.msra.mxu0 %v2486
      %3905 = vmatprep.subr.bf16.mxu0 %v2495
      %3906 = vmatpush1.bf16.msra.mxu0 %v2494
      %3907 = vmatprep.subr.bf16.mxu0 %v2503
      %3908 = vmatpush1.bf16.msra.mxu0 %v2502
      %3909 = vmatprep.subr.bf16.mxu0 %v2511
      %3910 = vmatpush1.bf16.msra.mxu0 %v2510
      %3911 = vmatprep.subr.bf16.mxu0 %v2519
      %3912 = vmatpush1.bf16.msra.mxu0 %v2518
      %3913 = vmatprep.subr.bf16.mxu0 %v2527
      %3914 = vmatpush1.bf16.msra.mxu0 %v2526
      %3915 = vmatprep.subr.bf16.mxu0 %v2535
      %3916 = vmatpush1.bf16.msra.mxu0 %v2534
      %3917 = vmatprep.subr.bf16.mxu0 %v2543
      %3918 = vmatpush1.bf16.msra.mxu0 %v2542
      %3919 = vmatprep.subr.bf16.mxu0 %v2551
      %3920 = vmatpush1.bf16.msra.mxu0 %v2550
      %3921 = vmatprep.subr.bf16.mxu0 %v2559
      %3922 = vmatpush1.bf16.msra.mxu0 %v2558
      %3923 = vmatprep.subr.bf16.mxu0 %v2567
      %3924 = vmatpush1.bf16.msra.mxu0 %v2566
      %3925 = vmatprep.subr.bf16.mxu0 %v2575
      %3926 = vmatpush1.bf16.msra.mxu0 %v2574
      %3927 = vmatprep.subr.bf16.mxu0 %v2583
      %3928 = vmatpush1.bf16.msra.mxu0 %v2582
      %3929 = vmatprep.subr.bf16.mxu0 %v2591
      %3930 = vmatpush1.bf16.msra.mxu0 %v2590
      %3931 = vmatprep.subr.bf16.mxu0 %v2599
      %3932 = vmatpush1.bf16.msra.mxu0 %v2598
      %3933 = vmatprep.mubr.bf16.mxu0 %v291
      %3934 = vmatmul.mubr.bf16.gmra.mrb[0].mxu0 %v290
      %v3935 = vpop.f32.mrb[0].mxu0
      %v3936 = vadd.f32 %v3895, %v3935
      %v3937 = vpop.f32.mrb[0].mxu0
      %v3938 = vadd.f32 %v3897, %v3937
      %v3939 = vpop.f32.mrb[0].mxu0
      %v3940 = vpop.f32.mrb[0].mxu0
      %3941 = vdwg.mxu0
      %3942 = vmatprep.subr.bf16.mxu0 %v2607
      %3943 = vmatpush1.bf16.msra.mxu0 %v2606
      %3944 = vmatprep.subr.bf16.mxu0 %v2615
      %3945 = vmatpush1.bf16.msra.mxu0 %v2614
      %3946 = vmatprep.subr.bf16.mxu0 %v2623
      %3947 = vmatpush1.bf16.msra.mxu0 %v2622
      %3948 = vmatprep.subr.bf16.mxu0 %v2631
      %3949 = vmatpush1.bf16.msra.mxu0 %v2630
      %3950 = vmatprep.subr.bf16.mxu0 %v2639
      %3951 = vmatpush1.bf16.msra.mxu0 %v2638
      %3952 = vmatprep.subr.bf16.mxu0 %v2647
      %3953 = vmatpush1.bf16.msra.mxu0 %v2646
      %3954 = vmatprep.subr.bf16.mxu0 %v2655
      %3955 = vmatpush1.bf16.msra.mxu0 %v2654
      %3956 = vmatprep.subr.bf16.mxu0 %v2663
      %3957 = vmatpush1.bf16.msra.mxu0 %v2662
      %3958 = vmatprep.subr.bf16.mxu0 %v2671
      %3959 = vmatpush1.bf16.msra.mxu0 %v2670
      %3960 = vmatprep.subr.bf16.mxu0 %v2679
      %3961 = vmatpush1.bf16.msra.mxu0 %v2678
      %3962 = vmatprep.subr.bf16.mxu0 %v2687
      %3963 = vmatpush1.bf16.msra.mxu0 %v2686
      %3964 = vmatprep.subr.bf16.mxu0 %v2695
      %3965 = vmatpush1.bf16.msra.mxu0 %v2694
      %3966 = vmatprep.subr.bf16.mxu0 %v2703
      %3967 = vmatpush1.bf16.msra.mxu0 %v2702
      %3968 = vmatprep.subr.bf16.mxu0 %v2711
      %3969 = vmatpush1.bf16.msra.mxu0 %v2710
      %3970 = vmatprep.subr.bf16.mxu0 %v2719
      %3971 = vmatpush1.bf16.msra.mxu0 %v2718
      %3972 = vmatprep.subr.bf16.mxu0 %v2727
      %3973 = vmatpush1.bf16.msra.mxu0 %v2726
      %3974 = vmatprep.mubr.bf16.mxu0 %v293
      %3975 = vmatmul.mubr.bf16.gmra.mrb[0].mxu0 %v292
      %v3976 = vpop.f32.mrb[0].mxu0
      %v3977 = vadd.f32 %v3936, %v3976
      %v3978 = vpop.f32.mrb[0].mxu0
      %v3979 = vadd.f32 %v3938, %v3978
      %v3980 = vpop.f32.mrb[0].mxu0
      %v3981 = vpop.f32.mrb[0].mxu0
      %3982 = vdwg.mxu0
      %3983 = vmatprep.subr.bf16.mxu0 %v2735
      %3984 = vmatpush1.bf16.msra.mxu0 %v2734
      %3985 = vmatprep.subr.bf16.mxu0 %v2743
      %3986 = vmatpush1.bf16.msra.mxu0 %v2742
      %3987 = vmatprep.subr.bf16.mxu0 %v2751
      %3988 = vmatpush1.bf16.msra.mxu0 %v2750
      %3989 = vmatprep.subr.bf16.mxu0 %v2759
      %3990 = vmatpush1.bf16.msra.mxu0 %v2758
      %3991 = vmatprep.subr.bf16.mxu0 %v2767
      %3992 = vmatpush1.bf16.msra.mxu0 %v2766
      %3993 = vmatprep.subr.bf16.mxu0 %v2775
      %3994 = vmatpush1.bf16.msra.mxu0 %v2774
      %3995 = vmatprep.subr.bf16.mxu0 %v2783
      %3996 = vmatpush1.bf16.msra.mxu0 %v2782
      %3997 = vmatprep.subr.bf16.mxu0 %v2791
      %3998 = vmatpush1.bf16.msra.mxu0 %v2790
      %3999 = vmatprep.subr.bf16.mxu0 %v2799
      %4000 = vmatpush1.bf16.msra.mxu0 %v2798
      %4001 = vmatprep.subr.bf16.mxu0 %v2807
      %4002 = vmatpush1.bf16.msra.mxu0 %v2806
      %4003 = vmatprep.subr.bf16.mxu0 %v2815
      %4004 = vmatpush1.bf16.msra.mxu0 %v2814
      %4005 = vmatprep.subr.bf16.mxu0 %v2823
      %4006 = vmatpush1.bf16.msra.mxu0 %v2822
      %4007 = vmatprep.subr.bf16.mxu0 %v2831
      %4008 = vmatpush1.bf16.msra.mxu0 %v2830
      %4009 = vmatprep.subr.bf16.mxu0 %v2839
      %4010 = vmatpush1.bf16.msra.mxu0 %v2838
      %4011 = vmatprep.subr.bf16.mxu0 %v2847
      %4012 = vmatpush1.bf16.msra.mxu0 %v2846
      %4013 = vmatprep.subr.bf16.mxu0 %v2855
      %4014 = vmatpush1.bf16.msra.mxu0 %v2854
      %4015 = vmatprep.mubr.bf16.mxu0 %v295
      %4016 = vmatmul.mubr.bf16.gmra.mrb[0].mxu0 %v294
      %v4017 = vpop.f32.mrb[0].mxu0
      %v4018 = vadd.f32 %v3977, %v4017
      %v4019 = vpop.f32.mrb[0].mxu0
      %v4020 = vadd.f32 %v3979, %v4019
      %v4021 = vpop.f32.mrb[0].mxu0
      %v4022 = vpop.f32.mrb[0].mxu0
      %4023 = vdwg.mxu0
      %v4024 = vadd.f32 %v272, %v3526
      %v4025 = vadd.f32 %v273, %v3528
      %v4026 = vadd.f32 %v274, %v3690
      %v4027 = vadd.f32 %v275, %v3692
      %v4028 = vadd.f32 %v276, %v3854
      %v4029 = vadd.f32 %v277, %v3856
      %v4030 = vadd.f32 %v278, %v4018
      %v4031 = vadd.f32 %v279, %v4020
      %4032 = vst [vmem:[%s4] sm:$0xff] %v4024
      %4033 = vst [vmem:[%s4 + $0x8] sm:$0xff] %v4025
      %4034 = vst [vmem:[%s4 + $0x10] sm:$0xff] %v4026
      %4035 = vst [vmem:[%s4 + $0x18] sm:$0xff] %v4027
      %4036 = vst [vmem:[%s4 + $0x20] sm:$0xff] %v4028
      %4037 = vst [vmem:[%s4 + $0x28] sm:$0xff] %v4029
      %4038 = vst [vmem:[%s4 + $0x30] sm:$0xff] %v4030
      %4039 = vst [vmem:[%s4 + $0x38] sm:$0xff] %v4031
      %p4040 = scmp.eq.s32.totalorder %s18, 3
      // Predicated region
      $region41: #{net_forward.7} parent=35 // pred_check
        %p4041 = pneg %p4040
      $region42: #{net_forward.7} parent=35 // pred_check_branch
        %4043 = sbr.rel (%p4041) target = $region44
      $region43: #{net_forward.7} parent=35 // pred_region
        %v4044 = vld [vmem:[%s4] sm:$0xff]
        %v4045 = vld [vmem:[%s4 + $0x8] sm:$0xff]
        %v4046 = vld [vmem:[%s4 + $0x10] sm:$0xff]
        %v4047 = vld [vmem:[%s4 + $0x18] sm:$0xff]
        %v4048 = vld [vmem:[%s4 + $0x20] sm:$0xff]
        %v4049 = vld [vmem:[%s4 + $0x28] sm:$0xff]
        %v4050 = vld [vmem:[%s4 + $0x30] sm:$0xff]
        %v4051 = vld [vmem:[%s4 + $0x38] sm:$0xff]
        %v4052 = vmax.f32 %v4044, 0.0
        %v4053 = vmax.f32 %v4045, 0.0
        %v4054 = vmax.f32 %v4046, 0.0
        %v4055 = vmax.f32 %v4047, 0.0
        %v4056 = vmax.f32 %v4048, 0.0
        %v4057 = vmax.f32 %v4049, 0.0
        %v4058 = vmax.f32 %v4050, 0.0
        %v4059 = vmax.f32 %v4051, 0.0
        %4060 = vst [vmem:[%s4] sm:$0xff] %v4052
        %4061 = vst [vmem:[%s4 + $0x8] sm:$0xff] %v4053
        %4062 = vst [vmem:[%s4 + $0x10] sm:$0xff] %v4054
        %4063 = vst [vmem:[%s4 + $0x18] sm:$0xff] %v4055
        %4064 = vst [vmem:[%s4 + $0x20] sm:$0xff] %v4056
        %4065 = vst [vmem:[%s4 + $0x28] sm:$0xff] %v4057
        %4066 = vst [vmem:[%s4 + $0x30] sm:$0xff] %v4058
        %4067 = vst [vmem:[%s4 + $0x38] sm:$0xff] %v4059
        %v4068 = vpack.c.bf16 %v4052, %v4052
        %v4069 = vpack.c.bf16 %v4053, %v4053
        %v4070 = vpack.c.bf16 %v4054, %v4054
        %v4071 = vpack.c.bf16 %v4055, %v4055
        %v4072 = vpack.c.bf16 %v4056, %v4056
        %v4073 = vpack.c.bf16 %v4057, %v4057
        %v4074 = vpack.c.bf16 %v4058, %v4058
        %v4075 = vpack.c.bf16 %v4059, %v4059
        %v4076 = vld [vmem:[%s2] sm:$0xff]
        %v4077 = vld [vmem:[%s2 + $0x8] sm:$0xff]
        %v4078 = vld [vmem:[%s2 + $0x10] sm:$0xff]
        %v4079 = vld [vmem:[%s2 + $0x18] sm:$0xff]
        %v4080 = vld [vmem:[%s2 + $0x20] sm:$0xff]
        %v4081 = vld [vmem:[%s2 + $0x28] sm:$0xff]
        %v4082 = vld [vmem:[%s2 + $0x30] sm:$0xff]
        %v4083 = vld [vmem:[%s2 + $0x38] sm:$0xff]
        %v4084 = vld [vmem:[%s2 + $0x40] sm:$0xff]
        %v4085 = vld [vmem:[%s2 + $0x48] sm:$0xff]
        %v4086 = vld [vmem:[%s2 + $0x50] sm:$0xff]
        %v4087 = vld [vmem:[%s2 + $0x58] sm:$0xff]
        %v4088 = vld [vmem:[%s2 + $0x60] sm:$0xff]
        %v4089 = vld [vmem:[%s2 + $0x68] sm:$0xff]
        %v4090 = vld [vmem:[%s2 + $0x70] sm:$0xff]
        %v4091 = vld [vmem:[%s2 + $0x78] sm:$0xff]
        %v4092 = vld [vmem:[%s2 + $0x80] sm:$0xff]
        %v4093 = vld [vmem:[%s2 + $0x88] sm:$0xff]
        %v4094 = vld [vmem:[%s2 + $0x90] sm:$0xff]
        %v4095 = vld [vmem:[%s2 + $0x98] sm:$0xff]
        %v4096 = vld [vmem:[%s2 + $0xa0] sm:$0xff]
        %v4097 = vld [vmem:[%s2 + $0xa8] sm:$0xff]
        %v4098 = vld [vmem:[%s2 + $0xb0] sm:$0xff]
        %v4099 = vld [vmem:[%s2 + $0xb8] sm:$0xff]
        %v4100 = vld [vmem:[%s2 + $0xc0] sm:$0xff]
        %v4101 = vld [vmem:[%s2 + $0xc8] sm:$0xff]
        %v4102 = vld [vmem:[%s2 + $0xd0] sm:$0xff]
        %v4103 = vld [vmem:[%s2 + $0xd8] sm:$0xff]
        %v4104 = vld [vmem:[%s2 + $0xe0] sm:$0xff]
        %v4105 = vld [vmem:[%s2 + $0xe8] sm:$0xff]
        %v4106 = vld [vmem:[%s2 + $0xf0] sm:$0xff]
        %v4107 = vld [vmem:[%s2 + $0xf8] sm:$0xff]
        %v4108 = vld [vmem:[%s2 + $0x100] sm:$0xff]
        %v4109 = vld [vmem:[%s2 + $0x108] sm:$0xff]
        %v4110 = vld [vmem:[%s2 + $0x110] sm:$0xff]
        %v4111 = vld [vmem:[%s2 + $0x118] sm:$0xff]
        %v4112 = vld [vmem:[%s2 + $0x120] sm:$0xff]
        %v4113 = vld [vmem:[%s2 + $0x128] sm:$0xff]
        %v4114 = vld [vmem:[%s2 + $0x130] sm:$0xff]
        %v4115 = vld [vmem:[%s2 + $0x138] sm:$0xff]
        %v4116 = vld [vmem:[%s2 + $0x140] sm:$0xff]
        %v4117 = vld [vmem:[%s2 + $0x148] sm:$0xff]
        %v4118 = vld [vmem:[%s2 + $0x150] sm:$0xff]
        %v4119 = vld [vmem:[%s2 + $0x158] sm:$0xff]
        %v4120 = vld [vmem:[%s2 + $0x160] sm:$0xff]
        %v4121 = vld [vmem:[%s2 + $0x168] sm:$0xff]
        %v4122 = vld [vmem:[%s2 + $0x170] sm:$0xff]
        %v4123 = vld [vmem:[%s2 + $0x178] sm:$0xff]
        %v4124 = vld [vmem:[%s2 + $0x180] sm:$0xff]
        %v4125 = vld [vmem:[%s2 + $0x188] sm:$0xff]
        %v4126 = vld [vmem:[%s2 + $0x190] sm:$0xff]
        %v4127 = vld [vmem:[%s2 + $0x198] sm:$0xff]
        %v4128 = vld [vmem:[%s2 + $0x1a0] sm:$0xff]
        %v4129 = vld [vmem:[%s2 + $0x1a8] sm:$0xff]
        %v4130 = vld [vmem:[%s2 + $0x1b0] sm:$0xff]
        %v4131 = vld [vmem:[%s2 + $0x1b8] sm:$0xff]
        %v4132 = vld [vmem:[%s2 + $0x1c0] sm:$0xff]
        %v4133 = vld [vmem:[%s2 + $0x1c8] sm:$0xff]
        %v4134 = vld [vmem:[%s2 + $0x1d0] sm:$0xff]
        %v4135 = vld [vmem:[%s2 + $0x1d8] sm:$0xff]
        %v4136 = vld [vmem:[%s2 + $0x1e0] sm:$0xff]
        %v4137 = vld [vmem:[%s2 + $0x1e8] sm:$0xff]
        %v4138 = vld [vmem:[%s2 + $0x1f0] sm:$0xff]
        %v4139 = vld [vmem:[%s2 + $0x1f8] sm:$0xff]
        %v4140 = vld [vmem:[%s2 + $0x200] sm:$0xff]
        %v4141 = vld [vmem:[%s2 + $0x208] sm:$0xff]
        %v4142 = vld [vmem:[%s2 + $0x210] sm:$0xff]
        %v4143 = vld [vmem:[%s2 + $0x218] sm:$0xff]
        %v4144 = vld [vmem:[%s2 + $0x220] sm:$0xff]
        %v4145 = vld [vmem:[%s2 + $0x228] sm:$0xff]
        %v4146 = vld [vmem:[%s2 + $0x230] sm:$0xff]
        %v4147 = vld [vmem:[%s2 + $0x238] sm:$0xff]
        %v4148 = vld [vmem:[%s2 + $0x240] sm:$0xff]
        %v4149 = vld [vmem:[%s2 + $0x248] sm:$0xff]
        %v4150 = vld [vmem:[%s2 + $0x250] sm:$0xff]
        %v4151 = vld [vmem:[%s2 + $0x258] sm:$0xff]
        %v4152 = vld [vmem:[%s2 + $0x260] sm:$0xff]
        %v4153 = vld [vmem:[%s2 + $0x268] sm:$0xff]
        %v4154 = vld [vmem:[%s2 + $0x270] sm:$0xff]
        %v4155 = vld [vmem:[%s2 + $0x278] sm:$0xff]
        %v4156 = vld [vmem:[%s2 + $0x280] sm:$0xff]
        %v4157 = vld [vmem:[%s2 + $0x288] sm:$0xff]
        %v4158 = vld [vmem:[%s2 + $0x290] sm:$0xff]
        %v4159 = vld [vmem:[%s2 + $0x298] sm:$0xff]
        %v4160 = vld [vmem:[%s2 + $0x2a0] sm:$0xff]
        %v4161 = vld [vmem:[%s2 + $0x2a8] sm:$0xff]
        %v4162 = vld [vmem:[%s2 + $0x2b0] sm:$0xff]
        %v4163 = vld [vmem:[%s2 + $0x2b8] sm:$0xff]
        %v4164 = vld [vmem:[%s2 + $0x2c0] sm:$0xff]
        %v4165 = vld [vmem:[%s2 + $0x2c8] sm:$0xff]
        %v4166 = vld [vmem:[%s2 + $0x2d0] sm:$0xff]
        %v4167 = vld [vmem:[%s2 + $0x2d8] sm:$0xff]
        %v4168 = vld [vmem:[%s2 + $0x2e0] sm:$0xff]
        %v4169 = vld [vmem:[%s2 + $0x2e8] sm:$0xff]
        %v4170 = vld [vmem:[%s2 + $0x2f0] sm:$0xff]
        %v4171 = vld [vmem:[%s2 + $0x2f8] sm:$0xff]
        %v4172 = vld [vmem:[%s2 + $0x300] sm:$0xff]
        %v4173 = vld [vmem:[%s2 + $0x308] sm:$0xff]
        %v4174 = vld [vmem:[%s2 + $0x310] sm:$0xff]
        %v4175 = vld [vmem:[%s2 + $0x318] sm:$0xff]
        %v4176 = vld [vmem:[%s2 + $0x320] sm:$0xff]
        %v4177 = vld [vmem:[%s2 + $0x328] sm:$0xff]
        %v4178 = vld [vmem:[%s2 + $0x330] sm:$0xff]
        %v4179 = vld [vmem:[%s2 + $0x338] sm:$0xff]
        %v4180 = vld [vmem:[%s2 + $0x340] sm:$0xff]
        %v4181 = vld [vmem:[%s2 + $0x348] sm:$0xff]
        %v4182 = vld [vmem:[%s2 + $0x350] sm:$0xff]
        %v4183 = vld [vmem:[%s2 + $0x358] sm:$0xff]
        %v4184 = vld [vmem:[%s2 + $0x360] sm:$0xff]
        %v4185 = vld [vmem:[%s2 + $0x368] sm:$0xff]
        %v4186 = vld [vmem:[%s2 + $0x370] sm:$0xff]
        %v4187 = vld [vmem:[%s2 + $0x378] sm:$0xff]
        %v4188 = vld [vmem:[%s2 + $0x380] sm:$0xff]
        %v4189 = vld [vmem:[%s2 + $0x388] sm:$0xff]
        %v4190 = vld [vmem:[%s2 + $0x390] sm:$0xff]
        %v4191 = vld [vmem:[%s2 + $0x398] sm:$0xff]
        %v4192 = vld [vmem:[%s2 + $0x3a0] sm:$0xff]
        %v4193 = vld [vmem:[%s2 + $0x3a8] sm:$0xff]
        %v4194 = vld [vmem:[%s2 + $0x3b0] sm:$0xff]
        %v4195 = vld [vmem:[%s2 + $0x3b8] sm:$0xff]
        %v4196 = vld [vmem:[%s2 + $0x3c0] sm:$0xff]
        %v4197 = vld [vmem:[%s2 + $0x3c8] sm:$0xff]
        %v4198 = vld [vmem:[%s2 + $0x3d0] sm:$0xff]
        %v4199 = vld [vmem:[%s2 + $0x3d8] sm:$0xff]
        %v4200 = vld [vmem:[%s2 + $0x3e0] sm:$0xff]
        %v4201 = vld [vmem:[%s2 + $0x3e8] sm:$0xff]
        %v4202 = vld [vmem:[%s2 + $0x3f0] sm:$0xff]
        %v4203 = vld [vmem:[%s2 + $0x3f8] sm:$0xff]
        %v4204 = vld [vmem:[%s2 + $0x400] sm:$0xff]
        %v4205 = vld [vmem:[%s2 + $0x408] sm:$0xff]
        %v4206 = vld [vmem:[%s2 + $0x410] sm:$0xff]
        %v4207 = vld [vmem:[%s2 + $0x418] sm:$0xff]
        %v4208 = vld [vmem:[%s2 + $0x420] sm:$0xff]
        %v4209 = vld [vmem:[%s2 + $0x428] sm:$0xff]
        %v4210 = vld [vmem:[%s2 + $0x430] sm:$0xff]
        %v4211 = vld [vmem:[%s2 + $0x438] sm:$0xff]
        %v4212 = vld [vmem:[%s2 + $0x440] sm:$0xff]
        %v4213 = vld [vmem:[%s2 + $0x448] sm:$0xff]
        %v4214 = vld [vmem:[%s2 + $0x450] sm:$0xff]
        %v4215 = vld [vmem:[%s2 + $0x458] sm:$0xff]
        %v4216 = vld [vmem:[%s2 + $0x460] sm:$0xff]
        %v4217 = vld [vmem:[%s2 + $0x468] sm:$0xff]
        %v4218 = vld [vmem:[%s2 + $0x470] sm:$0xff]
        %v4219 = vld [vmem:[%s2 + $0x478] sm:$0xff]
        %v4220 = vld [vmem:[%s2 + $0x480] sm:$0xff]
        %v4221 = vld [vmem:[%s2 + $0x488] sm:$0xff]
        %v4222 = vld [vmem:[%s2 + $0x490] sm:$0xff]
        %v4223 = vld [vmem:[%s2 + $0x498] sm:$0xff]
        %v4224 = vld [vmem:[%s2 + $0x4a0] sm:$0xff]
        %v4225 = vld [vmem:[%s2 + $0x4a8] sm:$0xff]
        %v4226 = vld [vmem:[%s2 + $0x4b0] sm:$0xff]
        %v4227 = vld [vmem:[%s2 + $0x4b8] sm:$0xff]
        %v4228 = vld [vmem:[%s2 + $0x4c0] sm:$0xff]
        %v4229 = vld [vmem:[%s2 + $0x4c8] sm:$0xff]
        %v4230 = vld [vmem:[%s2 + $0x4d0] sm:$0xff]
        %v4231 = vld [vmem:[%s2 + $0x4d8] sm:$0xff]
        %v4232 = vld [vmem:[%s2 + $0x4e0] sm:$0xff]
        %v4233 = vld [vmem:[%s2 + $0x4e8] sm:$0xff]
        %v4234 = vld [vmem:[%s2 + $0x4f0] sm:$0xff]
        %v4235 = vld [vmem:[%s2 + $0x4f8] sm:$0xff]
        %v4236 = vld [vmem:[%s2 + $0x500] sm:$0xff]
        %v4237 = vld [vmem:[%s2 + $0x508] sm:$0xff]
        %v4238 = vld [vmem:[%s2 + $0x510] sm:$0xff]
        %v4239 = vld [vmem:[%s2 + $0x518] sm:$0xff]
        %v4240 = vld [vmem:[%s2 + $0x520] sm:$0xff]
        %v4241 = vld [vmem:[%s2 + $0x528] sm:$0xff]
        %v4242 = vld [vmem:[%s2 + $0x530] sm:$0xff]
        %v4243 = vld [vmem:[%s2 + $0x538] sm:$0xff]
        %v4244 = vld [vmem:[%s2 + $0x540] sm:$0xff]
        %v4245 = vld [vmem:[%s2 + $0x548] sm:$0xff]
        %v4246 = vld [vmem:[%s2 + $0x550] sm:$0xff]
        %v4247 = vld [vmem:[%s2 + $0x558] sm:$0xff]
        %v4248 = vld [vmem:[%s2 + $0x560] sm:$0xff]
        %v4249 = vld [vmem:[%s2 + $0x568] sm:$0xff]
        %v4250 = vld [vmem:[%s2 + $0x570] sm:$0xff]
        %v4251 = vld [vmem:[%s2 + $0x578] sm:$0xff]
        %v4252 = vld [vmem:[%s2 + $0x580] sm:$0xff]
        %v4253 = vld [vmem:[%s2 + $0x588] sm:$0xff]
        %v4254 = vld [vmem:[%s2 + $0x590] sm:$0xff]
        %v4255 = vld [vmem:[%s2 + $0x598] sm:$0xff]
        %v4256 = vld [vmem:[%s2 + $0x5a0] sm:$0xff]
        %v4257 = vld [vmem:[%s2 + $0x5a8] sm:$0xff]
        %v4258 = vld [vmem:[%s2 + $0x5b0] sm:$0xff]
        %v4259 = vld [vmem:[%s2 + $0x5b8] sm:$0xff]
        %v4260 = vld [vmem:[%s2 + $0x5c0] sm:$0xff]
        %v4261 = vld [vmem:[%s2 + $0x5c8] sm:$0xff]
        %v4262 = vld [vmem:[%s2 + $0x5d0] sm:$0xff]
        %v4263 = vld [vmem:[%s2 + $0x5d8] sm:$0xff]
        %v4264 = vld [vmem:[%s2 + $0x5e0] sm:$0xff]
        %v4265 = vld [vmem:[%s2 + $0x5e8] sm:$0xff]
        %v4266 = vld [vmem:[%s2 + $0x5f0] sm:$0xff]
        %v4267 = vld [vmem:[%s2 + $0x5f8] sm:$0xff]
        %v4268 = vld [vmem:[%s2 + $0x600] sm:$0xff]
        %v4269 = vld [vmem:[%s2 + $0x608] sm:$0xff]
        %v4270 = vld [vmem:[%s2 + $0x610] sm:$0xff]
        %v4271 = vld [vmem:[%s2 + $0x618] sm:$0xff]
        %v4272 = vld [vmem:[%s2 + $0x620] sm:$0xff]
        %v4273 = vld [vmem:[%s2 + $0x628] sm:$0xff]
        %v4274 = vld [vmem:[%s2 + $0x630] sm:$0xff]
        %v4275 = vld [vmem:[%s2 + $0x638] sm:$0xff]
        %v4276 = vld [vmem:[%s2 + $0x640] sm:$0xff]
        %v4277 = vld [vmem:[%s2 + $0x648] sm:$0xff]
        %v4278 = vld [vmem:[%s2 + $0x650] sm:$0xff]
        %v4279 = vld [vmem:[%s2 + $0x658] sm:$0xff]
        %v4280 = vld [vmem:[%s2 + $0x660] sm:$0xff]
        %v4281 = vld [vmem:[%s2 + $0x668] sm:$0xff]
        %v4282 = vld [vmem:[%s2 + $0x670] sm:$0xff]
        %v4283 = vld [vmem:[%s2 + $0x678] sm:$0xff]
        %v4284 = vld [vmem:[%s2 + $0x680] sm:$0xff]
        %v4285 = vld [vmem:[%s2 + $0x688] sm:$0xff]
        %v4286 = vld [vmem:[%s2 + $0x690] sm:$0xff]
        %v4287 = vld [vmem:[%s2 + $0x698] sm:$0xff]
        %v4288 = vld [vmem:[%s2 + $0x6a0] sm:$0xff]
        %v4289 = vld [vmem:[%s2 + $0x6a8] sm:$0xff]
        %v4290 = vld [vmem:[%s2 + $0x6b0] sm:$0xff]
        %v4291 = vld [vmem:[%s2 + $0x6b8] sm:$0xff]
        %v4292 = vld [vmem:[%s2 + $0x6c0] sm:$0xff]
        %v4293 = vld [vmem:[%s2 + $0x6c8] sm:$0xff]
        %v4294 = vld [vmem:[%s2 + $0x6d0] sm:$0xff]
        %v4295 = vld [vmem:[%s2 + $0x6d8] sm:$0xff]
        %v4296 = vld [vmem:[%s2 + $0x6e0] sm:$0xff]
        %v4297 = vld [vmem:[%s2 + $0x6e8] sm:$0xff]
        %v4298 = vld [vmem:[%s2 + $0x6f0] sm:$0xff]
        %v4299 = vld [vmem:[%s2 + $0x6f8] sm:$0xff]
        %v4300 = vld [vmem:[%s2 + $0x700] sm:$0xff]
        %v4301 = vld [vmem:[%s2 + $0x708] sm:$0xff]
        %v4302 = vld [vmem:[%s2 + $0x710] sm:$0xff]
        %v4303 = vld [vmem:[%s2 + $0x718] sm:$0xff]
        %v4304 = vld [vmem:[%s2 + $0x720] sm:$0xff]
        %v4305 = vld [vmem:[%s2 + $0x728] sm:$0xff]
        %v4306 = vld [vmem:[%s2 + $0x730] sm:$0xff]
        %v4307 = vld [vmem:[%s2 + $0x738] sm:$0xff]
        %v4308 = vld [vmem:[%s2 + $0x740] sm:$0xff]
        %v4309 = vld [vmem:[%s2 + $0x748] sm:$0xff]
        %v4310 = vld [vmem:[%s2 + $0x750] sm:$0xff]
        %v4311 = vld [vmem:[%s2 + $0x758] sm:$0xff]
        %v4312 = vld [vmem:[%s2 + $0x760] sm:$0xff]
        %v4313 = vld [vmem:[%s2 + $0x768] sm:$0xff]
        %v4314 = vld [vmem:[%s2 + $0x770] sm:$0xff]
        %v4315 = vld [vmem:[%s2 + $0x778] sm:$0xff]
        %v4316 = vld [vmem:[%s2 + $0x780] sm:$0xff]
        %v4317 = vld [vmem:[%s2 + $0x788] sm:$0xff]
        %v4318 = vld [vmem:[%s2 + $0x790] sm:$0xff]
        %v4319 = vld [vmem:[%s2 + $0x798] sm:$0xff]
        %v4320 = vld [vmem:[%s2 + $0x7a0] sm:$0xff]
        %v4321 = vld [vmem:[%s2 + $0x7a8] sm:$0xff]
        %v4322 = vld [vmem:[%s2 + $0x7b0] sm:$0xff]
        %v4323 = vld [vmem:[%s2 + $0x7b8] sm:$0xff]
        %v4324 = vld [vmem:[%s2 + $0x7c0] sm:$0xff]
        %v4325 = vld [vmem:[%s2 + $0x7c8] sm:$0xff]
        %v4326 = vld [vmem:[%s2 + $0x7d0] sm:$0xff]
        %v4327 = vld [vmem:[%s2 + $0x7d8] sm:$0xff]
        %v4328 = vld [vmem:[%s2 + $0x7e0] sm:$0xff]
        %v4329 = vld [vmem:[%s2 + $0x7e8] sm:$0xff]
        %v4330 = vld [vmem:[%s2 + $0x7f0] sm:$0xff]
        %v4331 = vld [vmem:[%s2 + $0x7f8] sm:$0xff]
        %v4332 = vld [vmem:[%s2 + $0x800] sm:$0xff]
        %v4333 = vld [vmem:[%s2 + $0x808] sm:$0xff]
        %v4334 = vld [vmem:[%s2 + $0x810] sm:$0xff]
        %v4335 = vld [vmem:[%s2 + $0x818] sm:$0xff]
        %v4336 = vld [vmem:[%s2 + $0x820] sm:$0xff]
        %v4337 = vld [vmem:[%s2 + $0x828] sm:$0xff]
        %v4338 = vld [vmem:[%s2 + $0x830] sm:$0xff]
        %v4339 = vld [vmem:[%s2 + $0x838] sm:$0xff]
        %v4340 = vld [vmem:[%s2 + $0x840] sm:$0xff]
        %v4341 = vld [vmem:[%s2 + $0x848] sm:$0xff]
        %v4342 = vld [vmem:[%s2 + $0x850] sm:$0xff]
        %v4343 = vld [vmem:[%s2 + $0x858] sm:$0xff]
        %v4344 = vld [vmem:[%s2 + $0x860] sm:$0xff]
        %v4345 = vld [vmem:[%s2 + $0x868] sm:$0xff]
        %v4346 = vld [vmem:[%s2 + $0x870] sm:$0xff]
        %v4347 = vld [vmem:[%s2 + $0x878] sm:$0xff]
        %v4348 = vld [vmem:[%s2 + $0x880] sm:$0xff]
        %v4349 = vld [vmem:[%s2 + $0x888] sm:$0xff]
        %v4350 = vld [vmem:[%s2 + $0x890] sm:$0xff]
        %v4351 = vld [vmem:[%s2 + $0x898] sm:$0xff]
        %v4352 = vld [vmem:[%s2 + $0x8a0] sm:$0xff]
        %v4353 = vld [vmem:[%s2 + $0x8a8] sm:$0xff]
        %v4354 = vld [vmem:[%s2 + $0x8b0] sm:$0xff]
        %v4355 = vld [vmem:[%s2 + $0x8b8] sm:$0xff]
        %v4356 = vld [vmem:[%s2 + $0x8c0] sm:$0xff]
        %v4357 = vld [vmem:[%s2 + $0x8c8] sm:$0xff]
        %v4358 = vld [vmem:[%s2 + $0x8d0] sm:$0xff]
        %v4359 = vld [vmem:[%s2 + $0x8d8] sm:$0xff]
        %v4360 = vld [vmem:[%s2 + $0x8e0] sm:$0xff]
        %v4361 = vld [vmem:[%s2 + $0x8e8] sm:$0xff]
        %v4362 = vld [vmem:[%s2 + $0x8f0] sm:$0xff]
        %v4363 = vld [vmem:[%s2 + $0x8f8] sm:$0xff]
        %v4364 = vld [vmem:[%s2 + $0x900] sm:$0xff]
        %v4365 = vld [vmem:[%s2 + $0x908] sm:$0xff]
        %v4366 = vld [vmem:[%s2 + $0x910] sm:$0xff]
        %v4367 = vld [vmem:[%s2 + $0x918] sm:$0xff]
        %v4368 = vld [vmem:[%s2 + $0x920] sm:$0xff]
        %v4369 = vld [vmem:[%s2 + $0x928] sm:$0xff]
        %v4370 = vld [vmem:[%s2 + $0x930] sm:$0xff]
        %v4371 = vld [vmem:[%s2 + $0x938] sm:$0xff]
        %v4372 = vld [vmem:[%s2 + $0x940] sm:$0xff]
        %v4373 = vld [vmem:[%s2 + $0x948] sm:$0xff]
        %v4374 = vld [vmem:[%s2 + $0x950] sm:$0xff]
        %v4375 = vld [vmem:[%s2 + $0x958] sm:$0xff]
        %v4376 = vld [vmem:[%s2 + $0x960] sm:$0xff]
        %v4377 = vld [vmem:[%s2 + $0x968] sm:$0xff]
        %v4378 = vld [vmem:[%s2 + $0x970] sm:$0xff]
        %v4379 = vld [vmem:[%s2 + $0x978] sm:$0xff]
        %v4380 = vld [vmem:[%s2 + $0x980] sm:$0xff]
        %v4381 = vld [vmem:[%s2 + $0x988] sm:$0xff]
        %v4382 = vld [vmem:[%s2 + $0x990] sm:$0xff]
        %v4383 = vld [vmem:[%s2 + $0x998] sm:$0xff]
        %v4384 = vld [vmem:[%s2 + $0x9a0] sm:$0xff]
        %v4385 = vld [vmem:[%s2 + $0x9a8] sm:$0xff]
        %v4386 = vld [vmem:[%s2 + $0x9b0] sm:$0xff]
        %v4387 = vld [vmem:[%s2 + $0x9b8] sm:$0xff]
        %v4388 = vld [vmem:[%s2 + $0x9c0] sm:$0xff]
        %v4389 = vld [vmem:[%s2 + $0x9c8] sm:$0xff]
        %v4390 = vld [vmem:[%s2 + $0x9d0] sm:$0xff]
        %v4391 = vld [vmem:[%s2 + $0x9d8] sm:$0xff]
        %v4392 = vld [vmem:[%s2 + $0x9e0] sm:$0xff]
        %v4393 = vld [vmem:[%s2 + $0x9e8] sm:$0xff]
        %v4394 = vld [vmem:[%s2 + $0x9f0] sm:$0xff]
        %v4395 = vld [vmem:[%s2 + $0x9f8] sm:$0xff]
        %v4396 = vld [vmem:[%s2 + $0xa00] sm:$0xff]
        %v4397 = vld [vmem:[%s2 + $0xa08] sm:$0xff]
        %v4398 = vld [vmem:[%s2 + $0xa10] sm:$0xff]
        %v4399 = vld [vmem:[%s2 + $0xa18] sm:$0xff]
        %v4400 = vld [vmem:[%s2 + $0xa20] sm:$0xff]
        %v4401 = vld [vmem:[%s2 + $0xa28] sm:$0xff]
        %v4402 = vld [vmem:[%s2 + $0xa30] sm:$0xff]
        %v4403 = vld [vmem:[%s2 + $0xa38] sm:$0xff]
        %v4404 = vld [vmem:[%s2 + $0xa40] sm:$0xff]
        %v4405 = vld [vmem:[%s2 + $0xa48] sm:$0xff]
        %v4406 = vld [vmem:[%s2 + $0xa50] sm:$0xff]
        %v4407 = vld [vmem:[%s2 + $0xa58] sm:$0xff]
        %v4408 = vld [vmem:[%s2 + $0xa60] sm:$0xff]
        %v4409 = vld [vmem:[%s2 + $0xa68] sm:$0xff]
        %v4410 = vld [vmem:[%s2 + $0xa70] sm:$0xff]
        %v4411 = vld [vmem:[%s2 + $0xa78] sm:$0xff]
        %v4412 = vld [vmem:[%s2 + $0xa80] sm:$0xff]
        %v4413 = vld [vmem:[%s2 + $0xa88] sm:$0xff]
        %v4414 = vld [vmem:[%s2 + $0xa90] sm:$0xff]
        %v4415 = vld [vmem:[%s2 + $0xa98] sm:$0xff]
        %v4416 = vld [vmem:[%s2 + $0xaa0] sm:$0xff]
        %v4417 = vld [vmem:[%s2 + $0xaa8] sm:$0xff]
        %v4418 = vld [vmem:[%s2 + $0xab0] sm:$0xff]
        %v4419 = vld [vmem:[%s2 + $0xab8] sm:$0xff]
        %v4420 = vld [vmem:[%s2 + $0xac0] sm:$0xff]
        %v4421 = vld [vmem:[%s2 + $0xac8] sm:$0xff]
        %v4422 = vld [vmem:[%s2 + $0xad0] sm:$0xff]
        %v4423 = vld [vmem:[%s2 + $0xad8] sm:$0xff]
        %v4424 = vld [vmem:[%s2 + $0xae0] sm:$0xff]
        %v4425 = vld [vmem:[%s2 + $0xae8] sm:$0xff]
        %v4426 = vld [vmem:[%s2 + $0xaf0] sm:$0xff]
        %v4427 = vld [vmem:[%s2 + $0xaf8] sm:$0xff]
        %v4428 = vld [vmem:[%s2 + $0xb00] sm:$0xff]
        %v4429 = vld [vmem:[%s2 + $0xb08] sm:$0xff]
        %v4430 = vld [vmem:[%s2 + $0xb10] sm:$0xff]
        %v4431 = vld [vmem:[%s2 + $0xb18] sm:$0xff]
        %v4432 = vld [vmem:[%s2 + $0xb20] sm:$0xff]
        %v4433 = vld [vmem:[%s2 + $0xb28] sm:$0xff]
        %v4434 = vld [vmem:[%s2 + $0xb30] sm:$0xff]
        %v4435 = vld [vmem:[%s2 + $0xb38] sm:$0xff]
        %v4436 = vld [vmem:[%s2 + $0xb40] sm:$0xff]
        %v4437 = vld [vmem:[%s2 + $0xb48] sm:$0xff]
        %v4438 = vld [vmem:[%s2 + $0xb50] sm:$0xff]
        %v4439 = vld [vmem:[%s2 + $0xb58] sm:$0xff]
        %v4440 = vld [vmem:[%s2 + $0xb60] sm:$0xff]
        %v4441 = vld [vmem:[%s2 + $0xb68] sm:$0xff]
        %v4442 = vld [vmem:[%s2 + $0xb70] sm:$0xff]
        %v4443 = vld [vmem:[%s2 + $0xb78] sm:$0xff]
        %v4444 = vld [vmem:[%s2 + $0xb80] sm:$0xff]
        %v4445 = vld [vmem:[%s2 + $0xb88] sm:$0xff]
        %v4446 = vld [vmem:[%s2 + $0xb90] sm:$0xff]
        %v4447 = vld [vmem:[%s2 + $0xb98] sm:$0xff]
        %v4448 = vld [vmem:[%s2 + $0xba0] sm:$0xff]
        %v4449 = vld [vmem:[%s2 + $0xba8] sm:$0xff]
        %v4450 = vld [vmem:[%s2 + $0xbb0] sm:$0xff]
        %v4451 = vld [vmem:[%s2 + $0xbb8] sm:$0xff]
        %v4452 = vld [vmem:[%s2 + $0xbc0] sm:$0xff]
        %v4453 = vld [vmem:[%s2 + $0xbc8] sm:$0xff]
        %v4454 = vld [vmem:[%s2 + $0xbd0] sm:$0xff]
        %v4455 = vld [vmem:[%s2 + $0xbd8] sm:$0xff]
        %v4456 = vld [vmem:[%s2 + $0xbe0] sm:$0xff]
        %v4457 = vld [vmem:[%s2 + $0xbe8] sm:$0xff]
        %v4458 = vld [vmem:[%s2 + $0xbf0] sm:$0xff]
        %v4459 = vld [vmem:[%s2 + $0xbf8] sm:$0xff]
        %v4460 = vld [vmem:[%s2 + $0xc00] sm:$0xff]
        %v4461 = vld [vmem:[%s2 + $0xc08] sm:$0xff]
        %v4462 = vld [vmem:[%s2 + $0xc10] sm:$0xff]
        %v4463 = vld [vmem:[%s2 + $0xc18] sm:$0xff]
        %v4464 = vld [vmem:[%s2 + $0xc20] sm:$0xff]
        %v4465 = vld [vmem:[%s2 + $0xc28] sm:$0xff]
        %v4466 = vld [vmem:[%s2 + $0xc30] sm:$0xff]
        %v4467 = vld [vmem:[%s2 + $0xc38] sm:$0xff]
        %v4468 = vld [vmem:[%s2 + $0xc40] sm:$0xff]
        %v4469 = vld [vmem:[%s2 + $0xc48] sm:$0xff]
        %v4470 = vld [vmem:[%s2 + $0xc50] sm:$0xff]
        %v4471 = vld [vmem:[%s2 + $0xc58] sm:$0xff]
        %v4472 = vld [vmem:[%s2 + $0xc60] sm:$0xff]
        %v4473 = vld [vmem:[%s2 + $0xc68] sm:$0xff]
        %v4474 = vld [vmem:[%s2 + $0xc70] sm:$0xff]
        %v4475 = vld [vmem:[%s2 + $0xc78] sm:$0xff]
        %v4476 = vld [vmem:[%s2 + $0xc80] sm:$0xff]
        %v4477 = vld [vmem:[%s2 + $0xc88] sm:$0xff]
        %v4478 = vld [vmem:[%s2 + $0xc90] sm:$0xff]
        %v4479 = vld [vmem:[%s2 + $0xc98] sm:$0xff]
        %v4480 = vld [vmem:[%s2 + $0xca0] sm:$0xff]
        %v4481 = vld [vmem:[%s2 + $0xca8] sm:$0xff]
        %v4482 = vld [vmem:[%s2 + $0xcb0] sm:$0xff]
        %v4483 = vld [vmem:[%s2 + $0xcb8] sm:$0xff]
        %v4484 = vld [vmem:[%s2 + $0xcc0] sm:$0xff]
        %v4485 = vld [vmem:[%s2 + $0xcc8] sm:$0xff]
        %v4486 = vld [vmem:[%s2 + $0xcd0] sm:$0xff]
        %v4487 = vld [vmem:[%s2 + $0xcd8] sm:$0xff]
        %v4488 = vld [vmem:[%s2 + $0xce0] sm:$0xff]
        %v4489 = vld [vmem:[%s2 + $0xce8] sm:$0xff]
        %v4490 = vld [vmem:[%s2 + $0xcf0] sm:$0xff]
        %v4491 = vld [vmem:[%s2 + $0xcf8] sm:$0xff]
        %v4492 = vld [vmem:[%s2 + $0xd00] sm:$0xff]
        %v4493 = vld [vmem:[%s2 + $0xd08] sm:$0xff]
        %v4494 = vld [vmem:[%s2 + $0xd10] sm:$0xff]
        %v4495 = vld [vmem:[%s2 + $0xd18] sm:$0xff]
        %v4496 = vld [vmem:[%s2 + $0xd20] sm:$0xff]
        %v4497 = vld [vmem:[%s2 + $0xd28] sm:$0xff]
        %v4498 = vld [vmem:[%s2 + $0xd30] sm:$0xff]
        %v4499 = vld [vmem:[%s2 + $0xd38] sm:$0xff]
        %v4500 = vld [vmem:[%s2 + $0xd40] sm:$0xff]
        %v4501 = vld [vmem:[%s2 + $0xd48] sm:$0xff]
        %v4502 = vld [vmem:[%s2 + $0xd50] sm:$0xff]
        %v4503 = vld [vmem:[%s2 + $0xd58] sm:$0xff]
        %v4504 = vld [vmem:[%s2 + $0xd60] sm:$0xff]
        %v4505 = vld [vmem:[%s2 + $0xd68] sm:$0xff]
        %v4506 = vld [vmem:[%s2 + $0xd70] sm:$0xff]
        %v4507 = vld [vmem:[%s2 + $0xd78] sm:$0xff]
        %v4508 = vld [vmem:[%s2 + $0xd80] sm:$0xff]
        %v4509 = vld [vmem:[%s2 + $0xd88] sm:$0xff]
        %v4510 = vld [vmem:[%s2 + $0xd90] sm:$0xff]
        %v4511 = vld [vmem:[%s2 + $0xd98] sm:$0xff]
        %v4512 = vld [vmem:[%s2 + $0xda0] sm:$0xff]
        %v4513 = vld [vmem:[%s2 + $0xda8] sm:$0xff]
        %v4514 = vld [vmem:[%s2 + $0xdb0] sm:$0xff]
        %v4515 = vld [vmem:[%s2 + $0xdb8] sm:$0xff]
        %v4516 = vld [vmem:[%s2 + $0xdc0] sm:$0xff]
        %v4517 = vld [vmem:[%s2 + $0xdc8] sm:$0xff]
        %v4518 = vld [vmem:[%s2 + $0xdd0] sm:$0xff]
        %v4519 = vld [vmem:[%s2 + $0xdd8] sm:$0xff]
        %v4520 = vld [vmem:[%s2 + $0xde0] sm:$0xff]
        %v4521 = vld [vmem:[%s2 + $0xde8] sm:$0xff]
        %v4522 = vld [vmem:[%s2 + $0xdf0] sm:$0xff]
        %v4523 = vld [vmem:[%s2 + $0xdf8] sm:$0xff]
        %v4524 = vld [vmem:[%s2 + $0xe00] sm:$0xff]
        %v4525 = vld [vmem:[%s2 + $0xe08] sm:$0xff]
        %v4526 = vld [vmem:[%s2 + $0xe10] sm:$0xff]
        %v4527 = vld [vmem:[%s2 + $0xe18] sm:$0xff]
        %v4528 = vld [vmem:[%s2 + $0xe20] sm:$0xff]
        %v4529 = vld [vmem:[%s2 + $0xe28] sm:$0xff]
        %v4530 = vld [vmem:[%s2 + $0xe30] sm:$0xff]
        %v4531 = vld [vmem:[%s2 + $0xe38] sm:$0xff]
        %v4532 = vld [vmem:[%s2 + $0xe40] sm:$0xff]
        %v4533 = vld [vmem:[%s2 + $0xe48] sm:$0xff]
        %v4534 = vld [vmem:[%s2 + $0xe50] sm:$0xff]
        %v4535 = vld [vmem:[%s2 + $0xe58] sm:$0xff]
        %v4536 = vld [vmem:[%s2 + $0xe60] sm:$0xff]
        %v4537 = vld [vmem:[%s2 + $0xe68] sm:$0xff]
        %v4538 = vld [vmem:[%s2 + $0xe70] sm:$0xff]
        %v4539 = vld [vmem:[%s2 + $0xe78] sm:$0xff]
        %v4540 = vld [vmem:[%s2 + $0xe80] sm:$0xff]
        %v4541 = vld [vmem:[%s2 + $0xe88] sm:$0xff]
        %v4542 = vld [vmem:[%s2 + $0xe90] sm:$0xff]
        %v4543 = vld [vmem:[%s2 + $0xe98] sm:$0xff]
        %v4544 = vld [vmem:[%s2 + $0xea0] sm:$0xff]
        %v4545 = vld [vmem:[%s2 + $0xea8] sm:$0xff]
        %v4546 = vld [vmem:[%s2 + $0xeb0] sm:$0xff]
        %v4547 = vld [vmem:[%s2 + $0xeb8] sm:$0xff]
        %v4548 = vld [vmem:[%s2 + $0xec0] sm:$0xff]
        %v4549 = vld [vmem:[%s2 + $0xec8] sm:$0xff]
        %v4550 = vld [vmem:[%s2 + $0xed0] sm:$0xff]
        %v4551 = vld [vmem:[%s2 + $0xed8] sm:$0xff]
        %v4552 = vld [vmem:[%s2 + $0xee0] sm:$0xff]
        %v4553 = vld [vmem:[%s2 + $0xee8] sm:$0xff]
        %v4554 = vld [vmem:[%s2 + $0xef0] sm:$0xff]
        %v4555 = vld [vmem:[%s2 + $0xef8] sm:$0xff]
        %v4556 = vld [vmem:[%s2 + $0xf00] sm:$0xff]
        %v4557 = vld [vmem:[%s2 + $0xf08] sm:$0xff]
        %v4558 = vld [vmem:[%s2 + $0xf10] sm:$0xff]
        %v4559 = vld [vmem:[%s2 + $0xf18] sm:$0xff]
        %v4560 = vld [vmem:[%s2 + $0xf20] sm:$0xff]
        %v4561 = vld [vmem:[%s2 + $0xf28] sm:$0xff]
        %v4562 = vld [vmem:[%s2 + $0xf30] sm:$0xff]
        %v4563 = vld [vmem:[%s2 + $0xf38] sm:$0xff]
        %v4564 = vld [vmem:[%s2 + $0xf40] sm:$0xff]
        %v4565 = vld [vmem:[%s2 + $0xf48] sm:$0xff]
        %v4566 = vld [vmem:[%s2 + $0xf50] sm:$0xff]
        %v4567 = vld [vmem:[%s2 + $0xf58] sm:$0xff]
        %v4568 = vld [vmem:[%s2 + $0xf60] sm:$0xff]
        %v4569 = vld [vmem:[%s2 + $0xf68] sm:$0xff]
        %v4570 = vld [vmem:[%s2 + $0xf70] sm:$0xff]
        %v4571 = vld [vmem:[%s2 + $0xf78] sm:$0xff]
        %v4572 = vld [vmem:[%s2 + $0xf80] sm:$0xff]
        %v4573 = vld [vmem:[%s2 + $0xf88] sm:$0xff]
        %v4574 = vld [vmem:[%s2 + $0xf90] sm:$0xff]
        %v4575 = vld [vmem:[%s2 + $0xf98] sm:$0xff]
        %v4576 = vld [vmem:[%s2 + $0xfa0] sm:$0xff]
        %v4577 = vld [vmem:[%s2 + $0xfa8] sm:$0xff]
        %v4578 = vld [vmem:[%s2 + $0xfb0] sm:$0xff]
        %v4579 = vld [vmem:[%s2 + $0xfb8] sm:$0xff]
        %v4580 = vld [vmem:[%s2 + $0xfc0] sm:$0xff]
        %v4581 = vld [vmem:[%s2 + $0xfc8] sm:$0xff]
        %v4582 = vld [vmem:[%s2 + $0xfd0] sm:$0xff]
        %v4583 = vld [vmem:[%s2 + $0xfd8] sm:$0xff]
        %v4584 = vld [vmem:[%s2 + $0xfe0] sm:$0xff]
        %v4585 = vld [vmem:[%s2 + $0xfe8] sm:$0xff]
        %v4586 = vld [vmem:[%s2 + $0xff0] sm:$0xff]
        %v4587 = vld [vmem:[%s2 + $0xff8] sm:$0xff]
        %v5100 = vunpack.c.l.b16 %v4076
        %v5101 = vunpack.c.h.b16 %v4076
        %v5102 = vunpack.c.l.b16 %v4077
        %v5103 = vunpack.c.h.b16 %v4077
        %v5104 = vunpack.c.l.b16 %v4078
        %v5105 = vunpack.c.h.b16 %v4078
        %v5106 = vunpack.c.l.b16 %v4079
        %v5107 = vunpack.c.h.b16 %v4079
        %v5108 = vunpack.c.l.b16 %v4080
        %v5109 = vunpack.c.h.b16 %v4080
        %v5110 = vunpack.c.l.b16 %v4081
        %v5111 = vunpack.c.h.b16 %v4081
        %v5112 = vunpack.c.l.b16 %v4082
        %v5113 = vunpack.c.h.b16 %v4082
        %v5114 = vunpack.c.l.b16 %v4083
        %v5115 = vunpack.c.h.b16 %v4083
        %v5116 = vunpack.c.l.b16 %v4084
        %v5117 = vunpack.c.h.b16 %v4084
        %v5118 = vunpack.c.l.b16 %v4085
        %v5119 = vunpack.c.h.b16 %v4085
        %v5120 = vunpack.c.l.b16 %v4086
        %v5121 = vunpack.c.h.b16 %v4086
        %v5122 = vunpack.c.l.b16 %v4087
        %v5123 = vunpack.c.h.b16 %v4087
        %v5124 = vunpack.c.l.b16 %v4088
        %v5125 = vunpack.c.h.b16 %v4088
        %v5126 = vunpack.c.l.b16 %v4089
        %v5127 = vunpack.c.h.b16 %v4089
        %v5128 = vunpack.c.l.b16 %v4090
        %v5129 = vunpack.c.h.b16 %v4090
        %v5130 = vunpack.c.l.b16 %v4091
        %v5131 = vunpack.c.h.b16 %v4091
        %v5132 = vunpack.c.l.b16 %v4092
        %v5133 = vunpack.c.h.b16 %v4092
        %v5134 = vunpack.c.l.b16 %v4093
        %v5135 = vunpack.c.h.b16 %v4093
        %v5136 = vunpack.c.l.b16 %v4094
        %v5137 = vunpack.c.h.b16 %v4094
        %v5138 = vunpack.c.l.b16 %v4095
        %v5139 = vunpack.c.h.b16 %v4095
        %v5140 = vunpack.c.l.b16 %v4096
        %v5141 = vunpack.c.h.b16 %v4096
        %v5142 = vunpack.c.l.b16 %v4097
        %v5143 = vunpack.c.h.b16 %v4097
        %v5144 = vunpack.c.l.b16 %v4098
        %v5145 = vunpack.c.h.b16 %v4098
        %v5146 = vunpack.c.l.b16 %v4099
        %v5147 = vunpack.c.h.b16 %v4099
        %v5148 = vunpack.c.l.b16 %v4100
        %v5149 = vunpack.c.h.b16 %v4100
        %v5150 = vunpack.c.l.b16 %v4101
        %v5151 = vunpack.c.h.b16 %v4101
        %v5152 = vunpack.c.l.b16 %v4102
        %v5153 = vunpack.c.h.b16 %v4102
        %v5154 = vunpack.c.l.b16 %v4103
        %v5155 = vunpack.c.h.b16 %v4103
        %v5156 = vunpack.c.l.b16 %v4104
        %v5157 = vunpack.c.h.b16 %v4104
        %v5158 = vunpack.c.l.b16 %v4105
        %v5159 = vunpack.c.h.b16 %v4105
        %v5160 = vunpack.c.l.b16 %v4106
        %v5161 = vunpack.c.h.b16 %v4106
        %v5162 = vunpack.c.l.b16 %v4107
        %v5163 = vunpack.c.h.b16 %v4107
        %v5164 = vunpack.c.l.b16 %v4108
        %v5165 = vunpack.c.h.b16 %v4108
        %v5166 = vunpack.c.l.b16 %v4109
        %v5167 = vunpack.c.h.b16 %v4109
        %v5168 = vunpack.c.l.b16 %v4110
        %v5169 = vunpack.c.h.b16 %v4110
        %v5170 = vunpack.c.l.b16 %v4111
        %v5171 = vunpack.c.h.b16 %v4111
        %v5172 = vunpack.c.l.b16 %v4112
        %v5173 = vunpack.c.h.b16 %v4112
        %v5174 = vunpack.c.l.b16 %v4113
        %v5175 = vunpack.c.h.b16 %v4113
        %v5176 = vunpack.c.l.b16 %v4114
        %v5177 = vunpack.c.h.b16 %v4114
        %v5178 = vunpack.c.l.b16 %v4115
        %v5179 = vunpack.c.h.b16 %v4115
        %v5180 = vunpack.c.l.b16 %v4116
        %v5181 = vunpack.c.h.b16 %v4116
        %v5182 = vunpack.c.l.b16 %v4117
        %v5183 = vunpack.c.h.b16 %v4117
        %v5184 = vunpack.c.l.b16 %v4118
        %v5185 = vunpack.c.h.b16 %v4118
        %v5186 = vunpack.c.l.b16 %v4119
        %v5187 = vunpack.c.h.b16 %v4119
        %v5188 = vunpack.c.l.b16 %v4120
        %v5189 = vunpack.c.h.b16 %v4120
        %v5190 = vunpack.c.l.b16 %v4121
        %v5191 = vunpack.c.h.b16 %v4121
        %v5192 = vunpack.c.l.b16 %v4122
        %v5193 = vunpack.c.h.b16 %v4122
        %v5194 = vunpack.c.l.b16 %v4123
        %v5195 = vunpack.c.h.b16 %v4123
        %v5196 = vunpack.c.l.b16 %v4124
        %v5197 = vunpack.c.h.b16 %v4124
        %v5198 = vunpack.c.l.b16 %v4125
        %v5199 = vunpack.c.h.b16 %v4125
        %v5200 = vunpack.c.l.b16 %v4126
        %v5201 = vunpack.c.h.b16 %v4126
        %v5202 = vunpack.c.l.b16 %v4127
        %v5203 = vunpack.c.h.b16 %v4127
        %v5204 = vunpack.c.l.b16 %v4128
        %v5205 = vunpack.c.h.b16 %v4128
        %v5206 = vunpack.c.l.b16 %v4129
        %v5207 = vunpack.c.h.b16 %v4129
        %v5208 = vunpack.c.l.b16 %v4130
        %v5209 = vunpack.c.h.b16 %v4130
        %v5210 = vunpack.c.l.b16 %v4131
        %v5211 = vunpack.c.h.b16 %v4131
        %v5212 = vunpack.c.l.b16 %v4132
        %v5213 = vunpack.c.h.b16 %v4132
        %v5214 = vunpack.c.l.b16 %v4133
        %v5215 = vunpack.c.h.b16 %v4133
        %v5216 = vunpack.c.l.b16 %v4134
        %v5217 = vunpack.c.h.b16 %v4134
        %v5218 = vunpack.c.l.b16 %v4135
        %v5219 = vunpack.c.h.b16 %v4135
        %v5220 = vunpack.c.l.b16 %v4136
        %v5221 = vunpack.c.h.b16 %v4136
        %v5222 = vunpack.c.l.b16 %v4137
        %v5223 = vunpack.c.h.b16 %v4137
        %v5224 = vunpack.c.l.b16 %v4138
        %v5225 = vunpack.c.h.b16 %v4138
        %v5226 = vunpack.c.l.b16 %v4139
        %v5227 = vunpack.c.h.b16 %v4139
        %v5228 = vunpack.c.l.b16 %v4140
        %v5229 = vunpack.c.h.b16 %v4140
        %v5230 = vunpack.c.l.b16 %v4141
        %v5231 = vunpack.c.h.b16 %v4141
        %v5232 = vunpack.c.l.b16 %v4142
        %v5233 = vunpack.c.h.b16 %v4142
        %v5234 = vunpack.c.l.b16 %v4143
        %v5235 = vunpack.c.h.b16 %v4143
        %v5236 = vunpack.c.l.b16 %v4144
        %v5237 = vunpack.c.h.b16 %v4144
        %v5238 = vunpack.c.l.b16 %v4145
        %v5239 = vunpack.c.h.b16 %v4145
        %v5240 = vunpack.c.l.b16 %v4146
        %v5241 = vunpack.c.h.b16 %v4146
        %v5242 = vunpack.c.l.b16 %v4147
        %v5243 = vunpack.c.h.b16 %v4147
        %v5244 = vunpack.c.l.b16 %v4148
        %v5245 = vunpack.c.h.b16 %v4148
        %v5246 = vunpack.c.l.b16 %v4149
        %v5247 = vunpack.c.h.b16 %v4149
        %v5248 = vunpack.c.l.b16 %v4150
        %v5249 = vunpack.c.h.b16 %v4150
        %v5250 = vunpack.c.l.b16 %v4151
        %v5251 = vunpack.c.h.b16 %v4151
        %v5252 = vunpack.c.l.b16 %v4152
        %v5253 = vunpack.c.h.b16 %v4152
        %v5254 = vunpack.c.l.b16 %v4153
        %v5255 = vunpack.c.h.b16 %v4153
        %v5256 = vunpack.c.l.b16 %v4154
        %v5257 = vunpack.c.h.b16 %v4154
        %v5258 = vunpack.c.l.b16 %v4155
        %v5259 = vunpack.c.h.b16 %v4155
        %v5260 = vunpack.c.l.b16 %v4156
        %v5261 = vunpack.c.h.b16 %v4156
        %v5262 = vunpack.c.l.b16 %v4157
        %v5263 = vunpack.c.h.b16 %v4157
        %v5264 = vunpack.c.l.b16 %v4158
        %v5265 = vunpack.c.h.b16 %v4158
        %v5266 = vunpack.c.l.b16 %v4159
        %v5267 = vunpack.c.h.b16 %v4159
        %v5268 = vunpack.c.l.b16 %v4160
        %v5269 = vunpack.c.h.b16 %v4160
        %v5270 = vunpack.c.l.b16 %v4161
        %v5271 = vunpack.c.h.b16 %v4161
        %v5272 = vunpack.c.l.b16 %v4162
        %v5273 = vunpack.c.h.b16 %v4162
        %v5274 = vunpack.c.l.b16 %v4163
        %v5275 = vunpack.c.h.b16 %v4163
        %v5276 = vunpack.c.l.b16 %v4164
        %v5277 = vunpack.c.h.b16 %v4164
        %v5278 = vunpack.c.l.b16 %v4165
        %v5279 = vunpack.c.h.b16 %v4165
        %v5280 = vunpack.c.l.b16 %v4166
        %v5281 = vunpack.c.h.b16 %v4166
        %v5282 = vunpack.c.l.b16 %v4167
        %v5283 = vunpack.c.h.b16 %v4167
        %v5284 = vunpack.c.l.b16 %v4168
        %v5285 = vunpack.c.h.b16 %v4168
        %v5286 = vunpack.c.l.b16 %v4169
        %v5287 = vunpack.c.h.b16 %v4169
        %v5288 = vunpack.c.l.b16 %v4170
        %v5289 = vunpack.c.h.b16 %v4170
        %v5290 = vunpack.c.l.b16 %v4171
        %v5291 = vunpack.c.h.b16 %v4171
        %v5292 = vunpack.c.l.b16 %v4172
        %v5293 = vunpack.c.h.b16 %v4172
        %v5294 = vunpack.c.l.b16 %v4173
        %v5295 = vunpack.c.h.b16 %v4173
        %v5296 = vunpack.c.l.b16 %v4174
        %v5297 = vunpack.c.h.b16 %v4174
        %v5298 = vunpack.c.l.b16 %v4175
        %v5299 = vunpack.c.h.b16 %v4175
        %v5300 = vunpack.c.l.b16 %v4176
        %v5301 = vunpack.c.h.b16 %v4176
        %v5302 = vunpack.c.l.b16 %v4177
        %v5303 = vunpack.c.h.b16 %v4177
        %v5304 = vunpack.c.l.b16 %v4178
        %v5305 = vunpack.c.h.b16 %v4178
        %v5306 = vunpack.c.l.b16 %v4179
        %v5307 = vunpack.c.h.b16 %v4179
        %v5308 = vunpack.c.l.b16 %v4180
        %v5309 = vunpack.c.h.b16 %v4180
        %v5310 = vunpack.c.l.b16 %v4181
        %v5311 = vunpack.c.h.b16 %v4181
        %v5312 = vunpack.c.l.b16 %v4182
        %v5313 = vunpack.c.h.b16 %v4182
        %v5314 = vunpack.c.l.b16 %v4183
        %v5315 = vunpack.c.h.b16 %v4183
        %v5316 = vunpack.c.l.b16 %v4184
        %v5317 = vunpack.c.h.b16 %v4184
        %v5318 = vunpack.c.l.b16 %v4185
        %v5319 = vunpack.c.h.b16 %v4185
        %v5320 = vunpack.c.l.b16 %v4186
        %v5321 = vunpack.c.h.b16 %v4186
        %v5322 = vunpack.c.l.b16 %v4187
        %v5323 = vunpack.c.h.b16 %v4187
        %v5324 = vunpack.c.l.b16 %v4188
        %v5325 = vunpack.c.h.b16 %v4188
        %v5326 = vunpack.c.l.b16 %v4189
        %v5327 = vunpack.c.h.b16 %v4189
        %v5328 = vunpack.c.l.b16 %v4190
        %v5329 = vunpack.c.h.b16 %v4190
        %v5330 = vunpack.c.l.b16 %v4191
        %v5331 = vunpack.c.h.b16 %v4191
        %v5332 = vunpack.c.l.b16 %v4192
        %v5333 = vunpack.c.h.b16 %v4192
        %v5334 = vunpack.c.l.b16 %v4193
        %v5335 = vunpack.c.h.b16 %v4193
        %v5336 = vunpack.c.l.b16 %v4194
        %v5337 = vunpack.c.h.b16 %v4194
        %v5338 = vunpack.c.l.b16 %v4195
        %v5339 = vunpack.c.h.b16 %v4195
        %v5340 = vunpack.c.l.b16 %v4196
        %v5341 = vunpack.c.h.b16 %v4196
        %v5342 = vunpack.c.l.b16 %v4197
        %v5343 = vunpack.c.h.b16 %v4197
        %v5344 = vunpack.c.l.b16 %v4198
        %v5345 = vunpack.c.h.b16 %v4198
        %v5346 = vunpack.c.l.b16 %v4199
        %v5347 = vunpack.c.h.b16 %v4199
        %v5348 = vunpack.c.l.b16 %v4200
        %v5349 = vunpack.c.h.b16 %v4200
        %v5350 = vunpack.c.l.b16 %v4201
        %v5351 = vunpack.c.h.b16 %v4201
        %v5352 = vunpack.c.l.b16 %v4202
        %v5353 = vunpack.c.h.b16 %v4202
        %v5354 = vunpack.c.l.b16 %v4203
        %v5355 = vunpack.c.h.b16 %v4203
        %v5356 = vunpack.c.l.b16 %v4204
        %v5357 = vunpack.c.h.b16 %v4204
        %v5358 = vunpack.c.l.b16 %v4205
        %v5359 = vunpack.c.h.b16 %v4205
        %v5360 = vunpack.c.l.b16 %v4206
        %v5361 = vunpack.c.h.b16 %v4206
        %v5362 = vunpack.c.l.b16 %v4207
        %v5363 = vunpack.c.h.b16 %v4207
        %v5364 = vunpack.c.l.b16 %v4208
        %v5365 = vunpack.c.h.b16 %v4208
        %v5366 = vunpack.c.l.b16 %v4209
        %v5367 = vunpack.c.h.b16 %v4209
        %v5368 = vunpack.c.l.b16 %v4210
        %v5369 = vunpack.c.h.b16 %v4210
        %v5370 = vunpack.c.l.b16 %v4211
        %v5371 = vunpack.c.h.b16 %v4211
        %v5372 = vunpack.c.l.b16 %v4212
        %v5373 = vunpack.c.h.b16 %v4212
        %v5374 = vunpack.c.l.b16 %v4213
        %v5375 = vunpack.c.h.b16 %v4213
        %v5376 = vunpack.c.l.b16 %v4214
        %v5377 = vunpack.c.h.b16 %v4214
        %v5378 = vunpack.c.l.b16 %v4215
        %v5379 = vunpack.c.h.b16 %v4215
        %v5380 = vunpack.c.l.b16 %v4216
        %v5381 = vunpack.c.h.b16 %v4216
        %v5382 = vunpack.c.l.b16 %v4217
        %v5383 = vunpack.c.h.b16 %v4217
        %v5384 = vunpack.c.l.b16 %v4218
        %v5385 = vunpack.c.h.b16 %v4218
        %v5386 = vunpack.c.l.b16 %v4219
        %v5387 = vunpack.c.h.b16 %v4219
        %v5388 = vunpack.c.l.b16 %v4220
        %v5389 = vunpack.c.h.b16 %v4220
        %v5390 = vunpack.c.l.b16 %v4221
        %v5391 = vunpack.c.h.b16 %v4221
        %v5392 = vunpack.c.l.b16 %v4222
        %v5393 = vunpack.c.h.b16 %v4222
        %v5394 = vunpack.c.l.b16 %v4223
        %v5395 = vunpack.c.h.b16 %v4223
        %v5396 = vunpack.c.l.b16 %v4224
        %v5397 = vunpack.c.h.b16 %v4224
        %v5398 = vunpack.c.l.b16 %v4225
        %v5399 = vunpack.c.h.b16 %v4225
        %v5400 = vunpack.c.l.b16 %v4226
        %v5401 = vunpack.c.h.b16 %v4226
        %v5402 = vunpack.c.l.b16 %v4227
        %v5403 = vunpack.c.h.b16 %v4227
        %v5404 = vunpack.c.l.b16 %v4228
        %v5405 = vunpack.c.h.b16 %v4228
        %v5406 = vunpack.c.l.b16 %v4229
        %v5407 = vunpack.c.h.b16 %v4229
        %v5408 = vunpack.c.l.b16 %v4230
        %v5409 = vunpack.c.h.b16 %v4230
        %v5410 = vunpack.c.l.b16 %v4231
        %v5411 = vunpack.c.h.b16 %v4231
        %v5412 = vunpack.c.l.b16 %v4232
        %v5413 = vunpack.c.h.b16 %v4232
        %v5414 = vunpack.c.l.b16 %v4233
        %v5415 = vunpack.c.h.b16 %v4233
        %v5416 = vunpack.c.l.b16 %v4234
        %v5417 = vunpack.c.h.b16 %v4234
        %v5418 = vunpack.c.l.b16 %v4235
        %v5419 = vunpack.c.h.b16 %v4235
        %v5420 = vunpack.c.l.b16 %v4236
        %v5421 = vunpack.c.h.b16 %v4236
        %v5422 = vunpack.c.l.b16 %v4237
        %v5423 = vunpack.c.h.b16 %v4237
        %v5424 = vunpack.c.l.b16 %v4238
        %v5425 = vunpack.c.h.b16 %v4238
        %v5426 = vunpack.c.l.b16 %v4239
        %v5427 = vunpack.c.h.b16 %v4239
        %v5428 = vunpack.c.l.b16 %v4240
        %v5429 = vunpack.c.h.b16 %v4240
        %v5430 = vunpack.c.l.b16 %v4241
        %v5431 = vunpack.c.h.b16 %v4241
        %v5432 = vunpack.c.l.b16 %v4242
        %v5433 = vunpack.c.h.b16 %v4242
        %v5434 = vunpack.c.l.b16 %v4243
        %v5435 = vunpack.c.h.b16 %v4243
        %v5436 = vunpack.c.l.b16 %v4244
        %v5437 = vunpack.c.h.b16 %v4244
        %v5438 = vunpack.c.l.b16 %v4245
        %v5439 = vunpack.c.h.b16 %v4245
        %v5440 = vunpack.c.l.b16 %v4246
        %v5441 = vunpack.c.h.b16 %v4246
        %v5442 = vunpack.c.l.b16 %v4247
        %v5443 = vunpack.c.h.b16 %v4247
        %v5444 = vunpack.c.l.b16 %v4248
        %v5445 = vunpack.c.h.b16 %v4248
        %v5446 = vunpack.c.l.b16 %v4249
        %v5447 = vunpack.c.h.b16 %v4249
        %v5448 = vunpack.c.l.b16 %v4250
        %v5449 = vunpack.c.h.b16 %v4250
        %v5450 = vunpack.c.l.b16 %v4251
        %v5451 = vunpack.c.h.b16 %v4251
        %v5452 = vunpack.c.l.b16 %v4252
        %v5453 = vunpack.c.h.b16 %v4252
        %v5454 = vunpack.c.l.b16 %v4253
        %v5455 = vunpack.c.h.b16 %v4253
        %v5456 = vunpack.c.l.b16 %v4254
        %v5457 = vunpack.c.h.b16 %v4254
        %v5458 = vunpack.c.l.b16 %v4255
        %v5459 = vunpack.c.h.b16 %v4255
        %v5460 = vunpack.c.l.b16 %v4256
        %v5461 = vunpack.c.h.b16 %v4256
        %v5462 = vunpack.c.l.b16 %v4257
        %v5463 = vunpack.c.h.b16 %v4257
        %v5464 = vunpack.c.l.b16 %v4258
        %v5465 = vunpack.c.h.b16 %v4258
        %v5466 = vunpack.c.l.b16 %v4259
        %v5467 = vunpack.c.h.b16 %v4259
        %v5468 = vunpack.c.l.b16 %v4260
        %v5469 = vunpack.c.h.b16 %v4260
        %v5470 = vunpack.c.l.b16 %v4261
        %v5471 = vunpack.c.h.b16 %v4261
        %v5472 = vunpack.c.l.b16 %v4262
        %v5473 = vunpack.c.h.b16 %v4262
        %v5474 = vunpack.c.l.b16 %v4263
        %v5475 = vunpack.c.h.b16 %v4263
        %v5476 = vunpack.c.l.b16 %v4264
        %v5477 = vunpack.c.h.b16 %v4264
        %v5478 = vunpack.c.l.b16 %v4265
        %v5479 = vunpack.c.h.b16 %v4265
        %v5480 = vunpack.c.l.b16 %v4266
        %v5481 = vunpack.c.h.b16 %v4266
        %v5482 = vunpack.c.l.b16 %v4267
        %v5483 = vunpack.c.h.b16 %v4267
        %v5484 = vunpack.c.l.b16 %v4268
        %v5485 = vunpack.c.h.b16 %v4268
        %v5486 = vunpack.c.l.b16 %v4269
        %v5487 = vunpack.c.h.b16 %v4269
        %v5488 = vunpack.c.l.b16 %v4270
        %v5489 = vunpack.c.h.b16 %v4270
        %v5490 = vunpack.c.l.b16 %v4271
        %v5491 = vunpack.c.h.b16 %v4271
        %v5492 = vunpack.c.l.b16 %v4272
        %v5493 = vunpack.c.h.b16 %v4272
        %v5494 = vunpack.c.l.b16 %v4273
        %v5495 = vunpack.c.h.b16 %v4273
        %v5496 = vunpack.c.l.b16 %v4274
        %v5497 = vunpack.c.h.b16 %v4274
        %v5498 = vunpack.c.l.b16 %v4275
        %v5499 = vunpack.c.h.b16 %v4275
        %v5500 = vunpack.c.l.b16 %v4276
        %v5501 = vunpack.c.h.b16 %v4276
        %v5502 = vunpack.c.l.b16 %v4277
        %v5503 = vunpack.c.h.b16 %v4277
        %v5504 = vunpack.c.l.b16 %v4278
        %v5505 = vunpack.c.h.b16 %v4278
        %v5506 = vunpack.c.l.b16 %v4279
        %v5507 = vunpack.c.h.b16 %v4279
        %v5508 = vunpack.c.l.b16 %v4280
        %v5509 = vunpack.c.h.b16 %v4280
        %v5510 = vunpack.c.l.b16 %v4281
        %v5511 = vunpack.c.h.b16 %v4281
        %v5512 = vunpack.c.l.b16 %v4282
        %v5513 = vunpack.c.h.b16 %v4282
        %v5514 = vunpack.c.l.b16 %v4283
        %v5515 = vunpack.c.h.b16 %v4283
        %v5516 = vunpack.c.l.b16 %v4284
        %v5517 = vunpack.c.h.b16 %v4284
        %v5518 = vunpack.c.l.b16 %v4285
        %v5519 = vunpack.c.h.b16 %v4285
        %v5520 = vunpack.c.l.b16 %v4286
        %v5521 = vunpack.c.h.b16 %v4286
        %v5522 = vunpack.c.l.b16 %v4287
        %v5523 = vunpack.c.h.b16 %v4287
        %v5524 = vunpack.c.l.b16 %v4288
        %v5525 = vunpack.c.h.b16 %v4288
        %v5526 = vunpack.c.l.b16 %v4289
        %v5527 = vunpack.c.h.b16 %v4289
        %v5528 = vunpack.c.l.b16 %v4290
        %v5529 = vunpack.c.h.b16 %v4290
        %v5530 = vunpack.c.l.b16 %v4291
        %v5531 = vunpack.c.h.b16 %v4291
        %v5532 = vunpack.c.l.b16 %v4292
        %v5533 = vunpack.c.h.b16 %v4292
        %v5534 = vunpack.c.l.b16 %v4293
        %v5535 = vunpack.c.h.b16 %v4293
        %v5536 = vunpack.c.l.b16 %v4294
        %v5537 = vunpack.c.h.b16 %v4294
        %v5538 = vunpack.c.l.b16 %v4295
        %v5539 = vunpack.c.h.b16 %v4295
        %v5540 = vunpack.c.l.b16 %v4296
        %v5541 = vunpack.c.h.b16 %v4296
        %v5542 = vunpack.c.l.b16 %v4297
        %v5543 = vunpack.c.h.b16 %v4297
        %v5544 = vunpack.c.l.b16 %v4298
        %v5545 = vunpack.c.h.b16 %v4298
        %v5546 = vunpack.c.l.b16 %v4299
        %v5547 = vunpack.c.h.b16 %v4299
        %v5548 = vunpack.c.l.b16 %v4300
        %v5549 = vunpack.c.h.b16 %v4300
        %v5550 = vunpack.c.l.b16 %v4301
        %v5551 = vunpack.c.h.b16 %v4301
        %v5552 = vunpack.c.l.b16 %v4302
        %v5553 = vunpack.c.h.b16 %v4302
        %v5554 = vunpack.c.l.b16 %v4303
        %v5555 = vunpack.c.h.b16 %v4303
        %v5556 = vunpack.c.l.b16 %v4304
        %v5557 = vunpack.c.h.b16 %v4304
        %v5558 = vunpack.c.l.b16 %v4305
        %v5559 = vunpack.c.h.b16 %v4305
        %v5560 = vunpack.c.l.b16 %v4306
        %v5561 = vunpack.c.h.b16 %v4306
        %v5562 = vunpack.c.l.b16 %v4307
        %v5563 = vunpack.c.h.b16 %v4307
        %v5564 = vunpack.c.l.b16 %v4308
        %v5565 = vunpack.c.h.b16 %v4308
        %v5566 = vunpack.c.l.b16 %v4309
        %v5567 = vunpack.c.h.b16 %v4309
        %v5568 = vunpack.c.l.b16 %v4310
        %v5569 = vunpack.c.h.b16 %v4310
        %v5570 = vunpack.c.l.b16 %v4311
        %v5571 = vunpack.c.h.b16 %v4311
        %v5572 = vunpack.c.l.b16 %v4312
        %v5573 = vunpack.c.h.b16 %v4312
        %v5574 = vunpack.c.l.b16 %v4313
        %v5575 = vunpack.c.h.b16 %v4313
        %v5576 = vunpack.c.l.b16 %v4314
        %v5577 = vunpack.c.h.b16 %v4314
        %v5578 = vunpack.c.l.b16 %v4315
        %v5579 = vunpack.c.h.b16 %v4315
        %v5580 = vunpack.c.l.b16 %v4316
        %v5581 = vunpack.c.h.b16 %v4316
        %v5582 = vunpack.c.l.b16 %v4317
        %v5583 = vunpack.c.h.b16 %v4317
        %v5584 = vunpack.c.l.b16 %v4318
        %v5585 = vunpack.c.h.b16 %v4318
        %v5586 = vunpack.c.l.b16 %v4319
        %v5587 = vunpack.c.h.b16 %v4319
        %v5588 = vunpack.c.l.b16 %v4320
        %v5589 = vunpack.c.h.b16 %v4320
        %v5590 = vunpack.c.l.b16 %v4321
        %v5591 = vunpack.c.h.b16 %v4321
        %v5592 = vunpack.c.l.b16 %v4322
        %v5593 = vunpack.c.h.b16 %v4322
        %v5594 = vunpack.c.l.b16 %v4323
        %v5595 = vunpack.c.h.b16 %v4323
        %v5596 = vunpack.c.l.b16 %v4324
        %v5597 = vunpack.c.h.b16 %v4324
        %v5598 = vunpack.c.l.b16 %v4325
        %v5599 = vunpack.c.h.b16 %v4325
        %v5600 = vunpack.c.l.b16 %v4326
        %v5601 = vunpack.c.h.b16 %v4326
        %v5602 = vunpack.c.l.b16 %v4327
        %v5603 = vunpack.c.h.b16 %v4327
        %v5604 = vunpack.c.l.b16 %v4328
        %v5605 = vunpack.c.h.b16 %v4328
        %v5606 = vunpack.c.l.b16 %v4329
        %v5607 = vunpack.c.h.b16 %v4329
        %v5608 = vunpack.c.l.b16 %v4330
        %v5609 = vunpack.c.h.b16 %v4330
        %v5610 = vunpack.c.l.b16 %v4331
        %v5611 = vunpack.c.h.b16 %v4331
        %v5612 = vunpack.c.l.b16 %v4332
        %v5613 = vunpack.c.h.b16 %v4332
        %v5614 = vunpack.c.l.b16 %v4333
        %v5615 = vunpack.c.h.b16 %v4333
        %v5616 = vunpack.c.l.b16 %v4334
        %v5617 = vunpack.c.h.b16 %v4334
        %v5618 = vunpack.c.l.b16 %v4335
        %v5619 = vunpack.c.h.b16 %v4335
        %v5620 = vunpack.c.l.b16 %v4336
        %v5621 = vunpack.c.h.b16 %v4336
        %v5622 = vunpack.c.l.b16 %v4337
        %v5623 = vunpack.c.h.b16 %v4337
        %v5624 = vunpack.c.l.b16 %v4338
        %v5625 = vunpack.c.h.b16 %v4338
        %v5626 = vunpack.c.l.b16 %v4339
        %v5627 = vunpack.c.h.b16 %v4339
        %v5628 = vunpack.c.l.b16 %v4340
        %v5629 = vunpack.c.h.b16 %v4340
        %v5630 = vunpack.c.l.b16 %v4341
        %v5631 = vunpack.c.h.b16 %v4341
        %v5632 = vunpack.c.l.b16 %v4342
        %v5633 = vunpack.c.h.b16 %v4342
        %v5634 = vunpack.c.l.b16 %v4343
        %v5635 = vunpack.c.h.b16 %v4343
        %v5636 = vunpack.c.l.b16 %v4344
        %v5637 = vunpack.c.h.b16 %v4344
        %v5638 = vunpack.c.l.b16 %v4345
        %v5639 = vunpack.c.h.b16 %v4345
        %v5640 = vunpack.c.l.b16 %v4346
        %v5641 = vunpack.c.h.b16 %v4346
        %v5642 = vunpack.c.l.b16 %v4347
        %v5643 = vunpack.c.h.b16 %v4347
        %v5644 = vunpack.c.l.b16 %v4348
        %v5645 = vunpack.c.h.b16 %v4348
        %v5646 = vunpack.c.l.b16 %v4349
        %v5647 = vunpack.c.h.b16 %v4349
        %v5648 = vunpack.c.l.b16 %v4350
        %v5649 = vunpack.c.h.b16 %v4350
        %v5650 = vunpack.c.l.b16 %v4351
        %v5651 = vunpack.c.h.b16 %v4351
        %v5652 = vunpack.c.l.b16 %v4352
        %v5653 = vunpack.c.h.b16 %v4352
        %v5654 = vunpack.c.l.b16 %v4353
        %v5655 = vunpack.c.h.b16 %v4353
        %v5656 = vunpack.c.l.b16 %v4354
        %v5657 = vunpack.c.h.b16 %v4354
        %v5658 = vunpack.c.l.b16 %v4355
        %v5659 = vunpack.c.h.b16 %v4355
        %v5660 = vunpack.c.l.b16 %v4356
        %v5661 = vunpack.c.h.b16 %v4356
        %v5662 = vunpack.c.l.b16 %v4357
        %v5663 = vunpack.c.h.b16 %v4357
        %v5664 = vunpack.c.l.b16 %v4358
        %v5665 = vunpack.c.h.b16 %v4358
        %v5666 = vunpack.c.l.b16 %v4359
        %v5667 = vunpack.c.h.b16 %v4359
        %v5668 = vunpack.c.l.b16 %v4360
        %v5669 = vunpack.c.h.b16 %v4360
        %v5670 = vunpack.c.l.b16 %v4361
        %v5671 = vunpack.c.h.b16 %v4361
        %v5672 = vunpack.c.l.b16 %v4362
        %v5673 = vunpack.c.h.b16 %v4362
        %v5674 = vunpack.c.l.b16 %v4363
        %v5675 = vunpack.c.h.b16 %v4363
        %v5676 = vunpack.c.l.b16 %v4364
        %v5677 = vunpack.c.h.b16 %v4364
        %v5678 = vunpack.c.l.b16 %v4365
        %v5679 = vunpack.c.h.b16 %v4365
        %v5680 = vunpack.c.l.b16 %v4366
        %v5681 = vunpack.c.h.b16 %v4366
        %v5682 = vunpack.c.l.b16 %v4367
        %v5683 = vunpack.c.h.b16 %v4367
        %v5684 = vunpack.c.l.b16 %v4368
        %v5685 = vunpack.c.h.b16 %v4368
        %v5686 = vunpack.c.l.b16 %v4369
        %v5687 = vunpack.c.h.b16 %v4369
        %v5688 = vunpack.c.l.b16 %v4370
        %v5689 = vunpack.c.h.b16 %v4370
        %v5690 = vunpack.c.l.b16 %v4371
        %v5691 = vunpack.c.h.b16 %v4371
        %v5692 = vunpack.c.l.b16 %v4372
        %v5693 = vunpack.c.h.b16 %v4372
        %v5694 = vunpack.c.l.b16 %v4373
        %v5695 = vunpack.c.h.b16 %v4373
        %v5696 = vunpack.c.l.b16 %v4374
        %v5697 = vunpack.c.h.b16 %v4374
        %v5698 = vunpack.c.l.b16 %v4375
        %v5699 = vunpack.c.h.b16 %v4375
        %v5700 = vunpack.c.l.b16 %v4376
        %v5701 = vunpack.c.h.b16 %v4376
        %v5702 = vunpack.c.l.b16 %v4377
        %v5703 = vunpack.c.h.b16 %v4377
        %v5704 = vunpack.c.l.b16 %v4378
        %v5705 = vunpack.c.h.b16 %v4378
        %v5706 = vunpack.c.l.b16 %v4379
        %v5707 = vunpack.c.h.b16 %v4379
        %v5708 = vunpack.c.l.b16 %v4380
        %v5709 = vunpack.c.h.b16 %v4380
        %v5710 = vunpack.c.l.b16 %v4381
        %v5711 = vunpack.c.h.b16 %v4381
        %v5712 = vunpack.c.l.b16 %v4382
        %v5713 = vunpack.c.h.b16 %v4382
        %v5714 = vunpack.c.l.b16 %v4383
        %v5715 = vunpack.c.h.b16 %v4383
        %v5716 = vunpack.c.l.b16 %v4384
        %v5717 = vunpack.c.h.b16 %v4384
        %v5718 = vunpack.c.l.b16 %v4385
        %v5719 = vunpack.c.h.b16 %v4385
        %v5720 = vunpack.c.l.b16 %v4386
        %v5721 = vunpack.c.h.b16 %v4386
        %v5722 = vunpack.c.l.b16 %v4387
        %v5723 = vunpack.c.h.b16 %v4387
        %v5724 = vunpack.c.l.b16 %v4388
        %v5725 = vunpack.c.h.b16 %v4388
        %v5726 = vunpack.c.l.b16 %v4389
        %v5727 = vunpack.c.h.b16 %v4389
        %v5728 = vunpack.c.l.b16 %v4390
        %v5729 = vunpack.c.h.b16 %v4390
        %v5730 = vunpack.c.l.b16 %v4391
        %v5731 = vunpack.c.h.b16 %v4391
        %v5732 = vunpack.c.l.b16 %v4392
        %v5733 = vunpack.c.h.b16 %v4392
        %v5734 = vunpack.c.l.b16 %v4393
        %v5735 = vunpack.c.h.b16 %v4393
        %v5736 = vunpack.c.l.b16 %v4394
        %v5737 = vunpack.c.h.b16 %v4394
        %v5738 = vunpack.c.l.b16 %v4395
        %v5739 = vunpack.c.h.b16 %v4395
        %v5740 = vunpack.c.l.b16 %v4396
        %v5741 = vunpack.c.h.b16 %v4396
        %v5742 = vunpack.c.l.b16 %v4397
        %v5743 = vunpack.c.h.b16 %v4397
        %v5744 = vunpack.c.l.b16 %v4398
        %v5745 = vunpack.c.h.b16 %v4398
        %v5746 = vunpack.c.l.b16 %v4399
        %v5747 = vunpack.c.h.b16 %v4399
        %v5748 = vunpack.c.l.b16 %v4400
        %v5749 = vunpack.c.h.b16 %v4400
        %v5750 = vunpack.c.l.b16 %v4401
        %v5751 = vunpack.c.h.b16 %v4401
        %v5752 = vunpack.c.l.b16 %v4402
        %v5753 = vunpack.c.h.b16 %v4402
        %v5754 = vunpack.c.l.b16 %v4403
        %v5755 = vunpack.c.h.b16 %v4403
        %v5756 = vunpack.c.l.b16 %v4404
        %v5757 = vunpack.c.h.b16 %v4404
        %v5758 = vunpack.c.l.b16 %v4405
        %v5759 = vunpack.c.h.b16 %v4405
        %v5760 = vunpack.c.l.b16 %v4406
        %v5761 = vunpack.c.h.b16 %v4406
        %v5762 = vunpack.c.l.b16 %v4407
        %v5763 = vunpack.c.h.b16 %v4407
        %v5764 = vunpack.c.l.b16 %v4408
        %v5765 = vunpack.c.h.b16 %v4408
        %v5766 = vunpack.c.l.b16 %v4409
        %v5767 = vunpack.c.h.b16 %v4409
        %v5768 = vunpack.c.l.b16 %v4410
        %v5769 = vunpack.c.h.b16 %v4410
        %v5770 = vunpack.c.l.b16 %v4411
        %v5771 = vunpack.c.h.b16 %v4411
        %v5772 = vunpack.c.l.b16 %v4412
        %v5773 = vunpack.c.h.b16 %v4412
        %v5774 = vunpack.c.l.b16 %v4413
        %v5775 = vunpack.c.h.b16 %v4413
        %v5776 = vunpack.c.l.b16 %v4414
        %v5777 = vunpack.c.h.b16 %v4414
        %v5778 = vunpack.c.l.b16 %v4415
        %v5779 = vunpack.c.h.b16 %v4415
        %v5780 = vunpack.c.l.b16 %v4416
        %v5781 = vunpack.c.h.b16 %v4416
        %v5782 = vunpack.c.l.b16 %v4417
        %v5783 = vunpack.c.h.b16 %v4417
        %v5784 = vunpack.c.l.b16 %v4418
        %v5785 = vunpack.c.h.b16 %v4418
        %v5786 = vunpack.c.l.b16 %v4419
        %v5787 = vunpack.c.h.b16 %v4419
        %v5788 = vunpack.c.l.b16 %v4420
        %v5789 = vunpack.c.h.b16 %v4420
        %v5790 = vunpack.c.l.b16 %v4421
        %v5791 = vunpack.c.h.b16 %v4421
        %v5792 = vunpack.c.l.b16 %v4422
        %v5793 = vunpack.c.h.b16 %v4422
        %v5794 = vunpack.c.l.b16 %v4423
        %v5795 = vunpack.c.h.b16 %v4423
        %v5796 = vunpack.c.l.b16 %v4424
        %v5797 = vunpack.c.h.b16 %v4424
        %v5798 = vunpack.c.l.b16 %v4425
        %v5799 = vunpack.c.h.b16 %v4425
        %v5800 = vunpack.c.l.b16 %v4426
        %v5801 = vunpack.c.h.b16 %v4426
        %v5802 = vunpack.c.l.b16 %v4427
        %v5803 = vunpack.c.h.b16 %v4427
        %v5804 = vunpack.c.l.b16 %v4428
        %v5805 = vunpack.c.h.b16 %v4428
        %v5806 = vunpack.c.l.b16 %v4429
        %v5807 = vunpack.c.h.b16 %v4429
        %v5808 = vunpack.c.l.b16 %v4430
        %v5809 = vunpack.c.h.b16 %v4430
        %v5810 = vunpack.c.l.b16 %v4431
        %v5811 = vunpack.c.h.b16 %v4431
        %v5812 = vunpack.c.l.b16 %v4432
        %v5813 = vunpack.c.h.b16 %v4432
        %v5814 = vunpack.c.l.b16 %v4433
        %v5815 = vunpack.c.h.b16 %v4433
        %v5816 = vunpack.c.l.b16 %v4434
        %v5817 = vunpack.c.h.b16 %v4434
        %v5818 = vunpack.c.l.b16 %v4435
        %v5819 = vunpack.c.h.b16 %v4435
        %v5820 = vunpack.c.l.b16 %v4436
        %v5821 = vunpack.c.h.b16 %v4436
        %v5822 = vunpack.c.l.b16 %v4437
        %v5823 = vunpack.c.h.b16 %v4437
        %v5824 = vunpack.c.l.b16 %v4438
        %v5825 = vunpack.c.h.b16 %v4438
        %v5826 = vunpack.c.l.b16 %v4439
        %v5827 = vunpack.c.h.b16 %v4439
        %v5828 = vunpack.c.l.b16 %v4440
        %v5829 = vunpack.c.h.b16 %v4440
        %v5830 = vunpack.c.l.b16 %v4441
        %v5831 = vunpack.c.h.b16 %v4441
        %v5832 = vunpack.c.l.b16 %v4442
        %v5833 = vunpack.c.h.b16 %v4442
        %v5834 = vunpack.c.l.b16 %v4443
        %v5835 = vunpack.c.h.b16 %v4443
        %v5836 = vunpack.c.l.b16 %v4444
        %v5837 = vunpack.c.h.b16 %v4444
        %v5838 = vunpack.c.l.b16 %v4445
        %v5839 = vunpack.c.h.b16 %v4445
        %v5840 = vunpack.c.l.b16 %v4446
        %v5841 = vunpack.c.h.b16 %v4446
        %v5842 = vunpack.c.l.b16 %v4447
        %v5843 = vunpack.c.h.b16 %v4447
        %v5844 = vunpack.c.l.b16 %v4448
        %v5845 = vunpack.c.h.b16 %v4448
        %v5846 = vunpack.c.l.b16 %v4449
        %v5847 = vunpack.c.h.b16 %v4449
        %v5848 = vunpack.c.l.b16 %v4450
        %v5849 = vunpack.c.h.b16 %v4450
        %v5850 = vunpack.c.l.b16 %v4451
        %v5851 = vunpack.c.h.b16 %v4451
        %v5852 = vunpack.c.l.b16 %v4452
        %v5853 = vunpack.c.h.b16 %v4452
        %v5854 = vunpack.c.l.b16 %v4453
        %v5855 = vunpack.c.h.b16 %v4453
        %v5856 = vunpack.c.l.b16 %v4454
        %v5857 = vunpack.c.h.b16 %v4454
        %v5858 = vunpack.c.l.b16 %v4455
        %v5859 = vunpack.c.h.b16 %v4455
        %v5860 = vunpack.c.l.b16 %v4456
        %v5861 = vunpack.c.h.b16 %v4456
        %v5862 = vunpack.c.l.b16 %v4457
        %v5863 = vunpack.c.h.b16 %v4457
        %v5864 = vunpack.c.l.b16 %v4458
        %v5865 = vunpack.c.h.b16 %v4458
        %v5866 = vunpack.c.l.b16 %v4459
        %v5867 = vunpack.c.h.b16 %v4459
        %v5868 = vunpack.c.l.b16 %v4460
        %v5869 = vunpack.c.h.b16 %v4460
        %v5870 = vunpack.c.l.b16 %v4461
        %v5871 = vunpack.c.h.b16 %v4461
        %v5872 = vunpack.c.l.b16 %v4462
        %v5873 = vunpack.c.h.b16 %v4462
        %v5874 = vunpack.c.l.b16 %v4463
        %v5875 = vunpack.c.h.b16 %v4463
        %v5876 = vunpack.c.l.b16 %v4464
        %v5877 = vunpack.c.h.b16 %v4464
        %v5878 = vunpack.c.l.b16 %v4465
        %v5879 = vunpack.c.h.b16 %v4465
        %v5880 = vunpack.c.l.b16 %v4466
        %v5881 = vunpack.c.h.b16 %v4466
        %v5882 = vunpack.c.l.b16 %v4467
        %v5883 = vunpack.c.h.b16 %v4467
        %v5884 = vunpack.c.l.b16 %v4468
        %v5885 = vunpack.c.h.b16 %v4468
        %v5886 = vunpack.c.l.b16 %v4469
        %v5887 = vunpack.c.h.b16 %v4469
        %v5888 = vunpack.c.l.b16 %v4470
        %v5889 = vunpack.c.h.b16 %v4470
        %v5890 = vunpack.c.l.b16 %v4471
        %v5891 = vunpack.c.h.b16 %v4471
        %v5892 = vunpack.c.l.b16 %v4472
        %v5893 = vunpack.c.h.b16 %v4472
        %v5894 = vunpack.c.l.b16 %v4473
        %v5895 = vunpack.c.h.b16 %v4473
        %v5896 = vunpack.c.l.b16 %v4474
        %v5897 = vunpack.c.h.b16 %v4474
        %v5898 = vunpack.c.l.b16 %v4475
        %v5899 = vunpack.c.h.b16 %v4475
        %v5900 = vunpack.c.l.b16 %v4476
        %v5901 = vunpack.c.h.b16 %v4476
        %v5902 = vunpack.c.l.b16 %v4477
        %v5903 = vunpack.c.h.b16 %v4477
        %v5904 = vunpack.c.l.b16 %v4478
        %v5905 = vunpack.c.h.b16 %v4478
        %v5906 = vunpack.c.l.b16 %v4479
        %v5907 = vunpack.c.h.b16 %v4479
        %v5908 = vunpack.c.l.b16 %v4480
        %v5909 = vunpack.c.h.b16 %v4480
        %v5910 = vunpack.c.l.b16 %v4481
        %v5911 = vunpack.c.h.b16 %v4481
        %v5912 = vunpack.c.l.b16 %v4482
        %v5913 = vunpack.c.h.b16 %v4482
        %v5914 = vunpack.c.l.b16 %v4483
        %v5915 = vunpack.c.h.b16 %v4483
        %v5916 = vunpack.c.l.b16 %v4484
        %v5917 = vunpack.c.h.b16 %v4484
        %v5918 = vunpack.c.l.b16 %v4485
        %v5919 = vunpack.c.h.b16 %v4485
        %v5920 = vunpack.c.l.b16 %v4486
        %v5921 = vunpack.c.h.b16 %v4486
        %v5922 = vunpack.c.l.b16 %v4487
        %v5923 = vunpack.c.h.b16 %v4487
        %v5924 = vunpack.c.l.b16 %v4488
        %v5925 = vunpack.c.h.b16 %v4488
        %v5926 = vunpack.c.l.b16 %v4489
        %v5927 = vunpack.c.h.b16 %v4489
        %v5928 = vunpack.c.l.b16 %v4490
        %v5929 = vunpack.c.h.b16 %v4490
        %v5930 = vunpack.c.l.b16 %v4491
        %v5931 = vunpack.c.h.b16 %v4491
        %v5932 = vunpack.c.l.b16 %v4492
        %v5933 = vunpack.c.h.b16 %v4492
        %v5934 = vunpack.c.l.b16 %v4493
        %v5935 = vunpack.c.h.b16 %v4493
        %v5936 = vunpack.c.l.b16 %v4494
        %v5937 = vunpack.c.h.b16 %v4494
        %v5938 = vunpack.c.l.b16 %v4495
        %v5939 = vunpack.c.h.b16 %v4495
        %v5940 = vunpack.c.l.b16 %v4496
        %v5941 = vunpack.c.h.b16 %v4496
        %v5942 = vunpack.c.l.b16 %v4497
        %v5943 = vunpack.c.h.b16 %v4497
        %v5944 = vunpack.c.l.b16 %v4498
        %v5945 = vunpack.c.h.b16 %v4498
        %v5946 = vunpack.c.l.b16 %v4499
        %v5947 = vunpack.c.h.b16 %v4499
        %v5948 = vunpack.c.l.b16 %v4500
        %v5949 = vunpack.c.h.b16 %v4500
        %v5950 = vunpack.c.l.b16 %v4501
        %v5951 = vunpack.c.h.b16 %v4501
        %v5952 = vunpack.c.l.b16 %v4502
        %v5953 = vunpack.c.h.b16 %v4502
        %v5954 = vunpack.c.l.b16 %v4503
        %v5955 = vunpack.c.h.b16 %v4503
        %v5956 = vunpack.c.l.b16 %v4504
        %v5957 = vunpack.c.h.b16 %v4504
        %v5958 = vunpack.c.l.b16 %v4505
        %v5959 = vunpack.c.h.b16 %v4505
        %v5960 = vunpack.c.l.b16 %v4506
        %v5961 = vunpack.c.h.b16 %v4506
        %v5962 = vunpack.c.l.b16 %v4507
        %v5963 = vunpack.c.h.b16 %v4507
        %v5964 = vunpack.c.l.b16 %v4508
        %v5965 = vunpack.c.h.b16 %v4508
        %v5966 = vunpack.c.l.b16 %v4509
        %v5967 = vunpack.c.h.b16 %v4509
        %v5968 = vunpack.c.l.b16 %v4510
        %v5969 = vunpack.c.h.b16 %v4510
        %v5970 = vunpack.c.l.b16 %v4511
        %v5971 = vunpack.c.h.b16 %v4511
        %v5972 = vunpack.c.l.b16 %v4512
        %v5973 = vunpack.c.h.b16 %v4512
        %v5974 = vunpack.c.l.b16 %v4513
        %v5975 = vunpack.c.h.b16 %v4513
        %v5976 = vunpack.c.l.b16 %v4514
        %v5977 = vunpack.c.h.b16 %v4514
        %v5978 = vunpack.c.l.b16 %v4515
        %v5979 = vunpack.c.h.b16 %v4515
        %v5980 = vunpack.c.l.b16 %v4516
        %v5981 = vunpack.c.h.b16 %v4516
        %v5982 = vunpack.c.l.b16 %v4517
        %v5983 = vunpack.c.h.b16 %v4517
        %v5984 = vunpack.c.l.b16 %v4518
        %v5985 = vunpack.c.h.b16 %v4518
        %v5986 = vunpack.c.l.b16 %v4519
        %v5987 = vunpack.c.h.b16 %v4519
        %v5988 = vunpack.c.l.b16 %v4520
        %v5989 = vunpack.c.h.b16 %v4520
        %v5990 = vunpack.c.l.b16 %v4521
        %v5991 = vunpack.c.h.b16 %v4521
        %v5992 = vunpack.c.l.b16 %v4522
        %v5993 = vunpack.c.h.b16 %v4522
        %v5994 = vunpack.c.l.b16 %v4523
        %v5995 = vunpack.c.h.b16 %v4523
        %v5996 = vunpack.c.l.b16 %v4524
        %v5997 = vunpack.c.h.b16 %v4524
        %v5998 = vunpack.c.l.b16 %v4525
        %v5999 = vunpack.c.h.b16 %v4525
        %v6000 = vunpack.c.l.b16 %v4526
        %v6001 = vunpack.c.h.b16 %v4526
        %v6002 = vunpack.c.l.b16 %v4527
        %v6003 = vunpack.c.h.b16 %v4527
        %v6004 = vunpack.c.l.b16 %v4528
        %v6005 = vunpack.c.h.b16 %v4528
        %v6006 = vunpack.c.l.b16 %v4529
        %v6007 = vunpack.c.h.b16 %v4529
        %v6008 = vunpack.c.l.b16 %v4530
        %v6009 = vunpack.c.h.b16 %v4530
        %v6010 = vunpack.c.l.b16 %v4531
        %v6011 = vunpack.c.h.b16 %v4531
        %v6012 = vunpack.c.l.b16 %v4532
        %v6013 = vunpack.c.h.b16 %v4532
        %v6014 = vunpack.c.l.b16 %v4533
        %v6015 = vunpack.c.h.b16 %v4533
        %v6016 = vunpack.c.l.b16 %v4534
        %v6017 = vunpack.c.h.b16 %v4534
        %v6018 = vunpack.c.l.b16 %v4535
        %v6019 = vunpack.c.h.b16 %v4535
        %v6020 = vunpack.c.l.b16 %v4536
        %v6021 = vunpack.c.h.b16 %v4536
        %v6022 = vunpack.c.l.b16 %v4537
        %v6023 = vunpack.c.h.b16 %v4537
        %v6024 = vunpack.c.l.b16 %v4538
        %v6025 = vunpack.c.h.b16 %v4538
        %v6026 = vunpack.c.l.b16 %v4539
        %v6027 = vunpack.c.h.b16 %v4539
        %v6028 = vunpack.c.l.b16 %v4540
        %v6029 = vunpack.c.h.b16 %v4540
        %v6030 = vunpack.c.l.b16 %v4541
        %v6031 = vunpack.c.h.b16 %v4541
        %v6032 = vunpack.c.l.b16 %v4542
        %v6033 = vunpack.c.h.b16 %v4542
        %v6034 = vunpack.c.l.b16 %v4543
        %v6035 = vunpack.c.h.b16 %v4543
        %v6036 = vunpack.c.l.b16 %v4544
        %v6037 = vunpack.c.h.b16 %v4544
        %v6038 = vunpack.c.l.b16 %v4545
        %v6039 = vunpack.c.h.b16 %v4545
        %v6040 = vunpack.c.l.b16 %v4546
        %v6041 = vunpack.c.h.b16 %v4546
        %v6042 = vunpack.c.l.b16 %v4547
        %v6043 = vunpack.c.h.b16 %v4547
        %v6044 = vunpack.c.l.b16 %v4548
        %v6045 = vunpack.c.h.b16 %v4548
        %v6046 = vunpack.c.l.b16 %v4549
        %v6047 = vunpack.c.h.b16 %v4549
        %v6048 = vunpack.c.l.b16 %v4550
        %v6049 = vunpack.c.h.b16 %v4550
        %v6050 = vunpack.c.l.b16 %v4551
        %v6051 = vunpack.c.h.b16 %v4551
        %v6052 = vunpack.c.l.b16 %v4552
        %v6053 = vunpack.c.h.b16 %v4552
        %v6054 = vunpack.c.l.b16 %v4553
        %v6055 = vunpack.c.h.b16 %v4553
        %v6056 = vunpack.c.l.b16 %v4554
        %v6057 = vunpack.c.h.b16 %v4554
        %v6058 = vunpack.c.l.b16 %v4555
        %v6059 = vunpack.c.h.b16 %v4555
        %v6060 = vunpack.c.l.b16 %v4556
        %v6061 = vunpack.c.h.b16 %v4556
        %v6062 = vunpack.c.l.b16 %v4557
        %v6063 = vunpack.c.h.b16 %v4557
        %v6064 = vunpack.c.l.b16 %v4558
        %v6065 = vunpack.c.h.b16 %v4558
        %v6066 = vunpack.c.l.b16 %v4559
        %v6067 = vunpack.c.h.b16 %v4559
        %v6068 = vunpack.c.l.b16 %v4560
        %v6069 = vunpack.c.h.b16 %v4560
        %v6070 = vunpack.c.l.b16 %v4561
        %v6071 = vunpack.c.h.b16 %v4561
        %v6072 = vunpack.c.l.b16 %v4562
        %v6073 = vunpack.c.h.b16 %v4562
        %v6074 = vunpack.c.l.b16 %v4563
        %v6075 = vunpack.c.h.b16 %v4563
        %v6076 = vunpack.c.l.b16 %v4564
        %v6077 = vunpack.c.h.b16 %v4564
        %v6078 = vunpack.c.l.b16 %v4565
        %v6079 = vunpack.c.h.b16 %v4565
        %v6080 = vunpack.c.l.b16 %v4566
        %v6081 = vunpack.c.h.b16 %v4566
        %v6082 = vunpack.c.l.b16 %v4567
        %v6083 = vunpack.c.h.b16 %v4567
        %v6084 = vunpack.c.l.b16 %v4568
        %v6085 = vunpack.c.h.b16 %v4568
        %v6086 = vunpack.c.l.b16 %v4569
        %v6087 = vunpack.c.h.b16 %v4569
        %v6088 = vunpack.c.l.b16 %v4570
        %v6089 = vunpack.c.h.b16 %v4570
        %v6090 = vunpack.c.l.b16 %v4571
        %v6091 = vunpack.c.h.b16 %v4571
        %v6092 = vunpack.c.l.b16 %v4572
        %v6093 = vunpack.c.h.b16 %v4572
        %v6094 = vunpack.c.l.b16 %v4573
        %v6095 = vunpack.c.h.b16 %v4573
        %v6096 = vunpack.c.l.b16 %v4574
        %v6097 = vunpack.c.h.b16 %v4574
        %v6098 = vunpack.c.l.b16 %v4575
        %v6099 = vunpack.c.h.b16 %v4575
        %v6100 = vunpack.c.l.b16 %v4576
        %v6101 = vunpack.c.h.b16 %v4576
        %v6102 = vunpack.c.l.b16 %v4577
        %v6103 = vunpack.c.h.b16 %v4577
        %v6104 = vunpack.c.l.b16 %v4578
        %v6105 = vunpack.c.h.b16 %v4578
        %v6106 = vunpack.c.l.b16 %v4579
        %v6107 = vunpack.c.h.b16 %v4579
        %v6108 = vunpack.c.l.b16 %v4580
        %v6109 = vunpack.c.h.b16 %v4580
        %v6110 = vunpack.c.l.b16 %v4581
        %v6111 = vunpack.c.h.b16 %v4581
        %v6112 = vunpack.c.l.b16 %v4582
        %v6113 = vunpack.c.h.b16 %v4582
        %v6114 = vunpack.c.l.b16 %v4583
        %v6115 = vunpack.c.h.b16 %v4583
        %v6116 = vunpack.c.l.b16 %v4584
        %v6117 = vunpack.c.h.b16 %v4584
        %v6118 = vunpack.c.l.b16 %v4585
        %v6119 = vunpack.c.h.b16 %v4585
        %v6120 = vunpack.c.l.b16 %v4586
        %v6121 = vunpack.c.h.b16 %v4586
        %v6122 = vunpack.c.l.b16 %v4587
        %v6123 = vunpack.c.h.b16 %v4587
        %v6124 = vpack.c.b16 %v5108, %v5100
        %v6125 = vpack.c.b16 %v5109, %v5101
        %v6126 = vpack.c.b16 %v5110, %v5102
        %v6127 = vpack.c.b16 %v5111, %v5103
        %v6128 = vpack.c.b16 %v5112, %v5104
        %v6129 = vpack.c.b16 %v5113, %v5105
        %v6130 = vpack.c.b16 %v5114, %v5106
        %v6131 = vpack.c.b16 %v5115, %v5107
        %v6132 = vpack.c.b16 %v5124, %v5116
        %v6133 = vpack.c.b16 %v5125, %v5117
        %v6134 = vpack.c.b16 %v5126, %v5118
        %v6135 = vpack.c.b16 %v5127, %v5119
        %v6136 = vpack.c.b16 %v5128, %v5120
        %v6137 = vpack.c.b16 %v5129, %v5121
        %v6138 = vpack.c.b16 %v5130, %v5122
        %v6139 = vpack.c.b16 %v5131, %v5123
        %v6140 = vpack.c.b16 %v5140, %v5132
        %v6141 = vpack.c.b16 %v5141, %v5133
        %v6142 = vpack.c.b16 %v5142, %v5134
        %v6143 = vpack.c.b16 %v5143, %v5135
        %v6144 = vpack.c.b16 %v5144, %v5136
        %v6145 = vpack.c.b16 %v5145, %v5137
        %v6146 = vpack.c.b16 %v5146, %v5138
        %v6147 = vpack.c.b16 %v5147, %v5139
        %v6148 = vpack.c.b16 %v5156, %v5148
        %v6149 = vpack.c.b16 %v5157, %v5149
        %v6150 = vpack.c.b16 %v5158, %v5150
        %v6151 = vpack.c.b16 %v5159, %v5151
        %v6152 = vpack.c.b16 %v5160, %v5152
        %v6153 = vpack.c.b16 %v5161, %v5153
        %v6154 = vpack.c.b16 %v5162, %v5154
        %v6155 = vpack.c.b16 %v5163, %v5155
        %v6156 = vpack.c.b16 %v5172, %v5164
        %v6157 = vpack.c.b16 %v5173, %v5165
        %v6158 = vpack.c.b16 %v5174, %v5166
        %v6159 = vpack.c.b16 %v5175, %v5167
        %v6160 = vpack.c.b16 %v5176, %v5168
        %v6161 = vpack.c.b16 %v5177, %v5169
        %v6162 = vpack.c.b16 %v5178, %v5170
        %v6163 = vpack.c.b16 %v5179, %v5171
        %v6164 = vpack.c.b16 %v5188, %v5180
        %v6165 = vpack.c.b16 %v5189, %v5181
        %v6166 = vpack.c.b16 %v5190, %v5182
        %v6167 = vpack.c.b16 %v5191, %v5183
        %v6168 = vpack.c.b16 %v5192, %v5184
        %v6169 = vpack.c.b16 %v5193, %v5185
        %v6170 = vpack.c.b16 %v5194, %v5186
        %v6171 = vpack.c.b16 %v5195, %v5187
        %v6172 = vpack.c.b16 %v5204, %v5196
        %v6173 = vpack.c.b16 %v5205, %v5197
        %v6174 = vpack.c.b16 %v5206, %v5198
        %v6175 = vpack.c.b16 %v5207, %v5199
        %v6176 = vpack.c.b16 %v5208, %v5200
        %v6177 = vpack.c.b16 %v5209, %v5201
        %v6178 = vpack.c.b16 %v5210, %v5202
        %v6179 = vpack.c.b16 %v5211, %v5203
        %v6180 = vpack.c.b16 %v5220, %v5212
        %v6181 = vpack.c.b16 %v5221, %v5213
        %v6182 = vpack.c.b16 %v5222, %v5214
        %v6183 = vpack.c.b16 %v5223, %v5215
        %v6184 = vpack.c.b16 %v5224, %v5216
        %v6185 = vpack.c.b16 %v5225, %v5217
        %v6186 = vpack.c.b16 %v5226, %v5218
        %v6187 = vpack.c.b16 %v5227, %v5219
        %v6188 = vpack.c.b16 %v5236, %v5228
        %v6189 = vpack.c.b16 %v5237, %v5229
        %v6190 = vpack.c.b16 %v5238, %v5230
        %v6191 = vpack.c.b16 %v5239, %v5231
        %v6192 = vpack.c.b16 %v5240, %v5232
        %v6193 = vpack.c.b16 %v5241, %v5233
        %v6194 = vpack.c.b16 %v5242, %v5234
        %v6195 = vpack.c.b16 %v5243, %v5235
        %v6196 = vpack.c.b16 %v5252, %v5244
        %v6197 = vpack.c.b16 %v5253, %v5245
        %v6198 = vpack.c.b16 %v5254, %v5246
        %v6199 = vpack.c.b16 %v5255, %v5247
        %v6200 = vpack.c.b16 %v5256, %v5248
        %v6201 = vpack.c.b16 %v5257, %v5249
        %v6202 = vpack.c.b16 %v5258, %v5250
        %v6203 = vpack.c.b16 %v5259, %v5251
        %v6204 = vpack.c.b16 %v5268, %v5260
        %v6205 = vpack.c.b16 %v5269, %v5261
        %v6206 = vpack.c.b16 %v5270, %v5262
        %v6207 = vpack.c.b16 %v5271, %v5263
        %v6208 = vpack.c.b16 %v5272, %v5264
        %v6209 = vpack.c.b16 %v5273, %v5265
        %v6210 = vpack.c.b16 %v5274, %v5266
        %v6211 = vpack.c.b16 %v5275, %v5267
        %v6212 = vpack.c.b16 %v5284, %v5276
        %v6213 = vpack.c.b16 %v5285, %v5277
        %v6214 = vpack.c.b16 %v5286, %v5278
        %v6215 = vpack.c.b16 %v5287, %v5279
        %v6216 = vpack.c.b16 %v5288, %v5280
        %v6217 = vpack.c.b16 %v5289, %v5281
        %v6218 = vpack.c.b16 %v5290, %v5282
        %v6219 = vpack.c.b16 %v5291, %v5283
        %v6220 = vpack.c.b16 %v5300, %v5292
        %v6221 = vpack.c.b16 %v5301, %v5293
        %v6222 = vpack.c.b16 %v5302, %v5294
        %v6223 = vpack.c.b16 %v5303, %v5295
        %v6224 = vpack.c.b16 %v5304, %v5296
        %v6225 = vpack.c.b16 %v5305, %v5297
        %v6226 = vpack.c.b16 %v5306, %v5298
        %v6227 = vpack.c.b16 %v5307, %v5299
        %v6228 = vpack.c.b16 %v5316, %v5308
        %v6229 = vpack.c.b16 %v5317, %v5309
        %v6230 = vpack.c.b16 %v5318, %v5310
        %v6231 = vpack.c.b16 %v5319, %v5311
        %v6232 = vpack.c.b16 %v5320, %v5312
        %v6233 = vpack.c.b16 %v5321, %v5313
        %v6234 = vpack.c.b16 %v5322, %v5314
        %v6235 = vpack.c.b16 %v5323, %v5315
        %v6236 = vpack.c.b16 %v5332, %v5324
        %v6237 = vpack.c.b16 %v5333, %v5325
        %v6238 = vpack.c.b16 %v5334, %v5326
        %v6239 = vpack.c.b16 %v5335, %v5327
        %v6240 = vpack.c.b16 %v5336, %v5328
        %v6241 = vpack.c.b16 %v5337, %v5329
        %v6242 = vpack.c.b16 %v5338, %v5330
        %v6243 = vpack.c.b16 %v5339, %v5331
        %v6244 = vpack.c.b16 %v5348, %v5340
        %v6245 = vpack.c.b16 %v5349, %v5341
        %v6246 = vpack.c.b16 %v5350, %v5342
        %v6247 = vpack.c.b16 %v5351, %v5343
        %v6248 = vpack.c.b16 %v5352, %v5344
        %v6249 = vpack.c.b16 %v5353, %v5345
        %v6250 = vpack.c.b16 %v5354, %v5346
        %v6251 = vpack.c.b16 %v5355, %v5347
        %v6252 = vpack.c.b16 %v5364, %v5356
        %v6253 = vpack.c.b16 %v5365, %v5357
        %v6254 = vpack.c.b16 %v5366, %v5358
        %v6255 = vpack.c.b16 %v5367, %v5359
        %v6256 = vpack.c.b16 %v5368, %v5360
        %v6257 = vpack.c.b16 %v5369, %v5361
        %v6258 = vpack.c.b16 %v5370, %v5362
        %v6259 = vpack.c.b16 %v5371, %v5363
        %v6260 = vpack.c.b16 %v5380, %v5372
        %v6261 = vpack.c.b16 %v5381, %v5373
        %v6262 = vpack.c.b16 %v5382, %v5374
        %v6263 = vpack.c.b16 %v5383, %v5375
        %v6264 = vpack.c.b16 %v5384, %v5376
        %v6265 = vpack.c.b16 %v5385, %v5377
        %v6266 = vpack.c.b16 %v5386, %v5378
        %v6267 = vpack.c.b16 %v5387, %v5379
        %v6268 = vpack.c.b16 %v5396, %v5388
        %v6269 = vpack.c.b16 %v5397, %v5389
        %v6270 = vpack.c.b16 %v5398, %v5390
        %v6271 = vpack.c.b16 %v5399, %v5391
        %v6272 = vpack.c.b16 %v5400, %v5392
        %v6273 = vpack.c.b16 %v5401, %v5393
        %v6274 = vpack.c.b16 %v5402, %v5394
        %v6275 = vpack.c.b16 %v5403, %v5395
        %v6276 = vpack.c.b16 %v5412, %v5404
        %v6277 = vpack.c.b16 %v5413, %v5405
        %v6278 = vpack.c.b16 %v5414, %v5406
        %v6279 = vpack.c.b16 %v5415, %v5407
        %v6280 = vpack.c.b16 %v5416, %v5408
        %v6281 = vpack.c.b16 %v5417, %v5409
        %v6282 = vpack.c.b16 %v5418, %v5410
        %v6283 = vpack.c.b16 %v5419, %v5411
        %v6284 = vpack.c.b16 %v5428, %v5420
        %v6285 = vpack.c.b16 %v5429, %v5421
        %v6286 = vpack.c.b16 %v5430, %v5422
        %v6287 = vpack.c.b16 %v5431, %v5423
        %v6288 = vpack.c.b16 %v5432, %v5424
        %v6289 = vpack.c.b16 %v5433, %v5425
        %v6290 = vpack.c.b16 %v5434, %v5426
        %v6291 = vpack.c.b16 %v5435, %v5427
        %v6292 = vpack.c.b16 %v5444, %v5436
        %v6293 = vpack.c.b16 %v5445, %v5437
        %v6294 = vpack.c.b16 %v5446, %v5438
        %v6295 = vpack.c.b16 %v5447, %v5439
        %v6296 = vpack.c.b16 %v5448, %v5440
        %v6297 = vpack.c.b16 %v5449, %v5441
        %v6298 = vpack.c.b16 %v5450, %v5442
        %v6299 = vpack.c.b16 %v5451, %v5443
        %v6300 = vpack.c.b16 %v5460, %v5452
        %v6301 = vpack.c.b16 %v5461, %v5453
        %v6302 = vpack.c.b16 %v5462, %v5454
        %v6303 = vpack.c.b16 %v5463, %v5455
        %v6304 = vpack.c.b16 %v5464, %v5456
        %v6305 = vpack.c.b16 %v5465, %v5457
        %v6306 = vpack.c.b16 %v5466, %v5458
        %v6307 = vpack.c.b16 %v5467, %v5459
        %v6308 = vpack.c.b16 %v5476, %v5468
        %v6309 = vpack.c.b16 %v5477, %v5469
        %v6310 = vpack.c.b16 %v5478, %v5470
        %v6311 = vpack.c.b16 %v5479, %v5471
        %v6312 = vpack.c.b16 %v5480, %v5472
        %v6313 = vpack.c.b16 %v5481, %v5473
        %v6314 = vpack.c.b16 %v5482, %v5474
        %v6315 = vpack.c.b16 %v5483, %v5475
        %v6316 = vpack.c.b16 %v5492, %v5484
        %v6317 = vpack.c.b16 %v5493, %v5485
        %v6318 = vpack.c.b16 %v5494, %v5486
        %v6319 = vpack.c.b16 %v5495, %v5487
        %v6320 = vpack.c.b16 %v5496, %v5488
        %v6321 = vpack.c.b16 %v5497, %v5489
        %v6322 = vpack.c.b16 %v5498, %v5490
        %v6323 = vpack.c.b16 %v5499, %v5491
        %v6324 = vpack.c.b16 %v5508, %v5500
        %v6325 = vpack.c.b16 %v5509, %v5501
        %v6326 = vpack.c.b16 %v5510, %v5502
        %v6327 = vpack.c.b16 %v5511, %v5503
        %v6328 = vpack.c.b16 %v5512, %v5504
        %v6329 = vpack.c.b16 %v5513, %v5505
        %v6330 = vpack.c.b16 %v5514, %v5506
        %v6331 = vpack.c.b16 %v5515, %v5507
        %v6332 = vpack.c.b16 %v5524, %v5516
        %v6333 = vpack.c.b16 %v5525, %v5517
        %v6334 = vpack.c.b16 %v5526, %v5518
        %v6335 = vpack.c.b16 %v5527, %v5519
        %v6336 = vpack.c.b16 %v5528, %v5520
        %v6337 = vpack.c.b16 %v5529, %v5521
        %v6338 = vpack.c.b16 %v5530, %v5522
        %v6339 = vpack.c.b16 %v5531, %v5523
        %v6340 = vpack.c.b16 %v5540, %v5532
        %v6341 = vpack.c.b16 %v5541, %v5533
        %v6342 = vpack.c.b16 %v5542, %v5534
        %v6343 = vpack.c.b16 %v5543, %v5535
        %v6344 = vpack.c.b16 %v5544, %v5536
        %v6345 = vpack.c.b16 %v5545, %v5537
        %v6346 = vpack.c.b16 %v5546, %v5538
        %v6347 = vpack.c.b16 %v5547, %v5539
        %v6348 = vpack.c.b16 %v5556, %v5548
        %v6349 = vpack.c.b16 %v5557, %v5549
        %v6350 = vpack.c.b16 %v5558, %v5550
        %v6351 = vpack.c.b16 %v5559, %v5551
        %v6352 = vpack.c.b16 %v5560, %v5552
        %v6353 = vpack.c.b16 %v5561, %v5553
        %v6354 = vpack.c.b16 %v5562, %v5554
        %v6355 = vpack.c.b16 %v5563, %v5555
        %v6356 = vpack.c.b16 %v5572, %v5564
        %v6357 = vpack.c.b16 %v5573, %v5565
        %v6358 = vpack.c.b16 %v5574, %v5566
        %v6359 = vpack.c.b16 %v5575, %v5567
        %v6360 = vpack.c.b16 %v5576, %v5568
        %v6361 = vpack.c.b16 %v5577, %v5569
        %v6362 = vpack.c.b16 %v5578, %v5570
        %v6363 = vpack.c.b16 %v5579, %v5571
        %v6364 = vpack.c.b16 %v5588, %v5580
        %v6365 = vpack.c.b16 %v5589, %v5581
        %v6366 = vpack.c.b16 %v5590, %v5582
        %v6367 = vpack.c.b16 %v5591, %v5583
        %v6368 = vpack.c.b16 %v5592, %v5584
        %v6369 = vpack.c.b16 %v5593, %v5585
        %v6370 = vpack.c.b16 %v5594, %v5586
        %v6371 = vpack.c.b16 %v5595, %v5587
        %v6372 = vpack.c.b16 %v5604, %v5596
        %v6373 = vpack.c.b16 %v5605, %v5597
        %v6374 = vpack.c.b16 %v5606, %v5598
        %v6375 = vpack.c.b16 %v5607, %v5599
        %v6376 = vpack.c.b16 %v5608, %v5600
        %v6377 = vpack.c.b16 %v5609, %v5601
        %v6378 = vpack.c.b16 %v5610, %v5602
        %v6379 = vpack.c.b16 %v5611, %v5603
        %v6380 = vpack.c.b16 %v5620, %v5612
        %v6381 = vpack.c.b16 %v5621, %v5613
        %v6382 = vpack.c.b16 %v5622, %v5614
        %v6383 = vpack.c.b16 %v5623, %v5615
        %v6384 = vpack.c.b16 %v5624, %v5616
        %v6385 = vpack.c.b16 %v5625, %v5617
        %v6386 = vpack.c.b16 %v5626, %v5618
        %v6387 = vpack.c.b16 %v5627, %v5619
        %v6388 = vpack.c.b16 %v5636, %v5628
        %v6389 = vpack.c.b16 %v5637, %v5629
        %v6390 = vpack.c.b16 %v5638, %v5630
        %v6391 = vpack.c.b16 %v5639, %v5631
        %v6392 = vpack.c.b16 %v5640, %v5632
        %v6393 = vpack.c.b16 %v5641, %v5633
        %v6394 = vpack.c.b16 %v5642, %v5634
        %v6395 = vpack.c.b16 %v5643, %v5635
        %v6396 = vpack.c.b16 %v5652, %v5644
        %v6397 = vpack.c.b16 %v5653, %v5645
        %v6398 = vpack.c.b16 %v5654, %v5646
        %v6399 = vpack.c.b16 %v5655, %v5647
        %v6400 = vpack.c.b16 %v5656, %v5648
        %v6401 = vpack.c.b16 %v5657, %v5649
        %v6402 = vpack.c.b16 %v5658, %v5650
        %v6403 = vpack.c.b16 %v5659, %v5651
        %v6404 = vpack.c.b16 %v5668, %v5660
        %v6405 = vpack.c.b16 %v5669, %v5661
        %v6406 = vpack.c.b16 %v5670, %v5662
        %v6407 = vpack.c.b16 %v5671, %v5663
        %v6408 = vpack.c.b16 %v5672, %v5664
        %v6409 = vpack.c.b16 %v5673, %v5665
        %v6410 = vpack.c.b16 %v5674, %v5666
        %v6411 = vpack.c.b16 %v5675, %v5667
        %v6412 = vpack.c.b16 %v5684, %v5676
        %v6413 = vpack.c.b16 %v5685, %v5677
        %v6414 = vpack.c.b16 %v5686, %v5678
        %v6415 = vpack.c.b16 %v5687, %v5679
        %v6416 = vpack.c.b16 %v5688, %v5680
        %v6417 = vpack.c.b16 %v5689, %v5681
        %v6418 = vpack.c.b16 %v5690, %v5682
        %v6419 = vpack.c.b16 %v5691, %v5683
        %v6420 = vpack.c.b16 %v5700, %v5692
        %v6421 = vpack.c.b16 %v5701, %v5693
        %v6422 = vpack.c.b16 %v5702, %v5694
        %v6423 = vpack.c.b16 %v5703, %v5695
        %v6424 = vpack.c.b16 %v5704, %v5696
        %v6425 = vpack.c.b16 %v5705, %v5697
        %v6426 = vpack.c.b16 %v5706, %v5698
        %v6427 = vpack.c.b16 %v5707, %v5699
        %v6428 = vpack.c.b16 %v5716, %v5708
        %v6429 = vpack.c.b16 %v5717, %v5709
        %v6430 = vpack.c.b16 %v5718, %v5710
        %v6431 = vpack.c.b16 %v5719, %v5711
        %v6432 = vpack.c.b16 %v5720, %v5712
        %v6433 = vpack.c.b16 %v5721, %v5713
        %v6434 = vpack.c.b16 %v5722, %v5714
        %v6435 = vpack.c.b16 %v5723, %v5715
        %v6436 = vpack.c.b16 %v5732, %v5724
        %v6437 = vpack.c.b16 %v5733, %v5725
        %v6438 = vpack.c.b16 %v5734, %v5726
        %v6439 = vpack.c.b16 %v5735, %v5727
        %v6440 = vpack.c.b16 %v5736, %v5728
        %v6441 = vpack.c.b16 %v5737, %v5729
        %v6442 = vpack.c.b16 %v5738, %v5730
        %v6443 = vpack.c.b16 %v5739, %v5731
        %v6444 = vpack.c.b16 %v5748, %v5740
        %v6445 = vpack.c.b16 %v5749, %v5741
        %v6446 = vpack.c.b16 %v5750, %v5742
        %v6447 = vpack.c.b16 %v5751, %v5743
        %v6448 = vpack.c.b16 %v5752, %v5744
        %v6449 = vpack.c.b16 %v5753, %v5745
        %v6450 = vpack.c.b16 %v5754, %v5746
        %v6451 = vpack.c.b16 %v5755, %v5747
        %v6452 = vpack.c.b16 %v5764, %v5756
        %v6453 = vpack.c.b16 %v5765, %v5757
        %v6454 = vpack.c.b16 %v5766, %v5758
        %v6455 = vpack.c.b16 %v5767, %v5759
        %v6456 = vpack.c.b16 %v5768, %v5760
        %v6457 = vpack.c.b16 %v5769, %v5761
        %v6458 = vpack.c.b16 %v5770, %v5762
        %v6459 = vpack.c.b16 %v5771, %v5763
        %v6460 = vpack.c.b16 %v5780, %v5772
        %v6461 = vpack.c.b16 %v5781, %v5773
        %v6462 = vpack.c.b16 %v5782, %v5774
        %v6463 = vpack.c.b16 %v5783, %v5775
        %v6464 = vpack.c.b16 %v5784, %v5776
        %v6465 = vpack.c.b16 %v5785, %v5777
        %v6466 = vpack.c.b16 %v5786, %v5778
        %v6467 = vpack.c.b16 %v5787, %v5779
        %v6468 = vpack.c.b16 %v5796, %v5788
        %v6469 = vpack.c.b16 %v5797, %v5789
        %v6470 = vpack.c.b16 %v5798, %v5790
        %v6471 = vpack.c.b16 %v5799, %v5791
        %v6472 = vpack.c.b16 %v5800, %v5792
        %v6473 = vpack.c.b16 %v5801, %v5793
        %v6474 = vpack.c.b16 %v5802, %v5794
        %v6475 = vpack.c.b16 %v5803, %v5795
        %v6476 = vpack.c.b16 %v5812, %v5804
        %v6477 = vpack.c.b16 %v5813, %v5805
        %v6478 = vpack.c.b16 %v5814, %v5806
        %v6479 = vpack.c.b16 %v5815, %v5807
        %v6480 = vpack.c.b16 %v5816, %v5808
        %v6481 = vpack.c.b16 %v5817, %v5809
        %v6482 = vpack.c.b16 %v5818, %v5810
        %v6483 = vpack.c.b16 %v5819, %v5811
        %v6484 = vpack.c.b16 %v5828, %v5820
        %v6485 = vpack.c.b16 %v5829, %v5821
        %v6486 = vpack.c.b16 %v5830, %v5822
        %v6487 = vpack.c.b16 %v5831, %v5823
        %v6488 = vpack.c.b16 %v5832, %v5824
        %v6489 = vpack.c.b16 %v5833, %v5825
        %v6490 = vpack.c.b16 %v5834, %v5826
        %v6491 = vpack.c.b16 %v5835, %v5827
        %v6492 = vpack.c.b16 %v5844, %v5836
        %v6493 = vpack.c.b16 %v5845, %v5837
        %v6494 = vpack.c.b16 %v5846, %v5838
        %v6495 = vpack.c.b16 %v5847, %v5839
        %v6496 = vpack.c.b16 %v5848, %v5840
        %v6497 = vpack.c.b16 %v5849, %v5841
        %v6498 = vpack.c.b16 %v5850, %v5842
        %v6499 = vpack.c.b16 %v5851, %v5843
        %v6500 = vpack.c.b16 %v5860, %v5852
        %v6501 = vpack.c.b16 %v5861, %v5853
        %v6502 = vpack.c.b16 %v5862, %v5854
        %v6503 = vpack.c.b16 %v5863, %v5855
        %v6504 = vpack.c.b16 %v5864, %v5856
        %v6505 = vpack.c.b16 %v5865, %v5857
        %v6506 = vpack.c.b16 %v5866, %v5858
        %v6507 = vpack.c.b16 %v5867, %v5859
        %v6508 = vpack.c.b16 %v5876, %v5868
        %v6509 = vpack.c.b16 %v5877, %v5869
        %v6510 = vpack.c.b16 %v5878, %v5870
        %v6511 = vpack.c.b16 %v5879, %v5871
        %v6512 = vpack.c.b16 %v5880, %v5872
        %v6513 = vpack.c.b16 %v5881, %v5873
        %v6514 = vpack.c.b16 %v5882, %v5874
        %v6515 = vpack.c.b16 %v5883, %v5875
        %v6516 = vpack.c.b16 %v5892, %v5884
        %v6517 = vpack.c.b16 %v5893, %v5885
        %v6518 = vpack.c.b16 %v5894, %v5886
        %v6519 = vpack.c.b16 %v5895, %v5887
        %v6520 = vpack.c.b16 %v5896, %v5888
        %v6521 = vpack.c.b16 %v5897, %v5889
        %v6522 = vpack.c.b16 %v5898, %v5890
        %v6523 = vpack.c.b16 %v5899, %v5891
        %v6524 = vpack.c.b16 %v5908, %v5900
        %v6525 = vpack.c.b16 %v5909, %v5901
        %v6526 = vpack.c.b16 %v5910, %v5902
        %v6527 = vpack.c.b16 %v5911, %v5903
        %v6528 = vpack.c.b16 %v5912, %v5904
        %v6529 = vpack.c.b16 %v5913, %v5905
        %v6530 = vpack.c.b16 %v5914, %v5906
        %v6531 = vpack.c.b16 %v5915, %v5907
        %v6532 = vpack.c.b16 %v5924, %v5916
        %v6533 = vpack.c.b16 %v5925, %v5917
        %v6534 = vpack.c.b16 %v5926, %v5918
        %v6535 = vpack.c.b16 %v5927, %v5919
        %v6536 = vpack.c.b16 %v5928, %v5920
        %v6537 = vpack.c.b16 %v5929, %v5921
        %v6538 = vpack.c.b16 %v5930, %v5922
        %v6539 = vpack.c.b16 %v5931, %v5923
        %v6540 = vpack.c.b16 %v5940, %v5932
        %v6541 = vpack.c.b16 %v5941, %v5933
        %v6542 = vpack.c.b16 %v5942, %v5934
        %v6543 = vpack.c.b16 %v5943, %v5935
        %v6544 = vpack.c.b16 %v5944, %v5936
        %v6545 = vpack.c.b16 %v5945, %v5937
        %v6546 = vpack.c.b16 %v5946, %v5938
        %v6547 = vpack.c.b16 %v5947, %v5939
        %v6548 = vpack.c.b16 %v5956, %v5948
        %v6549 = vpack.c.b16 %v5957, %v5949
        %v6550 = vpack.c.b16 %v5958, %v5950
        %v6551 = vpack.c.b16 %v5959, %v5951
        %v6552 = vpack.c.b16 %v5960, %v5952
        %v6553 = vpack.c.b16 %v5961, %v5953
        %v6554 = vpack.c.b16 %v5962, %v5954
        %v6555 = vpack.c.b16 %v5963, %v5955
        %v6556 = vpack.c.b16 %v5972, %v5964
        %v6557 = vpack.c.b16 %v5973, %v5965
        %v6558 = vpack.c.b16 %v5974, %v5966
        %v6559 = vpack.c.b16 %v5975, %v5967
        %v6560 = vpack.c.b16 %v5976, %v5968
        %v6561 = vpack.c.b16 %v5977, %v5969
        %v6562 = vpack.c.b16 %v5978, %v5970
        %v6563 = vpack.c.b16 %v5979, %v5971
        %v6564 = vpack.c.b16 %v5988, %v5980
        %v6565 = vpack.c.b16 %v5989, %v5981
        %v6566 = vpack.c.b16 %v5990, %v5982
        %v6567 = vpack.c.b16 %v5991, %v5983
        %v6568 = vpack.c.b16 %v5992, %v5984
        %v6569 = vpack.c.b16 %v5993, %v5985
        %v6570 = vpack.c.b16 %v5994, %v5986
        %v6571 = vpack.c.b16 %v5995, %v5987
        %v6572 = vpack.c.b16 %v6004, %v5996
        %v6573 = vpack.c.b16 %v6005, %v5997
        %v6574 = vpack.c.b16 %v6006, %v5998
        %v6575 = vpack.c.b16 %v6007, %v5999
        %v6576 = vpack.c.b16 %v6008, %v6000
        %v6577 = vpack.c.b16 %v6009, %v6001
        %v6578 = vpack.c.b16 %v6010, %v6002
        %v6579 = vpack.c.b16 %v6011, %v6003
        %v6580 = vpack.c.b16 %v6020, %v6012
        %v6581 = vpack.c.b16 %v6021, %v6013
        %v6582 = vpack.c.b16 %v6022, %v6014
        %v6583 = vpack.c.b16 %v6023, %v6015
        %v6584 = vpack.c.b16 %v6024, %v6016
        %v6585 = vpack.c.b16 %v6025, %v6017
        %v6586 = vpack.c.b16 %v6026, %v6018
        %v6587 = vpack.c.b16 %v6027, %v6019
        %v6588 = vpack.c.b16 %v6036, %v6028
        %v6589 = vpack.c.b16 %v6037, %v6029
        %v6590 = vpack.c.b16 %v6038, %v6030
        %v6591 = vpack.c.b16 %v6039, %v6031
        %v6592 = vpack.c.b16 %v6040, %v6032
        %v6593 = vpack.c.b16 %v6041, %v6033
        %v6594 = vpack.c.b16 %v6042, %v6034
        %v6595 = vpack.c.b16 %v6043, %v6035
        %v6596 = vpack.c.b16 %v6052, %v6044
        %v6597 = vpack.c.b16 %v6053, %v6045
        %v6598 = vpack.c.b16 %v6054, %v6046
        %v6599 = vpack.c.b16 %v6055, %v6047
        %v6600 = vpack.c.b16 %v6056, %v6048
        %v6601 = vpack.c.b16 %v6057, %v6049
        %v6602 = vpack.c.b16 %v6058, %v6050
        %v6603 = vpack.c.b16 %v6059, %v6051
        %v6604 = vpack.c.b16 %v6068, %v6060
        %v6605 = vpack.c.b16 %v6069, %v6061
        %v6606 = vpack.c.b16 %v6070, %v6062
        %v6607 = vpack.c.b16 %v6071, %v6063
        %v6608 = vpack.c.b16 %v6072, %v6064
        %v6609 = vpack.c.b16 %v6073, %v6065
        %v6610 = vpack.c.b16 %v6074, %v6066
        %v6611 = vpack.c.b16 %v6075, %v6067
        %v6612 = vpack.c.b16 %v6084, %v6076
        %v6613 = vpack.c.b16 %v6085, %v6077
        %v6614 = vpack.c.b16 %v6086, %v6078
        %v6615 = vpack.c.b16 %v6087, %v6079
        %v6616 = vpack.c.b16 %v6088, %v6080
        %v6617 = vpack.c.b16 %v6089, %v6081
        %v6618 = vpack.c.b16 %v6090, %v6082
        %v6619 = vpack.c.b16 %v6091, %v6083
        %v6620 = vpack.c.b16 %v6100, %v6092
        %v6621 = vpack.c.b16 %v6101, %v6093
        %v6622 = vpack.c.b16 %v6102, %v6094
        %v6623 = vpack.c.b16 %v6103, %v6095
        %v6624 = vpack.c.b16 %v6104, %v6096
        %v6625 = vpack.c.b16 %v6105, %v6097
        %v6626 = vpack.c.b16 %v6106, %v6098
        %v6627 = vpack.c.b16 %v6107, %v6099
        %v6628 = vpack.c.b16 %v6116, %v6108
        %v6629 = vpack.c.b16 %v6117, %v6109
        %v6630 = vpack.c.b16 %v6118, %v6110
        %v6631 = vpack.c.b16 %v6119, %v6111
        %v6632 = vpack.c.b16 %v6120, %v6112
        %v6633 = vpack.c.b16 %v6121, %v6113
        %v6634 = vpack.c.b16 %v6122, %v6114
        %v6635 = vpack.c.b16 %v6123, %v6115
        %7148 = vmatprep.subr.bf16.mxu0 %v6125
        %7149 = vmatpush1.bf16.msra.mxu0 %v6124
        %7150 = vmatprep.subr.bf16.mxu0 %v6133
        %7151 = vmatpush1.bf16.msra.mxu0 %v6132
        %7152 = vmatprep.subr.bf16.mxu0 %v6141
        %7153 = vmatpush1.bf16.msra.mxu0 %v6140
        %7154 = vmatprep.subr.bf16.mxu0 %v6149
        %7155 = vmatpush1.bf16.msra.mxu0 %v6148
        %7156 = vmatprep.subr.bf16.mxu0 %v6157
        %7157 = vmatpush1.bf16.msra.mxu0 %v6156
        %7158 = vmatprep.subr.bf16.mxu0 %v6165
        %7159 = vmatpush1.bf16.msra.mxu0 %v6164
        %7160 = vmatprep.subr.bf16.mxu0 %v6173
        %7161 = vmatpush1.bf16.msra.mxu0 %v6172
        %7162 = vmatprep.subr.bf16.mxu0 %v6181
        %7163 = vmatpush1.bf16.msra.mxu0 %v6180
        %7164 = vmatprep.subr.bf16.mxu0 %v6189
        %7165 = vmatpush1.bf16.msra.mxu0 %v6188
        %7166 = vmatprep.subr.bf16.mxu0 %v6197
        %7167 = vmatpush1.bf16.msra.mxu0 %v6196
        %7168 = vmatprep.subr.bf16.mxu0 %v6205
        %7169 = vmatpush1.bf16.msra.mxu0 %v6204
        %7170 = vmatprep.subr.bf16.mxu0 %v6213
        %7171 = vmatpush1.bf16.msra.mxu0 %v6212
        %7172 = vmatprep.subr.bf16.mxu0 %v6221
        %7173 = vmatpush1.bf16.msra.mxu0 %v6220
        %7174 = vmatprep.subr.bf16.mxu0 %v6229
        %7175 = vmatpush1.bf16.msra.mxu0 %v6228
        %7176 = vmatprep.subr.bf16.mxu0 %v6237
        %7177 = vmatpush1.bf16.msra.mxu0 %v6236
        %7178 = vmatprep.subr.bf16.mxu0 %v6245
        %7179 = vmatpush1.bf16.msra.mxu0 %v6244
        %7180 = vmatprep.mubr.bf16.mxu0 %v4069
        %7181 = vmatmul.mubr.bf16.gmra.mrb[0].mxu0 %v4068
        %v7182 = vpop.f32.mrb[0].mxu0
        %v7183 = vadd.f32 0.0, %v7182
        %v7184 = vpop.f32.mrb[0].mxu0
        %v7185 = vadd.f32 0.0, %v7184
        %v7186 = vpop.f32.mrb[0].mxu0
        %v7187 = vpop.f32.mrb[0].mxu0
        %7188 = vdwg.mxu0
        %7189 = vmatprep.subr.bf16.mxu0 %v6253
        %7190 = vmatpush1.bf16.msra.mxu0 %v6252
        %7191 = vmatprep.subr.bf16.mxu0 %v6261
        %7192 = vmatpush1.bf16.msra.mxu0 %v6260
        %7193 = vmatprep.subr.bf16.mxu0 %v6269
        %7194 = vmatpush1.bf16.msra.mxu0 %v6268
        %7195 = vmatprep.subr.bf16.mxu0 %v6277
        %7196 = vmatpush1.bf16.msra.mxu0 %v6276
        %7197 = vmatprep.subr.bf16.mxu0 %v6285
        %7198 = vmatpush1.bf16.msra.mxu0 %v6284
        %7199 = vmatprep.subr.bf16.mxu0 %v6293
        %7200 = vmatpush1.bf16.msra.mxu0 %v6292
        %7201 = vmatprep.subr.bf16.mxu0 %v6301
        %7202 = vmatpush1.bf16.msra.mxu0 %v6300
        %7203 = vmatprep.subr.bf16.mxu0 %v6309
        %7204 = vmatpush1.bf16.msra.mxu0 %v6308
        %7205 = vmatprep.subr.bf16.mxu0 %v6317
        %7206 = vmatpush1.bf16.msra.mxu0 %v6316
        %7207 = vmatprep.subr.bf16.mxu0 %v6325
        %7208 = vmatpush1.bf16.msra.mxu0 %v6324
        %7209 = vmatprep.subr.bf16.mxu0 %v6333
        %7210 = vmatpush1.bf16.msra.mxu0 %v6332
        %7211 = vmatprep.subr.bf16.mxu0 %v6341
        %7212 = vmatpush1.bf16.msra.mxu0 %v6340
        %7213 = vmatprep.subr.bf16.mxu0 %v6349
        %7214 = vmatpush1.bf16.msra.mxu0 %v6348
        %7215 = vmatprep.subr.bf16.mxu0 %v6357
        %7216 = vmatpush1.bf16.msra.mxu0 %v6356
        %7217 = vmatprep.subr.bf16.mxu0 %v6365
        %7218 = vmatpush1.bf16.msra.mxu0 %v6364
        %7219 = vmatprep.subr.bf16.mxu0 %v6373
        %7220 = vmatpush1.bf16.msra.mxu0 %v6372
        %7221 = vmatprep.mubr.bf16.mxu0 %v4071
        %7222 = vmatmul.mubr.bf16.gmra.mrb[0].mxu0 %v4070
        %v7223 = vpop.f32.mrb[0].mxu0
        %v7224 = vadd.f32 %v7183, %v7223
        %v7225 = vpop.f32.mrb[0].mxu0
        %v7226 = vadd.f32 %v7185, %v7225
        %v7227 = vpop.f32.mrb[0].mxu0
        %v7228 = vpop.f32.mrb[0].mxu0
        %7229 = vdwg.mxu0
        %7230 = vmatprep.subr.bf16.mxu0 %v6381
        %7231 = vmatpush1.bf16.msra.mxu0 %v6380
        %7232 = vmatprep.subr.bf16.mxu0 %v6389
        %7233 = vmatpush1.bf16.msra.mxu0 %v6388
        %7234 = vmatprep.subr.bf16.mxu0 %v6397
        %7235 = vmatpush1.bf16.msra.mxu0 %v6396
        %7236 = vmatprep.subr.bf16.mxu0 %v6405
        %7237 = vmatpush1.bf16.msra.mxu0 %v6404
        %7238 = vmatprep.subr.bf16.mxu0 %v6413
        %7239 = vmatpush1.bf16.msra.mxu0 %v6412
        %7240 = vmatprep.subr.bf16.mxu0 %v6421
        %7241 = vmatpush1.bf16.msra.mxu0 %v6420
        %7242 = vmatprep.subr.bf16.mxu0 %v6429
        %7243 = vmatpush1.bf16.msra.mxu0 %v6428
        %7244 = vmatprep.subr.bf16.mxu0 %v6437
        %7245 = vmatpush1.bf16.msra.mxu0 %v6436
        %7246 = vmatprep.subr.bf16.mxu0 %v6445
        %7247 = vmatpush1.bf16.msra.mxu0 %v6444
        %7248 = vmatprep.subr.bf16.mxu0 %v6453
        %7249 = vmatpush1.bf16.msra.mxu0 %v6452
        %7250 = vmatprep.subr.bf16.mxu0 %v6461
        %7251 = vmatpush1.bf16.msra.mxu0 %v6460
        %7252 = vmatprep.subr.bf16.mxu0 %v6469
        %7253 = vmatpush1.bf16.msra.mxu0 %v6468
        %7254 = vmatprep.subr.bf16.mxu0 %v6477
        %7255 = vmatpush1.bf16.msra.mxu0 %v6476
        %7256 = vmatprep.subr.bf16.mxu0 %v6485
        %7257 = vmatpush1.bf16.msra.mxu0 %v6484
        %7258 = vmatprep.subr.bf16.mxu0 %v6493
        %7259 = vmatpush1.bf16.msra.mxu0 %v6492
        %7260 = vmatprep.subr.bf16.mxu0 %v6501
        %7261 = vmatpush1.bf16.msra.mxu0 %v6500
        %7262 = vmatprep.mubr.bf16.mxu0 %v4073
        %7263 = vmatmul.mubr.bf16.gmra.mrb[0].mxu0 %v4072
        %v7264 = vpop.f32.mrb[0].mxu0
        %v7265 = vadd.f32 %v7224, %v7264
        %v7266 = vpop.f32.mrb[0].mxu0
        %v7267 = vadd.f32 %v7226, %v7266
        %v7268 = vpop.f32.mrb[0].mxu0
        %v7269 = vpop.f32.mrb[0].mxu0
        %7270 = vdwg.mxu0
        %7271 = vmatprep.subr.bf16.mxu0 %v6509
        %7272 = vmatpush1.bf16.msra.mxu0 %v6508
        %7273 = vmatprep.subr.bf16.mxu0 %v6517
        %7274 = vmatpush1.bf16.msra.mxu0 %v6516
        %7275 = vmatprep.subr.bf16.mxu0 %v6525
        %7276 = vmatpush1.bf16.msra.mxu0 %v6524
        %7277 = vmatprep.subr.bf16.mxu0 %v6533
        %7278 = vmatpush1.bf16.msra.mxu0 %v6532
        %7279 = vmatprep.subr.bf16.mxu0 %v6541
        %7280 = vmatpush1.bf16.msra.mxu0 %v6540
        %7281 = vmatprep.subr.bf16.mxu0 %v6549
        %7282 = vmatpush1.bf16.msra.mxu0 %v6548
        %7283 = vmatprep.subr.bf16.mxu0 %v6557
        %7284 = vmatpush1.bf16.msra.mxu0 %v6556
        %7285 = vmatprep.subr.bf16.mxu0 %v6565
        %7286 = vmatpush1.bf16.msra.mxu0 %v6564
        %7287 = vmatprep.subr.bf16.mxu0 %v6573
        %7288 = vmatpush1.bf16.msra.mxu0 %v6572
        %7289 = vmatprep.subr.bf16.mxu0 %v6581
        %7290 = vmatpush1.bf16.msra.mxu0 %v6580
        %7291 = vmatprep.subr.bf16.mxu0 %v6589
        %7292 = vmatpush1.bf16.msra.mxu0 %v6588
        %7293 = vmatprep.subr.bf16.mxu0 %v6597
        %7294 = vmatpush1.bf16.msra.mxu0 %v6596
        %7295 = vmatprep.subr.bf16.mxu0 %v6605
        %7296 = vmatpush1.bf16.msra.mxu0 %v6604
        %7297 = vmatprep.subr.bf16.mxu0 %v6613
        %7298 = vmatpush1.bf16.msra.mxu0 %v6612
        %7299 = vmatprep.subr.bf16.mxu0 %v6621
        %7300 = vmatpush1.bf16.msra.mxu0 %v6620
        %7301 = vmatprep.subr.bf16.mxu0 %v6629
        %7302 = vmatpush1.bf16.msra.mxu0 %v6628
        %7303 = vmatprep.mubr.bf16.mxu0 %v4075
        %7304 = vmatmul.mubr.bf16.gmra.mrb[0].mxu0 %v4074
        %v7305 = vpop.f32.mrb[0].mxu0
        %v7306 = vadd.f32 %v7265, %v7305
        %v7307 = vpop.f32.mrb[0].mxu0
        %v7308 = vadd.f32 %v7267, %v7307
        %v7309 = vpop.f32.mrb[0].mxu0
        %v7310 = vpop.f32.mrb[0].mxu0
        %7311 = vdwg.mxu0
        %7312 = vmatprep.subr.bf16.mxu0 %v6127
        %7313 = vmatpush1.bf16.msra.mxu0 %v6126
        %7314 = vmatprep.subr.bf16.mxu0 %v6135
        %7315 = vmatpush1.bf16.msra.mxu0 %v6134
        %7316 = vmatprep.subr.bf16.mxu0 %v6143
        %7317 = vmatpush1.bf16.msra.mxu0 %v6142
        %7318 = vmatprep.subr.bf16.mxu0 %v6151
        %7319 = vmatpush1.bf16.msra.mxu0 %v6150
        %7320 = vmatprep.subr.bf16.mxu0 %v6159
        %7321 = vmatpush1.bf16.msra.mxu0 %v6158
        %7322 = vmatprep.subr.bf16.mxu0 %v6167
        %7323 = vmatpush1.bf16.msra.mxu0 %v6166
        %7324 = vmatprep.subr.bf16.mxu0 %v6175
        %7325 = vmatpush1.bf16.msra.mxu0 %v6174
        %7326 = vmatprep.subr.bf16.mxu0 %v6183
        %7327 = vmatpush1.bf16.msra.mxu0 %v6182
        %7328 = vmatprep.subr.bf16.mxu0 %v6191
        %7329 = vmatpush1.bf16.msra.mxu0 %v6190
        %7330 = vmatprep.subr.bf16.mxu0 %v6199
        %7331 = vmatpush1.bf16.msra.mxu0 %v6198
        %7332 = vmatprep.subr.bf16.mxu0 %v6207
        %7333 = vmatpush1.bf16.msra.mxu0 %v6206
        %7334 = vmatprep.subr.bf16.mxu0 %v6215
        %7335 = vmatpush1.bf16.msra.mxu0 %v6214
        %7336 = vmatprep.subr.bf16.mxu0 %v6223
        %7337 = vmatpush1.bf16.msra.mxu0 %v6222
        %7338 = vmatprep.subr.bf16.mxu0 %v6231
        %7339 = vmatpush1.bf16.msra.mxu0 %v6230
        %7340 = vmatprep.subr.bf16.mxu0 %v6239
        %7341 = vmatpush1.bf16.msra.mxu0 %v6238
        %7342 = vmatprep.subr.bf16.mxu0 %v6247
        %7343 = vmatpush1.bf16.msra.mxu0 %v6246
        %7344 = vmatprep.mubr.bf16.mxu0 %v4069
        %7345 = vmatmul.mubr.bf16.gmra.mrb[0].mxu0 %v4068
        %v7346 = vpop.f32.mrb[0].mxu0
        %v7347 = vadd.f32 0.0, %v7346
        %v7348 = vpop.f32.mrb[0].mxu0
        %v7349 = vadd.f32 0.0, %v7348
        %v7350 = vpop.f32.mrb[0].mxu0
        %v7351 = vpop.f32.mrb[0].mxu0
        %7352 = vdwg.mxu0
        %7353 = vmatprep.subr.bf16.mxu0 %v6255
        %7354 = vmatpush1.bf16.msra.mxu0 %v6254
        %7355 = vmatprep.subr.bf16.mxu0 %v6263
        %7356 = vmatpush1.bf16.msra.mxu0 %v6262
        %7357 = vmatprep.subr.bf16.mxu0 %v6271
        %7358 = vmatpush1.bf16.msra.mxu0 %v6270
        %7359 = vmatprep.subr.bf16.mxu0 %v6279
        %7360 = vmatpush1.bf16.msra.mxu0 %v6278
        %7361 = vmatprep.subr.bf16.mxu0 %v6287
        %7362 = vmatpush1.bf16.msra.mxu0 %v6286
        %7363 = vmatprep.subr.bf16.mxu0 %v6295
        %7364 = vmatpush1.bf16.msra.mxu0 %v6294
        %7365 = vmatprep.subr.bf16.mxu0 %v6303
        %7366 = vmatpush1.bf16.msra.mxu0 %v6302
        %7367 = vmatprep.subr.bf16.mxu0 %v6311
        %7368 = vmatpush1.bf16.msra.mxu0 %v6310
        %7369 = vmatprep.subr.bf16.mxu0 %v6319
        %7370 = vmatpush1.bf16.msra.mxu0 %v6318
        %7371 = vmatprep.subr.bf16.mxu0 %v6327
        %7372 = vmatpush1.bf16.msra.mxu0 %v6326
        %7373 = vmatprep.subr.bf16.mxu0 %v6335
        %7374 = vmatpush1.bf16.msra.mxu0 %v6334
        %7375 = vmatprep.subr.bf16.mxu0 %v6343
        %7376 = vmatpush1.bf16.msra.mxu0 %v6342
        %7377 = vmatprep.subr.bf16.mxu0 %v6351
        %7378 = vmatpush1.bf16.msra.mxu0 %v6350
        %7379 = vmatprep.subr.bf16.mxu0 %v6359
        %7380 = vmatpush1.bf16.msra.mxu0 %v6358
        %7381 = vmatprep.subr.bf16.mxu0 %v6367
        %7382 = vmatpush1.bf16.msra.mxu0 %v6366
        %7383 = vmatprep.subr.bf16.mxu0 %v6375
        %7384 = vmatpush1.bf16.msra.mxu0 %v6374
        %7385 = vmatprep.mubr.bf16.mxu0 %v4071
        %7386 = vmatmul.mubr.bf16.gmra.mrb[0].mxu0 %v4070
        %v7387 = vpop.f32.mrb[0].mxu0
        %v7388 = vadd.f32 %v7347, %v7387
        %v7389 = vpop.f32.mrb[0].mxu0
        %v7390 = vadd.f32 %v7349, %v7389
        %v7391 = vpop.f32.mrb[0].mxu0
        %v7392 = vpop.f32.mrb[0].mxu0
        %7393 = vdwg.mxu0
        %7394 = vmatprep.subr.bf16.mxu0 %v6383
        %7395 = vmatpush1.bf16.msra.mxu0 %v6382
        %7396 = vmatprep.subr.bf16.mxu0 %v6391
        %7397 = vmatpush1.bf16.msra.mxu0 %v6390
        %7398 = vmatprep.subr.bf16.mxu0 %v6399
        %7399 = vmatpush1.bf16.msra.mxu0 %v6398
        %7400 = vmatprep.subr.bf16.mxu0 %v6407
        %7401 = vmatpush1.bf16.msra.mxu0 %v6406
        %7402 = vmatprep.subr.bf16.mxu0 %v6415
        %7403 = vmatpush1.bf16.msra.mxu0 %v6414
        %7404 = vmatprep.subr.bf16.mxu0 %v6423
        %7405 = vmatpush1.bf16.msra.mxu0 %v6422
        %7406 = vmatprep.subr.bf16.mxu0 %v6431
        %7407 = vmatpush1.bf16.msra.mxu0 %v6430
        %7408 = vmatprep.subr.bf16.mxu0 %v6439
        %7409 = vmatpush1.bf16.msra.mxu0 %v6438
        %7410 = vmatprep.subr.bf16.mxu0 %v6447
        %7411 = vmatpush1.bf16.msra.mxu0 %v6446
        %7412 = vmatprep.subr.bf16.mxu0 %v6455
        %7413 = vmatpush1.bf16.msra.mxu0 %v6454
        %7414 = vmatprep.subr.bf16.mxu0 %v6463
        %7415 = vmatpush1.bf16.msra.mxu0 %v6462
        %7416 = vmatprep.subr.bf16.mxu0 %v6471
        %7417 = vmatpush1.bf16.msra.mxu0 %v6470
        %7418 = vmatprep.subr.bf16.mxu0 %v6479
        %7419 = vmatpush1.bf16.msra.mxu0 %v6478
        %7420 = vmatprep.subr.bf16.mxu0 %v6487
        %7421 = vmatpush1.bf16.msra.mxu0 %v6486
        %7422 = vmatprep.subr.bf16.mxu0 %v6495
        %7423 = vmatpush1.bf16.msra.mxu0 %v6494
        %7424 = vmatprep.subr.bf16.mxu0 %v6503
        %7425 = vmatpush1.bf16.msra.mxu0 %v6502
        %7426 = vmatprep.mubr.bf16.mxu0 %v4073
        %7427 = vmatmul.mubr.bf16.gmra.mrb[0].mxu0 %v4072
        %v7428 = vpop.f32.mrb[0].mxu0
        %v7429 = vadd.f32 %v7388, %v7428
        %v7430 = vpop.f32.mrb[0].mxu0
        %v7431 = vadd.f32 %v7390, %v7430
        %v7432 = vpop.f32.mrb[0].mxu0
        %v7433 = vpop.f32.mrb[0].mxu0
        %7434 = vdwg.mxu0
        %7435 = vmatprep.subr.bf16.mxu0 %v6511
        %7436 = vmatpush1.bf16.msra.mxu0 %v6510
        %7437 = vmatprep.subr.bf16.mxu0 %v6519
        %7438 = vmatpush1.bf16.msra.mxu0 %v6518
        %7439 = vmatprep.subr.bf16.mxu0 %v6527
        %7440 = vmatpush1.bf16.msra.mxu0 %v6526
        %7441 = vmatprep.subr.bf16.mxu0 %v6535
        %7442 = vmatpush1.bf16.msra.mxu0 %v6534
        %7443 = vmatprep.subr.bf16.mxu0 %v6543
        %7444 = vmatpush1.bf16.msra.mxu0 %v6542
        %7445 = vmatprep.subr.bf16.mxu0 %v6551
        %7446 = vmatpush1.bf16.msra.mxu0 %v6550
        %7447 = vmatprep.subr.bf16.mxu0 %v6559
        %7448 = vmatpush1.bf16.msra.mxu0 %v6558
        %7449 = vmatprep.subr.bf16.mxu0 %v6567
        %7450 = vmatpush1.bf16.msra.mxu0 %v6566
        %7451 = vmatprep.subr.bf16.mxu0 %v6575
        %7452 = vmatpush1.bf16.msra.mxu0 %v6574
        %7453 = vmatprep.subr.bf16.mxu0 %v6583
        %7454 = vmatpush1.bf16.msra.mxu0 %v6582
        %7455 = vmatprep.subr.bf16.mxu0 %v6591
        %7456 = vmatpush1.bf16.msra.mxu0 %v6590
        %7457 = vmatprep.subr.bf16.mxu0 %v6599
        %7458 = vmatpush1.bf16.msra.mxu0 %v6598
        %7459 = vmatprep.subr.bf16.mxu0 %v6607
        %7460 = vmatpush1.bf16.msra.mxu0 %v6606
        %7461 = vmatprep.subr.bf16.mxu0 %v6615
        %7462 = vmatpush1.bf16.msra.mxu0 %v6614
        %7463 = vmatprep.subr.bf16.mxu0 %v6623
        %7464 = vmatpush1.bf16.msra.mxu0 %v6622
        %7465 = vmatprep.subr.bf16.mxu0 %v6631
        %7466 = vmatpush1.bf16.msra.mxu0 %v6630
        %7467 = vmatprep.mubr.bf16.mxu0 %v4075
        %7468 = vmatmul.mubr.bf16.gmra.mrb[0].mxu0 %v4074
        %v7469 = vpop.f32.mrb[0].mxu0
        %v7470 = vadd.f32 %v7429, %v7469
        %v7471 = vpop.f32.mrb[0].mxu0
        %v7472 = vadd.f32 %v7431, %v7471
        %v7473 = vpop.f32.mrb[0].mxu0
        %v7474 = vpop.f32.mrb[0].mxu0
        %7475 = vdwg.mxu0
        %7476 = vmatprep.subr.bf16.mxu0 %v6129
        %7477 = vmatpush1.bf16.msra.mxu0 %v6128
        %7478 = vmatprep.subr.bf16.mxu0 %v6137
        %7479 = vmatpush1.bf16.msra.mxu0 %v6136
        %7480 = vmatprep.subr.bf16.mxu0 %v6145
        %7481 = vmatpush1.bf16.msra.mxu0 %v6144
        %7482 = vmatprep.subr.bf16.mxu0 %v6153
        %7483 = vmatpush1.bf16.msra.mxu0 %v6152
        %7484 = vmatprep.subr.bf16.mxu0 %v6161
        %7485 = vmatpush1.bf16.msra.mxu0 %v6160
        %7486 = vmatprep.subr.bf16.mxu0 %v6169
        %7487 = vmatpush1.bf16.msra.mxu0 %v6168
        %7488 = vmatprep.subr.bf16.mxu0 %v6177
        %7489 = vmatpush1.bf16.msra.mxu0 %v6176
        %7490 = vmatprep.subr.bf16.mxu0 %v6185
        %7491 = vmatpush1.bf16.msra.mxu0 %v6184
        %7492 = vmatprep.subr.bf16.mxu0 %v6193
        %7493 = vmatpush1.bf16.msra.mxu0 %v6192
        %7494 = vmatprep.subr.bf16.mxu0 %v6201
        %7495 = vmatpush1.bf16.msra.mxu0 %v6200
        %7496 = vmatprep.subr.bf16.mxu0 %v6209
        %7497 = vmatpush1.bf16.msra.mxu0 %v6208
        %7498 = vmatprep.subr.bf16.mxu0 %v6217
        %7499 = vmatpush1.bf16.msra.mxu0 %v6216
        %7500 = vmatprep.subr.bf16.mxu0 %v6225
        %7501 = vmatpush1.bf16.msra.mxu0 %v6224
        %7502 = vmatprep.subr.bf16.mxu0 %v6233
        %7503 = vmatpush1.bf16.msra.mxu0 %v6232
        %7504 = vmatprep.subr.bf16.mxu0 %v6241
        %7505 = vmatpush1.bf16.msra.mxu0 %v6240
        %7506 = vmatprep.subr.bf16.mxu0 %v6249
        %7507 = vmatpush1.bf16.msra.mxu0 %v6248
        %7508 = vmatprep.mubr.bf16.mxu0 %v4069
        %7509 = vmatmul.mubr.bf16.gmra.mrb[0].mxu0 %v4068
        %v7510 = vpop.f32.mrb[0].mxu0
        %v7511 = vadd.f32 0.0, %v7510
        %v7512 = vpop.f32.mrb[0].mxu0
        %v7513 = vadd.f32 0.0, %v7512
        %v7514 = vpop.f32.mrb[0].mxu0
        %v7515 = vpop.f32.mrb[0].mxu0
        %7516 = vdwg.mxu0
        %7517 = vmatprep.subr.bf16.mxu0 %v6257
        %7518 = vmatpush1.bf16.msra.mxu0 %v6256
        %7519 = vmatprep.subr.bf16.mxu0 %v6265
        %7520 = vmatpush1.bf16.msra.mxu0 %v6264
        %7521 = vmatprep.subr.bf16.mxu0 %v6273
        %7522 = vmatpush1.bf16.msra.mxu0 %v6272
        %7523 = vmatprep.subr.bf16.mxu0 %v6281
        %7524 = vmatpush1.bf16.msra.mxu0 %v6280
        %7525 = vmatprep.subr.bf16.mxu0 %v6289
        %7526 = vmatpush1.bf16.msra.mxu0 %v6288
        %7527 = vmatprep.subr.bf16.mxu0 %v6297
        %7528 = vmatpush1.bf16.msra.mxu0 %v6296
        %7529 = vmatprep.subr.bf16.mxu0 %v6305
        %7530 = vmatpush1.bf16.msra.mxu0 %v6304
        %7531 = vmatprep.subr.bf16.mxu0 %v6313
        %7532 = vmatpush1.bf16.msra.mxu0 %v6312
        %7533 = vmatprep.subr.bf16.mxu0 %v6321
        %7534 = vmatpush1.bf16.msra.mxu0 %v6320
        %7535 = vmatprep.subr.bf16.mxu0 %v6329
        %7536 = vmatpush1.bf16.msra.mxu0 %v6328
        %7537 = vmatprep.subr.bf16.mxu0 %v6337
        %7538 = vmatpush1.bf16.msra.mxu0 %v6336
        %7539 = vmatprep.subr.bf16.mxu0 %v6345
        %7540 = vmatpush1.bf16.msra.mxu0 %v6344
        %7541 = vmatprep.subr.bf16.mxu0 %v6353
        %7542 = vmatpush1.bf16.msra.mxu0 %v6352
        %7543 = vmatprep.subr.bf16.mxu0 %v6361
        %7544 = vmatpush1.bf16.msra.mxu0 %v6360
        %7545 = vmatprep.subr.bf16.mxu0 %v6369
        %7546 = vmatpush1.bf16.msra.mxu0 %v6368
        %7547 = vmatprep.subr.bf16.mxu0 %v6377
        %7548 = vmatpush1.bf16.msra.mxu0 %v6376
        %7549 = vmatprep.mubr.bf16.mxu0 %v4071
        %7550 = vmatmul.mubr.bf16.gmra.mrb[0].mxu0 %v4070
        %v7551 = vpop.f32.mrb[0].mxu0
        %v7552 = vadd.f32 %v7511, %v7551
        %v7553 = vpop.f32.mrb[0].mxu0
        %v7554 = vadd.f32 %v7513, %v7553
        %v7555 = vpop.f32.mrb[0].mxu0
        %v7556 = vpop.f32.mrb[0].mxu0
        %7557 = vdwg.mxu0
        %7558 = vmatprep.subr.bf16.mxu0 %v6385
        %7559 = vmatpush1.bf16.msra.mxu0 %v6384
        %7560 = vmatprep.subr.bf16.mxu0 %v6393
        %7561 = vmatpush1.bf16.msra.mxu0 %v6392
        %7562 = vmatprep.subr.bf16.mxu0 %v6401
        %7563 = vmatpush1.bf16.msra.mxu0 %v6400
        %7564 = vmatprep.subr.bf16.mxu0 %v6409
        %7565 = vmatpush1.bf16.msra.mxu0 %v6408
        %7566 = vmatprep.subr.bf16.mxu0 %v6417
        %7567 = vmatpush1.bf16.msra.mxu0 %v6416
        %7568 = vmatprep.subr.bf16.mxu0 %v6425
        %7569 = vmatpush1.bf16.msra.mxu0 %v6424
        %7570 = vmatprep.subr.bf16.mxu0 %v6433
        %7571 = vmatpush1.bf16.msra.mxu0 %v6432
        %7572 = vmatprep.subr.bf16.mxu0 %v6441
        %7573 = vmatpush1.bf16.msra.mxu0 %v6440
        %7574 = vmatprep.subr.bf16.mxu0 %v6449
        %7575 = vmatpush1.bf16.msra.mxu0 %v6448
        %7576 = vmatprep.subr.bf16.mxu0 %v6457
        %7577 = vmatpush1.bf16.msra.mxu0 %v6456
        %7578 = vmatprep.subr.bf16.mxu0 %v6465
        %7579 = vmatpush1.bf16.msra.mxu0 %v6464
        %7580 = vmatprep.subr.bf16.mxu0 %v6473
        %7581 = vmatpush1.bf16.msra.mxu0 %v6472
        %7582 = vmatprep.subr.bf16.mxu0 %v6481
        %7583 = vmatpush1.bf16.msra.mxu0 %v6480
        %7584 = vmatprep.subr.bf16.mxu0 %v6489
        %7585 = vmatpush1.bf16.msra.mxu0 %v6488
        %7586 = vmatprep.subr.bf16.mxu0 %v6497
        %7587 = vmatpush1.bf16.msra.mxu0 %v6496
        %7588 = vmatprep.subr.bf16.mxu0 %v6505
        %7589 = vmatpush1.bf16.msra.mxu0 %v6504
        %7590 = vmatprep.mubr.bf16.mxu0 %v4073
        %7591 = vmatmul.mubr.bf16.gmra.mrb[0].mxu0 %v4072
        %v7592 = vpop.f32.mrb[0].mxu0
        %v7593 = vadd.f32 %v7552, %v7592
        %v7594 = vpop.f32.mrb[0].mxu0
        %v7595 = vadd.f32 %v7554, %v7594
        %v7596 = vpop.f32.mrb[0].mxu0
        %v7597 = vpop.f32.mrb[0].mxu0
        %7598 = vdwg.mxu0
        %7599 = vmatprep.subr.bf16.mxu0 %v6513
        %7600 = vmatpush1.bf16.msra.mxu0 %v6512
        %7601 = vmatprep.subr.bf16.mxu0 %v6521
        %7602 = vmatpush1.bf16.msra.mxu0 %v6520
        %7603 = vmatprep.subr.bf16.mxu0 %v6529
        %7604 = vmatpush1.bf16.msra.mxu0 %v6528
        %7605 = vmatprep.subr.bf16.mxu0 %v6537
        %7606 = vmatpush1.bf16.msra.mxu0 %v6536
        %7607 = vmatprep.subr.bf16.mxu0 %v6545
        %7608 = vmatpush1.bf16.msra.mxu0 %v6544
        %7609 = vmatprep.subr.bf16.mxu0 %v6553
        %7610 = vmatpush1.bf16.msra.mxu0 %v6552
        %7611 = vmatprep.subr.bf16.mxu0 %v6561
        %7612 = vmatpush1.bf16.msra.mxu0 %v6560
        %7613 = vmatprep.subr.bf16.mxu0 %v6569
        %7614 = vmatpush1.bf16.msra.mxu0 %v6568
        %7615 = vmatprep.subr.bf16.mxu0 %v6577
        %7616 = vmatpush1.bf16.msra.mxu0 %v6576
        %7617 = vmatprep.subr.bf16.mxu0 %v6585
        %7618 = vmatpush1.bf16.msra.mxu0 %v6584
        %7619 = vmatprep.subr.bf16.mxu0 %v6593
        %7620 = vmatpush1.bf16.msra.mxu0 %v6592
        %7621 = vmatprep.subr.bf16.mxu0 %v6601
        %7622 = vmatpush1.bf16.msra.mxu0 %v6600
        %7623 = vmatprep.subr.bf16.mxu0 %v6609
        %7624 = vmatpush1.bf16.msra.mxu0 %v6608
        %7625 = vmatprep.subr.bf16.mxu0 %v6617
        %7626 = vmatpush1.bf16.msra.mxu0 %v6616
        %7627 = vmatprep.subr.bf16.mxu0 %v6625
        %7628 = vmatpush1.bf16.msra.mxu0 %v6624
        %7629 = vmatprep.subr.bf16.mxu0 %v6633
        %7630 = vmatpush1.bf16.msra.mxu0 %v6632
        %7631 = vmatprep.mubr.bf16.mxu0 %v4075
        %7632 = vmatmul.mubr.bf16.gmra.mrb[0].mxu0 %v4074
        %v7633 = vpop.f32.mrb[0].mxu0
        %v7634 = vadd.f32 %v7593, %v7633
        %v7635 = vpop.f32.mrb[0].mxu0
        %v7636 = vadd.f32 %v7595, %v7635
        %v7637 = vpop.f32.mrb[0].mxu0
        %v7638 = vpop.f32.mrb[0].mxu0
        %7639 = vdwg.mxu0
        %7640 = vmatprep.subr.bf16.mxu0 %v6131
        %7641 = vmatpush1.bf16.msra.mxu0 %v6130
        %7642 = vmatprep.subr.bf16.mxu0 %v6139
        %7643 = vmatpush1.bf16.msra.mxu0 %v6138
        %7644 = vmatprep.subr.bf16.mxu0 %v6147
        %7645 = vmatpush1.bf16.msra.mxu0 %v6146
        %7646 = vmatprep.subr.bf16.mxu0 %v6155
        %7647 = vmatpush1.bf16.msra.mxu0 %v6154
        %7648 = vmatprep.subr.bf16.mxu0 %v6163
        %7649 = vmatpush1.bf16.msra.mxu0 %v6162
        %7650 = vmatprep.subr.bf16.mxu0 %v6171
        %7651 = vmatpush1.bf16.msra.mxu0 %v6170
        %7652 = vmatprep.subr.bf16.mxu0 %v6179
        %7653 = vmatpush1.bf16.msra.mxu0 %v6178
        %7654 = vmatprep.subr.bf16.mxu0 %v6187
        %7655 = vmatpush1.bf16.msra.mxu0 %v6186
        %7656 = vmatprep.subr.bf16.mxu0 %v6195
        %7657 = vmatpush1.bf16.msra.mxu0 %v6194
        %7658 = vmatprep.subr.bf16.mxu0 %v6203
        %7659 = vmatpush1.bf16.msra.mxu0 %v6202
        %7660 = vmatprep.subr.bf16.mxu0 %v6211
        %7661 = vmatpush1.bf16.msra.mxu0 %v6210
        %7662 = vmatprep.subr.bf16.mxu0 %v6219
        %7663 = vmatpush1.bf16.msra.mxu0 %v6218
        %7664 = vmatprep.subr.bf16.mxu0 %v6227
        %7665 = vmatpush1.bf16.msra.mxu0 %v6226
        %7666 = vmatprep.subr.bf16.mxu0 %v6235
        %7667 = vmatpush1.bf16.msra.mxu0 %v6234
        %7668 = vmatprep.subr.bf16.mxu0 %v6243
        %7669 = vmatpush1.bf16.msra.mxu0 %v6242
        %7670 = vmatprep.subr.bf16.mxu0 %v6251
        %7671 = vmatpush1.bf16.msra.mxu0 %v6250
        %7672 = vmatprep.mubr.bf16.mxu0 %v4069
        %7673 = vmatmul.mubr.bf16.gmra.mrb[0].mxu0 %v4068
        %v7674 = vpop.f32.mrb[0].mxu0
        %v7675 = vadd.f32 0.0, %v7674
        %v7676 = vpop.f32.mrb[0].mxu0
        %v7677 = vadd.f32 0.0, %v7676
        %v7678 = vpop.f32.mrb[0].mxu0
        %v7679 = vpop.f32.mrb[0].mxu0
        %7680 = vdwg.mxu0
        %7681 = vmatprep.subr.bf16.mxu0 %v6259
        %7682 = vmatpush1.bf16.msra.mxu0 %v6258
        %7683 = vmatprep.subr.bf16.mxu0 %v6267
        %7684 = vmatpush1.bf16.msra.mxu0 %v6266
        %7685 = vmatprep.subr.bf16.mxu0 %v6275
        %7686 = vmatpush1.bf16.msra.mxu0 %v6274
        %7687 = vmatprep.subr.bf16.mxu0 %v6283
        %7688 = vmatpush1.bf16.msra.mxu0 %v6282
        %7689 = vmatprep.subr.bf16.mxu0 %v6291
        %7690 = vmatpush1.bf16.msra.mxu0 %v6290
        %7691 = vmatprep.subr.bf16.mxu0 %v6299
        %7692 = vmatpush1.bf16.msra.mxu0 %v6298
        %7693 = vmatprep.subr.bf16.mxu0 %v6307
        %7694 = vmatpush1.bf16.msra.mxu0 %v6306
        %7695 = vmatprep.subr.bf16.mxu0 %v6315
        %7696 = vmatpush1.bf16.msra.mxu0 %v6314
        %7697 = vmatprep.subr.bf16.mxu0 %v6323
        %7698 = vmatpush1.bf16.msra.mxu0 %v6322
        %7699 = vmatprep.subr.bf16.mxu0 %v6331
        %7700 = vmatpush1.bf16.msra.mxu0 %v6330
        %7701 = vmatprep.subr.bf16.mxu0 %v6339
        %7702 = vmatpush1.bf16.msra.mxu0 %v6338
        %7703 = vmatprep.subr.bf16.mxu0 %v6347
        %7704 = vmatpush1.bf16.msra.mxu0 %v6346
        %7705 = vmatprep.subr.bf16.mxu0 %v6355
        %7706 = vmatpush1.bf16.msra.mxu0 %v6354
        %7707 = vmatprep.subr.bf16.mxu0 %v6363
        %7708 = vmatpush1.bf16.msra.mxu0 %v6362
        %7709 = vmatprep.subr.bf16.mxu0 %v6371
        %7710 = vmatpush1.bf16.msra.mxu0 %v6370
        %7711 = vmatprep.subr.bf16.mxu0 %v6379
        %7712 = vmatpush1.bf16.msra.mxu0 %v6378
        %7713 = vmatprep.mubr.bf16.mxu0 %v4071
        %7714 = vmatmul.mubr.bf16.gmra.mrb[0].mxu0 %v4070
        %v7715 = vpop.f32.mrb[0].mxu0
        %v7716 = vadd.f32 %v7675, %v7715
        %v7717 = vpop.f32.mrb[0].mxu0
        %v7718 = vadd.f32 %v7677, %v7717
        %v7719 = vpop.f32.mrb[0].mxu0
        %v7720 = vpop.f32.mrb[0].mxu0
        %7721 = vdwg.mxu0
        %7722 = vmatprep.subr.bf16.mxu0 %v6387
        %7723 = vmatpush1.bf16.msra.mxu0 %v6386
        %7724 = vmatprep.subr.bf16.mxu0 %v6395
        %7725 = vmatpush1.bf16.msra.mxu0 %v6394
        %7726 = vmatprep.subr.bf16.mxu0 %v6403
        %7727 = vmatpush1.bf16.msra.mxu0 %v6402
        %7728 = vmatprep.subr.bf16.mxu0 %v6411
        %7729 = vmatpush1.bf16.msra.mxu0 %v6410
        %7730 = vmatprep.subr.bf16.mxu0 %v6419
        %7731 = vmatpush1.bf16.msra.mxu0 %v6418
        %7732 = vmatprep.subr.bf16.mxu0 %v6427
        %7733 = vmatpush1.bf16.msra.mxu0 %v6426
        %7734 = vmatprep.subr.bf16.mxu0 %v6435
        %7735 = vmatpush1.bf16.msra.mxu0 %v6434
        %7736 = vmatprep.subr.bf16.mxu0 %v6443
        %7737 = vmatpush1.bf16.msra.mxu0 %v6442
        %7738 = vmatprep.subr.bf16.mxu0 %v6451
        %7739 = vmatpush1.bf16.msra.mxu0 %v6450
        %7740 = vmatprep.subr.bf16.mxu0 %v6459
        %7741 = vmatpush1.bf16.msra.mxu0 %v6458
        %7742 = vmatprep.subr.bf16.mxu0 %v6467
        %7743 = vmatpush1.bf16.msra.mxu0 %v6466
        %7744 = vmatprep.subr.bf16.mxu0 %v6475
        %7745 = vmatpush1.bf16.msra.mxu0 %v6474
        %7746 = vmatprep.subr.bf16.mxu0 %v6483
        %7747 = vmatpush1.bf16.msra.mxu0 %v6482
        %7748 = vmatprep.subr.bf16.mxu0 %v6491
        %7749 = vmatpush1.bf16.msra.mxu0 %v6490
        %7750 = vmatprep.subr.bf16.mxu0 %v6499
        %7751 = vmatpush1.bf16.msra.mxu0 %v6498
        %7752 = vmatprep.subr.bf16.mxu0 %v6507
        %7753 = vmatpush1.bf16.msra.mxu0 %v6506
        %7754 = vmatprep.mubr.bf16.mxu0 %v4073
        %7755 = vmatmul.mubr.bf16.gmra.mrb[0].mxu0 %v4072
        %v7756 = vpop.f32.mrb[0].mxu0
        %v7757 = vadd.f32 %v7716, %v7756
        %v7758 = vpop.f32.mrb[0].mxu0
        %v7759 = vadd.f32 %v7718, %v7758
        %v7760 = vpop.f32.mrb[0].mxu0
        %v7761 = vpop.f32.mrb[0].mxu0
        %7762 = vdwg.mxu0
        %7763 = vmatprep.subr.bf16.mxu0 %v6515
        %7764 = vmatpush1.bf16.msra.mxu0 %v6514
        %7765 = vmatprep.subr.bf16.mxu0 %v6523
        %7766 = vmatpush1.bf16.msra.mxu0 %v6522
        %7767 = vmatprep.subr.bf16.mxu0 %v6531
        %7768 = vmatpush1.bf16.msra.mxu0 %v6530
        %7769 = vmatprep.subr.bf16.mxu0 %v6539
        %7770 = vmatpush1.bf16.msra.mxu0 %v6538
        %7771 = vmatprep.subr.bf16.mxu0 %v6547
        %7772 = vmatpush1.bf16.msra.mxu0 %v6546
        %7773 = vmatprep.subr.bf16.mxu0 %v6555
        %7774 = vmatpush1.bf16.msra.mxu0 %v6554
        %7775 = vmatprep.subr.bf16.mxu0 %v6563
        %7776 = vmatpush1.bf16.msra.mxu0 %v6562
        %7777 = vmatprep.subr.bf16.mxu0 %v6571
        %7778 = vmatpush1.bf16.msra.mxu0 %v6570
        %7779 = vmatprep.subr.bf16.mxu0 %v6579
        %7780 = vmatpush1.bf16.msra.mxu0 %v6578
        %7781 = vmatprep.subr.bf16.mxu0 %v6587
        %7782 = vmatpush1.bf16.msra.mxu0 %v6586
        %7783 = vmatprep.subr.bf16.mxu0 %v6595
        %7784 = vmatpush1.bf16.msra.mxu0 %v6594
        %7785 = vmatprep.subr.bf16.mxu0 %v6603
        %7786 = vmatpush1.bf16.msra.mxu0 %v6602
        %7787 = vmatprep.subr.bf16.mxu0 %v6611
        %7788 = vmatpush1.bf16.msra.mxu0 %v6610
        %7789 = vmatprep.subr.bf16.mxu0 %v6619
        %7790 = vmatpush1.bf16.msra.mxu0 %v6618
        %7791 = vmatprep.subr.bf16.mxu0 %v6627
        %7792 = vmatpush1.bf16.msra.mxu0 %v6626
        %7793 = vmatprep.subr.bf16.mxu0 %v6635
        %7794 = vmatpush1.bf16.msra.mxu0 %v6634
        %7795 = vmatprep.mubr.bf16.mxu0 %v4075
        %7796 = vmatmul.mubr.bf16.gmra.mrb[0].mxu0 %v4074
        %v7797 = vpop.f32.mrb[0].mxu0
        %v7798 = vadd.f32 %v7757, %v7797
        %v7799 = vpop.f32.mrb[0].mxu0
        %v7800 = vadd.f32 %v7759, %v7799
        %v7801 = vpop.f32.mrb[0].mxu0
        %v7802 = vpop.f32.mrb[0].mxu0
        %7803 = vdwg.mxu0
        %v7804 = vmax.f32 %v7306, 0.0
        %v7805 = vmax.f32 %v7308, 0.0
        %v7806 = vmax.f32 %v7470, 0.0
        %v7807 = vmax.f32 %v7472, 0.0
        %v7808 = vmax.f32 %v7634, 0.0
        %v7809 = vmax.f32 %v7636, 0.0
        %v7810 = vmax.f32 %v7798, 0.0
        %v7811 = vmax.f32 %v7800, 0.0
        %7812 = vst [vmem:[%s5] sm:$0xff] %v7804
        %7813 = vst [vmem:[%s5 + $0x8] sm:$0xff] %v7805
        %7814 = vst [vmem:[%s5 + $0x10] sm:$0xff] %v7806
        %7815 = vst [vmem:[%s5 + $0x18] sm:$0xff] %v7807
        %7816 = vst [vmem:[%s5 + $0x20] sm:$0xff] %v7808
        %7817 = vst [vmem:[%s5 + $0x28] sm:$0xff] %v7809
        %7818 = vst [vmem:[%s5 + $0x30] sm:$0xff] %v7810
        %7819 = vst [vmem:[%s5 + $0x38] sm:$0xff] %v7811
        %v7820 = vpack.c.bf16 %v7804, %v7804
        %v7821 = vpack.c.bf16 %v7805, %v7805
        %v7822 = vpack.c.bf16 %v7806, %v7806
        %v7823 = vpack.c.bf16 %v7807, %v7807
        %v7824 = vpack.c.bf16 %v7808, %v7808
        %v7825 = vpack.c.bf16 %v7809, %v7809
        %v7826 = vpack.c.bf16 %v7810, %v7810
        %v7827 = vpack.c.bf16 %v7811, %v7811
        %v7828 = vld [vmem:[%s3] sm:$0xf]
        %v7829 = vld [vmem:[%s3 + $0x4] sm:$0xf]
        %v7830 = vld [vmem:[%s3 + $0x8] sm:$0xf]
        %v7831 = vld [vmem:[%s3 + $0xc] sm:$0xf]
        %v7832 = vld [vmem:[%s3 + $0x10] sm:$0xf]
        %v7833 = vld [vmem:[%s3 + $0x14] sm:$0xf]
        %v7834 = vld [vmem:[%s3 + $0x18] sm:$0xf]
        %v7835 = vld [vmem:[%s3 + $0x1c] sm:$0xf]
        %v7836 = vld [vmem:[%s3 + $0x20] sm:$0xf]
        %v7837 = vld [vmem:[%s3 + $0x24] sm:$0xf]
        %v7838 = vld [vmem:[%s3 + $0x28] sm:$0xf]
        %v7839 = vld [vmem:[%s3 + $0x2c] sm:$0xf]
        %v7840 = vld [vmem:[%s3 + $0x30] sm:$0xf]
        %v7841 = vld [vmem:[%s3 + $0x34] sm:$0xf]
        %v7842 = vld [vmem:[%s3 + $0x38] sm:$0xf]
        %v7843 = vld [vmem:[%s3 + $0x3c] sm:$0xf]
        %v7844 = vld [vmem:[%s3 + $0x40] sm:$0xf]
        %v7845 = vld [vmem:[%s3 + $0x44] sm:$0xf]
        %v7846 = vld [vmem:[%s3 + $0x48] sm:$0xf]
        %v7847 = vld [vmem:[%s3 + $0x4c] sm:$0xf]
        %v7848 = vld [vmem:[%s3 + $0x50] sm:$0xf]
        %v7849 = vld [vmem:[%s3 + $0x54] sm:$0xf]
        %v7850 = vld [vmem:[%s3 + $0x58] sm:$0xf]
        %v7851 = vld [vmem:[%s3 + $0x5c] sm:$0xf]
        %v7852 = vld [vmem:[%s3 + $0x60] sm:$0xf]
        %v7853 = vld [vmem:[%s3 + $0x64] sm:$0xf]
        %v7854 = vld [vmem:[%s3 + $0x68] sm:$0xf]
        %v7855 = vld [vmem:[%s3 + $0x6c] sm:$0xf]
        %v7856 = vld [vmem:[%s3 + $0x70] sm:$0xf]
        %v7857 = vld [vmem:[%s3 + $0x74] sm:$0xf]
        %v7858 = vld [vmem:[%s3 + $0x78] sm:$0xf]
        %v7859 = vld [vmem:[%s3 + $0x7c] sm:$0xf]
        %v7860 = vld [vmem:[%s3 + $0x80] sm:$0xf]
        %v7861 = vld [vmem:[%s3 + $0x84] sm:$0xf]
        %v7862 = vld [vmem:[%s3 + $0x88] sm:$0xf]
        %v7863 = vld [vmem:[%s3 + $0x8c] sm:$0xf]
        %v7864 = vld [vmem:[%s3 + $0x90] sm:$0xf]
        %v7865 = vld [vmem:[%s3 + $0x94] sm:$0xf]
        %v7866 = vld [vmem:[%s3 + $0x98] sm:$0xf]
        %v7867 = vld [vmem:[%s3 + $0x9c] sm:$0xf]
        %v7868 = vld [vmem:[%s3 + $0xa0] sm:$0xf]
        %v7869 = vld [vmem:[%s3 + $0xa4] sm:$0xf]
        %v7870 = vld [vmem:[%s3 + $0xa8] sm:$0xf]
        %v7871 = vld [vmem:[%s3 + $0xac] sm:$0xf]
        %v7872 = vld [vmem:[%s3 + $0xb0] sm:$0xf]
        %v7873 = vld [vmem:[%s3 + $0xb4] sm:$0xf]
        %v7874 = vld [vmem:[%s3 + $0xb8] sm:$0xf]
        %v7875 = vld [vmem:[%s3 + $0xbc] sm:$0xf]
        %v7876 = vld [vmem:[%s3 + $0xc0] sm:$0xf]
        %v7877 = vld [vmem:[%s3 + $0xc4] sm:$0xf]
        %v7878 = vld [vmem:[%s3 + $0xc8] sm:$0xf]
        %v7879 = vld [vmem:[%s3 + $0xcc] sm:$0xf]
        %v7880 = vld [vmem:[%s3 + $0xd0] sm:$0xf]
        %v7881 = vld [vmem:[%s3 + $0xd4] sm:$0xf]
        %v7882 = vld [vmem:[%s3 + $0xd8] sm:$0xf]
        %v7883 = vld [vmem:[%s3 + $0xdc] sm:$0xf]
        %v7884 = vld [vmem:[%s3 + $0xe0] sm:$0xf]
        %v7885 = vld [vmem:[%s3 + $0xe4] sm:$0xf]
        %v7886 = vld [vmem:[%s3 + $0xe8] sm:$0xf]
        %v7887 = vld [vmem:[%s3 + $0xec] sm:$0xf]
        %v7888 = vld [vmem:[%s3 + $0xf0] sm:$0xf]
        %v7889 = vld [vmem:[%s3 + $0xf4] sm:$0xf]
        %v7890 = vld [vmem:[%s3 + $0xf8] sm:$0xf]
        %v7891 = vld [vmem:[%s3 + $0xfc] sm:$0xf]
        %v7892 = vld [vmem:[%s3 + $0x100] sm:$0xf]
        %v7893 = vld [vmem:[%s3 + $0x104] sm:$0xf]
        %v7894 = vld [vmem:[%s3 + $0x108] sm:$0xf]
        %v7895 = vld [vmem:[%s3 + $0x10c] sm:$0xf]
        %v7896 = vld [vmem:[%s3 + $0x110] sm:$0xf]
        %v7897 = vld [vmem:[%s3 + $0x114] sm:$0xf]
        %v7898 = vld [vmem:[%s3 + $0x118] sm:$0xf]
        %v7899 = vld [vmem:[%s3 + $0x11c] sm:$0xf]
        %v7900 = vld [vmem:[%s3 + $0x120] sm:$0xf]
        %v7901 = vld [vmem:[%s3 + $0x124] sm:$0xf]
        %v7902 = vld [vmem:[%s3 + $0x128] sm:$0xf]
        %v7903 = vld [vmem:[%s3 + $0x12c] sm:$0xf]
        %v7904 = vld [vmem:[%s3 + $0x130] sm:$0xf]
        %v7905 = vld [vmem:[%s3 + $0x134] sm:$0xf]
        %v7906 = vld [vmem:[%s3 + $0x138] sm:$0xf]
        %v7907 = vld [vmem:[%s3 + $0x13c] sm:$0xf]
        %v7908 = vld [vmem:[%s3 + $0x140] sm:$0xf]
        %v7909 = vld [vmem:[%s3 + $0x144] sm:$0xf]
        %v7910 = vld [vmem:[%s3 + $0x148] sm:$0xf]
        %v7911 = vld [vmem:[%s3 + $0x14c] sm:$0xf]
        %v7912 = vld [vmem:[%s3 + $0x150] sm:$0xf]
        %v7913 = vld [vmem:[%s3 + $0x154] sm:$0xf]
        %v7914 = vld [vmem:[%s3 + $0x158] sm:$0xf]
        %v7915 = vld [vmem:[%s3 + $0x15c] sm:$0xf]
        %v7916 = vld [vmem:[%s3 + $0x160] sm:$0xf]
        %v7917 = vld [vmem:[%s3 + $0x164] sm:$0xf]
        %v7918 = vld [vmem:[%s3 + $0x168] sm:$0xf]
        %v7919 = vld [vmem:[%s3 + $0x16c] sm:$0xf]
        %v7920 = vld [vmem:[%s3 + $0x170] sm:$0xf]
        %v7921 = vld [vmem:[%s3 + $0x174] sm:$0xf]
        %v7922 = vld [vmem:[%s3 + $0x178] sm:$0xf]
        %v7923 = vld [vmem:[%s3 + $0x17c] sm:$0xf]
        %v7924 = vld [vmem:[%s3 + $0x180] sm:$0xf]
        %v7925 = vld [vmem:[%s3 + $0x184] sm:$0xf]
        %v7926 = vld [vmem:[%s3 + $0x188] sm:$0xf]
        %v7927 = vld [vmem:[%s3 + $0x18c] sm:$0xf]
        %v7928 = vld [vmem:[%s3 + $0x190] sm:$0xf]
        %v7929 = vld [vmem:[%s3 + $0x194] sm:$0xf]
        %v7930 = vld [vmem:[%s3 + $0x198] sm:$0xf]
        %v7931 = vld [vmem:[%s3 + $0x19c] sm:$0xf]
        %v7932 = vld [vmem:[%s3 + $0x1a0] sm:$0xf]
        %v7933 = vld [vmem:[%s3 + $0x1a4] sm:$0xf]
        %v7934 = vld [vmem:[%s3 + $0x1a8] sm:$0xf]
        %v7935 = vld [vmem:[%s3 + $0x1ac] sm:$0xf]
        %v7936 = vld [vmem:[%s3 + $0x1b0] sm:$0xf]
        %v7937 = vld [vmem:[%s3 + $0x1b4] sm:$0xf]
        %v7938 = vld [vmem:[%s3 + $0x1b8] sm:$0xf]
        %v7939 = vld [vmem:[%s3 + $0x1bc] sm:$0xf]
        %v7940 = vld [vmem:[%s3 + $0x1c0] sm:$0xf]
        %v7941 = vld [vmem:[%s3 + $0x1c4] sm:$0xf]
        %v7942 = vld [vmem:[%s3 + $0x1c8] sm:$0xf]
        %v7943 = vld [vmem:[%s3 + $0x1cc] sm:$0xf]
        %v7944 = vld [vmem:[%s3 + $0x1d0] sm:$0xf]
        %v7945 = vld [vmem:[%s3 + $0x1d4] sm:$0xf]
        %v7946 = vld [vmem:[%s3 + $0x1d8] sm:$0xf]
        %v7947 = vld [vmem:[%s3 + $0x1dc] sm:$0xf]
        %v7948 = vld [vmem:[%s3 + $0x1e0] sm:$0xf]
        %v7949 = vld [vmem:[%s3 + $0x1e4] sm:$0xf]
        %v7950 = vld [vmem:[%s3 + $0x1e8] sm:$0xf]
        %v7951 = vld [vmem:[%s3 + $0x1ec] sm:$0xf]
        %v7952 = vld [vmem:[%s3 + $0x1f0] sm:$0xf]
        %v7953 = vld [vmem:[%s3 + $0x1f4] sm:$0xf]
        %v7954 = vld [vmem:[%s3 + $0x1f8] sm:$0xf]
        %v7955 = vld [vmem:[%s3 + $0x1fc] sm:$0xf]
        %v8084 = vunpack.c.l.b16 %v7828
        %v8085 = vunpack.c.l.b16 %v7829
        %v8086 = vunpack.c.l.b16 %v7830
        %v8087 = vunpack.c.l.b16 %v7831
        %v8088 = vunpack.c.l.b16 %v7832
        %v8089 = vunpack.c.l.b16 %v7833
        %v8090 = vunpack.c.l.b16 %v7834
        %v8091 = vunpack.c.l.b16 %v7835
        %v8092 = vunpack.c.l.b16 %v7836
        %v8093 = vunpack.c.l.b16 %v7837
        %v8094 = vunpack.c.l.b16 %v7838
        %v8095 = vunpack.c.l.b16 %v7839
        %v8096 = vunpack.c.l.b16 %v7840
        %v8097 = vunpack.c.l.b16 %v7841
        %v8098 = vunpack.c.l.b16 %v7842
        %v8099 = vunpack.c.l.b16 %v7843
        %v8100 = vunpack.c.l.b16 %v7844
        %v8101 = vunpack.c.l.b16 %v7845
        %v8102 = vunpack.c.l.b16 %v7846
        %v8103 = vunpack.c.l.b16 %v7847
        %v8104 = vunpack.c.l.b16 %v7848
        %v8105 = vunpack.c.l.b16 %v7849
        %v8106 = vunpack.c.l.b16 %v7850
        %v8107 = vunpack.c.l.b16 %v7851
        %v8108 = vunpack.c.l.b16 %v7852
        %v8109 = vunpack.c.l.b16 %v7853
        %v8110 = vunpack.c.l.b16 %v7854
        %v8111 = vunpack.c.l.b16 %v7855
        %v8112 = vunpack.c.l.b16 %v7856
        %v8113 = vunpack.c.l.b16 %v7857
        %v8114 = vunpack.c.l.b16 %v7858
        %v8115 = vunpack.c.l.b16 %v7859
        %v8116 = vunpack.c.l.b16 %v7860
        %v8117 = vunpack.c.l.b16 %v7861
        %v8118 = vunpack.c.l.b16 %v7862
        %v8119 = vunpack.c.l.b16 %v7863
        %v8120 = vunpack.c.l.b16 %v7864
        %v8121 = vunpack.c.l.b16 %v7865
        %v8122 = vunpack.c.l.b16 %v7866
        %v8123 = vunpack.c.l.b16 %v7867
        %v8124 = vunpack.c.l.b16 %v7868
        %v8125 = vunpack.c.l.b16 %v7869
        %v8126 = vunpack.c.l.b16 %v7870
        %v8127 = vunpack.c.l.b16 %v7871
        %v8128 = vunpack.c.l.b16 %v7872
        %v8129 = vunpack.c.l.b16 %v7873
        %v8130 = vunpack.c.l.b16 %v7874
        %v8131 = vunpack.c.l.b16 %v7875
        %v8132 = vunpack.c.l.b16 %v7876
        %v8133 = vunpack.c.l.b16 %v7877
        %v8134 = vunpack.c.l.b16 %v7878
        %v8135 = vunpack.c.l.b16 %v7879
        %v8136 = vunpack.c.l.b16 %v7880
        %v8137 = vunpack.c.l.b16 %v7881
        %v8138 = vunpack.c.l.b16 %v7882
        %v8139 = vunpack.c.l.b16 %v7883
        %v8140 = vunpack.c.l.b16 %v7884
        %v8141 = vunpack.c.l.b16 %v7885
        %v8142 = vunpack.c.l.b16 %v7886
        %v8143 = vunpack.c.l.b16 %v7887
        %v8144 = vunpack.c.l.b16 %v7888
        %v8145 = vunpack.c.l.b16 %v7889
        %v8146 = vunpack.c.l.b16 %v7890
        %v8147 = vunpack.c.l.b16 %v7891
        %v8148 = vunpack.c.l.b16 %v7892
        %v8149 = vunpack.c.l.b16 %v7893
        %v8150 = vunpack.c.l.b16 %v7894
        %v8151 = vunpack.c.l.b16 %v7895
        %v8152 = vunpack.c.l.b16 %v7896
        %v8153 = vunpack.c.l.b16 %v7897
        %v8154 = vunpack.c.l.b16 %v7898
        %v8155 = vunpack.c.l.b16 %v7899
        %v8156 = vunpack.c.l.b16 %v7900
        %v8157 = vunpack.c.l.b16 %v7901
        %v8158 = vunpack.c.l.b16 %v7902
        %v8159 = vunpack.c.l.b16 %v7903
        %v8160 = vunpack.c.l.b16 %v7904
        %v8161 = vunpack.c.l.b16 %v7905
        %v8162 = vunpack.c.l.b16 %v7906
        %v8163 = vunpack.c.l.b16 %v7907
        %v8164 = vunpack.c.l.b16 %v7908
        %v8165 = vunpack.c.l.b16 %v7909
        %v8166 = vunpack.c.l.b16 %v7910
        %v8167 = vunpack.c.l.b16 %v7911
        %v8168 = vunpack.c.l.b16 %v7912
        %v8169 = vunpack.c.l.b16 %v7913
        %v8170 = vunpack.c.l.b16 %v7914
        %v8171 = vunpack.c.l.b16 %v7915
        %v8172 = vunpack.c.l.b16 %v7916
        %v8173 = vunpack.c.l.b16 %v7917
        %v8174 = vunpack.c.l.b16 %v7918
        %v8175 = vunpack.c.l.b16 %v7919
        %v8176 = vunpack.c.l.b16 %v7920
        %v8177 = vunpack.c.l.b16 %v7921
        %v8178 = vunpack.c.l.b16 %v7922
        %v8179 = vunpack.c.l.b16 %v7923
        %v8180 = vunpack.c.l.b16 %v7924
        %v8181 = vunpack.c.l.b16 %v7925
        %v8182 = vunpack.c.l.b16 %v7926
        %v8183 = vunpack.c.l.b16 %v7927
        %v8184 = vunpack.c.l.b16 %v7928
        %v8185 = vunpack.c.l.b16 %v7929
        %v8186 = vunpack.c.l.b16 %v7930
        %v8187 = vunpack.c.l.b16 %v7931
        %v8188 = vunpack.c.l.b16 %v7932
        %v8189 = vunpack.c.l.b16 %v7933
        %v8190 = vunpack.c.l.b16 %v7934
        %v8191 = vunpack.c.l.b16 %v7935
        %v8192 = vunpack.c.l.b16 %v7936
        %v8193 = vunpack.c.l.b16 %v7937
        %v8194 = vunpack.c.l.b16 %v7938
        %v8195 = vunpack.c.l.b16 %v7939
        %v8196 = vunpack.c.l.b16 %v7940
        %v8197 = vunpack.c.l.b16 %v7941
        %v8198 = vunpack.c.l.b16 %v7942
        %v8199 = vunpack.c.l.b16 %v7943
        %v8200 = vunpack.c.l.b16 %v7944
        %v8201 = vunpack.c.l.b16 %v7945
        %v8202 = vunpack.c.l.b16 %v7946
        %v8203 = vunpack.c.l.b16 %v7947
        %v8204 = vunpack.c.l.b16 %v7948
        %v8205 = vunpack.c.l.b16 %v7949
        %v8206 = vunpack.c.l.b16 %v7950
        %v8207 = vunpack.c.l.b16 %v7951
        %v8208 = vunpack.c.l.b16 %v7952
        %v8209 = vunpack.c.l.b16 %v7953
        %v8210 = vunpack.c.l.b16 %v7954
        %v8211 = vunpack.c.l.b16 %v7955
        %v8212 = vpack.c.b16 %v8085, %v8084
        %v8213 = vpack.c.b16 %v8087, %v8086
        %v8214 = vpack.c.b16 %v8089, %v8088
        %v8215 = vpack.c.b16 %v8091, %v8090
        %v8216 = vpack.c.b16 %v8093, %v8092
        %v8217 = vpack.c.b16 %v8095, %v8094
        %v8218 = vpack.c.b16 %v8097, %v8096
        %v8219 = vpack.c.b16 %v8099, %v8098
        %v8220 = vpack.c.b16 %v8101, %v8100
        %v8221 = vpack.c.b16 %v8103, %v8102
        %v8222 = vpack.c.b16 %v8105, %v8104
        %v8223 = vpack.c.b16 %v8107, %v8106
        %v8224 = vpack.c.b16 %v8109, %v8108
        %v8225 = vpack.c.b16 %v8111, %v8110
        %v8226 = vpack.c.b16 %v8113, %v8112
        %v8227 = vpack.c.b16 %v8115, %v8114
        %v8228 = vpack.c.b16 %v8117, %v8116
        %v8229 = vpack.c.b16 %v8119, %v8118
        %v8230 = vpack.c.b16 %v8121, %v8120
        %v8231 = vpack.c.b16 %v8123, %v8122
        %v8232 = vpack.c.b16 %v8125, %v8124
        %v8233 = vpack.c.b16 %v8127, %v8126
        %v8234 = vpack.c.b16 %v8129, %v8128
        %v8235 = vpack.c.b16 %v8131, %v8130
        %v8236 = vpack.c.b16 %v8133, %v8132
        %v8237 = vpack.c.b16 %v8135, %v8134
        %v8238 = vpack.c.b16 %v8137, %v8136
        %v8239 = vpack.c.b16 %v8139, %v8138
        %v8240 = vpack.c.b16 %v8141, %v8140
        %v8241 = vpack.c.b16 %v8143, %v8142
        %v8242 = vpack.c.b16 %v8145, %v8144
        %v8243 = vpack.c.b16 %v8147, %v8146
        %v8244 = vpack.c.b16 %v8149, %v8148
        %v8245 = vpack.c.b16 %v8151, %v8150
        %v8246 = vpack.c.b16 %v8153, %v8152
        %v8247 = vpack.c.b16 %v8155, %v8154
        %v8248 = vpack.c.b16 %v8157, %v8156
        %v8249 = vpack.c.b16 %v8159, %v8158
        %v8250 = vpack.c.b16 %v8161, %v8160
        %v8251 = vpack.c.b16 %v8163, %v8162
        %v8252 = vpack.c.b16 %v8165, %v8164
        %v8253 = vpack.c.b16 %v8167, %v8166
        %v8254 = vpack.c.b16 %v8169, %v8168
        %v8255 = vpack.c.b16 %v8171, %v8170
        %v8256 = vpack.c.b16 %v8173, %v8172
        %v8257 = vpack.c.b16 %v8175, %v8174
        %v8258 = vpack.c.b16 %v8177, %v8176
        %v8259 = vpack.c.b16 %v8179, %v8178
        %v8260 = vpack.c.b16 %v8181, %v8180
        %v8261 = vpack.c.b16 %v8183, %v8182
        %v8262 = vpack.c.b16 %v8185, %v8184
        %v8263 = vpack.c.b16 %v8187, %v8186
        %v8264 = vpack.c.b16 %v8189, %v8188
        %v8265 = vpack.c.b16 %v8191, %v8190
        %v8266 = vpack.c.b16 %v8193, %v8192
        %v8267 = vpack.c.b16 %v8195, %v8194
        %v8268 = vpack.c.b16 %v8197, %v8196
        %v8269 = vpack.c.b16 %v8199, %v8198
        %v8270 = vpack.c.b16 %v8201, %v8200
        %v8271 = vpack.c.b16 %v8203, %v8202
        %v8272 = vpack.c.b16 %v8205, %v8204
        %v8273 = vpack.c.b16 %v8207, %v8206
        %v8274 = vpack.c.b16 %v8209, %v8208
        %v8275 = vpack.c.b16 %v8211, %v8210
        %8340 = vmatprep.subr.bf16.mxu0 0
        %8341 = vmatpush1.bf16.msra.mxu0 %v8212
        %8342 = vmatprep.subr.bf16.mxu0 0
        %8343 = vmatpush1.bf16.msra.mxu0 %v8213
        %8344 = vmatprep.subr.bf16.mxu0 0
        %8345 = vmatpush1.bf16.msra.mxu0 %v8214
        %8346 = vmatprep.subr.bf16.mxu0 0
        %8347 = vmatpush1.bf16.msra.mxu0 %v8215
        %8348 = vmatprep.subr.bf16.mxu0 0
        %8349 = vmatpush1.bf16.msra.mxu0 %v8216
        %8350 = vmatprep.subr.bf16.mxu0 0
        %8351 = vmatpush1.bf16.msra.mxu0 %v8217
        %8352 = vmatprep.subr.bf16.mxu0 0
        %8353 = vmatpush1.bf16.msra.mxu0 %v8218
        %8354 = vmatprep.subr.bf16.mxu0 0
        %8355 = vmatpush1.bf16.msra.mxu0 %v8219
        %8356 = vmatprep.subr.bf16.mxu0 0
        %8357 = vmatpush1.bf16.msra.mxu0 %v8220
        %8358 = vmatprep.subr.bf16.mxu0 0
        %8359 = vmatpush1.bf16.msra.mxu0 %v8221
        %8360 = vmatprep.subr.bf16.mxu0 0
        %8361 = vmatpush1.bf16.msra.mxu0 %v8222
        %8362 = vmatprep.subr.bf16.mxu0 0
        %8363 = vmatpush1.bf16.msra.mxu0 %v8223
        %8364 = vmatprep.subr.bf16.mxu0 0
        %8365 = vmatpush1.bf16.msra.mxu0 %v8224
        %8366 = vmatprep.subr.bf16.mxu0 0
        %8367 = vmatpush1.bf16.msra.mxu0 %v8225
        %8368 = vmatprep.subr.bf16.mxu0 0
        %8369 = vmatpush1.bf16.msra.mxu0 %v8226
        %8370 = vmatprep.subr.bf16.mxu0 0
        %8371 = vmatpush1.bf16.msra.mxu0 %v8227
        %8372 = vmatprep.mubr.bf16.mxu0 %v7821
        %8373 = vmatmul.mubr.bf16.gmra.mrb[0].mxu0 %v7820
        %v8374 = vpop.f32.mrb[0].mxu0
        %v8375 = vadd.f32 0.0, %v8374
        %v8376 = vpop.f32.mrb[0].mxu0
        %v8377 = vpop.f32.mrb[0].mxu0
        %v8378 = vpop.f32.mrb[0].mxu0
        %8379 = vdwg.mxu0
        %8380 = vmatprep.subr.bf16.mxu0 0
        %8381 = vmatpush1.bf16.msra.mxu0 %v8228
        %8382 = vmatprep.subr.bf16.mxu0 0
        %8383 = vmatpush1.bf16.msra.mxu0 %v8229
        %8384 = vmatprep.subr.bf16.mxu0 0
        %8385 = vmatpush1.bf16.msra.mxu0 %v8230
        %8386 = vmatprep.subr.bf16.mxu0 0
        %8387 = vmatpush1.bf16.msra.mxu0 %v8231
        %8388 = vmatprep.subr.bf16.mxu0 0
        %8389 = vmatpush1.bf16.msra.mxu0 %v8232
        %8390 = vmatprep.subr.bf16.mxu0 0
        %8391 = vmatpush1.bf16.msra.mxu0 %v8233
        %8392 = vmatprep.subr.bf16.mxu0 0
        %8393 = vmatpush1.bf16.msra.mxu0 %v8234
        %8394 = vmatprep.subr.bf16.mxu0 0
        %8395 = vmatpush1.bf16.msra.mxu0 %v8235
        %8396 = vmatprep.subr.bf16.mxu0 0
        %8397 = vmatpush1.bf16.msra.mxu0 %v8236
        %8398 = vmatprep.subr.bf16.mxu0 0
        %8399 = vmatpush1.bf16.msra.mxu0 %v8237
        %8400 = vmatprep.subr.bf16.mxu0 0
        %8401 = vmatpush1.bf16.msra.mxu0 %v8238
        %8402 = vmatprep.subr.bf16.mxu0 0
        %8403 = vmatpush1.bf16.msra.mxu0 %v8239
        %8404 = vmatprep.subr.bf16.mxu0 0
        %8405 = vmatpush1.bf16.msra.mxu0 %v8240
        %8406 = vmatprep.subr.bf16.mxu0 0
        %8407 = vmatpush1.bf16.msra.mxu0 %v8241
        %8408 = vmatprep.subr.bf16.mxu0 0
        %8409 = vmatpush1.bf16.msra.mxu0 %v8242
        %8410 = vmatprep.subr.bf16.mxu0 0
        %8411 = vmatpush1.bf16.msra.mxu0 %v8243
        %8412 = vmatprep.mubr.bf16.mxu0 %v7823
        %8413 = vmatmul.mubr.bf16.gmra.mrb[0].mxu0 %v7822
        %v8414 = vpop.f32.mrb[0].mxu0
        %v8415 = vadd.f32 %v8375, %v8414
        %v8416 = vpop.f32.mrb[0].mxu0
        %v8417 = vpop.f32.mrb[0].mxu0
        %v8418 = vpop.f32.mrb[0].mxu0
        %8419 = vdwg.mxu0
        %8420 = vmatprep.subr.bf16.mxu0 0
        %8421 = vmatpush1.bf16.msra.mxu0 %v8244
        %8422 = vmatprep.subr.bf16.mxu0 0
        %8423 = vmatpush1.bf16.msra.mxu0 %v8245
        %8424 = vmatprep.subr.bf16.mxu0 0
        %8425 = vmatpush1.bf16.msra.mxu0 %v8246
        %8426 = vmatprep.subr.bf16.mxu0 0
        %8427 = vmatpush1.bf16.msra.mxu0 %v8247
        %8428 = vmatprep.subr.bf16.mxu0 0
        %8429 = vmatpush1.bf16.msra.mxu0 %v8248
        %8430 = vmatprep.subr.bf16.mxu0 0
        %8431 = vmatpush1.bf16.msra.mxu0 %v8249
        %8432 = vmatprep.subr.bf16.mxu0 0
        %8433 = vmatpush1.bf16.msra.mxu0 %v8250
        %8434 = vmatprep.subr.bf16.mxu0 0
        %8435 = vmatpush1.bf16.msra.mxu0 %v8251
        %8436 = vmatprep.subr.bf16.mxu0 0
        %8437 = vmatpush1.bf16.msra.mxu0 %v8252
        %8438 = vmatprep.subr.bf16.mxu0 0
        %8439 = vmatpush1.bf16.msra.mxu0 %v8253
        %8440 = vmatprep.subr.bf16.mxu0 0
        %8441 = vmatpush1.bf16.msra.mxu0 %v8254
        %8442 = vmatprep.subr.bf16.mxu0 0
        %8443 = vmatpush1.bf16.msra.mxu0 %v8255
        %8444 = vmatprep.subr.bf16.mxu0 0
        %8445 = vmatpush1.bf16.msra.mxu0 %v8256
        %8446 = vmatprep.subr.bf16.mxu0 0
        %8447 = vmatpush1.bf16.msra.mxu0 %v8257
        %8448 = vmatprep.subr.bf16.mxu0 0
        %8449 = vmatpush1.bf16.msra.mxu0 %v8258
        %8450 = vmatprep.subr.bf16.mxu0 0
        %8451 = vmatpush1.bf16.msra.mxu0 %v8259
        %8452 = vmatprep.mubr.bf16.mxu0 %v7825
        %8453 = vmatmul.mubr.bf16.gmra.mrb[0].mxu0 %v7824
        %v8454 = vpop.f32.mrb[0].mxu0
        %v8455 = vadd.f32 %v8415, %v8454
        %v8456 = vpop.f32.mrb[0].mxu0
        %v8457 = vpop.f32.mrb[0].mxu0
        %v8458 = vpop.f32.mrb[0].mxu0
        %8459 = vdwg.mxu0
        %8460 = vmatprep.subr.bf16.mxu0 0
        %8461 = vmatpush1.bf16.msra.mxu0 %v8260
        %8462 = vmatprep.subr.bf16.mxu0 0
        %8463 = vmatpush1.bf16.msra.mxu0 %v8261
        %8464 = vmatprep.subr.bf16.mxu0 0
        %8465 = vmatpush1.bf16.msra.mxu0 %v8262
        %8466 = vmatprep.subr.bf16.mxu0 0
        %8467 = vmatpush1.bf16.msra.mxu0 %v8263
        %8468 = vmatprep.subr.bf16.mxu0 0
        %8469 = vmatpush1.bf16.msra.mxu0 %v8264
        %8470 = vmatprep.subr.bf16.mxu0 0
        %8471 = vmatpush1.bf16.msra.mxu0 %v8265
        %8472 = vmatprep.subr.bf16.mxu0 0
        %8473 = vmatpush1.bf16.msra.mxu0 %v8266
        %8474 = vmatprep.subr.bf16.mxu0 0
        %8475 = vmatpush1.bf16.msra.mxu0 %v8267
        %8476 = vmatprep.subr.bf16.mxu0 0
        %8477 = vmatpush1.bf16.msra.mxu0 %v8268
        %8478 = vmatprep.subr.bf16.mxu0 0
        %8479 = vmatpush1.bf16.msra.mxu0 %v8269
        %8480 = vmatprep.subr.bf16.mxu0 0
        %8481 = vmatpush1.bf16.msra.mxu0 %v8270
        %8482 = vmatprep.subr.bf16.mxu0 0
        %8483 = vmatpush1.bf16.msra.mxu0 %v8271
        %8484 = vmatprep.subr.bf16.mxu0 0
        %8485 = vmatpush1.bf16.msra.mxu0 %v8272
        %8486 = vmatprep.subr.bf16.mxu0 0
        %8487 = vmatpush1.bf16.msra.mxu0 %v8273
        %8488 = vmatprep.subr.bf16.mxu0 0
        %8489 = vmatpush1.bf16.msra.mxu0 %v8274
        %8490 = vmatprep.subr.bf16.mxu0 0
        %8491 = vmatpush1.bf16.msra.mxu0 %v8275
        %8492 = vmatprep.mubr.bf16.mxu0 %v7827
        %8493 = vmatmul.mubr.bf16.gmra.mrb[0].mxu0 %v7826
        %v8494 = vpop.f32.mrb[0].mxu0
        %v8495 = vadd.f32 %v8455, %v8494
        %v8496 = vpop.f32.mrb[0].mxu0
        %v8497 = vpop.f32.mrb[0].mxu0
        %v8498 = vpop.f32.mrb[0].mxu0
        %8499 = vdwg.mxu0
        %8500 = vst [vmem:[%s6] sm:$0xff] %v8495
      $region44: #{net_forward.7} parent=35 // pred_fallthru
        _
      // Predicated region
      $region45: #{net_forward.7} parent=35 // pred_check
        %p8501 = pneg %p125
      $region46: #{net_forward.7} parent=35 // pred_check_branch
        %8503 = sbr.rel (%p8501) target = $region48
      $region47: #{net_forward.7} parent=35 // pred_region
        _
      $region48: #{net_forward.7} parent=35 // pred_fallthru
        _
      // Predicated region
      $region49: #{net_forward.7} parent=35 // pred_check
        %p8504 = pneg %p146
      $region50: #{net_forward.7} parent=35 // pred_check_branch
        %8506 = sbr.rel (%p8504) target = $region52
      $region51: #{net_forward.7} parent=35 // pred_region
        _
      $region52: #{net_forward.7} parent=35 // pred_fallthru
        _
      // Predicated region
      $region53: #{net_forward.7} parent=35 // pred_check
        %p8507 = pneg %p167
      $region54: #{net_forward.7} parent=35 // pred_check_branch
        %8509 = sbr.rel (%p8507) target = $region56
      $region55: #{net_forward.7} parent=35 // pred_region
        _
      $region56: #{net_forward.7} parent=35 // pred_fallthru
        _
      // Predicated region
      $region57: #{net_forward.7} parent=35 // pred_check
        %p8510 = pneg %p125
      $region58: #{net_forward.7} parent=35 // pred_check_branch
        %8512 = sbr.rel (%p8510) target = $region60
      $region59: #{net_forward.7} parent=35 // pred_region
        _
      $region60: #{net_forward.7} parent=35 // pred_fallthru
        _
      // Predicated region
      $region61: #{net_forward.7} parent=35 // pred_check
        %p8513 = pneg %p146
      $region62: #{net_forward.7} parent=35 // pred_check_branch
        %8515 = sbr.rel (%p8513) target = $region64
      $region63: #{net_forward.7} parent=35 // pred_region
        _
      $region64: #{net_forward.7} parent=35 // pred_fallthru
        _
      // Predicated region
      $region65: #{net_forward.7} parent=35 // pred_check
        %p8516 = pneg %p167
      $region66: #{net_forward.7} parent=35 // pred_check_branch
        %8518 = sbr.rel (%p8516) target = $region68
      $region67: #{net_forward.7} parent=35 // pred_region
        _
      $region68: #{net_forward.7} parent=35 // pred_fallthru
        _
    $region36: #{net_forward.7} parent=5 // pred_fallthru
      _
    %p8519 = scmp.le.s32.totalorder 2, %s13
    // Predicated region
    $region69: #{net_forward.7} parent=5 // pred_check
      %p8520 = pneg %p8519
    $region70: #{net_forward.7} parent=5 // pred_check_branch
      %8522 = sbr.rel (%p8520) target = $region72
    $region71: #{net_forward.7} parent=5 // pred_region
      %s8523 = ssub.s32 %s13, 2
    $region72: #{net_forward.7} parent=5 // pred_fallthru
      _
  $region6: #{net_forward.7} parent=0 // loop_footer
    %s17 = sadd.s32 1, %s13
  $region7: #{net_forward.7} parent=0 // loop_footer_branch
    %12 = sbr.rel target = $region3
  $region8: #{net_forward.7} parent=0 // loop_exit
    _

</llo_original>
